<compile_context>
chip_gen: v6e
topology: v6e:2x2x1
jax: 0.10.0
libtpu: 0.0.40
codegen_flags: <defaults>
</compile_context>

<pallas_src>
import math
import functools

import jax
import jax.numpy as jnp
from jax import lax
from jax.experimental import pallas as pl
from jax.experimental.pallas import tpu as pltpu

EPS_LN = 1e-4          # glow-tts LayerNorm eps
NEG_INF = -1e4         # masked_fill value used by the reference module


# ----------------------------------------------------------------------------
# shared math helpers
# ----------------------------------------------------------------------------
def _layer_norm(x, gamma, beta):
    mean = jnp.mean(x, axis=-1, keepdims=True)
    var = jnp.mean((x - mean) ** 2, axis=-1, keepdims=True)
    return (x - mean) * lax.rsqrt(var + EPS_LN) * gamma + beta


def _softmax_exact(s):                       # reference path
    m = jnp.max(s, axis=-1, keepdims=True)
    e = jnp.exp(s - m)
    return e / jnp.sum(e, axis=-1, keepdims=True)


def _softmax_kernel(s):                      # in-kernel: EUP approximate reciprocal
    m = jnp.max(s, axis=-1, keepdims=True)
    e = jnp.exp(s - m)
    return e * pl.reciprocal(jnp.sum(e, axis=-1, keepdims=True), approx=True)


def _row_shift(x, d):
    """y[t] = x[t + d] with zero fill at the ends (Conv1d zero padding)."""
    if d == 0:
        return x
    T, C = x.shape
    z = jnp.zeros((abs(d), C), x.dtype)
    if d > 0:
        return jnp.concatenate([x[d:], z], axis=0)
    return jnp.concatenate([z, x[:T + d]], axis=0)
    # TODO(synk): pltpu.roll(x, -d, axis=0) + boundary-row mask would move the shift onto the
    #             otherwise-idle XLU instead of a sublane copy.


def _conv1d_taps(x, tap_w, bias, K):
    """Conv1d(padding=K//2) as K row-shifted MXU dots (contraction = Cin, no im2col concat)."""
    pad = K // 2
    taps = [tap_w(kk) for kk in range(K)]
    xc = x.astype(taps[0].dtype)
    acc = None
    for kk in range(K):
        t = jnp.dot(_row_shift(xc, kk - pad), taps[kk], preferred_element_type=jnp.float32)
        acc = t if acc is None else acc + t
    return acc + bias


# ----------------------------------------------------------------------------
# the fused Pallas kernel: one grid step == (batch element, encoder layer)
# ----------------------------------------------------------------------------
def fused_text_encoder_kernel(
        lens_ref,                                     # scalar prefetch (SMEM): [B] int32
        x_ref,                                        # [1, Tp, E]
        wqkv_ref, bqkv_ref, wo_ref, bo_ref, g1_ref, be1_ref,
        wf1_ref, bf1_ref, wf2_ref, bf2_ref, g2_ref, be2_ref,     # per-layer (leading dim 1)
        embw_ref, embb_ref, wbig_ref, bbig_ref,
        dw1_ref, db1_ref, dg1_ref, dbe1_ref, dw2_ref, db2_ref, dg2_ref, dbe2_ref,
        wpbig_ref, bpbig_ref,                                     # layer-invariant
        out_ref,                                      # [1, Tp, CP]
        act_ref,                                      # VMEM scratch [Tp, H] f32 (persists over l)
        *, n_heads, dk, dkp, K, T_orig):
    b = pl.program_id(0)
    l = pl.program_id(1)
    Tp = act_ref.shape[0]

    length = lens_ref[b]
    row_ids = lax.broadcasted_iota(jnp.int32, (Tp, 1), 0)
    col_ids = lax.broadcasted_iota(jnp.int32, (1, Tp), 1)
    m_tc = (row_ids < length).astype(jnp.float32)                 # [Tp, 1] sequence mask
    key_bias = jnp.where(col_ids < length, 0.0, NEG_INF)          # [1, Tp] additive key mask

    inv_sqrt_dk = 1.0 / math.sqrt(dk)
    bf16 = jnp.bfloat16

    # ---- l == 0: embedding_proj (* sqrt(H) folded into weights/bias on host) ----
    @pl.when(l == 0)
    def _():
        act_ref[...] = (jnp.dot(x_ref[0], embw_ref[...],
                                preferred_element_type=jnp.float32) + embb_ref[...])

    x = act_ref[...]                                              # [Tp, H] f32
    xb = x.astype(bf16)

    # ---- MultiHeadAttention: fused QKV matmul, 128-padded heads, fused O-projection ----
    qkv = jnp.dot(xb, wqkv_ref[0], preferred_element_type=jnp.float32) + bqkv_ref[0]
    heads = []
    for h in range(n_heads):
        base = 3 * dkp * h
        qh = qkv[:, base:base + dkp] * inv_sqrt_dk                # scale q (as the module does)
        kh = qkv[:, base + dkp:base + 2 * dkp]
        vh = qkv[:, base + 2 * dkp:base + 3 * dkp]
        s = lax.dot_general(qh.astype(bf16), kh.astype(bf16),
                            (((1,), (1,)), ((), ())),
                            preferred_element_type=jnp.float32)   # [Tp, Tp]
        p = _softmax_kernel(s + key_bias)                         # additive masking only
        heads.append(jnp.dot(p.astype(bf16), vh.astype(bf16),
                             preferred_element_type=jnp.float32))
    oh = jnp.concatenate(heads, axis=-1)                          # [Tp, nh*dkp], 128-aligned
    y = jnp.dot(oh.astype(bf16), wo_ref[0], preferred_element_type=jnp.float32) + bo_ref[0]

    x1 = _layer_norm(x + y, g1_ref[0], be1_ref[0])

    # ---- FFN: conv(x*mask) -> relu -> conv(.*mask) -> .*mask ----
    h1 = _conv1d_taps(x1 * m_tc, lambda kk: wf1_ref[0, kk], bf1_ref[0], K)
    h1 = jnp.maximum(h1, 0.0)
    h2 = _conv1d_taps(h1 * m_tc, lambda kk: wf2_ref[0, kk], bf2_ref[0], K)
    x2 = _layer_norm(x1 + h2 * m_tc, g2_ref[0], be2_ref[0])
    act_ref[...] = x2

    # ---- l == last: final mask, projection heads, duration predictor, packed output ----
    @pl.when(l == pl.num_programs(1) - 1)
    def _():
        xf = x2 * m_tc                                            # Encoder's final apply_mask
        # DurationPredictor on xf (x.detach() is a no-op in the forward pass).  The module only
        # masks at the very end; `tb` reproduces the Conv1d zero pad of the ORIGINAL tensor length
        # so T-padding does not leak into row T_orig-1.
        tb = (row_ids < T_orig).astype(jnp.float32)
        hd = jnp.maximum(_conv1d_taps(xf, lambda kk: dw1_ref[kk], db1_ref[...], K), 0.0)
        hd = _layer_norm(hd, dg1_ref[...], dbe1_ref[...])
        hd = jnp.maximum(_conv1d_taps(hd * tb, lambda kk: dw2_ref[kk], db2_ref[...], K), 0.0)
        hd = _layer_norm(hd, dg2_ref[...], dbe2_ref[...])

        # lane-dense packed output slab: [x | x_m | x_logs | logw | 0-pad]   (f32 matmuls: tiny)
        slab = jnp.dot(xf, wbig_ref[...], preferred_element_type=jnp.float32) + bbig_ref[...]
        slab = slab + (jnp.dot(hd, wpbig_ref[...], preferred_element_type=jnp.float32)
                       + bpbig_ref[...]) * m_tc                   # apply_mask on the logw column
        out_ref[0] = slab


# ----------------------------------------------------------------------------
# pallas_call wrapper
# ----------------------------------------------------------------------------
PER_LAYER = ('wqkv', 'bqkv', 'wo', 'bo', 'g1', 'be1',
             'wf1', 'bf1', 'wf2', 'bf2', 'g2', 'be2')
INVARIANT = ('emb_w', 'emb_b', 'w_big', 'b_big',
             'dw1', 'db1', 'dg1', 'dbe1', 'dw2', 'db2', 'dg2', 'dbe2',
             'wp_big', 'bp_big')


def _layer_spec(shape):
    rest = len(shape) - 1
    return pl.BlockSpec((1,) + tuple(shape[1:]),
                        lambda b, l, lens, _r=rest: (l,) + (0,) * _r)


def _fixed_spec(shape):
    nd = len(shape)
    return pl.BlockSpec(tuple(shape), lambda b, l, lens, _n=nd: (0,) * _n)


def text_encoder_forward(packed, x_in, lengths, *, n_layers, n_heads, K, meta):
    B, T, E = x_in.shape
    H, O, CP = meta['H'], meta['O'], meta['CP']
    dk, dkp, QKVW, OW, Fdp = meta['dk'], meta['dkp'], meta['QKVW'], meta['OW'], meta['Fdp']
    Ff = packed['wf1'].shape[-1]

    Tp = ((T + 127) // 128) * 128                     # lane-dense sequence length
    x_pad = jnp.pad(x_in, ((0, 0), (0, Tp - T), (0, 0)))

    per_layer = [packed[k] for k in PER_LAYER]
    invariant = [packed[k] for k in INVARIANT]

    in_specs = ([pl.BlockSpec((1, Tp, E), lambda b, l, lens: (b, 0, 0))]
                + [_layer_spec(w.shape) for w in per_layer]
                + [_fixed_spec(w.shape) for w in invariant])
    out_spec = pl.BlockSpec((1, Tp, CP), lambda b, l, lens: (b, 0, 0))

    kern = functools.partial(fused_text_encoder_kernel,
                             n_heads=n_heads, dk=dk, dkp=dkp, K=K, T_orig=T)

    # ---- VMEM budget (per-layer blocks double-buffered + invariants + IO + scratch) ----
    nbytes = lambda a: int(a.size) * a.dtype.itemsize
    per_layer_blk = sum(nbytes(w) // n_layers for w in per_layer)
    inv_blk = sum(nbytes(w) for w in invariant)
    io_blk = Tp * E * 4 + Tp * CP * 4
    vmem_need = 2 * (per_layer_blk + io_blk) + 2 * inv_blk + Tp * H * 4 + (8 << 20)
    vmem_limit = int(max(vmem_need, 32 * 1024 * 1024))

    # ---- advisory cost estimate for XLA's scheduler ----
    mm = lambda m, k, n: 2 * m * k * n
    per_layer_flops = (mm(Tp, H, QKVW) + n_heads * (mm(Tp, dkp, Tp) + mm(Tp, Tp, dkp))
                       + mm(Tp, OW, H) + K * (mm(Tp, H, Ff) + mm(Tp, Ff, H)))
    tail_flops = (mm(Tp, E, H) + K * (mm(Tp, H, Fdp) + mm(Tp, Fdp, Fdp))
                  + mm(Tp, H, CP) + mm(Tp, Fdp, CP))
    flops = B * (n_layers * per_layer_flops + tail_flops)
    trans = B * n_layers * n_heads * Tp * Tp
    bytes_acc = (nbytes(x_pad) + B * Tp * CP * 4
                 + B * sum(nbytes(w) for w in per_layer) + inv_blk)

    slab = pl.pallas_call(
        kern,
        out_shape=jax.ShapeDtypeStruct((B, Tp, CP), jnp.float32),
        grid_spec=pltpu.PrefetchScalarGridSpec(
            num_scalar_prefetch=1,
            grid=(B, n_layers),
            in_specs=in_specs,
            out_specs=out_spec,
            scratch_shapes=[pltpu.VMEM((Tp, H), jnp.float32)]),
        compiler_params=pltpu.CompilerParams(
            dimension_semantics=("parallel", "arbitrary"),
            vmem_limit_bytes=vmem_limit),
        cost_estimate=pl.CostEstimate(flops=int(flops), transcendentals=int(trans),
                                      bytes_accessed=int(bytes_acc)),
    )(lengths, x_pad, *per_layer, *invariant)

    slab = slab[:, :T, :]
    x = slab[..., 0:H]
    x_m = slab[..., H:H + O]
    x_logs = slab[..., H + O:H + 2 * O]
    logw = slab[..., H + 2 * O:H + 2 * O + 1]
    to_bct = lambda a: jnp.transpose(a, (0, 2, 1))
    return to_bct(x), to_bct(x_m), to_bct(x_logs), to_bct(logw)


# ----------------------------------------------------------------------------
# host-side weight packing: per-layer stacking, fused+128-padded QKV/O, bf16 cast,
# sqrt(H) folding, lane-dense packed output head
# ----------------------------------------------------------------------------
def pack_params(P, n_heads):
    H = P['emb_w'].shape[1]
    O = P['wm'].shape[1]
    L = len(P['layers'])
    dk = H // n_heads
    dkp = ((dk + 127) // 128) * 128
    QKVW = n_heads * 3 * dkp
    OW = n_heads * dkp
    CP = ((H + 2 * O + 1 + 127) // 128) * 128
    bf16 = jnp.bfloat16

    wqkv = jnp.zeros((L, H, QKVW), jnp.float32)
    bqkv = jnp.zeros((L, 1, QKVW), jnp.float32)
    wo_c = jnp.zeros((L, OW, H), jnp.float32)
    for li, lp in enumerate(P['layers']):
        for h in range(n_heads):
            base = 3 * dkp * h
            sl = slice(h * dk, (h + 1) * dk)
            wqkv = wqkv.at[li, :, base:base + dk].set(lp['wq'][:, sl])
            wqkv = wqkv.at[li, :, base + dkp:base + dkp + dk].set(lp['wk'][:, sl])
            wqkv = wqkv.at[li, :, base + 2 * dkp:base + 2 * dkp + dk].set(lp['wv'][:, sl])
            bqkv = bqkv.at[li, :, base:base + dk].set(lp['bq'][:, sl])
            bqkv = bqkv.at[li, :, base + dkp:base + dkp + dk].set(lp['bk'][:, sl])
            bqkv = bqkv.at[li, :, base + 2 * dkp:base + 2 * dkp + dk].set(lp['bv'][:, sl])
            wo_c = wo_c.at[li, h * dkp:h * dkp + dk, :].set(lp['wo'][sl, :])

    stk = lambda key: jnp.stack([lp[key] for lp in P['layers']], axis=0)

    packed = dict(
        wqkv=wqkv.astype(bf16), bqkv=bqkv,
        wo=wo_c.astype(bf16), bo=stk('bo'),
        g1=stk('g1'), be1=stk('be1'),
        wf1=stk('wf1').astype(bf16), bf1=stk('bf1'),
        wf2=stk('wf2').astype(bf16), bf2=stk('bf2'),
        g2=stk('g2'), be2=stk('be2'),
    )

    sqrtH = math.sqrt(H)
    packed['emb_w'] = P['emb_w'] * sqrtH          # once per sequence -> keep f32 exact
    packed['emb_b'] = P['emb_b'] * sqrtH

    # lane-dense packed output head: cols [0:H]=x, [H:H+O]=x_m, [H+O:H+2O]=x_logs, [H+2O]=logw
    w_big = jnp.zeros((H, CP), jnp.float32)
    w_big = w_big.at[:, 0:H].set(jnp.eye(H, dtype=jnp.float32))
    w_big = w_big.at[:, H:H + O].set(P['wm'])
    w_big = w_big.at[:, H + O:H + 2 * O].set(P['ws'])
    b_big = jnp.zeros((1, CP), jnp.float32)
    b_big = b_big.at[:, H:H + O].set(P['bm'])
    b_big = b_big.at[:, H + O:H + 2 * O].set(P['bs'])

    dp = P['dp']
    Fdp = dp['w1'].shape[2]
    lw_col = H + 2 * O
    wp_big = jnp.zeros((Fdp, CP), jnp.float32).at[:, lw_col:lw_col + 1].set(dp['wp'])
    bp_big = jnp.zeros((1, CP), jnp.float32).at[:, lw_col:lw_col + 1].set(dp['bp'])

    packed.update(
        w_big=w_big, b_big=b_big,
        dw1=dp['w1'].astype(bf16), db1=dp['b1'], dg1=dp['g1'], dbe1=dp['be1'],
        dw2=dp['w2'].astype(bf16), db2=dp['b2'], dg2=dp['g2'], dbe2=dp['be2'],
        wp_big=wp_big, bp_big=bp_big,
    )
    meta = dict(H=H, O=O, CP=CP, dk=dk, dkp=dkp, QKVW=QKVW, OW=OW, Fdp=Fdp)
    return packed, meta


# ----------------------------------------------------------------------------
# pure-JAX reference (true module structure; bf16 matmul operands to match the kernel precision)
# ----------------------------------------------------------------------------
def ref_text_encoder(P, x_in, lengths, *, n_heads, K):
    bf = lambda a: a.astype(jnp.bfloat16)
    mmb = lambda a, w: jnp.dot(bf(a), bf(w), preferred_element_type=jnp.float32)
    B, T, E = x_in.shape
    H = P['emb_w'].shape[1]
    dk = H // n_heads
    inv = 1.0 / math.sqrt(dk)
    mask = (jnp.arange(T)[None, :] < lengths[:, None]).astype(jnp.float32)      # [B, T]

    x = (x_in @ P['emb_w'] + P['emb_b']) * math.sqrt(H)                         # f32 [B, T, H]

    def conv(xb, w, b):                                   # Conv1d(padding=K//2), w [K, Cin, Cout]
        pad = K // 2
        Tl, Cin = xb.shape
        z = jnp.zeros((pad, Cin), xb.dtype)
        xp = jnp.concatenate([z, xb, z], axis=0)
        acc = jnp.zeros((Tl, w.shape[2]), jnp.float32) + b
        for kk in range(K):
            acc = acc + mmb(xp[kk:kk + Tl], w[kk])
        return acc

    def layer_b(xb, mb, p):                               # xb [T, H], mb [T, 1]
        q = mmb(xb, p['wq']) + p['bq']
        k = mmb(xb, p['wk']) + p['bk']
        v = mmb(xb, p['wv']) + p['bv']
        amask = mb * mb.T
        outs = []
        for h in range(n_heads):
            qh = q[:, h * dk:(h + 1) * dk] * inv
            kh = k[:, h * dk:(h + 1) * dk]
            vh = v[:, h * dk:(h + 1) * dk]
            s = jnp.dot(bf(qh), bf(kh).T, preferred_element_type=jnp.float32)
            s = jnp.where(amask > 0, s, NEG_INF)
            outs.append(jnp.dot(bf(_softmax_exact(s)), bf(vh),
                                preferred_element_type=jnp.float32))
        y = mmb(jnp.concatenate(outs, -1), p['wo']) + p['bo']
        x1 = _layer_norm(xb + y, p['g1'], p['be1'])
        hdn = jnp.maximum(conv(x1 * mb, p['wf1'], p['bf1']), 0.0)
        hdn = conv(hdn * mb, p['wf2'], p['bf2'])
        return _layer_norm(x1 + hdn * mb, p['g2'], p['be2'])

    xs = []
    for b in range(B):
        xb = x[b]
        mb = mask[b][:, None]
        for p in P['layers']:
            xb = layer_b(xb, mb, p)
        xs.append(xb * mb)                                # Encoder's final apply_mask
    x = jnp.stack(xs, axis=0)

    x_m = x @ P['wm'] + P['bm']
    x_logs = x @ P['ws'] + P['bs']

    dp = P['dp']
    logws = []
    for b in range(B):
        mb = mask[b][:, None]
        h = jnp.maximum(conv(x[b], dp['w1'], dp['b1']), 0.0)
        h = _layer_norm(h, dp['g1'], dp['be1'])
        h = jnp.maximum(conv(h, dp['w2'], dp['b2']), 0.0)
        h = _layer_norm(h, dp['g2'], dp['be2'])
        logws.append((h @ dp['wp'] + dp['bp']) * mb)
    logw = jnp.stack(logws, axis=0)

    to_bct = lambda a: jnp.transpose(a, (0, 2, 1))
    return to_bct(x), to_bct(x_m), to_bct(x_logs), to_bct(logw)


# ----------------------------------------------------------------------------
# deterministic parameter init (conv [K, Cin, Cout], linear [Din, Dout], bias [1, D])
# ----------------------------------------------------------------------------
def init_params(key, E, H, O, F, Fdp, n_layers, K):
    keys = iter(jax.random.split(key, 256))
    nk = lambda: next(keys)
    nrm = lambda k, shape, s=0.05: jax.random.normal(k, shape, jnp.float32) * s

    P = {'emb_w': nrm(nk(), (E, H)), 'emb_b': nrm(nk(), (1, H), 0.01)}
    layers = []
    for _ in range(n_layers):
        layers.append(dict(
            wq=nrm(nk(), (H, H)), bq=nrm(nk(), (1, H), 0.01),
            wk=nrm(nk(), (H, H)), bk=nrm(nk(), (1, H), 0.01),
            wv=nrm(nk(), (H, H)), bv=nrm(nk(), (1, H), 0.01),
            wo=nrm(nk(), (H, H)), bo=nrm(nk(), (1, H), 0.01),
            g1=jnp.ones((1, H), jnp.float32), be1=jnp.zeros((1, H), jnp.float32),
            wf1=nrm(nk(), (K, H, F)), bf1=nrm(nk(), (1, F), 0.01),
            wf2=nrm(nk(), (K, F, H)), bf2=nrm(nk(), (1, H), 0.01),
            g2=jnp.ones((1, H), jnp.float32), be2=jnp.zeros((1, H), jnp.float32),
        ))
    P['layers'] = layers
    P['wm'] = nrm(nk(), (H, O)); P['bm'] = nrm(nk(), (1, O), 0.01)
    P['ws'] = nrm(nk(), (H, O)); P['bs'] = nrm(nk(), (1, O), 0.01)
    P['dp'] = dict(
        w1=nrm(nk(), (K, H, Fdp)), b1=nrm(nk(), (1, Fdp), 0.01),
        g1=jnp.ones((1, Fdp), jnp.float32), be1=jnp.zeros((1, Fdp), jnp.float32),
        w2=nrm(nk(), (K, Fdp, Fdp)), b2=nrm(nk(), (1, Fdp), 0.01),
        g2=jnp.ones((1, Fdp), jnp.float32), be2=jnp.zeros((1, Fdp), jnp.float32),
        wp=nrm(nk(), (Fdp, 1)), bp=nrm(nk(), (1, 1), 0.01),
    )
    return P


if __name__ == "__main__":
    B, T = 2, 16
    E, H, O = 16, 32, 8          # embedding_dim, hidden_dim, outputs_dim
    F, Fdp = 64, 64              # filter_channels, filter_channels_dp
    n_heads, n_layers, K = 2, 2, 3

    key = jax.random.PRNGKey(0)
    k_x, k_p = jax.random.split(key)

    # inputs: x [B, T, embedding_dim]; PyTorch x_mask is [B, 1, T], derived here from lengths
    x_in = jax.random.normal(k_x, (B, T, E), jnp.float32)
    lengths = jnp.array([16, 12], jnp.int32)
    # ling_feat_emb / lang_emb / speaker_emb unused in this config (projections are None)

    params = init_params(k_p, E, H, O, F, Fdp, n_layers, K)
    packed, meta = pack_params(params, n_heads)

    outs = text_encoder_forward(packed, x_in, lengths,
                                n_layers=n_layers, n_heads=n_heads, K=K, meta=meta)
    outs = jax.block_until_ready(outs)
    x_enc, x_m, x_logs, logw = outs

    with jax.default_matmul_precision("float32"):
        refs = ref_text_encoder(params, x_in, lengths, n_heads=n_heads, K=K)
        refs = jax.block_until_ready(refs)

    names = ["x", "x_m", "x_logs", "logw"]
    for name, got, want in zip(names, outs, refs):
        assert got.shape == want.shape, (name, got.shape, want.shape)
        err = float(jnp.max(jnp.abs(got - want)))
        # bf16 MXU operands in the kernel (and matching casts in the reference) -> loosened tol
        assert jnp.allclose(got, want, rtol=1e-2, atol=1e-2), (name, err)

    assert x_enc.shape == (B, H, T)
    assert x_m.shape == (B, O, T)
    assert x_logs.shape == (B, O, T)
    assert logw.shape == (B, 1, T)
    print("KERNEL_OK")
</pallas_src>

<mosaic_0001>
module attributes {stable_mosaic.version = 11 : i64} {
  func.func @fused_text_encoder_kernel(%arg0: i32, %arg1: i32, %arg2: memref<2xi32, #tpu.memory_space<smem>>, %arg3: memref<1x128x16xf32, #tpu.memory_space<vmem>>, %arg4: memref<1x32x768xbf16, #tpu.memory_space<vmem>>, %arg5: memref<1x1x768xf32, #tpu.memory_space<vmem>>, %arg6: memref<1x256x32xbf16, #tpu.memory_space<vmem>>, %arg7: memref<1x1x32xf32, #tpu.memory_space<vmem>>, %arg8: memref<1x1x32xf32, #tpu.memory_space<vmem>>, %arg9: memref<1x1x32xf32, #tpu.memory_space<vmem>>, %arg10: memref<1x3x32x64xbf16, #tpu.memory_space<vmem>>, %arg11: memref<1x1x64xf32, #tpu.memory_space<vmem>>, %arg12: memref<1x3x64x32xbf16, #tpu.memory_space<vmem>>, %arg13: memref<1x1x32xf32, #tpu.memory_space<vmem>>, %arg14: memref<1x1x32xf32, #tpu.memory_space<vmem>>, %arg15: memref<1x1x32xf32, #tpu.memory_space<vmem>>, %arg16: memref<16x32xf32, #tpu.memory_space<vmem>>, %arg17: memref<1x32xf32, #tpu.memory_space<vmem>>, %arg18: memref<32x128xf32, #tpu.memory_space<vmem>>, %arg19: memref<1x128xf32, #tpu.memory_space<vmem>>, %arg20: memref<3x32x64xbf16, #tpu.memory_space<vmem>>, %arg21: memref<1x64xf32, #tpu.memory_space<vmem>>, %arg22: memref<1x64xf32, #tpu.memory_space<vmem>>, %arg23: memref<1x64xf32, #tpu.memory_space<vmem>>, %arg24: memref<3x64x64xbf16, #tpu.memory_space<vmem>>, %arg25: memref<1x64xf32, #tpu.memory_space<vmem>>, %arg26: memref<1x64xf32, #tpu.memory_space<vmem>>, %arg27: memref<1x64xf32, #tpu.memory_space<vmem>>, %arg28: memref<64x128xf32, #tpu.memory_space<vmem>>, %arg29: memref<1x128xf32, #tpu.memory_space<vmem>>, %arg30: memref<1x128x128xf32, #tpu.memory_space<vmem>>, %arg31: memref<128x32xf32, #tpu.memory_space<vmem>>) attributes {dimension_semantics = [#tpu.dimension_semantics<parallel>, #tpu.dimension_semantics<arbitrary>], iteration_bounds = array<i64: 2, 2>, scalar_prefetch = 1 : i64, scratch_operands = 1 : i64, tpu.core_type = #tpu.core_type<tc>, window_params = [{transform_indices = @transform_0, window_bounds = array<i64: 1, 128, 16>}, {transform_indices = @transform_1, window_bounds = array<i64: 1, 32, 768>}, {transform_indices = @transform_2, window_bounds = array<i64: 1, 1, 768>}, {transform_indices = @transform_3, window_bounds = array<i64: 1, 256, 32>}, {transform_indices = @transform_4, window_bounds = array<i64: 1, 1, 32>}, {transform_indices = @transform_5, window_bounds = array<i64: 1, 1, 32>}, {transform_indices = @transform_6, window_bounds = array<i64: 1, 1, 32>}, {transform_indices = @transform_7, window_bounds = array<i64: 1, 3, 32, 64>}, {transform_indices = @transform_8, window_bounds = array<i64: 1, 1, 64>}, {transform_indices = @transform_9, window_bounds = array<i64: 1, 3, 64, 32>}, {transform_indices = @transform_10, window_bounds = array<i64: 1, 1, 32>}, {transform_indices = @transform_11, window_bounds = array<i64: 1, 1, 32>}, {transform_indices = @transform_12, window_bounds = array<i64: 1, 1, 32>}, {pipeline_mode = #tpu.pipeline_mode<synchronous>, transform_indices = @transform_13, window_bounds = array<i64: 16, 32>}, {pipeline_mode = #tpu.pipeline_mode<synchronous>, transform_indices = @transform_14, window_bounds = array<i64: 1, 32>}, {pipeline_mode = #tpu.pipeline_mode<synchronous>, transform_indices = @transform_15, window_bounds = array<i64: 32, 128>}, {pipeline_mode = #tpu.pipeline_mode<synchronous>, transform_indices = @transform_16, window_bounds = array<i64: 1, 128>}, {pipeline_mode = #tpu.pipeline_mode<synchronous>, transform_indices = @transform_17, window_bounds = array<i64: 3, 32, 64>}, {pipeline_mode = #tpu.pipeline_mode<synchronous>, transform_indices = @transform_18, window_bounds = array<i64: 1, 64>}, {pipeline_mode = #tpu.pipeline_mode<synchronous>, transform_indices = @transform_19, window_bounds = array<i64: 1, 64>}, {pipeline_mode = #tpu.pipeline_mode<synchronous>, transform_indices = @transform_20, window_bounds = array<i64: 1, 64>}, {pipeline_mode = #tpu.pipeline_mode<synchronous>, transform_indices = @transform_21, window_bounds = array<i64: 3, 64, 64>}, {pipeline_mode = #tpu.pipeline_mode<synchronous>, transform_indices = @transform_22, window_bounds = array<i64: 1, 64>}, {pipeline_mode = #tpu.pipeline_mode<synchronous>, transform_indices = @transform_23, window_bounds = array<i64: 1, 64>}, {pipeline_mode = #tpu.pipeline_mode<synchronous>, transform_indices = @transform_24, window_bounds = array<i64: 1, 64>}, {pipeline_mode = #tpu.pipeline_mode<synchronous>, transform_indices = @transform_25, window_bounds = array<i64: 64, 128>}, {pipeline_mode = #tpu.pipeline_mode<synchronous>, transform_indices = @transform_26, window_bounds = array<i64: 1, 128>}, {transform_indices = @transform_27, window_bounds = array<i64: 1, 128, 128>}]} {
    %0 = arith.index_cast %arg0 : i32 to index
    %1 = memref.load %arg2[%0] : memref<2xi32, #tpu.memory_space<smem>>
    %2 = tpu.iota {dimensions = array<i32: 0>} : vector<128x1xi32>
    %3 = tpu.iota {dimensions = array<i32: 1>} : vector<1x128xi32>
    %4 = vector.broadcast %1 : i32 to vector<128x1xi32>
    %5 = arith.cmpi slt, %2, %4 : vector<128x1xi32>
    %6 = arith.extui %5 : vector<128x1xi1> to vector<128x1xi32>
    %7 = arith.sitofp %6 : vector<128x1xi32> to vector<128x1xf32>
    %8 = vector.broadcast %1 : i32 to vector<1x128xi32>
    %9 = arith.cmpi slt, %3, %8 : vector<1x128xi32>
    %cst = arith.constant 0.000000e+00 : f32
    %cst_0 = arith.constant -1.000000e+04 : f32
    %10 = vector.broadcast %cst : f32 to vector<1x128xf32>
    %11 = vector.broadcast %cst_0 : f32 to vector<1x128xf32>
    %12 = arith.select %9, %10, %11 : vector<1x128xi1>, vector<1x128xf32>
    %c0_i32 = arith.constant 0 : i32
    %13 = arith.cmpi eq, %arg1, %c0_i32 : i32
    %14 = arith.extui %13 : i1 to i32
    %c0_i32_1 = arith.constant 0 : i32
    %15 = arith.cmpi ne, %14, %c0_i32_1 : i32
    scf.if %15 {
      %c0_91 = arith.constant 0 : index
      %c0_92 = arith.constant 0 : index
      %c0_93 = arith.constant 0 : index
      %190 = vector.load %arg3[%c0_91, %c0_92, %c0_93] : memref<1x128x16xf32, #tpu.memory_space<vmem>>, vector<1x128x16xf32>
      %191 = vector.shape_cast %190 : vector<1x128x16xf32> to vector<128x16xf32>
      %c0_94 = arith.constant 0 : index
      %c0_95 = arith.constant 0 : index
      %192 = vector.load %arg16[%c0_94, %c0_95] : memref<16x32xf32, #tpu.memory_space<vmem>>, vector<16x32xf32>
      %cst_96 = arith.constant dense<0.000000e+00> : vector<128x32xf32>
      %193 = tpu.matmul %191, %192, %cst_96 {dimension_numbers = #tpu.dot_dimension_numbers<[1], [0], [0], [1], [0, 0, 1, 1], [], []>} : vector<128x16xf32>, vector<16x32xf32>, vector<128x32xf32> -> vector<128x32xf32>
      %c0_97 = arith.constant 0 : index
      %c0_98 = arith.constant 0 : index
      %194 = vector.load %arg17[%c0_97, %c0_98] : memref<1x32xf32, #tpu.memory_space<vmem>>, vector<1x32xf32>
      %195 = vector.broadcast %194 : vector<1x32xf32> to vector<128x32xf32>
      %196 = arith.addf %193, %195 : vector<128x32xf32>
      %c0_99 = arith.constant 0 : index
      %c0_100 = arith.constant 0 : index
      %197 = vector.load %arg31[%c0_99, %c0_100] : memref<128x32xf32, #tpu.memory_space<vmem>>, vector<128x32xf32>
      tpu.vector_store %arg31[%c0_99, %c0_100], %196 {strides = array<i32>} : memref<128x32xf32, #tpu.memory_space<vmem>>, vector<128x32xf32>,
    } else {
    }
    %c0 = arith.constant 0 : index
    %c0_2 = arith.constant 0 : index
    %16 = vector.load %arg31[%c0, %c0_2] : memref<128x32xf32, #tpu.memory_space<vmem>>, vector<128x32xf32>
    %17 = arith.truncf %16 : vector<128x32xf32> to vector<128x32xbf16>
    %c0_3 = arith.constant 0 : index
    %c0_4 = arith.constant 0 : index
    %c0_5 = arith.constant 0 : index
    %18 = vector.load %arg4[%c0_3, %c0_4, %c0_5] : memref<1x32x768xbf16, #tpu.memory_space<vmem>>, vector<1x32x768xbf16>
    %19 = vector.shape_cast %18 : vector<1x32x768xbf16> to vector<32x768xbf16>
    %cst_6 = arith.constant dense<0.000000e+00> : vector<128x768xf32>
    %20 = tpu.matmul %17, %19, %cst_6 {dimension_numbers = #tpu.dot_dimension_numbers<[1], [0], [0], [1], [0, 0, 1, 1], [], []>} : vector<128x32xbf16>, vector<32x768xbf16>, vector<128x768xf32> -> vector<128x768xf32>
    %c0_7 = arith.constant 0 : index
    %c0_8 = arith.constant 0 : index
    %c0_9 = arith.constant 0 : index
    %21 = vector.load %arg5[%c0_7, %c0_8, %c0_9] : memref<1x1x768xf32, #tpu.memory_space<vmem>>, vector<1x1x768xf32>
    %22 = vector.shape_cast %21 : vector<1x1x768xf32> to vector<1x768xf32>
    %23 = vector.broadcast %22 : vector<1x768xf32> to vector<128x768xf32>
    %24 = arith.addf %20, %23 : vector<128x768xf32>
    %25 = vector.extract_strided_slice %24 {offsets = [0, 0], sizes = [128, 128], strides = [1, 1]} : vector<128x768xf32> to vector<128x128xf32>
    %cst_10 = arith.constant 2.500000e-01 : f32
    %26 = vector.broadcast %cst_10 : f32 to vector<128x128xf32>
    %27 = arith.mulf %25, %26 : vector<128x128xf32>
    %28 = vector.extract_strided_slice %24 {offsets = [0, 128], sizes = [128, 128], strides = [1, 1]} : vector<128x768xf32> to vector<128x128xf32>
    %29 = vector.extract_strided_slice %24 {offsets = [0, 256], sizes = [128, 128], strides = [1, 1]} : vector<128x768xf32> to vector<128x128xf32>
    %30 = arith.truncf %27 : vector<128x128xf32> to vector<128x128xbf16>
    %31 = arith.truncf %28 : vector<128x128xf32> to vector<128x128xbf16>
    %cst_11 = arith.constant dense<0.000000e+00> : vector<128x128xf32>
    %32 = tpu.matmul %30, %31, %cst_11 {dimension_numbers = #tpu.dot_dimension_numbers<[1], [1], [0], [0], [0, 0, 1, 0], [], []>} : vector<128x128xbf16>, vector<128x128xbf16>, vector<128x128xf32> -> vector<128x128xf32>
    %33 = vector.broadcast %12 : vector<1x128xf32> to vector<128x128xf32>
    %34 = arith.addf %32, %33 : vector<128x128xf32>
    %cst_12 = arith.constant dense<0xFF800000> : vector<128xf32>
    %35 = vector.multi_reduction <maximumf>, %34, %cst_12 [1] : vector<128x128xf32> to vector<128xf32>
    %36 = vector.shape_cast %35 : vector<128xf32> to vector<128x1xf32>
    %37 = vector.broadcast %36 : vector<128x1xf32> to vector<128x128xf32>
    %38 = arith.subf %34, %37 : vector<128x128xf32>
    %39 = math.exp %38 : vector<128x128xf32>
    %cst_13 = arith.constant dense<0.000000e+00> : vector<128xf32>
    %40 = vector.multi_reduction <add>, %39, %cst_13 [1] : vector<128x128xf32> to vector<128xf32>
    %41 = vector.shape_cast %40 : vector<128xf32> to vector<128x1xf32>
    %42 = tpu.reciprocal %41 {approx = true} : vector<128x1xf32> -> vector<128x1xf32>
    %43 = vector.broadcast %42 : vector<128x1xf32> to vector<128x128xf32>
    %44 = arith.mulf %39, %43 : vector<128x128xf32>
    %45 = arith.truncf %44 : vector<128x128xf32> to vector<128x128xbf16>
    %46 = arith.truncf %29 : vector<128x128xf32> to vector<128x128xbf16>
    %cst_14 = arith.constant dense<0.000000e+00> : vector<128x128xf32>
    %47 = tpu.matmul %45, %46, %cst_14 {dimension_numbers = #tpu.dot_dimension_numbers<[1], [0], [0], [1], [0, 0, 1, 1], [], []>} : vector<128x128xbf16>, vector<128x128xbf16>, vector<128x128xf32> -> vector<128x128xf32>
    %48 = vector.extract_strided_slice %24 {offsets = [0, 384], sizes = [128, 128], strides = [1, 1]} : vector<128x768xf32> to vector<128x128xf32>
    %cst_15 = arith.constant 2.500000e-01 : f32
    %49 = vector.broadcast %cst_15 : f32 to vector<128x128xf32>
    %50 = arith.mulf %48, %49 : vector<128x128xf32>
    %51 = vector.extract_strided_slice %24 {offsets = [0, 512], sizes = [128, 128], strides = [1, 1]} : vector<128x768xf32> to vector<128x128xf32>
    %52 = vector.extract_strided_slice %24 {offsets = [0, 640], sizes = [128, 128], strides = [1, 1]} : vector<128x768xf32> to vector<128x128xf32>
    %53 = arith.truncf %50 : vector<128x128xf32> to vector<128x128xbf16>
    %54 = arith.truncf %51 : vector<128x128xf32> to vector<128x128xbf16>
    %cst_16 = arith.constant dense<0.000000e+00> : vector<128x128xf32>
    %55 = tpu.matmul %53, %54, %cst_16 {dimension_numbers = #tpu.dot_dimension_numbers<[1], [1], [0], [0], [0, 0, 1, 0], [], []>} : vector<128x128xbf16>, vector<128x128xbf16>, vector<128x128xf32> -> vector<128x128xf32>
    %56 = vector.broadcast %12 : vector<1x128xf32> to vector<128x128xf32>
    %57 = arith.addf %55, %56 : vector<128x128xf32>
    %cst_17 = arith.constant dense<0xFF800000> : vector<128xf32>
    %58 = vector.multi_reduction <maximumf>, %57, %cst_17 [1] : vector<128x128xf32> to vector<128xf32>
    %59 = vector.shape_cast %58 : vector<128xf32> to vector<128x1xf32>
    %60 = vector.broadcast %59 : vector<128x1xf32> to vector<128x128xf32>
    %61 = arith.subf %57, %60 : vector<128x128xf32>
    %62 = math.exp %61 : vector<128x128xf32>
    %cst_18 = arith.constant dense<0.000000e+00> : vector<128xf32>
    %63 = vector.multi_reduction <add>, %62, %cst_18 [1] : vector<128x128xf32> to vector<128xf32>
    %64 = vector.shape_cast %63 : vector<128xf32> to vector<128x1xf32>
    %65 = tpu.reciprocal %64 {approx = true} : vector<128x1xf32> -> vector<128x1xf32>
    %66 = vector.broadcast %65 : vector<128x1xf32> to vector<128x128xf32>
    %67 = arith.mulf %62, %66 : vector<128x128xf32>
    %68 = arith.truncf %67 : vector<128x128xf32> to vector<128x128xbf16>
    %69 = arith.truncf %52 : vector<128x128xf32> to vector<128x128xbf16>
    %cst_19 = arith.constant dense<0.000000e+00> : vector<128x128xf32>
    %70 = tpu.matmul %68, %69, %cst_19 {dimension_numbers = #tpu.dot_dimension_numbers<[1], [0], [0], [1], [0, 0, 1, 1], [], []>} : vector<128x128xbf16>, vector<128x128xbf16>, vector<128x128xf32> -> vector<128x128xf32>
    %71 = tpu.concatenate %47, %70 in 1 : vector<128x128xf32>, vector<128x128xf32> -> vector<128x256xf32>
    %72 = arith.truncf %71 : vector<128x256xf32> to vector<128x256xbf16>
    %c0_20 = arith.constant 0 : index
    %c0_21 = arith.constant 0 : index
    %c0_22 = arith.constant 0 : index
    %73 = vector.load %arg6[%c0_20, %c0_21, %c0_22] : memref<1x256x32xbf16, #tpu.memory_space<vmem>>, vector<1x256x32xbf16>
    %74 = vector.shape_cast %73 : vector<1x256x32xbf16> to vector<256x32xbf16>
    %cst_23 = arith.constant dense<0.000000e+00> : vector<128x32xf32>
    %75 = tpu.matmul %72, %74, %cst_23 {dimension_numbers = #tpu.dot_dimension_numbers<[1], [0], [0], [1], [0, 0, 1, 1], [], []>} : vector<128x256xbf16>, vector<256x32xbf16>, vector<128x32xf32> -> vector<128x32xf32>
    %c0_24 = arith.constant 0 : index
    %c0_25 = arith.constant 0 : index
    %c0_26 = arith.constant 0 : index
    %76 = vector.load %arg7[%c0_24, %c0_25, %c0_26] : memref<1x1x32xf32, #tpu.memory_space<vmem>>, vector<1x1x32xf32>
    %77 = vector.shape_cast %76 : vector<1x1x32xf32> to vector<1x32xf32>
    %78 = vector.broadcast %77 : vector<1x32xf32> to vector<128x32xf32>
    %79 = arith.addf %75, %78 : vector<128x32xf32>
    %80 = arith.addf %16, %79 : vector<128x32xf32>
    %c0_27 = arith.constant 0 : index
    %c0_28 = arith.constant 0 : index
    %c0_29 = arith.constant 0 : index
    %81 = vector.load %arg8[%c0_27, %c0_28, %c0_29] : memref<1x1x32xf32, #tpu.memory_space<vmem>>, vector<1x1x32xf32>
    %82 = vector.shape_cast %81 : vector<1x1x32xf32> to vector<1x32xf32>
    %c0_30 = arith.constant 0 : index
    %c0_31 = arith.constant 0 : index
    %c0_32 = arith.constant 0 : index
    %83 = vector.load %arg9[%c0_30, %c0_31, %c0_32] : memref<1x1x32xf32, #tpu.memory_space<vmem>>, vector<1x1x32xf32>
    %84 = vector.shape_cast %83 : vector<1x1x32xf32> to vector<1x32xf32>
    %cst_33 = arith.constant dense<0.000000e+00> : vector<128xf32>
    %85 = vector.multi_reduction <add>, %80, %cst_33 [1] : vector<128x32xf32> to vector<128xf32>
    %86 = vector.shape_cast %85 : vector<128xf32> to vector<128x1xf32>
    %cst_34 = arith.constant 3.200000e+01 : f32
    %87 = vector.broadcast %cst_34 : f32 to vector<128x1xf32>
    %88 = arith.divf %86, %87 : vector<128x1xf32>
    %89 = vector.broadcast %88 : vector<128x1xf32> to vector<128x32xf32>
    %90 = arith.subf %80, %89 : vector<128x32xf32>
    %91 = arith.mulf %90, %90 : vector<128x32xf32>
    %cst_35 = arith.constant dense<0.000000e+00> : vector<128xf32>
    %92 = vector.multi_reduction <add>, %91, %cst_35 [1] : vector<128x32xf32> to vector<128xf32>
    %93 = vector.shape_cast %92 : vector<128xf32> to vector<128x1xf32>
    %cst_36 = arith.constant 3.200000e+01 : f32
    %94 = vector.broadcast %cst_36 : f32 to vector<128x1xf32>
    %95 = arith.divf %93, %94 : vector<128x1xf32>
    %96 = vector.broadcast %88 : vector<128x1xf32> to vector<128x32xf32>
    %97 = arith.subf %80, %96 : vector<128x32xf32>
    %cst_37 = arith.constant 9.99999974E-5 : f32
    %98 = vector.broadcast %cst_37 : f32 to vector<128x1xf32>
    %99 = arith.addf %95, %98 : vector<128x1xf32>
    %100 = math.rsqrt %99 : vector<128x1xf32>
    %101 = vector.broadcast %100 : vector<128x1xf32> to vector<128x32xf32>
    %102 = arith.mulf %97, %101 : vector<128x32xf32>
    %103 = vector.broadcast %82 : vector<1x32xf32> to vector<128x32xf32>
    %104 = arith.mulf %102, %103 : vector<128x32xf32>
    %105 = vector.broadcast %84 : vector<1x32xf32> to vector<128x32xf32>
    %106 = arith.addf %104, %105 : vector<128x32xf32>
    %107 = vector.broadcast %7 : vector<128x1xf32> to vector<128x32xf32>
    %108 = arith.mulf %106, %107 : vector<128x32xf32>
    %c0_38 = arith.constant 0 : index
    %c0_39 = arith.constant 0 : index
    %c0_40 = arith.constant 0 : index
    %109 = vector.load %arg11[%c0_38, %c0_39, %c0_40] : memref<1x1x64xf32, #tpu.memory_space<vmem>>, vector<1x1x64xf32>
    %110 = vector.shape_cast %109 : vector<1x1x64xf32> to vector<1x64xf32>
    %c0_41 = arith.constant 0 : index
    %c0_42 = arith.constant 0 : index
    %c0_43 = arith.constant 0 : index
    %c0_44 = arith.constant 0 : index
    %111 = vector.load %arg10[%c0_41, %c0_42, %c0_43, %c0_44] : memref<1x3x32x64xbf16, #tpu.memory_space<vmem>>, vector<1x1x32x64xbf16>
    %112 = vector.shape_cast %111 : vector<1x1x32x64xbf16> to vector<32x64xbf16>
    %c0_45 = arith.constant 0 : index
    %c1 = arith.constant 1 : index
    %c0_46 = arith.constant 0 : index
    %c0_47 = arith.constant 0 : index
    %113 = vector.load %arg10[%c0_45, %c1, %c0_46, %c0_47] : memref<1x3x32x64xbf16, #tpu.memory_space<vmem>>, vector<1x1x32x64xbf16>
    %114 = vector.shape_cast %113 : vector<1x1x32x64xbf16> to vector<32x64xbf16>
    %c0_48 = arith.constant 0 : index
    %c2 = arith.constant 2 : index
    %c0_49 = arith.constant 0 : index
    %c0_50 = arith.constant 0 : index
    %115 = vector.load %arg10[%c0_48, %c2, %c0_49, %c0_50] : memref<1x3x32x64xbf16, #tpu.memory_space<vmem>>, vector<1x1x32x64xbf16>
    %116 = vector.shape_cast %115 : vector<1x1x32x64xbf16> to vector<32x64xbf16>
    %117 = arith.truncf %108 : vector<128x32xf32> to vector<128x32xbf16>
    %cst_51 = arith.constant 0.000000e+00 : bf16
    %118 = vector.broadcast %cst_51 : bf16 to vector<1x32xbf16>
    %119 = vector.extract_strided_slice %117 {offsets = [0, 0], sizes = [127, 32], strides = [1, 1]} : vector<128x32xbf16> to vector<127x32xbf16>
    %120 = tpu.concatenate %118, %119 in 0 : vector<1x32xbf16>, vector<127x32xbf16> -> vector<128x32xbf16>
    %cst_52 = arith.constant dense<0.000000e+00> : vector<128x64xf32>
    %121 = tpu.matmul %120, %112, %cst_52 {dimension_numbers = #tpu.dot_dimension_numbers<[1], [0], [0], [1], [0, 0, 1, 1], [], []>} : vector<128x32xbf16>, vector<32x64xbf16>, vector<128x64xf32> -> vector<128x64xf32>
    %cst_53 = arith.constant dense<0.000000e+00> : vector<128x64xf32>
    %122 = tpu.matmul %117, %114, %cst_53 {dimension_numbers = #tpu.dot_dimension_numbers<[1], [0], [0], [1], [0, 0, 1, 1], [], []>} : vector<128x32xbf16>, vector<32x64xbf16>, vector<128x64xf32> -> vector<128x64xf32>
    %123 = arith.addf %121, %122 : vector<128x64xf32>
    %cst_54 = arith.constant 0.000000e+00 : bf16
    %124 = vector.broadcast %cst_54 : bf16 to vector<1x32xbf16>
    %125 = vector.extract_strided_slice %117 {offsets = [1, 0], sizes = [127, 32], strides = [1, 1]} : vector<128x32xbf16> to vector<127x32xbf16>
    %126 = tpu.concatenate %125, %124 in 0 : vector<127x32xbf16>, vector<1x32xbf16> -> vector<128x32xbf16>
    %cst_55 = arith.constant dense<0.000000e+00> : vector<128x64xf32>
    %127 = tpu.matmul %126, %116, %cst_55 {dimension_numbers = #tpu.dot_dimension_numbers<[1], [0], [0], [1], [0, 0, 1, 1], [], []>} : vector<128x32xbf16>, vector<32x64xbf16>, vector<128x64xf32> -> vector<128x64xf32>
    %128 = arith.addf %123, %127 : vector<128x64xf32>
    %129 = vector.broadcast %110 : vector<1x64xf32> to vector<128x64xf32>
    %130 = arith.addf %128, %129 : vector<128x64xf32>
    %cst_56 = arith.constant 0.000000e+00 : f32
    %131 = vector.broadcast %cst_56 : f32 to vector<128x64xf32>
    %132 = arith.maximumf %130, %131 : vector<128x64xf32>
    %133 = vector.broadcast %7 : vector<128x1xf32> to vector<128x64xf32>
    %134 = arith.mulf %132, %133 : vector<128x64xf32>
    %c0_57 = arith.constant 0 : index
    %c0_58 = arith.constant 0 : index
    %c0_59 = arith.constant 0 : index
    %135 = vector.load %arg13[%c0_57, %c0_58, %c0_59] : memref<1x1x32xf32, #tpu.memory_space<vmem>>, vector<1x1x32xf32>
    %136 = vector.shape_cast %135 : vector<1x1x32xf32> to vector<1x32xf32>
    %c0_60 = arith.constant 0 : index
    %c0_61 = arith.constant 0 : index
    %c0_62 = arith.constant 0 : index
    %c0_63 = arith.constant 0 : index
    %137 = vector.load %arg12[%c0_60, %c0_61, %c0_62, %c0_63] : memref<1x3x64x32xbf16, #tpu.memory_space<vmem>>, vector<1x1x64x32xbf16>
    %138 = vector.shape_cast %137 : vector<1x1x64x32xbf16> to vector<64x32xbf16>
    %c0_64 = arith.constant 0 : index
    %c1_65 = arith.constant 1 : index
    %c0_66 = arith.constant 0 : index
    %c0_67 = arith.constant 0 : index
    %139 = vector.load %arg12[%c0_64, %c1_65, %c0_66, %c0_67] : memref<1x3x64x32xbf16, #tpu.memory_space<vmem>>, vector<1x1x64x32xbf16>
    %140 = vector.shape_cast %139 : vector<1x1x64x32xbf16> to vector<64x32xbf16>
    %c0_68 = arith.constant 0 : index
    %c2_69 = arith.constant 2 : index
    %c0_70 = arith.constant 0 : index
    %c0_71 = arith.constant 0 : index
    %141 = vector.load %arg12[%c0_68, %c2_69, %c0_70, %c0_71] : memref<1x3x64x32xbf16, #tpu.memory_space<vmem>>, vector<1x1x64x32xbf16>
    %142 = vector.shape_cast %141 : vector<1x1x64x32xbf16> to vector<64x32xbf16>
    %143 = arith.truncf %134 : vector<128x64xf32> to vector<128x64xbf16>
    %cst_72 = arith.constant 0.000000e+00 : bf16
    %144 = vector.broadcast %cst_72 : bf16 to vector<1x64xbf16>
    %145 = vector.extract_strided_slice %143 {offsets = [0, 0], sizes = [127, 64], strides = [1, 1]} : vector<128x64xbf16> to vector<127x64xbf16>
    %146 = tpu.concatenate %144, %145 in 0 : vector<1x64xbf16>, vector<127x64xbf16> -> vector<128x64xbf16>
    %cst_73 = arith.constant dense<0.000000e+00> : vector<128x32xf32>
    %147 = tpu.matmul %146, %138, %cst_73 {dimension_numbers = #tpu.dot_dimension_numbers<[1], [0], [0], [1], [0, 0, 1, 1], [], []>} : vector<128x64xbf16>, vector<64x32xbf16>, vector<128x32xf32> -> vector<128x32xf32>
    %cst_74 = arith.constant dense<0.000000e+00> : vector<128x32xf32>
    %148 = tpu.matmul %143, %140, %cst_74 {dimension_numbers = #tpu.dot_dimension_numbers<[1], [0], [0], [1], [0, 0, 1, 1], [], []>} : vector<128x64xbf16>, vector<64x32xbf16>, vector<128x32xf32> -> vector<128x32xf32>
    %149 = arith.addf %147, %148 : vector<128x32xf32>
    %cst_75 = arith.constant 0.000000e+00 : bf16
    %150 = vector.broadcast %cst_75 : bf16 to vector<1x64xbf16>
    %151 = vector.extract_strided_slice %143 {offsets = [1, 0], sizes = [127, 64], strides = [1, 1]} : vector<128x64xbf16> to vector<127x64xbf16>
    %152 = tpu.concatenate %151, %150 in 0 : vector<127x64xbf16>, vector<1x64xbf16> -> vector<128x64xbf16>
    %cst_76 = arith.constant dense<0.000000e+00> : vector<128x32xf32>
    %153 = tpu.matmul %152, %142, %cst_76 {dimension_numbers = #tpu.dot_dimension_numbers<[1], [0], [0], [1], [0, 0, 1, 1], [], []>} : vector<128x64xbf16>, vector<64x32xbf16>, vector<128x32xf32> -> vector<128x32xf32>
    %154 = arith.addf %149, %153 : vector<128x32xf32>
    %155 = vector.broadcast %136 : vector<1x32xf32> to vector<128x32xf32>
    %156 = arith.addf %154, %155 : vector<128x32xf32>
    %157 = vector.broadcast %7 : vector<128x1xf32> to vector<128x32xf32>
    %158 = arith.mulf %156, %157 : vector<128x32xf32>
    %159 = arith.addf %106, %158 : vector<128x32xf32>
    %c0_77 = arith.constant 0 : index
    %c0_78 = arith.constant 0 : index
    %c0_79 = arith.constant 0 : index
    %160 = vector.load %arg14[%c0_77, %c0_78, %c0_79] : memref<1x1x32xf32, #tpu.memory_space<vmem>>, vector<1x1x32xf32>
    %161 = vector.shape_cast %160 : vector<1x1x32xf32> to vector<1x32xf32>
    %c0_80 = arith.constant 0 : index
    %c0_81 = arith.constant 0 : index
    %c0_82 = arith.constant 0 : index
    %162 = vector.load %arg15[%c0_80, %c0_81, %c0_82] : memref<1x1x32xf32, #tpu.memory_space<vmem>>, vector<1x1x32xf32>
    %163 = vector.shape_cast %162 : vector<1x1x32xf32> to vector<1x32xf32>
    %cst_83 = arith.constant dense<0.000000e+00> : vector<128xf32>
    %164 = vector.multi_reduction <add>, %159, %cst_83 [1] : vector<128x32xf32> to vector<128xf32>
    %165 = vector.shape_cast %164 : vector<128xf32> to vector<128x1xf32>
    %cst_84 = arith.constant 3.200000e+01 : f32
    %166 = vector.broadcast %cst_84 : f32 to vector<128x1xf32>
    %167 = arith.divf %165, %166 : vector<128x1xf32>
    %168 = vector.broadcast %167 : vector<128x1xf32> to vector<128x32xf32>
    %169 = arith.subf %159, %168 : vector<128x32xf32>
    %170 = arith.mulf %169, %169 : vector<128x32xf32>
    %cst_85 = arith.constant dense<0.000000e+00> : vector<128xf32>
    %171 = vector.multi_reduction <add>, %170, %cst_85 [1] : vector<128x32xf32> to vector<128xf32>
    %172 = vector.shape_cast %171 : vector<128xf32> to vector<128x1xf32>
    %cst_86 = arith.constant 3.200000e+01 : f32
    %173 = vector.broadcast %cst_86 : f32 to vector<128x1xf32>
    %174 = arith.divf %172, %173 : vector<128x1xf32>
    %175 = vector.broadcast %167 : vector<128x1xf32> to vector<128x32xf32>
    %176 = arith.subf %159, %175 : vector<128x32xf32>
    %cst_87 = arith.constant 9.99999974E-5 : f32
    %177 = vector.broadcast %cst_87 : f32 to vector<128x1xf32>
    %178 = arith.addf %174, %177 : vector<128x1xf32>
    %179 = math.rsqrt %178 : vector<128x1xf32>
    %180 = vector.broadcast %179 : vector<128x1xf32> to vector<128x32xf32>
    %181 = arith.mulf %176, %180 : vector<128x32xf32>
    %182 = vector.broadcast %161 : vector<1x32xf32> to vector<128x32xf32>
    %183 = arith.mulf %181, %182 : vector<128x32xf32>
    %184 = vector.broadcast %163 : vector<1x32xf32> to vector<128x32xf32>
    %185 = arith.addf %183, %184 : vector<128x32xf32>
    %c0_88 = arith.constant 0 : index
    %c0_89 = arith.constant 0 : index
    %186 = vector.load %arg31[%c0_88, %c0_89] : memref<128x32xf32, #tpu.memory_space<vmem>>, vector<128x32xf32>
    tpu.vector_store %arg31[%c0_88, %c0_89], %185 {strides = array<i32>} : memref<128x32xf32, #tpu.memory_space<vmem>>, vector<128x32xf32>,
    %c1_i32 = arith.constant 1 : i32
    %187 = arith.cmpi eq, %arg1, %c1_i32 : i32
    %188 = arith.extui %187 : i1 to i32
    %c0_i32_90 = arith.constant 0 : i32
    %189 = arith.cmpi ne, %188, %c0_i32_90 : i32
    scf.if %189 {
      %190 = vector.broadcast %7 : vector<128x1xf32> to vector<128x32xf32>
      %191 = arith.mulf %185, %190 : vector<128x32xf32>
      %c16_i32 = arith.constant 16 : i32
      %192 = vector.broadcast %c16_i32 : i32 to vector<128x1xi32>
      %193 = arith.cmpi slt, %2, %192 : vector<128x1xi32>
      %194 = arith.extui %193 : vector<128x1xi1> to vector<128x1xi32>
      %195 = arith.sitofp %194 : vector<128x1xi32> to vector<128x1xf32>
      %c0_91 = arith.constant 0 : index
      %c0_92 = arith.constant 0 : index
      %196 = vector.load %arg21[%c0_91, %c0_92] : memref<1x64xf32, #tpu.memory_space<vmem>>, vector<1x64xf32>
      %c0_93 = arith.constant 0 : index
      %c0_94 = arith.constant 0 : index
      %c0_95 = arith.constant 0 : index
      %197 = vector.load %arg20[%c0_93, %c0_94, %c0_95] : memref<3x32x64xbf16, #tpu.memory_space<vmem>>, vector<1x32x64xbf16>
      %198 = vector.shape_cast %197 : vector<1x32x64xbf16> to vector<32x64xbf16>
      %c1_96 = arith.constant 1 : index
      %c0_97 = arith.constant 0 : index
      %c0_98 = arith.constant 0 : index
      %199 = vector.load %arg20[%c1_96, %c0_97, %c0_98] : memref<3x32x64xbf16, #tpu.memory_space<vmem>>, vector<1x32x64xbf16>
      %200 = vector.shape_cast %199 : vector<1x32x64xbf16> to vector<32x64xbf16>
      %c2_99 = arith.constant 2 : index
      %c0_100 = arith.constant 0 : index
      %c0_101 = arith.constant 0 : index
      %201 = vector.load %arg20[%c2_99, %c0_100, %c0_101] : memref<3x32x64xbf16, #tpu.memory_space<vmem>>, vector<1x32x64xbf16>
      %202 = vector.shape_cast %201 : vector<1x32x64xbf16> to vector<32x64xbf16>
      %203 = arith.truncf %191 : vector<128x32xf32> to vector<128x32xbf16>
      %cst_102 = arith.constant 0.000000e+00 : bf16
      %204 = vector.broadcast %cst_102 : bf16 to vector<1x32xbf16>
      %205 = vector.extract_strided_slice %203 {offsets = [0, 0], sizes = [127, 32], strides = [1, 1]} : vector<128x32xbf16> to vector<127x32xbf16>
      %206 = tpu.concatenate %204, %205 in 0 : vector<1x32xbf16>, vector<127x32xbf16> -> vector<128x32xbf16>
      %cst_103 = arith.constant dense<0.000000e+00> : vector<128x64xf32>
      %207 = tpu.matmul %206, %198, %cst_103 {dimension_numbers = #tpu.dot_dimension_numbers<[1], [0], [0], [1], [0, 0, 1, 1], [], []>} : vector<128x32xbf16>, vector<32x64xbf16>, vector<128x64xf32> -> vector<128x64xf32>
      %cst_104 = arith.constant dense<0.000000e+00> : vector<128x64xf32>
      %208 = tpu.matmul %203, %200, %cst_104 {dimension_numbers = #tpu.dot_dimension_numbers<[1], [0], [0], [1], [0, 0, 1, 1], [], []>} : vector<128x32xbf16>, vector<32x64xbf16>, vector<128x64xf32> -> vector<128x64xf32>
      %209 = arith.addf %207, %208 : vector<128x64xf32>
      %cst_105 = arith.constant 0.000000e+00 : bf16
      %210 = vector.broadcast %cst_105 : bf16 to vector<1x32xbf16>
      %211 = vector.extract_strided_slice %203 {offsets = [1, 0], sizes = [127, 32], strides = [1, 1]} : vector<128x32xbf16> to vector<127x32xbf16>
      %212 = tpu.concatenate %211, %210 in 0 : vector<127x32xbf16>, vector<1x32xbf16> -> vector<128x32xbf16>
      %cst_106 = arith.constant dense<0.000000e+00> : vector<128x64xf32>
      %213 = tpu.matmul %212, %202, %cst_106 {dimension_numbers = #tpu.dot_dimension_numbers<[1], [0], [0], [1], [0, 0, 1, 1], [], []>} : vector<128x32xbf16>, vector<32x64xbf16>, vector<128x64xf32> -> vector<128x64xf32>
      %214 = arith.addf %209, %213 : vector<128x64xf32>
      %215 = vector.broadcast %196 : vector<1x64xf32> to vector<128x64xf32>
      %216 = arith.addf %214, %215 : vector<128x64xf32>
      %cst_107 = arith.constant 0.000000e+00 : f32
      %217 = vector.broadcast %cst_107 : f32 to vector<128x64xf32>
      %218 = arith.maximumf %216, %217 : vector<128x64xf32>
      %c0_108 = arith.constant 0 : index
      %c0_109 = arith.constant 0 : index
      %219 = vector.load %arg22[%c0_108, %c0_109] : memref<1x64xf32, #tpu.memory_space<vmem>>, vector<1x64xf32>
      %c0_110 = arith.constant 0 : index
      %c0_111 = arith.constant 0 : index
      %220 = vector.load %arg23[%c0_110, %c0_111] : memref<1x64xf32, #tpu.memory_space<vmem>>, vector<1x64xf32>
      %cst_112 = arith.constant dense<0.000000e+00> : vector<128xf32>
      %221 = vector.multi_reduction <add>, %218, %cst_112 [1] : vector<128x64xf32> to vector<128xf32>
      %222 = vector.shape_cast %221 : vector<128xf32> to vector<128x1xf32>
      %cst_113 = arith.constant 6.400000e+01 : f32
      %223 = vector.broadcast %cst_113 : f32 to vector<128x1xf32>
      %224 = arith.divf %222, %223 : vector<128x1xf32>
      %225 = vector.broadcast %224 : vector<128x1xf32> to vector<128x64xf32>
      %226 = arith.subf %218, %225 : vector<128x64xf32>
      %227 = arith.mulf %226, %226 : vector<128x64xf32>
      %cst_114 = arith.constant dense<0.000000e+00> : vector<128xf32>
      %228 = vector.multi_reduction <add>, %227, %cst_114 [1] : vector<128x64xf32> to vector<128xf32>
      %229 = vector.shape_cast %228 : vector<128xf32> to vector<128x1xf32>
      %cst_115 = arith.constant 6.400000e+01 : f32
      %230 = vector.broadcast %cst_115 : f32 to vector<128x1xf32>
      %231 = arith.divf %229, %230 : vector<128x1xf32>
      %232 = vector.broadcast %224 : vector<128x1xf32> to vector<128x64xf32>
      %233 = arith.subf %218, %232 : vector<128x64xf32>
      %cst_116 = arith.constant 9.99999974E-5 : f32
      %234 = vector.broadcast %cst_116 : f32 to vector<128x1xf32>
      %235 = arith.addf %231, %234 : vector<128x1xf32>
      %236 = math.rsqrt %235 : vector<128x1xf32>
      %237 = vector.broadcast %236 : vector<128x1xf32> to vector<128x64xf32>
      %238 = arith.mulf %233, %237 : vector<128x64xf32>
      %239 = vector.broadcast %219 : vector<1x64xf32> to vector<128x64xf32>
      %240 = arith.mulf %238, %239 : vector<128x64xf32>
      %241 = vector.broadcast %220 : vector<1x64xf32> to vector<128x64xf32>
      %242 = arith.addf %240, %241 : vector<128x64xf32>
      %243 = vector.broadcast %195 : vector<128x1xf32> to vector<128x64xf32>
      %244 = arith.mulf %242, %243 : vector<128x64xf32>
      %c0_117 = arith.constant 0 : index
      %c0_118 = arith.constant 0 : index
      %245 = vector.load %arg25[%c0_117, %c0_118] : memref<1x64xf32, #tpu.memory_space<vmem>>, vector<1x64xf32>
      %c0_119 = arith.constant 0 : index
      %c0_120 = arith.constant 0 : index
      %c0_121 = arith.constant 0 : index
      %246 = vector.load %arg24[%c0_119, %c0_120, %c0_121] : memref<3x64x64xbf16, #tpu.memory_space<vmem>>, vector<1x64x64xbf16>
      %247 = vector.shape_cast %246 : vector<1x64x64xbf16> to vector<64x64xbf16>
      %c1_122 = arith.constant 1 : index
      %c0_123 = arith.constant 0 : index
      %c0_124 = arith.constant 0 : index
      %248 = vector.load %arg24[%c1_122, %c0_123, %c0_124] : memref<3x64x64xbf16, #tpu.memory_space<vmem>>, vector<1x64x64xbf16>
      %249 = vector.shape_cast %248 : vector<1x64x64xbf16> to vector<64x64xbf16>
      %c2_125 = arith.constant 2 : index
      %c0_126 = arith.constant 0 : index
      %c0_127 = arith.constant 0 : index
      %250 = vector.load %arg24[%c2_125, %c0_126, %c0_127] : memref<3x64x64xbf16, #tpu.memory_space<vmem>>, vector<1x64x64xbf16>
      %251 = vector.shape_cast %250 : vector<1x64x64xbf16> to vector<64x64xbf16>
      %252 = arith.truncf %244 : vector<128x64xf32> to vector<128x64xbf16>
      %cst_128 = arith.constant 0.000000e+00 : bf16
      %253 = vector.broadcast %cst_128 : bf16 to vector<1x64xbf16>
      %254 = vector.extract_strided_slice %252 {offsets = [0, 0], sizes = [127, 64], strides = [1, 1]} : vector<128x64xbf16> to vector<127x64xbf16>
      %255 = tpu.concatenate %253, %254 in 0 : vector<1x64xbf16>, vector<127x64xbf16> -> vector<128x64xbf16>
      %cst_129 = arith.constant dense<0.000000e+00> : vector<128x64xf32>
      %256 = tpu.matmul %255, %247, %cst_129 {dimension_numbers = #tpu.dot_dimension_numbers<[1], [0], [0], [1], [0, 0, 1, 1], [], []>} : vector<128x64xbf16>, vector<64x64xbf16>, vector<128x64xf32> -> vector<128x64xf32>
      %cst_130 = arith.constant dense<0.000000e+00> : vector<128x64xf32>
      %257 = tpu.matmul %252, %249, %cst_130 {dimension_numbers = #tpu.dot_dimension_numbers<[1], [0], [0], [1], [0, 0, 1, 1], [], []>} : vector<128x64xbf16>, vector<64x64xbf16>, vector<128x64xf32> -> vector<128x64xf32>
      %258 = arith.addf %256, %257 : vector<128x64xf32>
      %cst_131 = arith.constant 0.000000e+00 : bf16
      %259 = vector.broadcast %cst_131 : bf16 to vector<1x64xbf16>
      %260 = vector.extract_strided_slice %252 {offsets = [1, 0], sizes = [127, 64], strides = [1, 1]} : vector<128x64xbf16> to vector<127x64xbf16>
      %261 = tpu.concatenate %260, %259 in 0 : vector<127x64xbf16>, vector<1x64xbf16> -> vector<128x64xbf16>
      %cst_132 = arith.constant dense<0.000000e+00> : vector<128x64xf32>
      %262 = tpu.matmul %261, %251, %cst_132 {dimension_numbers = #tpu.dot_dimension_numbers<[1], [0], [0], [1], [0, 0, 1, 1], [], []>} : vector<128x64xbf16>, vector<64x64xbf16>, vector<128x64xf32> -> vector<128x64xf32>
      %263 = arith.addf %258, %262 : vector<128x64xf32>
      %264 = vector.broadcast %245 : vector<1x64xf32> to vector<128x64xf32>
      %265 = arith.addf %263, %264 : vector<128x64xf32>
      %cst_133 = arith.constant 0.000000e+00 : f32
      %266 = vector.broadcast %cst_133 : f32 to vector<128x64xf32>
      %267 = arith.maximumf %265, %266 : vector<128x64xf32>
      %c0_134 = arith.constant 0 : index
      %c0_135 = arith.constant 0 : index
      %268 = vector.load %arg26[%c0_134, %c0_135] : memref<1x64xf32, #tpu.memory_space<vmem>>, vector<1x64xf32>
      %c0_136 = arith.constant 0 : index
      %c0_137 = arith.constant 0 : index
      %269 = vector.load %arg27[%c0_136, %c0_137] : memref<1x64xf32, #tpu.memory_space<vmem>>, vector<1x64xf32>
      %cst_138 = arith.constant dense<0.000000e+00> : vector<128xf32>
      %270 = vector.multi_reduction <add>, %267, %cst_138 [1] : vector<128x64xf32> to vector<128xf32>
      %271 = vector.shape_cast %270 : vector<128xf32> to vector<128x1xf32>
      %cst_139 = arith.constant 6.400000e+01 : f32
      %272 = vector.broadcast %cst_139 : f32 to vector<128x1xf32>
      %273 = arith.divf %271, %272 : vector<128x1xf32>
      %274 = vector.broadcast %273 : vector<128x1xf32> to vector<128x64xf32>
      %275 = arith.subf %267, %274 : vector<128x64xf32>
      %276 = arith.mulf %275, %275 : vector<128x64xf32>
      %cst_140 = arith.constant dense<0.000000e+00> : vector<128xf32>
      %277 = vector.multi_reduction <add>, %276, %cst_140 [1] : vector<128x64xf32> to vector<128xf32>
      %278 = vector.shape_cast %277 : vector<128xf32> to vector<128x1xf32>
      %cst_141 = arith.constant 6.400000e+01 : f32
      %279 = vector.broadcast %cst_141 : f32 to vector<128x1xf32>
      %280 = arith.divf %278, %279 : vector<128x1xf32>
      %281 = vector.broadcast %273 : vector<128x1xf32> to vector<128x64xf32>
      %282 = arith.subf %267, %281 : vector<128x64xf32>
      %cst_142 = arith.constant 9.99999974E-5 : f32
      %283 = vector.broadcast %cst_142 : f32 to vector<128x1xf32>
      %284 = arith.addf %280, %283 : vector<128x1xf32>
      %285 = math.rsqrt %284 : vector<128x1xf32>
      %286 = vector.broadcast %285 : vector<128x1xf32> to vector<128x64xf32>
      %287 = arith.mulf %282, %286 : vector<128x64xf32>
      %288 = vector.broadcast %268 : vector<1x64xf32> to vector<128x64xf32>
      %289 = arith.mulf %287, %288 : vector<128x64xf32>
      %290 = vector.broadcast %269 : vector<1x64xf32> to vector<128x64xf32>
      %291 = arith.addf %289, %290 : vector<128x64xf32>
      %c0_143 = arith.constant 0 : index
      %c0_144 = arith.constant 0 : index
      %292 = vector.load %arg18[%c0_143, %c0_144] : memref<32x128xf32, #tpu.memory_space<vmem>>, vector<32x128xf32>
      %cst_145 = arith.constant dense<0.000000e+00> : vector<128x128xf32>
      %293 = tpu.matmul %191, %292, %cst_145 {dimension_numbers = #tpu.dot_dimension_numbers<[1], [0], [0], [1], [0, 0, 1, 1], [], []>} : vector<128x32xf32>, vector<32x128xf32>, vector<128x128xf32> -> vector<128x128xf32>
      %c0_146 = arith.constant 0 : index
      %c0_147 = arith.constant 0 : index
      %294 = vector.load %arg19[%c0_146, %c0_147] : memref<1x128xf32, #tpu.memory_space<vmem>>, vector<1x128xf32>
      %295 = vector.broadcast %294 : vector<1x128xf32> to vector<128x128xf32>
      %296 = arith.addf %293, %295 : vector<128x128xf32>
      %c0_148 = arith.constant 0 : index
      %c0_149 = arith.constant 0 : index
      %297 = vector.load %arg28[%c0_148, %c0_149] : memref<64x128xf32, #tpu.memory_space<vmem>>, vector<64x128xf32>
      %cst_150 = arith.constant dense<0.000000e+00> : vector<128x128xf32>
      %298 = tpu.matmul %291, %297, %cst_150 {dimension_numbers = #tpu.dot_dimension_numbers<[1], [0], [0], [1], [0, 0, 1, 1], [], []>} : vector<128x64xf32>, vector<64x128xf32>, vector<128x128xf32> -> vector<128x128xf32>
      %c0_151 = arith.constant 0 : index
      %c0_152 = arith.constant 0 : index
      %299 = vector.load %arg29[%c0_151, %c0_152] : memref<1x128xf32, #tpu.memory_space<vmem>>, vector<1x128xf32>
      %300 = vector.broadcast %299 : vector<1x128xf32> to vector<128x128xf32>
      %301 = arith.addf %298, %300 : vector<128x128xf32>
      %302 = vector.broadcast %7 : vector<128x1xf32> to vector<128x128xf32>
      %303 = arith.mulf %301, %302 : vector<128x128xf32>
      %304 = arith.addf %296, %303 : vector<128x128xf32>
      %c0_153 = arith.constant 0 : index
      %c0_154 = arith.constant 0 : index
      %c0_155 = arith.constant 0 : index
      %305 = vector.load %arg30[%c0_153, %c0_154, %c0_155] : memref<1x128x128xf32, #tpu.memory_space<vmem>>, vector<1x128x128xf32>
      %306 = vector.shape_cast %305 : vector<1x128x128xf32> to vector<128x128xf32>
      %307 = vector.shape_cast %304 : vector<128x128xf32> to vector<1x128x128xf32>
      tpu.vector_store %arg30[%c0_153, %c0_154, %c0_155], %307 {strides = array<i32>} : memref<1x128x128xf32, #tpu.memory_space<vmem>>, vector<1x128x128xf32>,
    } else {
    }
    return
  }
  func.func @transform_0(%arg0: i32, %arg1: i32, %arg2: memref<2xi32, #tpu.memory_space<smem>>) -> (i32, i32, i32) {
    %c0_i32 = arith.constant 0 : i32
    %c0_i32_0 = arith.constant 0 : i32
    %c0_i32_1 = arith.constant 0 : i32
    return %arg0, %c0_i32, %c0_i32_0 : i32, i32, i32
  }
  func.func @transform_1(%arg0: i32, %arg1: i32, %arg2: memref<2xi32, #tpu.memory_space<smem>>) -> (i32, i32, i32) {
    %c0_i32 = arith.constant 0 : i32
    %c0_i32_0 = arith.constant 0 : i32
    %c0_i32_1 = arith.constant 0 : i32
    return %arg1, %c0_i32, %c0_i32_0 : i32, i32, i32
  }
  func.func @transform_2(%arg0: i32, %arg1: i32, %arg2: memref<2xi32, #tpu.memory_space<smem>>) -> (i32, i32, i32) {
    %c0_i32 = arith.constant 0 : i32
    %c0_i32_0 = arith.constant 0 : i32
    %c0_i32_1 = arith.constant 0 : i32
    return %arg1, %c0_i32, %c0_i32_0 : i32, i32, i32
  }
  func.func @transform_3(%arg0: i32, %arg1: i32, %arg2: memref<2xi32, #tpu.memory_space<smem>>) -> (i32, i32, i32) {
    %c0_i32 = arith.constant 0 : i32
    %c0_i32_0 = arith.constant 0 : i32
    %c0_i32_1 = arith.constant 0 : i32
    return %arg1, %c0_i32, %c0_i32_0 : i32, i32, i32
  }
  func.func @transform_4(%arg0: i32, %arg1: i32, %arg2: memref<2xi32, #tpu.memory_space<smem>>) -> (i32, i32, i32) {
    %c0_i32 = arith.constant 0 : i32
    %c0_i32_0 = arith.constant 0 : i32
    %c0_i32_1 = arith.constant 0 : i32
    return %arg1, %c0_i32, %c0_i32_0 : i32, i32, i32
  }
  func.func @transform_5(%arg0: i32, %arg1: i32, %arg2: memref<2xi32, #tpu.memory_space<smem>>) -> (i32, i32, i32) {
    %c0_i32 = arith.constant 0 : i32
    %c0_i32_0 = arith.constant 0 : i32
    %c0_i32_1 = arith.constant 0 : i32
    return %arg1, %c0_i32, %c0_i32_0 : i32, i32, i32
  }
  func.func @transform_6(%arg0: i32, %arg1: i32, %arg2: memref<2xi32, #tpu.memory_space<smem>>) -> (i32, i32, i32) {
    %c0_i32 = arith.constant 0 : i32
    %c0_i32_0 = arith.constant 0 : i32
    %c0_i32_1 = arith.constant 0 : i32
    return %arg1, %c0_i32, %c0_i32_0 : i32, i32, i32
  }
  func.func @transform_7(%arg0: i32, %arg1: i32, %arg2: memref<2xi32, #tpu.memory_space<smem>>) -> (i32, i32, i32, i32) {
    %c0_i32 = arith.constant 0 : i32
    %c0_i32_0 = arith.constant 0 : i32
    %c0_i32_1 = arith.constant 0 : i32
    %c0_i32_2 = arith.constant 0 : i32
    return %arg1, %c0_i32, %c0_i32_0, %c0_i32_1 : i32, i32, i32, i32
  }
  func.func @transform_8(%arg0: i32, %arg1: i32, %arg2: memref<2xi32, #tpu.memory_space<smem>>) -> (i32, i32, i32) {
    %c0_i32 = arith.constant 0 : i32
    %c0_i32_0 = arith.constant 0 : i32
    %c0_i32_1 = arith.constant 0 : i32
    return %arg1, %c0_i32, %c0_i32_0 : i32, i32, i32
  }
  func.func @transform_9(%arg0: i32, %arg1: i32, %arg2: memref<2xi32, #tpu.memory_space<smem>>) -> (i32, i32, i32, i32) {
    %c0_i32 = arith.constant 0 : i32
    %c0_i32_0 = arith.constant 0 : i32
    %c0_i32_1 = arith.constant 0 : i32
    %c0_i32_2 = arith.constant 0 : i32
    return %arg1, %c0_i32, %c0_i32_0, %c0_i32_1 : i32, i32, i32, i32
  }
  func.func @transform_10(%arg0: i32, %arg1: i32, %arg2: memref<2xi32, #tpu.memory_space<smem>>) -> (i32, i32, i32) {
    %c0_i32 = arith.constant 0 : i32
    %c0_i32_0 = arith.constant 0 : i32
    %c0_i32_1 = arith.constant 0 : i32
    return %arg1, %c0_i32, %c0_i32_0 : i32, i32, i32
  }
  func.func @transform_11(%arg0: i32, %arg1: i32, %arg2: memref<2xi32, #tpu.memory_space<smem>>) -> (i32, i32, i32) {
    %c0_i32 = arith.constant 0 : i32
    %c0_i32_0 = arith.constant 0 : i32
    %c0_i32_1 = arith.constant 0 : i32
    return %arg1, %c0_i32, %c0_i32_0 : i32, i32, i32
  }
  func.func @transform_12(%arg0: i32, %arg1: i32, %arg2: memref<2xi32, #tpu.memory_space<smem>>) -> (i32, i32, i32) {
    %c0_i32 = arith.constant 0 : i32
    %c0_i32_0 = arith.constant 0 : i32
    %c0_i32_1 = arith.constant 0 : i32
    return %arg1, %c0_i32, %c0_i32_0 : i32, i32, i32
  }
  func.func @transform_13(%arg0: i32, %arg1: i32, %arg2: memref<2xi32, #tpu.memory_space<smem>>) -> (i32, i32) {
    %c0_i32 = arith.constant 0 : i32
    %c0_i32_0 = arith.constant 0 : i32
    %c0_i32_1 = arith.constant 0 : i32
    return %c0_i32, %c0_i32_0 : i32, i32
  }
  func.func @transform_14(%arg0: i32, %arg1: i32, %arg2: memref<2xi32, #tpu.memory_space<smem>>) -> (i32, i32) {
    %c0_i32 = arith.constant 0 : i32
    %c0_i32_0 = arith.constant 0 : i32
    %c0_i32_1 = arith.constant 0 : i32
    return %c0_i32, %c0_i32_0 : i32, i32
  }
  func.func @transform_15(%arg0: i32, %arg1: i32, %arg2: memref<2xi32, #tpu.memory_space<smem>>) -> (i32, i32) {
    %c0_i32 = arith.constant 0 : i32
    %c0_i32_0 = arith.constant 0 : i32
    %c0_i32_1 = arith.constant 0 : i32
    return %c0_i32, %c0_i32_0 : i32, i32
  }
  func.func @transform_16(%arg0: i32, %arg1: i32, %arg2: memref<2xi32, #tpu.memory_space<smem>>) -> (i32, i32) {
    %c0_i32 = arith.constant 0 : i32
    %c0_i32_0 = arith.constant 0 : i32
    %c0_i32_1 = arith.constant 0 : i32
    return %c0_i32, %c0_i32_0 : i32, i32
  }
  func.func @transform_17(%arg0: i32, %arg1: i32, %arg2: memref<2xi32, #tpu.memory_space<smem>>) -> (i32, i32, i32) {
    %c0_i32 = arith.constant 0 : i32
    %c0_i32_0 = arith.constant 0 : i32
    %c0_i32_1 = arith.constant 0 : i32
    %c0_i32_2 = arith.constant 0 : i32
    return %c0_i32, %c0_i32_0, %c0_i32_1 : i32, i32, i32
  }
  func.func @transform_18(%arg0: i32, %arg1: i32, %arg2: memref<2xi32, #tpu.memory_space<smem>>) -> (i32, i32) {
    %c0_i32 = arith.constant 0 : i32
    %c0_i32_0 = arith.constant 0 : i32
    %c0_i32_1 = arith.constant 0 : i32
    return %c0_i32, %c0_i32_0 : i32, i32
  }
  func.func @transform_19(%arg0: i32, %arg1: i32, %arg2: memref<2xi32, #tpu.memory_space<smem>>) -> (i32, i32) {
    %c0_i32 = arith.constant 0 : i32
    %c0_i32_0 = arith.constant 0 : i32
    %c0_i32_1 = arith.constant 0 : i32
    return %c0_i32, %c0_i32_0 : i32, i32
  }
  func.func @transform_20(%arg0: i32, %arg1: i32, %arg2: memref<2xi32, #tpu.memory_space<smem>>) -> (i32, i32) {
    %c0_i32 = arith.constant 0 : i32
    %c0_i32_0 = arith.constant 0 : i32
    %c0_i32_1 = arith.constant 0 : i32
    return %c0_i32, %c0_i32_0 : i32, i32
  }
  func.func @transform_21(%arg0: i32, %arg1: i32, %arg2: memref<2xi32, #tpu.memory_space<smem>>) -> (i32, i32, i32) {
    %c0_i32 = arith.constant 0 : i32
    %c0_i32_0 = arith.constant 0 : i32
    %c0_i32_1 = arith.constant 0 : i32
    %c0_i32_2 = arith.constant 0 : i32
    return %c0_i32, %c0_i32_0, %c0_i32_1 : i32, i32, i32
  }
  func.func @transform_22(%arg0: i32, %arg1: i32, %arg2: memref<2xi32, #tpu.memory_space<smem>>) -> (i32, i32) {
    %c0_i32 = arith.constant 0 : i32
    %c0_i32_0 = arith.constant 0 : i32
    %c0_i32_1 = arith.constant 0 : i32
    return %c0_i32, %c0_i32_0 : i32, i32
  }
  func.func @transform_23(%arg0: i32, %arg1: i32, %arg2: memref<2xi32, #tpu.memory_space<smem>>) -> (i32, i32) {
    %c0_i32 = arith.constant 0 : i32
    %c0_i32_0 = arith.constant 0 : i32
    %c0_i32_1 = arith.constant 0 : i32
    return %c0_i32, %c0_i32_0 : i32, i32
  }
  func.func @transform_24(%arg0: i32, %arg1: i32, %arg2: memref<2xi32, #tpu.memory_space<smem>>) -> (i32, i32) {
    %c0_i32 = arith.constant 0 : i32
    %c0_i32_0 = arith.constant 0 : i32
    %c0_i32_1 = arith.constant 0 : i32
    return %c0_i32, %c0_i32_0 : i32, i32
  }
  func.func @transform_25(%arg0: i32, %arg1: i32, %arg2: memref<2xi32, #tpu.memory_space<smem>>) -> (i32, i32) {
    %c0_i32 = arith.constant 0 : i32
    %c0_i32_0 = arith.constant 0 : i32
    %c0_i32_1 = arith.constant 0 : i32
    return %c0_i32, %c0_i32_0 : i32, i32
  }
  func.func @transform_26(%arg0: i32, %arg1: i32, %arg2: memref<2xi32, #tpu.memory_space<smem>>) -> (i32, i32) {
    %c0_i32 = arith.constant 0 : i32
    %c0_i32_0 = arith.constant 0 : i32
    %c0_i32_1 = arith.constant 0 : i32
    return %c0_i32, %c0_i32_0 : i32, i32
  }
  func.func @transform_27(%arg0: i32, %arg1: i32, %arg2: memref<2xi32, #tpu.memory_space<smem>>) -> (i32, i32, i32) {
    %c0_i32 = arith.constant 0 : i32
    %c0_i32_0 = arith.constant 0 : i32
    %c0_i32_1 = arith.constant 0 : i32
    return %arg0, %c0_i32, %c0_i32_0 : i32, i32, i32
  }
}

</mosaic_0001>

<llo_original>
// kernel: tpu_custom_call.1
$region0: #{tpu_custom_call.1}
  #allocation0 [shape = 'u32[]', space=smem, size = 0x4, offset = 0x4, fixed_abs, tag = 'smem constant byte address 0x4 - core index']
  #allocation1 [shape = 'u32[144,128]{1,0:T(1,128)}', space=vmem, size = 0x12000, scoped, tag = 'internal scratch']
  #allocation2 [shape = 'f32[128,32]{1,0:T(8,128)}', space=vmem, size = 0x10000, scoped, tag = 'scratch operand']
  #allocation3 [shape = 's32[1]{0}', space=sflag, size = 0x4, scoped, tag = 'scoped memory for tpu_custom_call.1']
  #allocation4 [shape = 'u8[512]{0}', space=smem, size = 0x200, scoped, tag = 'prefetched SMEM operand 0']
  %s0 = inlined_call_operand.vmem [shape: s32[2], index: 0, kind: input, shape index: {}]
  %s1 = inlined_call_operand.vmem [shape: f32[2,128,16], index: 1, kind: input, shape index: {}]
  %s2 = inlined_call_operand.vmem [shape: bf16[2,32,768], index: 2, kind: input, shape index: {}]
  %s3 = inlined_call_operand.vmem [shape: f32[2,1,768], index: 3, kind: input, shape index: {}]
  %s4 = inlined_call_operand.vmem [shape: bf16[2,256,32], index: 4, kind: input, shape index: {}]
  %s5 = inlined_call_operand.vmem [shape: f32[2,1,32], index: 5, kind: input, shape index: {}]
  %s6 = inlined_call_operand.vmem [shape: f32[2,1,32], index: 6, kind: input, shape index: {}]
  %s7 = inlined_call_operand.vmem [shape: f32[2,1,32], index: 7, kind: input, shape index: {}]
  %s8 = inlined_call_operand.vmem [shape: bf16[2,3,32,64], index: 8, kind: input, shape index: {}]
  %s9 = inlined_call_operand.vmem [shape: f32[2,1,64], index: 9, kind: input, shape index: {}]
  %s10 = inlined_call_operand.vmem [shape: bf16[2,3,64,32], index: 10, kind: input, shape index: {}]
  %s11 = inlined_call_operand.vmem [shape: f32[2,1,32], index: 11, kind: input, shape index: {}]
  %s12 = inlined_call_operand.vmem [shape: f32[2,1,32], index: 12, kind: input, shape index: {}]
  %s13 = inlined_call_operand.vmem [shape: f32[2,1,32], index: 13, kind: input, shape index: {}]
  %s14 = inlined_call_operand.vmem [shape: f32[16,32], index: 14, kind: input, shape index: {}]
  %s15 = inlined_call_operand.vmem [shape: f32[1,32], index: 15, kind: input, shape index: {}]
  %s16 = inlined_call_operand.vmem [shape: f32[32,128], index: 16, kind: input, shape index: {}]
  %s17 = inlined_call_operand.vmem [shape: f32[1,128], index: 17, kind: input, shape index: {}]
  %s18 = inlined_call_operand.vmem [shape: bf16[3,32,64], index: 18, kind: input, shape index: {}]
  %s19 = inlined_call_operand.vmem [shape: f32[1,64], index: 19, kind: input, shape index: {}]
  %s20 = inlined_call_operand.vmem [shape: f32[1,64], index: 20, kind: input, shape index: {}]
  %s21 = inlined_call_operand.vmem [shape: f32[1,64], index: 21, kind: input, shape index: {}]
  %s22 = inlined_call_operand.vmem [shape: bf16[3,64,64], index: 22, kind: input, shape index: {}]
  %s23 = inlined_call_operand.vmem [shape: f32[1,64], index: 23, kind: input, shape index: {}]
  %s24 = inlined_call_operand.vmem [shape: f32[1,64], index: 24, kind: input, shape index: {}]
  %s25 = inlined_call_operand.vmem [shape: f32[1,64], index: 25, kind: input, shape index: {}]
  %s26 = inlined_call_operand.vmem [shape: f32[64,128], index: 26, kind: input, shape index: {}]
  %s27 = inlined_call_operand.vmem [shape: f32[1,128], index: 27, kind: input, shape index: {}]
  %s28 = inlined_call_operand.hbm [shape: f32[2,128,128], index: 28, kind: output, shape index: {}]
  %s29 = sld [smem:[#allocation0]]
  $region149: #{tpu_custom_call.1} parent=0
    _
  %s31 = ssub.s32 1, %s29
  %s32 = scalar_select 0, %s31, %s29
  %s33 = sshll.u32 %s0, 4
  %s34 = int_to_ptr.vmem [resolvable:$true] %s33
  %36 = dma.vmem_to_smem %s34, 16, [#allocation4], [#allocation3]
  %37 = dma.done [#allocation3], 16
  %38 = sfence
  $region1: #{tpu_custom_call.1} parent=0
    #allocation5 [shape = 'u8[131072]{0}', space=vmem, size = 0x20000, scoped, tag = 'output window, operand 0']
    #allocation6 [shape = 's32[2]{0}', space=sflag, size = 0x8, scoped, tag = 'scoped memory for tpu_custom_call.1']
    %39 = vsyncpa [#allocation6], 0
    %s40 = scalar_lea.sflag [#allocation6], 1
    %41 = vsyncpa %s40, 0
    loop: start=0, step=1, limit=6
    $region2: #{tpu_custom_call.1} parent=1 // loop_pre_header
      _
    $region3: #{tpu_custom_call.1} parent=1 // loop_header
      %s43 = sphi 0, %s47
      %p44 = scmp.ge.s32.totalorder %s43, 6
      %s50 = sphi 0, %s62
      %s51 = sphi 0, %s58
      %s52 = sphi 0, %s50
      %s53 = sphi 0, %s51
      %s54 = sphi 0, %s52
      %s55 = sphi 0, %s53
      %s65 = sphi 0, %s67
      %s68 = sphi 0, %s65
      %s69 = sphi 0, %s68
      %s85 = sphi 0, %s69
      %s91 = sphi 0, %s93
      %s94 = sphi 0, %s91
      %s95 = sphi 0, %s94
      %s111 = sphi 0, %s95
      %s117 = sphi 0, %s119
      %s120 = sphi 0, %s117
      %s121 = sphi 0, %s120
      %s137 = sphi 0, %s121
      %s143 = sphi 0, %s145
      %s146 = sphi 0, %s143
      %s147 = sphi 0, %s146
      %s163 = sphi 0, %s147
      %s169 = sphi 0, %s171
      %s172 = sphi 0, %s169
      %s173 = sphi 0, %s172
      %s189 = sphi 0, %s173
      %s195 = sphi 0, %s197
      %s198 = sphi 0, %s195
      %s199 = sphi 0, %s198
      %s215 = sphi 0, %s199
      %s221 = sphi 0, %s223
      %s224 = sphi 0, %s221
      %s225 = sphi 0, %s224
      %s241 = sphi 0, %s225
      %s247 = sphi 0, %s249
      %s250 = sphi 0, %s247
      %s251 = sphi 0, %s250
      %s267 = sphi 0, %s251
      %s273 = sphi 0, %s275
      %s276 = sphi 0, %s273
      %s277 = sphi 0, %s276
      %s293 = sphi 0, %s277
      %s299 = sphi 0, %s301
      %s302 = sphi 0, %s299
      %s303 = sphi 0, %s302
      %s319 = sphi 0, %s303
      %s325 = sphi 0, %s327
      %s328 = sphi 0, %s325
      %s329 = sphi 0, %s328
      %s345 = sphi 0, %s329
      %s351 = sphi 0, %s353
      %s354 = sphi 0, %s351
      %s355 = sphi 0, %s354
      %s371 = sphi 0, %s355
      %s377 = sphi 0, %s379
      %s380 = sphi 0, %s377
      %s381 = sphi 0, %s380
      %s397 = sphi 0, %s381
      %s401 = sphi 0, %s401
      %s403 = sphi 0, %s401
      %s404 = sphi 0, %s403
      %s418 = sphi 0, %s404
      %s422 = sphi 0, %s422
      %s424 = sphi 0, %s422
      %s425 = sphi 0, %s424
      %s439 = sphi 0, %s425
      %s443 = sphi 0, %s443
      %s445 = sphi 0, %s443
      %s446 = sphi 0, %s445
      %s460 = sphi 0, %s446
      %s464 = sphi 0, %s464
      %s466 = sphi 0, %s464
      %s467 = sphi 0, %s466
      %s481 = sphi 0, %s467
      %s485 = sphi 0, %s485
      %s487 = sphi 0, %s485
      %s488 = sphi 0, %s487
      %s502 = sphi 0, %s488
      %s506 = sphi 0, %s506
      %s508 = sphi 0, %s506
      %s509 = sphi 0, %s508
      %s523 = sphi 0, %s509
      %s527 = sphi 0, %s527
      %s529 = sphi 0, %s527
      %s530 = sphi 0, %s529
      %s544 = sphi 0, %s530
      %s548 = sphi 0, %s548
      %s550 = sphi 0, %s548
      %s551 = sphi 0, %s550
      %s565 = sphi 0, %s551
      %s569 = sphi 0, %s569
      %s571 = sphi 0, %s569
      %s572 = sphi 0, %s571
      %s586 = sphi 0, %s572
      %s590 = sphi 0, %s590
      %s592 = sphi 0, %s590
      %s593 = sphi 0, %s592
      %s607 = sphi 0, %s593
      %s611 = sphi 0, %s611
      %s613 = sphi 0, %s611
      %s614 = sphi 0, %s613
      %s628 = sphi 0, %s614
      %s632 = sphi 0, %s632
      %s634 = sphi 0, %s632
      %s635 = sphi 0, %s634
      %s649 = sphi 0, %s635
      %s653 = sphi 0, %s653
      %s655 = sphi 0, %s653
      %s656 = sphi 0, %s655
      %s670 = sphi 0, %s656
      %s674 = sphi 0, %s674
      %s676 = sphi 0, %s674
      %s677 = sphi 0, %s676
      %s691 = sphi 0, %s677
      %s697 = sphi 0, %s699
      %s700 = sphi 0, %s697
      %s701 = sphi 0, %s700
      %s717 = sphi 0, %s701
    $region4: #{tpu_custom_call.1} parent=1 // loop_header_branch
      %46 = sbr.rel (%p44) target = $region8
    $region5: #{tpu_custom_call.1} parent=1 // loop_body
      %s48 = ssub.s32 %s43, 1
      %s49 = ssub.s32 %s43, 2
      %s56 = sadd.s32 1, %s51
      %p57 = scmp.ge.s32.totalorder %s56, 2
      %s58 = scalar_select %p57, 0, %s56
      %s59 = sadd.s32 1, %s50
      %s60 = scalar_select %p57, %s59, %s50
      %p61 = scmp.ge.s32.totalorder %s60, 2
      %s62 = scalar_select %p61, 0, %s60
      %s63 = ssub.s32 %s50, %s62
      %p64 = scmp.eq.s32.totalorder %s63, 0
      %s66 = sadd.s32 %s65, 1
      %s67 = scalar_select %p64, %s65, %s66
      %p70 = pneg %p64
      %p71 = scmp.eq.s32.totalorder %s43, 3
      %p72 = por %p70, %p71
      %p73 = scmp.ne.s32.totalorder %s65, %s68
      %p74 = scmp.eq.s32.totalorder %s43, 0
      %p75 = por %p73, %p74
      %p76 = scmp.ne.s32.totalorder %s65, %s68
      %p77 = scmp.eq.s32.totalorder %s48, 3
      %p78 = por %p76, %p77
      %p79 = scmp.ne.s32.totalorder %s68, %s69
      %p80 = scmp.eq.s32.totalorder %s48, 0
      %p81 = por %p79, %p80
      %p82 = scmp.ne.s32.totalorder %s68, %s69
      %p83 = scmp.eq.s32.totalorder %s49, 3
      %p84 = por %p82, %p83
      %p86 = scmp.ne.s32.totalorder %s69, %s85
      %p87 = scmp.eq.s32.totalorder %s49, 0
      %p88 = por %p86, %p87
      %s89 = ssub.s32 %s51, %s58
      %p90 = scmp.eq.s32.totalorder %s89, 0
      %s92 = sadd.s32 %s91, 1
      %s93 = scalar_select %p90, %s91, %s92
      %p96 = pneg %p90
      %p97 = scmp.eq.s32.totalorder %s43, 3
      %p98 = por %p96, %p97
      %p99 = scmp.ne.s32.totalorder %s91, %s94
      %p100 = scmp.eq.s32.totalorder %s43, 0
      %p101 = por %p99, %p100
      %p102 = scmp.ne.s32.totalorder %s91, %s94
      %p103 = scmp.eq.s32.totalorder %s48, 3
      %p104 = por %p102, %p103
      %p105 = scmp.ne.s32.totalorder %s94, %s95
      %p106 = scmp.eq.s32.totalorder %s48, 0
      %p107 = por %p105, %p106
      %p108 = scmp.ne.s32.totalorder %s94, %s95
      %p109 = scmp.eq.s32.totalorder %s49, 3
      %p110 = por %p108, %p109
      %p112 = scmp.ne.s32.totalorder %s95, %s111
      %p113 = scmp.eq.s32.totalorder %s49, 0
      %p114 = por %p112, %p113
      %s115 = ssub.s32 %s51, %s58
      %p116 = scmp.eq.s32.totalorder %s115, 0
      %s118 = sadd.s32 %s117, 1
      %s119 = scalar_select %p116, %s117, %s118
      %p122 = pneg %p116
      %p123 = scmp.eq.s32.totalorder %s43, 3
      %p124 = por %p122, %p123
      %p125 = scmp.ne.s32.totalorder %s117, %s120
      %p126 = scmp.eq.s32.totalorder %s43, 0
      %p127 = por %p125, %p126
      %p128 = scmp.ne.s32.totalorder %s117, %s120
      %p129 = scmp.eq.s32.totalorder %s48, 3
      %p130 = por %p128, %p129
      %p131 = scmp.ne.s32.totalorder %s120, %s121
      %p132 = scmp.eq.s32.totalorder %s48, 0
      %p133 = por %p131, %p132
      %p134 = scmp.ne.s32.totalorder %s120, %s121
      %p135 = scmp.eq.s32.totalorder %s49, 3
      %p136 = por %p134, %p135
      %p138 = scmp.ne.s32.totalorder %s121, %s137
      %p139 = scmp.eq.s32.totalorder %s49, 0
      %p140 = por %p138, %p139
      %s141 = ssub.s32 %s51, %s58
      %p142 = scmp.eq.s32.totalorder %s141, 0
      %s144 = sadd.s32 %s143, 1
      %s145 = scalar_select %p142, %s143, %s144
      %p148 = pneg %p142
      %p149 = scmp.eq.s32.totalorder %s43, 3
      %p150 = por %p148, %p149
      %p151 = scmp.ne.s32.totalorder %s143, %s146
      %p152 = scmp.eq.s32.totalorder %s43, 0
      %p153 = por %p151, %p152
      %p154 = scmp.ne.s32.totalorder %s143, %s146
      %p155 = scmp.eq.s32.totalorder %s48, 3
      %p156 = por %p154, %p155
      %p157 = scmp.ne.s32.totalorder %s146, %s147
      %p158 = scmp.eq.s32.totalorder %s48, 0
      %p159 = por %p157, %p158
      %p160 = scmp.ne.s32.totalorder %s146, %s147
      %p161 = scmp.eq.s32.totalorder %s49, 3
      %p162 = por %p160, %p161
      %p164 = scmp.ne.s32.totalorder %s147, %s163
      %p165 = scmp.eq.s32.totalorder %s49, 0
      %p166 = por %p164, %p165
      %s167 = ssub.s32 %s51, %s58
      %p168 = scmp.eq.s32.totalorder %s167, 0
      %s170 = sadd.s32 %s169, 1
      %s171 = scalar_select %p168, %s169, %s170
      %p174 = pneg %p168
      %p175 = scmp.eq.s32.totalorder %s43, 3
      %p176 = por %p174, %p175
      %p177 = scmp.ne.s32.totalorder %s169, %s172
      %p178 = scmp.eq.s32.totalorder %s43, 0
      %p179 = por %p177, %p178
      %p180 = scmp.ne.s32.totalorder %s169, %s172
      %p181 = scmp.eq.s32.totalorder %s48, 3
      %p182 = por %p180, %p181
      %p183 = scmp.ne.s32.totalorder %s172, %s173
      %p184 = scmp.eq.s32.totalorder %s48, 0
      %p185 = por %p183, %p184
      %p186 = scmp.ne.s32.totalorder %s172, %s173
      %p187 = scmp.eq.s32.totalorder %s49, 3
      %p188 = por %p186, %p187
      %p190 = scmp.ne.s32.totalorder %s173, %s189
      %p191 = scmp.eq.s32.totalorder %s49, 0
      %p192 = por %p190, %p191
      %s193 = ssub.s32 %s51, %s58
      %p194 = scmp.eq.s32.totalorder %s193, 0
      %s196 = sadd.s32 %s195, 1
      %s197 = scalar_select %p194, %s195, %s196
      %p200 = pneg %p194
      %p201 = scmp.eq.s32.totalorder %s43, 3
      %p202 = por %p200, %p201
      %p203 = scmp.ne.s32.totalorder %s195, %s198
      %p204 = scmp.eq.s32.totalorder %s43, 0
      %p205 = por %p203, %p204
      %p206 = scmp.ne.s32.totalorder %s195, %s198
      %p207 = scmp.eq.s32.totalorder %s48, 3
      %p208 = por %p206, %p207
      %p209 = scmp.ne.s32.totalorder %s198, %s199
      %p210 = scmp.eq.s32.totalorder %s48, 0
      %p211 = por %p209, %p210
      %p212 = scmp.ne.s32.totalorder %s198, %s199
      %p213 = scmp.eq.s32.totalorder %s49, 3
      %p214 = por %p212, %p213
      %p216 = scmp.ne.s32.totalorder %s199, %s215
      %p217 = scmp.eq.s32.totalorder %s49, 0
      %p218 = por %p216, %p217
      %s219 = ssub.s32 %s51, %s58
      %p220 = scmp.eq.s32.totalorder %s219, 0
      %s222 = sadd.s32 %s221, 1
      %s223 = scalar_select %p220, %s221, %s222
      %p226 = pneg %p220
      %p227 = scmp.eq.s32.totalorder %s43, 3
      %p228 = por %p226, %p227
      %p229 = scmp.ne.s32.totalorder %s221, %s224
      %p230 = scmp.eq.s32.totalorder %s43, 0
      %p231 = por %p229, %p230
      %p232 = scmp.ne.s32.totalorder %s221, %s224
      %p233 = scmp.eq.s32.totalorder %s48, 3
      %p234 = por %p232, %p233
      %p235 = scmp.ne.s32.totalorder %s224, %s225
      %p236 = scmp.eq.s32.totalorder %s48, 0
      %p237 = por %p235, %p236
      %p238 = scmp.ne.s32.totalorder %s224, %s225
      %p239 = scmp.eq.s32.totalorder %s49, 3
      %p240 = por %p238, %p239
      %p242 = scmp.ne.s32.totalorder %s225, %s241
      %p243 = scmp.eq.s32.totalorder %s49, 0
      %p244 = por %p242, %p243
      %s245 = ssub.s32 %s51, %s58
      %p246 = scmp.eq.s32.totalorder %s245, 0
      %s248 = sadd.s32 %s247, 1
      %s249 = scalar_select %p246, %s247, %s248
      %p252 = pneg %p246
      %p253 = scmp.eq.s32.totalorder %s43, 3
      %p254 = por %p252, %p253
      %p255 = scmp.ne.s32.totalorder %s247, %s250
      %p256 = scmp.eq.s32.totalorder %s43, 0
      %p257 = por %p255, %p256
      %p258 = scmp.ne.s32.totalorder %s247, %s250
      %p259 = scmp.eq.s32.totalorder %s48, 3
      %p260 = por %p258, %p259
      %p261 = scmp.ne.s32.totalorder %s250, %s251
      %p262 = scmp.eq.s32.totalorder %s48, 0
      %p263 = por %p261, %p262
      %p264 = scmp.ne.s32.totalorder %s250, %s251
      %p265 = scmp.eq.s32.totalorder %s49, 3
      %p266 = por %p264, %p265
      %p268 = scmp.ne.s32.totalorder %s251, %s267
      %p269 = scmp.eq.s32.totalorder %s49, 0
      %p270 = por %p268, %p269
      %s271 = ssub.s32 %s51, %s58
      %p272 = scmp.eq.s32.totalorder %s271, 0
      %s274 = sadd.s32 %s273, 1
      %s275 = scalar_select %p272, %s273, %s274
      %p278 = pneg %p272
      %p279 = scmp.eq.s32.totalorder %s43, 3
      %p280 = por %p278, %p279
      %p281 = scmp.ne.s32.totalorder %s273, %s276
      %p282 = scmp.eq.s32.totalorder %s43, 0
      %p283 = por %p281, %p282
      %p284 = scmp.ne.s32.totalorder %s273, %s276
      %p285 = scmp.eq.s32.totalorder %s48, 3
      %p286 = por %p284, %p285
      %p287 = scmp.ne.s32.totalorder %s276, %s277
      %p288 = scmp.eq.s32.totalorder %s48, 0
      %p289 = por %p287, %p288
      %p290 = scmp.ne.s32.totalorder %s276, %s277
      %p291 = scmp.eq.s32.totalorder %s49, 3
      %p292 = por %p290, %p291
      %p294 = scmp.ne.s32.totalorder %s277, %s293
      %p295 = scmp.eq.s32.totalorder %s49, 0
      %p296 = por %p294, %p295
      %s297 = ssub.s32 %s51, %s58
      %p298 = scmp.eq.s32.totalorder %s297, 0
      %s300 = sadd.s32 %s299, 1
      %s301 = scalar_select %p298, %s299, %s300
      %p304 = pneg %p298
      %p305 = scmp.eq.s32.totalorder %s43, 3
      %p306 = por %p304, %p305
      %p307 = scmp.ne.s32.totalorder %s299, %s302
      %p308 = scmp.eq.s32.totalorder %s43, 0
      %p309 = por %p307, %p308
      %p310 = scmp.ne.s32.totalorder %s299, %s302
      %p311 = scmp.eq.s32.totalorder %s48, 3
      %p312 = por %p310, %p311
      %p313 = scmp.ne.s32.totalorder %s302, %s303
      %p314 = scmp.eq.s32.totalorder %s48, 0
      %p315 = por %p313, %p314
      %p316 = scmp.ne.s32.totalorder %s302, %s303
      %p317 = scmp.eq.s32.totalorder %s49, 3
      %p318 = por %p316, %p317
      %p320 = scmp.ne.s32.totalorder %s303, %s319
      %p321 = scmp.eq.s32.totalorder %s49, 0
      %p322 = por %p320, %p321
      %s323 = ssub.s32 %s51, %s58
      %p324 = scmp.eq.s32.totalorder %s323, 0
      %s326 = sadd.s32 %s325, 1
      %s327 = scalar_select %p324, %s325, %s326
      %p330 = pneg %p324
      %p331 = scmp.eq.s32.totalorder %s43, 3
      %p332 = por %p330, %p331
      %p333 = scmp.ne.s32.totalorder %s325, %s328
      %p334 = scmp.eq.s32.totalorder %s43, 0
      %p335 = por %p333, %p334
      %p336 = scmp.ne.s32.totalorder %s325, %s328
      %p337 = scmp.eq.s32.totalorder %s48, 3
      %p338 = por %p336, %p337
      %p339 = scmp.ne.s32.totalorder %s328, %s329
      %p340 = scmp.eq.s32.totalorder %s48, 0
      %p341 = por %p339, %p340
      %p342 = scmp.ne.s32.totalorder %s328, %s329
      %p343 = scmp.eq.s32.totalorder %s49, 3
      %p344 = por %p342, %p343
      %p346 = scmp.ne.s32.totalorder %s329, %s345
      %p347 = scmp.eq.s32.totalorder %s49, 0
      %p348 = por %p346, %p347
      %s349 = ssub.s32 %s51, %s58
      %p350 = scmp.eq.s32.totalorder %s349, 0
      %s352 = sadd.s32 %s351, 1
      %s353 = scalar_select %p350, %s351, %s352
      %p356 = pneg %p350
      %p357 = scmp.eq.s32.totalorder %s43, 3
      %p358 = por %p356, %p357
      %p359 = scmp.ne.s32.totalorder %s351, %s354
      %p360 = scmp.eq.s32.totalorder %s43, 0
      %p361 = por %p359, %p360
      %p362 = scmp.ne.s32.totalorder %s351, %s354
      %p363 = scmp.eq.s32.totalorder %s48, 3
      %p364 = por %p362, %p363
      %p365 = scmp.ne.s32.totalorder %s354, %s355
      %p366 = scmp.eq.s32.totalorder %s48, 0
      %p367 = por %p365, %p366
      %p368 = scmp.ne.s32.totalorder %s354, %s355
      %p369 = scmp.eq.s32.totalorder %s49, 3
      %p370 = por %p368, %p369
      %p372 = scmp.ne.s32.totalorder %s355, %s371
      %p373 = scmp.eq.s32.totalorder %s49, 0
      %p374 = por %p372, %p373
      %s375 = ssub.s32 %s51, %s58
      %p376 = scmp.eq.s32.totalorder %s375, 0
      %s378 = sadd.s32 %s377, 1
      %s379 = scalar_select %p376, %s377, %s378
      %p382 = pneg %p376
      %p383 = scmp.eq.s32.totalorder %s43, 3
      %p384 = por %p382, %p383
      %p385 = scmp.ne.s32.totalorder %s377, %s380
      %p386 = scmp.eq.s32.totalorder %s43, 0
      %p387 = por %p385, %p386
      %p388 = scmp.ne.s32.totalorder %s377, %s380
      %p389 = scmp.eq.s32.totalorder %s48, 3
      %p390 = por %p388, %p389
      %p391 = scmp.ne.s32.totalorder %s380, %s381
      %p392 = scmp.eq.s32.totalorder %s48, 0
      %p393 = por %p391, %p392
      %p394 = scmp.ne.s32.totalorder %s380, %s381
      %p395 = scmp.eq.s32.totalorder %s49, 3
      %p396 = por %p394, %p395
      %p398 = scmp.ne.s32.totalorder %s381, %s397
      %p399 = scmp.eq.s32.totalorder %s49, 0
      %p400 = por %p398, %p399
      %s402 = sadd.s32 %s401, 1
      %p405 = scmp.eq.s32.totalorder %s43, 3
      %p406 = scmp.ne.s32.totalorder %s401, %s403
      %p407 = scmp.eq.s32.totalorder %s43, 0
      %p408 = por %p406, %p407
      %p409 = scmp.ne.s32.totalorder %s401, %s403
      %p410 = scmp.eq.s32.totalorder %s48, 3
      %p411 = por %p409, %p410
      %p412 = scmp.ne.s32.totalorder %s403, %s404
      %p413 = scmp.eq.s32.totalorder %s48, 0
      %p414 = por %p412, %p413
      %p415 = scmp.ne.s32.totalorder %s403, %s404
      %p416 = scmp.eq.s32.totalorder %s49, 3
      %p417 = por %p415, %p416
      %p419 = scmp.ne.s32.totalorder %s404, %s418
      %p420 = scmp.eq.s32.totalorder %s49, 0
      %p421 = por %p419, %p420
      %s423 = sadd.s32 %s422, 1
      %p426 = scmp.eq.s32.totalorder %s43, 3
      %p427 = scmp.ne.s32.totalorder %s422, %s424
      %p428 = scmp.eq.s32.totalorder %s43, 0
      %p429 = por %p427, %p428
      %p430 = scmp.ne.s32.totalorder %s422, %s424
      %p431 = scmp.eq.s32.totalorder %s48, 3
      %p432 = por %p430, %p431
      %p433 = scmp.ne.s32.totalorder %s424, %s425
      %p434 = scmp.eq.s32.totalorder %s48, 0
      %p435 = por %p433, %p434
      %p436 = scmp.ne.s32.totalorder %s424, %s425
      %p437 = scmp.eq.s32.totalorder %s49, 3
      %p438 = por %p436, %p437
      %p440 = scmp.ne.s32.totalorder %s425, %s439
      %p441 = scmp.eq.s32.totalorder %s49, 0
      %p442 = por %p440, %p441
      %s444 = sadd.s32 %s443, 1
      %p447 = scmp.eq.s32.totalorder %s43, 3
      %p448 = scmp.ne.s32.totalorder %s443, %s445
      %p449 = scmp.eq.s32.totalorder %s43, 0
      %p450 = por %p448, %p449
      %p451 = scmp.ne.s32.totalorder %s443, %s445
      %p452 = scmp.eq.s32.totalorder %s48, 3
      %p453 = por %p451, %p452
      %p454 = scmp.ne.s32.totalorder %s445, %s446
      %p455 = scmp.eq.s32.totalorder %s48, 0
      %p456 = por %p454, %p455
      %p457 = scmp.ne.s32.totalorder %s445, %s446
      %p458 = scmp.eq.s32.totalorder %s49, 3
      %p459 = por %p457, %p458
      %p461 = scmp.ne.s32.totalorder %s446, %s460
      %p462 = scmp.eq.s32.totalorder %s49, 0
      %p463 = por %p461, %p462
      %s465 = sadd.s32 %s464, 1
      %p468 = scmp.eq.s32.totalorder %s43, 3
      %p469 = scmp.ne.s32.totalorder %s464, %s466
      %p470 = scmp.eq.s32.totalorder %s43, 0
      %p471 = por %p469, %p470
      %p472 = scmp.ne.s32.totalorder %s464, %s466
      %p473 = scmp.eq.s32.totalorder %s48, 3
      %p474 = por %p472, %p473
      %p475 = scmp.ne.s32.totalorder %s466, %s467
      %p476 = scmp.eq.s32.totalorder %s48, 0
      %p477 = por %p475, %p476
      %p478 = scmp.ne.s32.totalorder %s466, %s467
      %p479 = scmp.eq.s32.totalorder %s49, 3
      %p480 = por %p478, %p479
      %p482 = scmp.ne.s32.totalorder %s467, %s481
      %p483 = scmp.eq.s32.totalorder %s49, 0
      %p484 = por %p482, %p483
      %s486 = sadd.s32 %s485, 1
      %p489 = scmp.eq.s32.totalorder %s43, 3
      %p490 = scmp.ne.s32.totalorder %s485, %s487
      %p491 = scmp.eq.s32.totalorder %s43, 0
      %p492 = por %p490, %p491
      %p493 = scmp.ne.s32.totalorder %s485, %s487
      %p494 = scmp.eq.s32.totalorder %s48, 3
      %p495 = por %p493, %p494
      %p496 = scmp.ne.s32.totalorder %s487, %s488
      %p497 = scmp.eq.s32.totalorder %s48, 0
      %p498 = por %p496, %p497
      %p499 = scmp.ne.s32.totalorder %s487, %s488
      %p500 = scmp.eq.s32.totalorder %s49, 3
      %p501 = por %p499, %p500
      %p503 = scmp.ne.s32.totalorder %s488, %s502
      %p504 = scmp.eq.s32.totalorder %s49, 0
      %p505 = por %p503, %p504
      %s507 = sadd.s32 %s506, 1
      %p510 = scmp.eq.s32.totalorder %s43, 3
      %p511 = scmp.ne.s32.totalorder %s506, %s508
      %p512 = scmp.eq.s32.totalorder %s43, 0
      %p513 = por %p511, %p512
      %p514 = scmp.ne.s32.totalorder %s506, %s508
      %p515 = scmp.eq.s32.totalorder %s48, 3
      %p516 = por %p514, %p515
      %p517 = scmp.ne.s32.totalorder %s508, %s509
      %p518 = scmp.eq.s32.totalorder %s48, 0
      %p519 = por %p517, %p518
      %p520 = scmp.ne.s32.totalorder %s508, %s509
      %p521 = scmp.eq.s32.totalorder %s49, 3
      %p522 = por %p520, %p521
      %p524 = scmp.ne.s32.totalorder %s509, %s523
      %p525 = scmp.eq.s32.totalorder %s49, 0
      %p526 = por %p524, %p525
      %s528 = sadd.s32 %s527, 1
      %p531 = scmp.eq.s32.totalorder %s43, 3
      %p532 = scmp.ne.s32.totalorder %s527, %s529
      %p533 = scmp.eq.s32.totalorder %s43, 0
      %p534 = por %p532, %p533
      %p535 = scmp.ne.s32.totalorder %s527, %s529
      %p536 = scmp.eq.s32.totalorder %s48, 3
      %p537 = por %p535, %p536
      %p538 = scmp.ne.s32.totalorder %s529, %s530
      %p539 = scmp.eq.s32.totalorder %s48, 0
      %p540 = por %p538, %p539
      %p541 = scmp.ne.s32.totalorder %s529, %s530
      %p542 = scmp.eq.s32.totalorder %s49, 3
      %p543 = por %p541, %p542
      %p545 = scmp.ne.s32.totalorder %s530, %s544
      %p546 = scmp.eq.s32.totalorder %s49, 0
      %p547 = por %p545, %p546
      %s549 = sadd.s32 %s548, 1
      %p552 = scmp.eq.s32.totalorder %s43, 3
      %p553 = scmp.ne.s32.totalorder %s548, %s550
      %p554 = scmp.eq.s32.totalorder %s43, 0
      %p555 = por %p553, %p554
      %p556 = scmp.ne.s32.totalorder %s548, %s550
      %p557 = scmp.eq.s32.totalorder %s48, 3
      %p558 = por %p556, %p557
      %p559 = scmp.ne.s32.totalorder %s550, %s551
      %p560 = scmp.eq.s32.totalorder %s48, 0
      %p561 = por %p559, %p560
      %p562 = scmp.ne.s32.totalorder %s550, %s551
      %p563 = scmp.eq.s32.totalorder %s49, 3
      %p564 = por %p562, %p563
      %p566 = scmp.ne.s32.totalorder %s551, %s565
      %p567 = scmp.eq.s32.totalorder %s49, 0
      %p568 = por %p566, %p567
      %s570 = sadd.s32 %s569, 1
      %p573 = scmp.eq.s32.totalorder %s43, 3
      %p574 = scmp.ne.s32.totalorder %s569, %s571
      %p575 = scmp.eq.s32.totalorder %s43, 0
      %p576 = por %p574, %p575
      %p577 = scmp.ne.s32.totalorder %s569, %s571
      %p578 = scmp.eq.s32.totalorder %s48, 3
      %p579 = por %p577, %p578
      %p580 = scmp.ne.s32.totalorder %s571, %s572
      %p581 = scmp.eq.s32.totalorder %s48, 0
      %p582 = por %p580, %p581
      %p583 = scmp.ne.s32.totalorder %s571, %s572
      %p584 = scmp.eq.s32.totalorder %s49, 3
      %p585 = por %p583, %p584
      %p587 = scmp.ne.s32.totalorder %s572, %s586
      %p588 = scmp.eq.s32.totalorder %s49, 0
      %p589 = por %p587, %p588
      %s591 = sadd.s32 %s590, 1
      %p594 = scmp.eq.s32.totalorder %s43, 3
      %p595 = scmp.ne.s32.totalorder %s590, %s592
      %p596 = scmp.eq.s32.totalorder %s43, 0
      %p597 = por %p595, %p596
      %p598 = scmp.ne.s32.totalorder %s590, %s592
      %p599 = scmp.eq.s32.totalorder %s48, 3
      %p600 = por %p598, %p599
      %p601 = scmp.ne.s32.totalorder %s592, %s593
      %p602 = scmp.eq.s32.totalorder %s48, 0
      %p603 = por %p601, %p602
      %p604 = scmp.ne.s32.totalorder %s592, %s593
      %p605 = scmp.eq.s32.totalorder %s49, 3
      %p606 = por %p604, %p605
      %p608 = scmp.ne.s32.totalorder %s593, %s607
      %p609 = scmp.eq.s32.totalorder %s49, 0
      %p610 = por %p608, %p609
      %s612 = sadd.s32 %s611, 1
      %p615 = scmp.eq.s32.totalorder %s43, 3
      %p616 = scmp.ne.s32.totalorder %s611, %s613
      %p617 = scmp.eq.s32.totalorder %s43, 0
      %p618 = por %p616, %p617
      %p619 = scmp.ne.s32.totalorder %s611, %s613
      %p620 = scmp.eq.s32.totalorder %s48, 3
      %p621 = por %p619, %p620
      %p622 = scmp.ne.s32.totalorder %s613, %s614
      %p623 = scmp.eq.s32.totalorder %s48, 0
      %p624 = por %p622, %p623
      %p625 = scmp.ne.s32.totalorder %s613, %s614
      %p626 = scmp.eq.s32.totalorder %s49, 3
      %p627 = por %p625, %p626
      %p629 = scmp.ne.s32.totalorder %s614, %s628
      %p630 = scmp.eq.s32.totalorder %s49, 0
      %p631 = por %p629, %p630
      %s633 = sadd.s32 %s632, 1
      %p636 = scmp.eq.s32.totalorder %s43, 3
      %p637 = scmp.ne.s32.totalorder %s632, %s634
      %p638 = scmp.eq.s32.totalorder %s43, 0
      %p639 = por %p637, %p638
      %p640 = scmp.ne.s32.totalorder %s632, %s634
      %p641 = scmp.eq.s32.totalorder %s48, 3
      %p642 = por %p640, %p641
      %p643 = scmp.ne.s32.totalorder %s634, %s635
      %p644 = scmp.eq.s32.totalorder %s48, 0
      %p645 = por %p643, %p644
      %p646 = scmp.ne.s32.totalorder %s634, %s635
      %p647 = scmp.eq.s32.totalorder %s49, 3
      %p648 = por %p646, %p647
      %p650 = scmp.ne.s32.totalorder %s635, %s649
      %p651 = scmp.eq.s32.totalorder %s49, 0
      %p652 = por %p650, %p651
      %s654 = sadd.s32 %s653, 1
      %p657 = scmp.eq.s32.totalorder %s43, 3
      %p658 = scmp.ne.s32.totalorder %s653, %s655
      %p659 = scmp.eq.s32.totalorder %s43, 0
      %p660 = por %p658, %p659
      %p661 = scmp.ne.s32.totalorder %s653, %s655
      %p662 = scmp.eq.s32.totalorder %s48, 3
      %p663 = por %p661, %p662
      %p664 = scmp.ne.s32.totalorder %s655, %s656
      %p665 = scmp.eq.s32.totalorder %s48, 0
      %p666 = por %p664, %p665
      %p667 = scmp.ne.s32.totalorder %s655, %s656
      %p668 = scmp.eq.s32.totalorder %s49, 3
      %p669 = por %p667, %p668
      %p671 = scmp.ne.s32.totalorder %s656, %s670
      %p672 = scmp.eq.s32.totalorder %s49, 0
      %p673 = por %p671, %p672
      %s675 = sadd.s32 %s674, 1
      %p678 = scmp.eq.s32.totalorder %s43, 3
      %p679 = scmp.ne.s32.totalorder %s674, %s676
      %p680 = scmp.eq.s32.totalorder %s43, 0
      %p681 = por %p679, %p680
      %p682 = scmp.ne.s32.totalorder %s674, %s676
      %p683 = scmp.eq.s32.totalorder %s48, 3
      %p684 = por %p682, %p683
      %p685 = scmp.ne.s32.totalorder %s676, %s677
      %p686 = scmp.eq.s32.totalorder %s48, 0
      %p687 = por %p685, %p686
      %p688 = scmp.ne.s32.totalorder %s676, %s677
      %p689 = scmp.eq.s32.totalorder %s49, 3
      %p690 = por %p688, %p689
      %p692 = scmp.ne.s32.totalorder %s677, %s691
      %p693 = scmp.eq.s32.totalorder %s49, 0
      %p694 = por %p692, %p693
      %s695 = ssub.s32 %s50, %s62
      %p696 = scmp.eq.s32.totalorder %s695, 0
      %s698 = sadd.s32 %s697, 1
      %s699 = scalar_select %p696, %s697, %s698
      %p702 = pneg %p696
      %p703 = scmp.eq.s32.totalorder %s43, 3
      %p704 = por %p702, %p703
      %p705 = scmp.ne.s32.totalorder %s697, %s700
      %p706 = scmp.eq.s32.totalorder %s43, 0
      %p707 = por %p705, %p706
      %p708 = scmp.ne.s32.totalorder %s697, %s700
      %p709 = scmp.eq.s32.totalorder %s48, 3
      %p710 = por %p708, %p709
      %p711 = scmp.ne.s32.totalorder %s700, %s701
      %p712 = scmp.eq.s32.totalorder %s48, 0
      %p713 = por %p711, %p712
      %p714 = scmp.ne.s32.totalorder %s700, %s701
      %p715 = scmp.eq.s32.totalorder %s49, 3
      %p716 = por %p714, %p715
      %p718 = scmp.ne.s32.totalorder %s701, %s717
      %p719 = scmp.eq.s32.totalorder %s49, 0
      %p720 = por %p718, %p719
      %p721 = scmp.le.s32.totalorder 1, %s43
      %p722 = scmp.lt.s32.totalorder %s43, 5
      %p723 = pnand %p721, %p722
      %p724 = pneg %p723
      // Predicated region
      $region9: #{tpu_custom_call.1} parent=5 // pred_check
        _
      $region10: #{tpu_custom_call.1} parent=5 // pred_check_branch
        %726 = sbr.rel (%p723) target = $region12
      $region11: #{tpu_custom_call.1} parent=5 // pred_region
        %s727 = ssub.s32 %s43, 1
        // Predicated region
        $region13: #{tpu_custom_call.1} parent=11 // pred_check
          %p728 = pneg %p414
        $region14: #{tpu_custom_call.1} parent=11 // pred_check_branch
          %730 = sbr.rel (%p728) target = $region16
        $region15: #{tpu_custom_call.1} parent=11 // pred_region
          _
        $region16: #{tpu_custom_call.1} parent=11 // pred_fallthru
          _
        // Predicated region
        $region17: #{tpu_custom_call.1} parent=11 // pred_check
          %p731 = pneg %p435
        $region18: #{tpu_custom_call.1} parent=11 // pred_check_branch
          %733 = sbr.rel (%p731) target = $region20
        $region19: #{tpu_custom_call.1} parent=11 // pred_region
          _
        $region20: #{tpu_custom_call.1} parent=11 // pred_fallthru
          _
        // Predicated region
        $region21: #{tpu_custom_call.1} parent=11 // pred_check
          %p734 = pneg %p456
        $region22: #{tpu_custom_call.1} parent=11 // pred_check_branch
          %736 = sbr.rel (%p734) target = $region24
        $region23: #{tpu_custom_call.1} parent=11 // pred_region
          _
        $region24: #{tpu_custom_call.1} parent=11 // pred_fallthru
          _
        // Predicated region
        $region25: #{tpu_custom_call.1} parent=11 // pred_check
          %p737 = pneg %p477
        $region26: #{tpu_custom_call.1} parent=11 // pred_check_branch
          %739 = sbr.rel (%p737) target = $region28
        $region27: #{tpu_custom_call.1} parent=11 // pred_region
          _
        $region28: #{tpu_custom_call.1} parent=11 // pred_fallthru
          _
        // Predicated region
        $region29: #{tpu_custom_call.1} parent=11 // pred_check
          %p740 = pneg %p498
        $region30: #{tpu_custom_call.1} parent=11 // pred_check_branch
          %742 = sbr.rel (%p740) target = $region32
        $region31: #{tpu_custom_call.1} parent=11 // pred_region
          _
        $region32: #{tpu_custom_call.1} parent=11 // pred_fallthru
          _
        // Predicated region
        $region33: #{tpu_custom_call.1} parent=11 // pred_check
          %p743 = pneg %p519
        $region34: #{tpu_custom_call.1} parent=11 // pred_check_branch
          %745 = sbr.rel (%p743) target = $region36
        $region35: #{tpu_custom_call.1} parent=11 // pred_region
          _
        $region36: #{tpu_custom_call.1} parent=11 // pred_fallthru
          _
        // Predicated region
        $region37: #{tpu_custom_call.1} parent=11 // pred_check
          %p746 = pneg %p540
        $region38: #{tpu_custom_call.1} parent=11 // pred_check_branch
          %748 = sbr.rel (%p746) target = $region40
        $region39: #{tpu_custom_call.1} parent=11 // pred_region
          _
        $region40: #{tpu_custom_call.1} parent=11 // pred_fallthru
          _
        // Predicated region
        $region41: #{tpu_custom_call.1} parent=11 // pred_check
          %p749 = pneg %p561
        $region42: #{tpu_custom_call.1} parent=11 // pred_check_branch
          %751 = sbr.rel (%p749) target = $region44
        $region43: #{tpu_custom_call.1} parent=11 // pred_region
          _
        $region44: #{tpu_custom_call.1} parent=11 // pred_fallthru
          _
        // Predicated region
        $region45: #{tpu_custom_call.1} parent=11 // pred_check
          %p752 = pneg %p582
        $region46: #{tpu_custom_call.1} parent=11 // pred_check_branch
          %754 = sbr.rel (%p752) target = $region48
        $region47: #{tpu_custom_call.1} parent=11 // pred_region
          _
        $region48: #{tpu_custom_call.1} parent=11 // pred_fallthru
          _
        // Predicated region
        $region49: #{tpu_custom_call.1} parent=11 // pred_check
          %p755 = pneg %p603
        $region50: #{tpu_custom_call.1} parent=11 // pred_check_branch
          %757 = sbr.rel (%p755) target = $region52
        $region51: #{tpu_custom_call.1} parent=11 // pred_region
          _
        $region52: #{tpu_custom_call.1} parent=11 // pred_fallthru
          _
        // Predicated region
        $region53: #{tpu_custom_call.1} parent=11 // pred_check
          %p758 = pneg %p624
        $region54: #{tpu_custom_call.1} parent=11 // pred_check_branch
          %760 = sbr.rel (%p758) target = $region56
        $region55: #{tpu_custom_call.1} parent=11 // pred_region
          _
        $region56: #{tpu_custom_call.1} parent=11 // pred_fallthru
          _
        // Predicated region
        $region57: #{tpu_custom_call.1} parent=11 // pred_check
          %p761 = pneg %p645
        $region58: #{tpu_custom_call.1} parent=11 // pred_check_branch
          %763 = sbr.rel (%p761) target = $region60
        $region59: #{tpu_custom_call.1} parent=11 // pred_region
          _
        $region60: #{tpu_custom_call.1} parent=11 // pred_fallthru
          _
        // Predicated region
        $region61: #{tpu_custom_call.1} parent=11 // pred_check
          %p764 = pneg %p666
        $region62: #{tpu_custom_call.1} parent=11 // pred_check_branch
          %766 = sbr.rel (%p764) target = $region64
        $region63: #{tpu_custom_call.1} parent=11 // pred_region
          _
        $region64: #{tpu_custom_call.1} parent=11 // pred_fallthru
          _
        // Predicated region
        $region65: #{tpu_custom_call.1} parent=11 // pred_check
          %p767 = pneg %p687
        $region66: #{tpu_custom_call.1} parent=11 // pred_check_branch
          %769 = sbr.rel (%p767) target = $region68
        $region67: #{tpu_custom_call.1} parent=11 // pred_region
          _
        $region68: #{tpu_custom_call.1} parent=11 // pred_fallthru
          _
      $region12: #{tpu_custom_call.1} parent=5 // pred_fallthru
        _
      %p770 = scmp.lt.s32.totalorder %s43, 4
      // Predicated region
      $region69: #{tpu_custom_call.1} parent=5 // pred_check
        %p771 = pneg %p770
      $region70: #{tpu_custom_call.1} parent=5 // pred_check_branch
        %773 = sbr.rel (%p771) target = $region72
      $region71: #{tpu_custom_call.1} parent=5 // pred_region
        // Predicated region
        $region73: #{tpu_custom_call.1} parent=71 // pred_check
          %p774 = pneg %p75
        $region74: #{tpu_custom_call.1} parent=71 // pred_check_branch
          %776 = sbr.rel (%p774) target = $region76
        $region75: #{tpu_custom_call.1} parent=71 // pred_region
          %p777 = scmp.lt.s32.totalorder %s50, 1
          %s778 = scalar_select %p777, %s50, 1
          %s779 = smul.addr %s778, 16
          %s780 = smul.addr %s779, 8
          %s781 = scalar_lea.vmem %s1, %s780
        $region76: #{tpu_custom_call.1} parent=71 // pred_fallthru
          _
        // Predicated region
        $region77: #{tpu_custom_call.1} parent=71 // pred_check
          %p782 = pneg %p101
        $region78: #{tpu_custom_call.1} parent=71 // pred_check_branch
          %784 = sbr.rel (%p782) target = $region80
        $region79: #{tpu_custom_call.1} parent=71 // pred_region
          %p785 = scmp.lt.s32.totalorder %s51, 1
          %s786 = scalar_select %p785, %s51, 1
          %s787 = smul.addr %s786, 24
          %s788 = smul.addr %s787, 4
          %s789 = scalar_lea.vmem %s2, %s788
        $region80: #{tpu_custom_call.1} parent=71 // pred_fallthru
          _
        // Predicated region
        $region81: #{tpu_custom_call.1} parent=71 // pred_check
          %p790 = pneg %p127
        $region82: #{tpu_custom_call.1} parent=71 // pred_check_branch
          %792 = sbr.rel (%p790) target = $region84
        $region83: #{tpu_custom_call.1} parent=71 // pred_region
          %p793 = scmp.lt.s32.totalorder %s51, 1
          %s794 = scalar_select %p793, %s51, 1
          %s795 = smul.addr %s794, 6
          %s796 = scalar_lea.vmem %s3, %s795
        $region84: #{tpu_custom_call.1} parent=71 // pred_fallthru
          _
        // Predicated region
        $region85: #{tpu_custom_call.1} parent=71 // pred_check
          %p797 = pneg %p153
        $region86: #{tpu_custom_call.1} parent=71 // pred_check_branch
          %799 = sbr.rel (%p797) target = $region88
        $region87: #{tpu_custom_call.1} parent=71 // pred_region
          %p800 = scmp.lt.s32.totalorder %s51, 1
          %s801 = scalar_select %p800, %s51, 1
          %s802 = smul.addr %s801, 32
          %s803 = smul.addr %s802, 4
          %s804 = scalar_lea.vmem %s4, %s803
        $region88: #{tpu_custom_call.1} parent=71 // pred_fallthru
          _
        // Predicated region
        $region89: #{tpu_custom_call.1} parent=71 // pred_check
          %p805 = pneg %p179
        $region90: #{tpu_custom_call.1} parent=71 // pred_check_branch
          %807 = sbr.rel (%p805) target = $region92
        $region91: #{tpu_custom_call.1} parent=71 // pred_region
          %p808 = scmp.lt.s32.totalorder %s51, 1
          %s809 = scalar_select %p808, %s51, 1
          %s810 = scalar_lea.vmem %s5, %s809
        $region92: #{tpu_custom_call.1} parent=71 // pred_fallthru
          _
        // Predicated region
        $region93: #{tpu_custom_call.1} parent=71 // pred_check
          %p811 = pneg %p205
        $region94: #{tpu_custom_call.1} parent=71 // pred_check_branch
          %813 = sbr.rel (%p811) target = $region96
        $region95: #{tpu_custom_call.1} parent=71 // pred_region
          %p814 = scmp.lt.s32.totalorder %s51, 1
          %s815 = scalar_select %p814, %s51, 1
          %s816 = scalar_lea.vmem %s6, %s815
        $region96: #{tpu_custom_call.1} parent=71 // pred_fallthru
          _
        // Predicated region
        $region97: #{tpu_custom_call.1} parent=71 // pred_check
          %p817 = pneg %p231
        $region98: #{tpu_custom_call.1} parent=71 // pred_check_branch
          %819 = sbr.rel (%p817) target = $region100
        $region99: #{tpu_custom_call.1} parent=71 // pred_region
          %p820 = scmp.lt.s32.totalorder %s51, 1
          %s821 = scalar_select %p820, %s51, 1
          %s822 = scalar_lea.vmem %s7, %s821
        $region100: #{tpu_custom_call.1} parent=71 // pred_fallthru
          _
        // Predicated region
        $region101: #{tpu_custom_call.1} parent=71 // pred_check
          %p823 = pneg %p257
        $region102: #{tpu_custom_call.1} parent=71 // pred_check_branch
          %825 = sbr.rel (%p823) target = $region104
        $region103: #{tpu_custom_call.1} parent=71 // pred_region
          %p826 = scmp.lt.s32.totalorder %s51, 1
          %s827 = scalar_select %p826, %s51, 1
          %s828 = smul.addr %s827, 12
          %s829 = smul.addr %s828, 4
          %s830 = scalar_lea.vmem %s8, %s829
        $region104: #{tpu_custom_call.1} parent=71 // pred_fallthru
          _
        // Predicated region
        $region105: #{tpu_custom_call.1} parent=71 // pred_check
          %p831 = pneg %p283
        $region106: #{tpu_custom_call.1} parent=71 // pred_check_branch
          %833 = sbr.rel (%p831) target = $region108
        $region107: #{tpu_custom_call.1} parent=71 // pred_region
          %p834 = scmp.lt.s32.totalorder %s51, 1
          %s835 = scalar_select %p834, %s51, 1
          %s836 = scalar_lea.vmem %s9, %s835
        $region108: #{tpu_custom_call.1} parent=71 // pred_fallthru
          _
        // Predicated region
        $region109: #{tpu_custom_call.1} parent=71 // pred_check
          %p837 = pneg %p309
        $region110: #{tpu_custom_call.1} parent=71 // pred_check_branch
          %839 = sbr.rel (%p837) target = $region112
        $region111: #{tpu_custom_call.1} parent=71 // pred_region
          %p840 = scmp.lt.s32.totalorder %s51, 1
          %s841 = scalar_select %p840, %s51, 1
          %s842 = smul.addr %s841, 24
          %s843 = smul.addr %s842, 4
          %s844 = scalar_lea.vmem %s10, %s843
        $region112: #{tpu_custom_call.1} parent=71 // pred_fallthru
          _
        // Predicated region
        $region113: #{tpu_custom_call.1} parent=71 // pred_check
          %p845 = pneg %p335
        $region114: #{tpu_custom_call.1} parent=71 // pred_check_branch
          %847 = sbr.rel (%p845) target = $region116
        $region115: #{tpu_custom_call.1} parent=71 // pred_region
          %p848 = scmp.lt.s32.totalorder %s51, 1
          %s849 = scalar_select %p848, %s51, 1
          %s850 = scalar_lea.vmem %s11, %s849
        $region116: #{tpu_custom_call.1} parent=71 // pred_fallthru
          _
        // Predicated region
        $region117: #{tpu_custom_call.1} parent=71 // pred_check
          %p851 = pneg %p361
        $region118: #{tpu_custom_call.1} parent=71 // pred_check_branch
          %853 = sbr.rel (%p851) target = $region120
        $region119: #{tpu_custom_call.1} parent=71 // pred_region
          %p854 = scmp.lt.s32.totalorder %s51, 1
          %s855 = scalar_select %p854, %s51, 1
          %s856 = scalar_lea.vmem %s12, %s855
        $region120: #{tpu_custom_call.1} parent=71 // pred_fallthru
          _
        // Predicated region
        $region121: #{tpu_custom_call.1} parent=71 // pred_check
          %p857 = pneg %p387
        $region122: #{tpu_custom_call.1} parent=71 // pred_check_branch
          %859 = sbr.rel (%p857) target = $region124
        $region123: #{tpu_custom_call.1} parent=71 // pred_region
          %p860 = scmp.lt.s32.totalorder %s51, 1
          %s861 = scalar_select %p860, %s51, 1
          %s862 = scalar_lea.vmem %s13, %s861
        $region124: #{tpu_custom_call.1} parent=71 // pred_fallthru
          _
      $region72: #{tpu_custom_call.1} parent=5 // pred_fallthru
        _
      %p863 = scmp.le.s32.totalorder 1, %s43
      %p864 = scmp.lt.s32.totalorder %s43, 5
      %p865 = pnand %p863, %p864
      %p866 = pneg %p865
      // Predicated region
      $region125: #{tpu_custom_call.1} parent=5 // pred_check
        _
      $region126: #{tpu_custom_call.1} parent=5 // pred_check_branch
        %868 = sbr.rel (%p865) target = $region128
      $region127: #{tpu_custom_call.1} parent=5 // pred_region
        %s869 = ssub.s32 %s43, 1
        %p870 = scmp.lt.s32.totalorder %s52, 1
        %s871 = scalar_select %p870, %s52, 1
        %s872 = smul.addr %s871, 16
        %s873 = smul.addr %s872, 8
        %s874 = scalar_lea.vmem %s1, %s873
        %p875 = pneg %p81
        %p876 = pneg %p78
        %p877 = scmp.lt.s32.totalorder %s53, 1
        %s878 = scalar_select %p877, %s53, 1
        %s879 = smul.addr %s878, 24
        %s880 = smul.addr %s879, 4
        %s881 = scalar_lea.vmem %s2, %s880
        %p882 = pneg %p107
        %p883 = pneg %p104
        %p884 = scmp.lt.s32.totalorder %s53, 1
        %s885 = scalar_select %p884, %s53, 1
        %s886 = smul.addr %s885, 6
        %s887 = scalar_lea.vmem %s3, %s886
        %p888 = pneg %p133
        %p889 = pneg %p130
        %p890 = scmp.lt.s32.totalorder %s53, 1
        %s891 = scalar_select %p890, %s53, 1
        %s892 = smul.addr %s891, 32
        %s893 = smul.addr %s892, 4
        %s894 = scalar_lea.vmem %s4, %s893
        %p895 = pneg %p159
        %p896 = pneg %p156
        %p897 = scmp.lt.s32.totalorder %s53, 1
        %s898 = scalar_select %p897, %s53, 1
        %s899 = scalar_lea.vmem %s5, %s898
        %p900 = pneg %p185
        %p901 = pneg %p182
        %p902 = scmp.lt.s32.totalorder %s53, 1
        %s903 = scalar_select %p902, %s53, 1
        %s904 = scalar_lea.vmem %s6, %s903
        %p905 = pneg %p211
        %p906 = pneg %p208
        %p907 = scmp.lt.s32.totalorder %s53, 1
        %s908 = scalar_select %p907, %s53, 1
        %s909 = scalar_lea.vmem %s7, %s908
        %p910 = pneg %p237
        %p911 = pneg %p234
        %p912 = scmp.lt.s32.totalorder %s53, 1
        %s913 = scalar_select %p912, %s53, 1
        %s914 = smul.addr %s913, 12
        %s915 = smul.addr %s914, 4
        %s916 = scalar_lea.vmem %s8, %s915
        %p917 = pneg %p263
        %p918 = pneg %p260
        %p919 = scmp.lt.s32.totalorder %s53, 1
        %s920 = scalar_select %p919, %s53, 1
        %s921 = scalar_lea.vmem %s9, %s920
        %p922 = pneg %p289
        %p923 = pneg %p286
        %p924 = scmp.lt.s32.totalorder %s53, 1
        %s925 = scalar_select %p924, %s53, 1
        %s926 = smul.addr %s925, 24
        %s927 = smul.addr %s926, 4
        %s928 = scalar_lea.vmem %s10, %s927
        %p929 = pneg %p315
        %p930 = pneg %p312
        %p931 = scmp.lt.s32.totalorder %s53, 1
        %s932 = scalar_select %p931, %s53, 1
        %s933 = scalar_lea.vmem %s11, %s932
        %p934 = pneg %p341
        %p935 = pneg %p338
        %p936 = scmp.lt.s32.totalorder %s53, 1
        %s937 = scalar_select %p936, %s53, 1
        %s938 = scalar_lea.vmem %s12, %s937
        %p939 = pneg %p367
        %p940 = pneg %p364
        %p941 = scmp.lt.s32.totalorder %s53, 1
        %s942 = scalar_select %p941, %s53, 1
        %s943 = scalar_lea.vmem %s13, %s942
        %p944 = pneg %p393
        %p945 = pneg %p390
        %p946 = pneg %p414
        %p947 = pneg %p411
        %p948 = pneg %p435
        %p949 = pneg %p432
        %p950 = pneg %p456
        %p951 = pneg %p453
        %p952 = pneg %p477
        %p953 = pneg %p474
        %p954 = pneg %p498
        %p955 = pneg %p495
        %p956 = pneg %p519
        %p957 = pneg %p516
        %p958 = pneg %p540
        %p959 = pneg %p537
        %p960 = pneg %p561
        %p961 = pneg %p558
        %p962 = pneg %p582
        %p963 = pneg %p579
        %p964 = pneg %p603
        %p965 = pneg %p600
        %p966 = pneg %p624
        %p967 = pneg %p621
        %p968 = pneg %p645
        %p969 = pneg %p642
        %p970 = pneg %p666
        %p971 = pneg %p663
        %p972 = pneg %p687
        %p973 = pneg %p684
        %p974 = pneg %p713
        %p975 = pneg %p710
        %s976 = sand.u32 %s700, 1
        %s977 = scalar_lea.sflag [#allocation6], %s976
        %s978 = sand.u32 %s700, 1
        %s979 = smul.addr %s978, 128
        %s980 = scalar_lea.vmem [#allocation5], %s979
        %p981 = scmp.lt.s32.totalorder %s52, 1
        %s982 = scalar_select %p981, %s52, 1
        %s983 = smul.addr %s982, 16
        %s984 = smul.addr %s983, 8
        %s985 = scalar_lea.vmem %s1, %s984
        %p986 = scmp.lt.s32.totalorder %s53, 1
        %s987 = scalar_select %p986, %s53, 1
        %s988 = smul.addr %s987, 24
        %s989 = smul.addr %s988, 4
        %s990 = scalar_lea.vmem %s2, %s989
        %p991 = scmp.lt.s32.totalorder %s53, 1
        %s992 = scalar_select %p991, %s53, 1
        %s993 = smul.addr %s992, 6
        %s994 = scalar_lea.vmem %s3, %s993
        %p995 = scmp.lt.s32.totalorder %s53, 1
        %s996 = scalar_select %p995, %s53, 1
        %s997 = smul.addr %s996, 32
        %s998 = smul.addr %s997, 4
        %s999 = scalar_lea.vmem %s4, %s998
        %p1000 = scmp.lt.s32.totalorder %s53, 1
        %s1001 = scalar_select %p1000, %s53, 1
        %s1002 = scalar_lea.vmem %s5, %s1001
        %p1003 = scmp.lt.s32.totalorder %s53, 1
        %s1004 = scalar_select %p1003, %s53, 1
        %s1005 = scalar_lea.vmem %s6, %s1004
        %p1006 = scmp.lt.s32.totalorder %s53, 1
        %s1007 = scalar_select %p1006, %s53, 1
        %s1008 = scalar_lea.vmem %s7, %s1007
        %p1009 = scmp.lt.s32.totalorder %s53, 1
        %s1010 = scalar_select %p1009, %s53, 1
        %s1011 = smul.addr %s1010, 12
        %s1012 = smul.addr %s1011, 4
        %s1013 = scalar_lea.vmem %s8, %s1012
        %p1014 = scmp.lt.s32.totalorder %s53, 1
        %s1015 = scalar_select %p1014, %s53, 1
        %s1016 = scalar_lea.vmem %s9, %s1015
        %p1017 = scmp.lt.s32.totalorder %s53, 1
        %s1018 = scalar_select %p1017, %s53, 1
        %s1019 = smul.addr %s1018, 24
        %s1020 = smul.addr %s1019, 4
        %s1021 = scalar_lea.vmem %s10, %s1020
        %p1022 = scmp.lt.s32.totalorder %s53, 1
        %s1023 = scalar_select %p1022, %s53, 1
        %s1024 = scalar_lea.vmem %s11, %s1023
        %p1025 = scmp.lt.s32.totalorder %s53, 1
        %s1026 = scalar_select %p1025, %s53, 1
        %s1027 = scalar_lea.vmem %s12, %s1026
        %p1028 = scmp.lt.s32.totalorder %s53, 1
        %s1029 = scalar_select %p1028, %s53, 1
        %s1030 = scalar_lea.vmem %s13, %s1029
        %s1032 = sld [smem:[#allocation4 + %s52]]
        %v1033 = vlaneseq
        %v1034 = vshrl.u32 %v1033, 7
        %v1035 = vadd.s32 %v1034, 8
        %v1036 = vadd.s32 %v1034, 16
        %v1037 = vadd.s32 %v1034, 24
        %v1038 = vadd.s32 %v1034, 32
        %v1039 = vadd.s32 %v1034, 40
        %v1040 = vadd.s32 %v1034, 48
        %v1041 = vadd.s32 %v1034, 56
        %v1042 = vadd.s32 %v1034, 64
        %v1043 = vadd.s32 %v1034, 72
        %v1044 = vadd.s32 %v1034, 80
        %v1045 = vadd.s32 %v1034, 88
        %v1046 = vadd.s32 %v1034, 96
        %v1047 = vadd.s32 %v1034, 104
        %v1048 = vadd.s32 %v1034, 112
        %v1049 = vadd.s32 %v1034, 120
        %v1050 = vlaneseq
        %v1051 = vand.u32 %v1050, 127
        %v1052 = vstv %s1032
        %vm1053 = vcmp.lt.s32.totalorder %v1034, %v1052
        %vm1054 = vcmp.lt.s32.totalorder %v1035, %v1052
        %vm1055 = vcmp.lt.s32.totalorder %v1036, %v1052
        %vm1056 = vcmp.lt.s32.totalorder %v1037, %v1052
        %vm1057 = vcmp.lt.s32.totalorder %v1038, %v1052
        %vm1058 = vcmp.lt.s32.totalorder %v1039, %v1052
        %vm1059 = vcmp.lt.s32.totalorder %v1040, %v1052
        %vm1060 = vcmp.lt.s32.totalorder %v1041, %v1052
        %vm1061 = vcmp.lt.s32.totalorder %v1042, %v1052
        %vm1062 = vcmp.lt.s32.totalorder %v1043, %v1052
        %vm1063 = vcmp.lt.s32.totalorder %v1044, %v1052
        %vm1064 = vcmp.lt.s32.totalorder %v1045, %v1052
        %vm1065 = vcmp.lt.s32.totalorder %v1046, %v1052
        %vm1066 = vcmp.lt.s32.totalorder %v1047, %v1052
        %vm1067 = vcmp.lt.s32.totalorder %v1048, %v1052
        %vm1068 = vcmp.lt.s32.totalorder %v1049, %v1052
        %v1069 = vsel %vm1053, 1, 0
        %v1070 = vsel %vm1054, 1, 0
        %v1071 = vsel %vm1055, 1, 0
        %v1072 = vsel %vm1056, 1, 0
        %v1073 = vsel %vm1057, 1, 0
        %v1074 = vsel %vm1058, 1, 0
        %v1075 = vsel %vm1059, 1, 0
        %v1076 = vsel %vm1060, 1, 0
        %v1077 = vsel %vm1061, 1, 0
        %v1078 = vsel %vm1062, 1, 0
        %v1079 = vsel %vm1063, 1, 0
        %v1080 = vsel %vm1064, 1, 0
        %v1081 = vsel %vm1065, 1, 0
        %v1082 = vsel %vm1066, 1, 0
        %v1083 = vsel %vm1067, 1, 0
        %v1084 = vsel %vm1068, 1, 0
        %v1085 = vcvt.s32.f32 %v1069
        %v1086 = vcvt.s32.f32 %v1070
        %v1087 = vcvt.s32.f32 %v1071
        %v1088 = vcvt.s32.f32 %v1072
        %v1089 = vcvt.s32.f32 %v1073
        %v1090 = vcvt.s32.f32 %v1074
        %v1091 = vcvt.s32.f32 %v1075
        %v1092 = vcvt.s32.f32 %v1076
        %v1093 = vcvt.s32.f32 %v1077
        %v1094 = vcvt.s32.f32 %v1078
        %v1095 = vcvt.s32.f32 %v1079
        %v1096 = vcvt.s32.f32 %v1080
        %v1097 = vcvt.s32.f32 %v1081
        %v1098 = vcvt.s32.f32 %v1082
        %v1099 = vcvt.s32.f32 %v1083
        %v1100 = vcvt.s32.f32 %v1084
        %vm1101 = vcmp.lt.s32.totalorder %v1051, %v1052
        %v1102 = vsel %vm1101, 0.0, -10000.0
        %p1103 = scmp.eq.s32.totalorder %s53, 0
        // Predicated region
        $region129: #{tpu_custom_call.1} parent=127 // pred_check
          %p1104 = pneg %p1103
        $region130: #{tpu_custom_call.1} parent=127 // pred_check_branch
          %1106 = sbr.rel (%p1104) target = $region132
        $region131: #{tpu_custom_call.1} parent=127 // pred_region
          %v1107 = vld [vmem:[%s985] sm:$0xff]
          %v1108 = vld [vmem:[%s985 + $0x8] sm:$0xff]
          %v1109 = vld [vmem:[%s985 + $0x10] sm:$0xff]
          %v1110 = vld [vmem:[%s985 + $0x18] sm:$0xff]
          %v1111 = vld [vmem:[%s985 + $0x20] sm:$0xff]
          %v1112 = vld [vmem:[%s985 + $0x28] sm:$0xff]
          %v1113 = vld [vmem:[%s985 + $0x30] sm:$0xff]
          %v1114 = vld [vmem:[%s985 + $0x38] sm:$0xff]
          %v1115 = vld [vmem:[%s985 + $0x40] sm:$0xff]
          %v1116 = vld [vmem:[%s985 + $0x48] sm:$0xff]
          %v1117 = vld [vmem:[%s985 + $0x50] sm:$0xff]
          %v1118 = vld [vmem:[%s985 + $0x58] sm:$0xff]
          %v1119 = vld [vmem:[%s985 + $0x60] sm:$0xff]
          %v1120 = vld [vmem:[%s985 + $0x68] sm:$0xff]
          %v1121 = vld [vmem:[%s985 + $0x70] sm:$0xff]
          %v1122 = vld [vmem:[%s985 + $0x78] sm:$0xff]
          %v1123 = vld [vmem:[%s14] sm:$0xff]
          %v1124 = vld [vmem:[%s14 + $0x8] sm:$0xff]
          %v1125 = vld [vmem:[%s15] sm:$0x1]
          %v1127 = vlaneseq
          %v1128 = vshrl.u32 %v1127, 7
          %v1129 = vsub.s32 0, %v1128
          %v1130 = vrot.slane %v1125, %v1129
          %vm1132 = vcmask 130048
          %v1134 = vsel %vm1132, %v1107, 0
          %v1137 = vsel %vm1132, %v1108, 0
          %v1140 = vsel %vm1132, %v1109, 0
          %v1143 = vsel %vm1132, %v1110, 0
          %v1146 = vsel %vm1132, %v1111, 0
          %v1149 = vsel %vm1132, %v1112, 0
          %v1152 = vsel %vm1132, %v1113, 0
          %v1155 = vsel %vm1132, %v1114, 0
          %v1158 = vsel %vm1132, %v1115, 0
          %v1161 = vsel %vm1132, %v1116, 0
          %v1164 = vsel %vm1132, %v1117, 0
          %v1167 = vsel %vm1132, %v1118, 0
          %v1170 = vsel %vm1132, %v1119, 0
          %v1173 = vsel %vm1132, %v1120, 0
          %v1176 = vsel %vm1132, %v1121, 0
          %v1179 = vsel %vm1132, %v1122, 0
          %1181 = vmatprep.subr.mxu0 0.0
          %1182 = vmatpush1.msra.mxu0 0.0
          %1183 = vmatprep.subr.mxu0 0.0
          %1184 = vmatpush1.msra.mxu0 0.0
          %1185 = vmatprep.subr.mxu0 0.0
          %1186 = vmatpush1.msra.mxu0 0.0
          %1187 = vmatprep.subr.mxu0 0.0
          %1188 = vmatpush1.msra.mxu0 0.0
          %1189 = vmatprep.subr.mxu0 0.0
          %1190 = vmatpush1.msra.mxu0 0.0
          %1191 = vmatprep.subr.mxu0 0.0
          %1192 = vmatpush1.msra.mxu0 0.0
          %1193 = vmatprep.subr.mxu0 0.0
          %1194 = vmatpush1.msra.mxu0 0.0
          %1195 = vmatprep.subr.mxu0 0.0
          %1196 = vmatpush1.msra.mxu0 0.0
          %1197 = vmatprep.subr.mxu0 0.0
          %1198 = vmatpush1.msra.mxu0 0.0
          %1199 = vmatprep.subr.mxu0 0.0
          %1200 = vmatpush1.msra.mxu0 0.0
          %1201 = vmatprep.subr.mxu0 0.0
          %1202 = vmatpush1.msra.mxu0 0.0
          %1203 = vmatprep.subr.mxu0 0.0
          %1204 = vmatpush1.msra.mxu0 0.0
          %1205 = vmatprep.subr.mxu0 0.0
          %1206 = vmatpush1.msra.mxu0 0.0
          %1207 = vmatprep.subr.mxu0 0.0
          %1208 = vmatpush1.msra.mxu0 0.0
          %1209 = vmatprep.subr.mxu0 0.0
          %1210 = vmatpush1.msra.mxu0 %v1124
          %1211 = vmatprep.subr.mxu0 0.0
          %1212 = vmatpush1.msra.mxu0 %v1123
          %1213 = vmatprep.subr.mxu0 0.0
          %1214 = vmatpush2.msra.mxu0 0.0
          %1215 = vmatprep.subr.mxu0 0.0
          %1216 = vmatpush2.msra.mxu0 0.0
          %1217 = vmatprep.subr.mxu0 0.0
          %1218 = vmatpush2.msra.mxu0 0.0
          %1219 = vmatprep.subr.mxu0 0.0
          %1220 = vmatpush2.msra.mxu0 0.0
          %1221 = vmatprep.subr.mxu0 0.0
          %1222 = vmatpush2.msra.mxu0 0.0
          %1223 = vmatprep.subr.mxu0 0.0
          %1224 = vmatpush2.msra.mxu0 0.0
          %1225 = vmatprep.subr.mxu0 0.0
          %1226 = vmatpush2.msra.mxu0 0.0
          %1227 = vmatprep.subr.mxu0 0.0
          %1228 = vmatpush2.msra.mxu0 0.0
          %1229 = vmatprep.subr.mxu0 0.0
          %1230 = vmatpush2.msra.mxu0 0.0
          %1231 = vmatprep.subr.mxu0 0.0
          %1232 = vmatpush2.msra.mxu0 0.0
          %1233 = vmatprep.subr.mxu0 0.0
          %1234 = vmatpush2.msra.mxu0 0.0
          %1235 = vmatprep.subr.mxu0 0.0
          %1236 = vmatpush2.msra.mxu0 0.0
          %1237 = vmatprep.subr.mxu0 0.0
          %1238 = vmatpush2.msra.mxu0 0.0
          %1239 = vmatprep.subr.mxu0 0.0
          %1240 = vmatpush2.msra.mxu0 0.0
          %1241 = vmatprep.subr.mxu0 0.0
          %1242 = vmatpush2.msra.mxu0 0.0
          %1243 = vmatprep.subr.mxu0 0.0
          %1244 = vmatpush2.msra.mxu0 0.0
          %1245 = vmatprep.mubr.f32.mxu0 0.0
          %1246 = vmatmul.mubr.f32.gmra.mxu0 %v1134
          %v1247 = vpop.f32.mrf.mxu0
          %v1248 = vadd.f32 %v1130, %v1247
          %v1249 = vpop.f32.mrf.mxu0
          %1250 = vmatprep.mubr.f32.mxu0 0.0
          %1251 = vmatmul.mubr.f32.gmra.mxu0 %v1137
          %v1252 = vpop.f32.mrf.mxu0
          %v1253 = vadd.f32 %v1130, %v1252
          %v1254 = vpop.f32.mrf.mxu0
          %1255 = vmatprep.mubr.f32.mxu0 0.0
          %1256 = vmatmul.mubr.f32.gmra.mxu0 %v1140
          %v1257 = vpop.f32.mrf.mxu0
          %v1258 = vadd.f32 %v1130, %v1257
          %v1259 = vpop.f32.mrf.mxu0
          %1260 = vmatprep.mubr.f32.mxu0 0.0
          %1261 = vmatmul.mubr.f32.gmra.mxu0 %v1143
          %v1262 = vpop.f32.mrf.mxu0
          %v1263 = vadd.f32 %v1130, %v1262
          %v1264 = vpop.f32.mrf.mxu0
          %1265 = vmatprep.mubr.f32.mxu0 0.0
          %1266 = vmatmul.mubr.f32.gmra.mxu0 %v1146
          %v1267 = vpop.f32.mrf.mxu0
          %v1268 = vadd.f32 %v1130, %v1267
          %v1269 = vpop.f32.mrf.mxu0
          %1270 = vmatprep.mubr.f32.mxu0 0.0
          %1271 = vmatmul.mubr.f32.gmra.mxu0 %v1149
          %v1272 = vpop.f32.mrf.mxu0
          %v1273 = vadd.f32 %v1130, %v1272
          %v1274 = vpop.f32.mrf.mxu0
          %1275 = vmatprep.mubr.f32.mxu0 0.0
          %1276 = vmatmul.mubr.f32.gmra.mxu0 %v1152
          %v1277 = vpop.f32.mrf.mxu0
          %v1278 = vadd.f32 %v1130, %v1277
          %v1279 = vpop.f32.mrf.mxu0
          %1280 = vmatprep.mubr.f32.mxu0 0.0
          %1281 = vmatmul.mubr.f32.gmra.mxu0 %v1155
          %v1282 = vpop.f32.mrf.mxu0
          %v1283 = vadd.f32 %v1130, %v1282
          %v1284 = vpop.f32.mrf.mxu0
          %1285 = vmatprep.mubr.f32.mxu0 0.0
          %1286 = vmatmul.mubr.f32.gmra.mxu0 %v1158
          %v1287 = vpop.f32.mrf.mxu0
          %v1288 = vadd.f32 %v1130, %v1287
          %v1289 = vpop.f32.mrf.mxu0
          %1290 = vmatprep.mubr.f32.mxu0 0.0
          %1291 = vmatmul.mubr.f32.gmra.mxu0 %v1161
          %v1292 = vpop.f32.mrf.mxu0
          %v1293 = vadd.f32 %v1130, %v1292
          %v1294 = vpop.f32.mrf.mxu0
          %1295 = vmatprep.mubr.f32.mxu0 0.0
          %1296 = vmatmul.mubr.f32.gmra.mxu0 %v1164
          %v1297 = vpop.f32.mrf.mxu0
          %v1298 = vadd.f32 %v1130, %v1297
          %v1299 = vpop.f32.mrf.mxu0
          %1300 = vmatprep.mubr.f32.mxu0 0.0
          %1301 = vmatmul.mubr.f32.gmra.mxu0 %v1167
          %v1302 = vpop.f32.mrf.mxu0
          %v1303 = vadd.f32 %v1130, %v1302
          %v1304 = vpop.f32.mrf.mxu0
          %1305 = vmatprep.mubr.f32.mxu0 0.0
          %1306 = vmatmul.mubr.f32.gmra.mxu0 %v1170
          %v1307 = vpop.f32.mrf.mxu0
          %v1308 = vadd.f32 %v1130, %v1307
          %v1309 = vpop.f32.mrf.mxu0
          %1310 = vmatprep.mubr.f32.mxu0 0.0
          %1311 = vmatmul.mubr.f32.gmra.mxu0 %v1173
          %v1312 = vpop.f32.mrf.mxu0
          %v1313 = vadd.f32 %v1130, %v1312
          %v1314 = vpop.f32.mrf.mxu0
          %1315 = vmatprep.mubr.f32.mxu0 0.0
          %1316 = vmatmul.mubr.f32.gmra.mxu0 %v1176
          %v1317 = vpop.f32.mrf.mxu0
          %v1318 = vadd.f32 %v1130, %v1317
          %v1319 = vpop.f32.mrf.mxu0
          %1320 = vmatprep.mubr.f32.mxu0 0.0
          %1321 = vmatmul.mubr.f32.gmra.mxu0 %v1179
          %v1322 = vpop.f32.mrf.mxu0
          %v1323 = vadd.f32 %v1130, %v1322
          %v1324 = vpop.f32.mrf.mxu0
          %1325 = vdwg.mxu0
          %vm1326 = vcmask 261120
          %1327 = vst.msk [vmem:[#allocation2] sm:$0xff] %vm1326, %v1248
          %1328 = vst.msk [vmem:[#allocation2 + $0x8] sm:$0xff] %vm1326, %v1253
          %1329 = vst.msk [vmem:[#allocation2 + $0x10] sm:$0xff] %vm1326, %v1258
          %1330 = vst.msk [vmem:[#allocation2 + $0x18] sm:$0xff] %vm1326, %v1263
          %1331 = vst.msk [vmem:[#allocation2 + $0x20] sm:$0xff] %vm1326, %v1268
          %1332 = vst.msk [vmem:[#allocation2 + $0x28] sm:$0xff] %vm1326, %v1273
          %1333 = vst.msk [vmem:[#allocation2 + $0x30] sm:$0xff] %vm1326, %v1278
          %1334 = vst.msk [vmem:[#allocation2 + $0x38] sm:$0xff] %vm1326, %v1283
          %1335 = vst.msk [vmem:[#allocation2 + $0x40] sm:$0xff] %vm1326, %v1288
          %1336 = vst.msk [vmem:[#allocation2 + $0x48] sm:$0xff] %vm1326, %v1293
          %1337 = vst.msk [vmem:[#allocation2 + $0x50] sm:$0xff] %vm1326, %v1298
          %1338 = vst.msk [vmem:[#allocation2 + $0x58] sm:$0xff] %vm1326, %v1303
          %1339 = vst.msk [vmem:[#allocation2 + $0x60] sm:$0xff] %vm1326, %v1308
          %1340 = vst.msk [vmem:[#allocation2 + $0x68] sm:$0xff] %vm1326, %v1313
          %1341 = vst.msk [vmem:[#allocation2 + $0x70] sm:$0xff] %vm1326, %v1318
          %1342 = vst.msk [vmem:[#allocation2 + $0x78] sm:$0xff] %vm1326, %v1323
        $region132: #{tpu_custom_call.1} parent=127 // pred_fallthru
          _
        %v1343 = vld [vmem:[#allocation2] sm:$0xff]
        %v1344 = vld [vmem:[#allocation2 + $0x8] sm:$0xff]
        %v1345 = vld [vmem:[#allocation2 + $0x10] sm:$0xff]
        %v1346 = vld [vmem:[#allocation2 + $0x18] sm:$0xff]
        %v1347 = vld [vmem:[#allocation2 + $0x20] sm:$0xff]
        %v1348 = vld [vmem:[#allocation2 + $0x28] sm:$0xff]
        %v1349 = vld [vmem:[#allocation2 + $0x30] sm:$0xff]
        %v1350 = vld [vmem:[#allocation2 + $0x38] sm:$0xff]
        %v1351 = vld [vmem:[#allocation2 + $0x40] sm:$0xff]
        %v1352 = vld [vmem:[#allocation2 + $0x48] sm:$0xff]
        %v1353 = vld [vmem:[#allocation2 + $0x50] sm:$0xff]
        %v1354 = vld [vmem:[#allocation2 + $0x58] sm:$0xff]
        %v1355 = vld [vmem:[#allocation2 + $0x60] sm:$0xff]
        %v1356 = vld [vmem:[#allocation2 + $0x68] sm:$0xff]
        %v1357 = vld [vmem:[#allocation2 + $0x70] sm:$0xff]
        %v1358 = vld [vmem:[#allocation2 + $0x78] sm:$0xff]
        %v1359 = vpack.c.bf16 %v1344, %v1343
        %v1360 = vpack.c.bf16 %v1346, %v1345
        %v1361 = vpack.c.bf16 %v1348, %v1347
        %v1362 = vpack.c.bf16 %v1350, %v1349
        %v1363 = vpack.c.bf16 %v1352, %v1351
        %v1364 = vpack.c.bf16 %v1354, %v1353
        %v1365 = vpack.c.bf16 %v1356, %v1355
        %v1366 = vpack.c.bf16 %v1358, %v1357
        %v1367 = vld [vmem:[%s990] sm:$0xff]
        %v1368 = vld [vmem:[%s990 + $0x8] sm:$0xff]
        %v1369 = vld [vmem:[%s990 + $0x10] sm:$0xff]
        %v1370 = vld [vmem:[%s990 + $0x18] sm:$0xff]
        %v1371 = vld [vmem:[%s990 + $0x20] sm:$0xff]
        %v1372 = vld [vmem:[%s990 + $0x28] sm:$0xff]
        %v1373 = vld [vmem:[%s990 + $0x30] sm:$0xff]
        %v1374 = vld [vmem:[%s990 + $0x38] sm:$0xff]
        %v1375 = vld [vmem:[%s990 + $0x40] sm:$0xff]
        %v1376 = vld [vmem:[%s990 + $0x48] sm:$0xff]
        %v1377 = vld [vmem:[%s990 + $0x50] sm:$0xff]
        %v1378 = vld [vmem:[%s990 + $0x58] sm:$0xff]
        %v1379 = vld [vmem:[%s994] sm:$0x3f]
        %v1381 = vlaneseq
        %v1382 = vshrl.u32 %v1381, 7
        %v1383 = vsub.s32 0, %v1382
        %v1384 = vrot.slane %v1379, %v1383
        %v1385 = vlaneseq
        %v1386 = vshrl.u32 %v1385, 7
        %v1387 = vsub.s32 1, %v1386
        %v1388 = vrot.slane %v1379, %v1387
        %v1389 = vlaneseq
        %v1390 = vshrl.u32 %v1389, 7
        %v1391 = vsub.s32 2, %v1390
        %v1392 = vrot.slane %v1379, %v1391
        %v1393 = vlaneseq
        %v1394 = vshrl.u32 %v1393, 7
        %v1395 = vsub.s32 3, %v1394
        %v1396 = vrot.slane %v1379, %v1395
        %v1397 = vlaneseq
        %v1398 = vshrl.u32 %v1397, 7
        %v1399 = vsub.s32 4, %v1398
        %v1400 = vrot.slane %v1379, %v1399
        %v1401 = vlaneseq
        %v1402 = vshrl.u32 %v1401, 7
        %v1403 = vsub.s32 5, %v1402
        %v1404 = vrot.slane %v1379, %v1403
        %v1423 = vunpack.c.l.b16 %v1367
        %v1424 = vunpack.c.h.b16 %v1367
        %v1425 = vunpack.c.l.b16 %v1368
        %v1426 = vunpack.c.h.b16 %v1368
        %v1427 = vunpack.c.l.b16 %v1369
        %v1428 = vunpack.c.h.b16 %v1369
        %v1429 = vunpack.c.l.b16 %v1370
        %v1430 = vunpack.c.h.b16 %v1370
        %v1431 = vunpack.c.l.b16 %v1371
        %v1432 = vunpack.c.h.b16 %v1371
        %v1433 = vunpack.c.l.b16 %v1372
        %v1434 = vunpack.c.h.b16 %v1372
        %v1435 = vunpack.c.l.b16 %v1373
        %v1436 = vunpack.c.h.b16 %v1373
        %v1437 = vunpack.c.l.b16 %v1374
        %v1438 = vunpack.c.h.b16 %v1374
        %v1439 = vunpack.c.l.b16 %v1375
        %v1440 = vunpack.c.h.b16 %v1375
        %v1441 = vunpack.c.l.b16 %v1376
        %v1442 = vunpack.c.h.b16 %v1376
        %v1443 = vunpack.c.l.b16 %v1377
        %v1444 = vunpack.c.h.b16 %v1377
        %v1445 = vunpack.c.l.b16 %v1378
        %v1446 = vunpack.c.h.b16 %v1378
        %v1447 = vpack.c.b16 %v1429, %v1423
        %v1448 = vpack.c.b16 %v1430, %v1424
        %v1449 = vpack.c.b16 %v1431, %v1425
        %v1450 = vpack.c.b16 %v1432, %v1426
        %v1451 = vpack.c.b16 %v1433, %v1427
        %v1452 = vpack.c.b16 %v1434, %v1428
        %v1453 = vpack.c.b16 %v1441, %v1435
        %v1454 = vpack.c.b16 %v1442, %v1436
        %v1455 = vpack.c.b16 %v1443, %v1437
        %v1456 = vpack.c.b16 %v1444, %v1438
        %v1457 = vpack.c.b16 %v1445, %v1439
        %v1458 = vpack.c.b16 %v1446, %v1440
        %vm1471 = vcmask 261120
        %v1473 = vsel %vm1471, %v1359, 0
        %v1476 = vsel %vm1471, %v1360, 0
        %v1479 = vsel %vm1471, %v1361, 0
        %v1482 = vsel %vm1471, %v1362, 0
        %v1485 = vsel %vm1471, %v1363, 0
        %v1488 = vsel %vm1471, %v1364, 0
        %v1491 = vsel %vm1471, %v1365, 0
        %v1494 = vsel %vm1471, %v1366, 0
        %1496 = vmatprep.subr.bf16.mxu0 0
        %1497 = vmatpush1.bf16.msra.mxu0 0
        %1498 = vmatprep.subr.bf16.mxu0 0
        %1499 = vmatpush1.bf16.msra.mxu0 0
        %1500 = vmatprep.subr.bf16.mxu0 0
        %1501 = vmatpush1.bf16.msra.mxu0 0
        %1502 = vmatprep.subr.bf16.mxu0 0
        %1503 = vmatpush1.bf16.msra.mxu0 0
        %1504 = vmatprep.subr.bf16.mxu0 0
        %1505 = vmatpush1.bf16.msra.mxu0 0
        %1506 = vmatprep.subr.bf16.mxu0 0
        %1507 = vmatpush1.bf16.msra.mxu0 0
        %1508 = vmatprep.subr.bf16.mxu0 %v1454
        %1509 = vmatpush1.bf16.msra.mxu0 %v1453
        %1510 = vmatprep.subr.bf16.mxu0 %v1448
        %1511 = vmatpush1.bf16.msra.mxu0 %v1447
        %1512 = vmatprep.subr.bf16.mxu0 0
        %1513 = vmatpush2.bf16.msra.mxu0 0
        %1514 = vmatprep.subr.bf16.mxu0 0
        %1515 = vmatpush2.bf16.msra.mxu0 0
        %1516 = vmatprep.subr.bf16.mxu0 0
        %1517 = vmatpush2.bf16.msra.mxu0 0
        %1518 = vmatprep.subr.bf16.mxu0 0
        %1519 = vmatpush2.bf16.msra.mxu0 0
        %1520 = vmatprep.subr.bf16.mxu0 0
        %1521 = vmatpush2.bf16.msra.mxu0 0
        %1522 = vmatprep.subr.bf16.mxu0 0
        %1523 = vmatpush2.bf16.msra.mxu0 0
        %1524 = vmatprep.subr.bf16.mxu0 0
        %1525 = vmatpush2.bf16.msra.mxu0 0
        %1526 = vmatprep.subr.bf16.mxu0 0
        %1527 = vmatpush2.bf16.msra.mxu0 0
        %1528 = vmatprep.mubr.bf16.mxu0 0
        %1529 = vmatmul.mubr.bf16.gmra.mxu0 %v1473
        %v1530 = vpop.f32.mrf.mxu0
        %v1531 = vadd.f32 %v1384, %v1530
        %v1532 = vpop.f32.mrf.mxu0
        %v1533 = vadd.f32 %v1388, %v1532
        %v1534 = vpop.f32.mrf.mxu0
        %v1535 = vadd.f32 %v1384, %v1534
        %v1536 = vpop.f32.mrf.mxu0
        %v1537 = vadd.f32 %v1388, %v1536
        %1538 = vmatprep.mubr.bf16.mxu0 0
        %1539 = vmatmul.mubr.bf16.gmra.mxu0 %v1476
        %v1540 = vpop.f32.mrf.mxu0
        %v1541 = vadd.f32 %v1384, %v1540
        %v1542 = vpop.f32.mrf.mxu0
        %v1543 = vadd.f32 %v1388, %v1542
        %v1544 = vpop.f32.mrf.mxu0
        %v1545 = vadd.f32 %v1384, %v1544
        %v1546 = vpop.f32.mrf.mxu0
        %v1547 = vadd.f32 %v1388, %v1546
        %1548 = vmatprep.mubr.bf16.mxu0 0
        %1549 = vmatmul.mubr.bf16.gmra.mxu0 %v1479
        %v1550 = vpop.f32.mrf.mxu0
        %v1551 = vadd.f32 %v1384, %v1550
        %v1552 = vpop.f32.mrf.mxu0
        %v1553 = vadd.f32 %v1388, %v1552
        %v1554 = vpop.f32.mrf.mxu0
        %v1555 = vadd.f32 %v1384, %v1554
        %v1556 = vpop.f32.mrf.mxu0
        %v1557 = vadd.f32 %v1388, %v1556
        %1558 = vmatprep.mubr.bf16.mxu0 0
        %1559 = vmatmul.mubr.bf16.gmra.mxu0 %v1482
        %v1560 = vpop.f32.mrf.mxu0
        %v1561 = vadd.f32 %v1384, %v1560
        %v1562 = vpop.f32.mrf.mxu0
        %v1563 = vadd.f32 %v1388, %v1562
        %v1564 = vpop.f32.mrf.mxu0
        %v1565 = vadd.f32 %v1384, %v1564
        %v1566 = vpop.f32.mrf.mxu0
        %v1567 = vadd.f32 %v1388, %v1566
        %1568 = vmatprep.mubr.bf16.mxu0 0
        %1569 = vmatmul.mubr.bf16.gmra.mxu0 %v1485
        %v1570 = vpop.f32.mrf.mxu0
        %v1571 = vadd.f32 %v1384, %v1570
        %v1572 = vpop.f32.mrf.mxu0
        %v1573 = vadd.f32 %v1388, %v1572
        %v1574 = vpop.f32.mrf.mxu0
        %v1575 = vadd.f32 %v1384, %v1574
        %v1576 = vpop.f32.mrf.mxu0
        %v1577 = vadd.f32 %v1388, %v1576
        %1578 = vmatprep.mubr.bf16.mxu0 0
        %1579 = vmatmul.mubr.bf16.gmra.mxu0 %v1488
        %v1580 = vpop.f32.mrf.mxu0
        %v1581 = vadd.f32 %v1384, %v1580
        %v1582 = vpop.f32.mrf.mxu0
        %v1583 = vadd.f32 %v1388, %v1582
        %v1584 = vpop.f32.mrf.mxu0
        %v1585 = vadd.f32 %v1384, %v1584
        %v1586 = vpop.f32.mrf.mxu0
        %v1587 = vadd.f32 %v1388, %v1586
        %1588 = vmatprep.mubr.bf16.mxu0 0
        %1589 = vmatmul.mubr.bf16.gmra.mxu0 %v1491
        %v1590 = vpop.f32.mrf.mxu0
        %v1591 = vadd.f32 %v1384, %v1590
        %v1592 = vpop.f32.mrf.mxu0
        %v1593 = vadd.f32 %v1388, %v1592
        %v1594 = vpop.f32.mrf.mxu0
        %v1595 = vadd.f32 %v1384, %v1594
        %v1596 = vpop.f32.mrf.mxu0
        %v1597 = vadd.f32 %v1388, %v1596
        %1598 = vmatprep.mubr.bf16.mxu0 0
        %1599 = vmatmul.mubr.bf16.gmra.mxu0 %v1494
        %v1600 = vpop.f32.mrf.mxu0
        %v1601 = vadd.f32 %v1384, %v1600
        %v1602 = vpop.f32.mrf.mxu0
        %v1603 = vadd.f32 %v1388, %v1602
        %v1604 = vpop.f32.mrf.mxu0
        %v1605 = vadd.f32 %v1384, %v1604
        %v1606 = vpop.f32.mrf.mxu0
        %v1607 = vadd.f32 %v1388, %v1606
        %1608 = vdwg.mxu0
        %1609 = vmatprep.subr.bf16.mxu0 0
        %1610 = vmatpush1.bf16.msra.mxu0 0
        %1611 = vmatprep.subr.bf16.mxu0 0
        %1612 = vmatpush1.bf16.msra.mxu0 0
        %1613 = vmatprep.subr.bf16.mxu0 0
        %1614 = vmatpush1.bf16.msra.mxu0 0
        %1615 = vmatprep.subr.bf16.mxu0 0
        %1616 = vmatpush1.bf16.msra.mxu0 0
        %1617 = vmatprep.subr.bf16.mxu0 0
        %1618 = vmatpush1.bf16.msra.mxu0 0
        %1619 = vmatprep.subr.bf16.mxu0 0
        %1620 = vmatpush1.bf16.msra.mxu0 0
        %1621 = vmatprep.subr.bf16.mxu0 %v1456
        %1622 = vmatpush1.bf16.msra.mxu0 %v1455
        %1623 = vmatprep.subr.bf16.mxu0 %v1450
        %1624 = vmatpush1.bf16.msra.mxu0 %v1449
        %1625 = vmatprep.subr.bf16.mxu0 0
        %1626 = vmatpush2.bf16.msra.mxu0 0
        %1627 = vmatprep.subr.bf16.mxu0 0
        %1628 = vmatpush2.bf16.msra.mxu0 0
        %1629 = vmatprep.subr.bf16.mxu0 0
        %1630 = vmatpush2.bf16.msra.mxu0 0
        %1631 = vmatprep.subr.bf16.mxu0 0
        %1632 = vmatpush2.bf16.msra.mxu0 0
        %1633 = vmatprep.subr.bf16.mxu0 0
        %1634 = vmatpush2.bf16.msra.mxu0 0
        %1635 = vmatprep.subr.bf16.mxu0 0
        %1636 = vmatpush2.bf16.msra.mxu0 0
        %1637 = vmatprep.subr.bf16.mxu0 0
        %1638 = vmatpush2.bf16.msra.mxu0 0
        %1639 = vmatprep.subr.bf16.mxu0 0
        %1640 = vmatpush2.bf16.msra.mxu0 0
        %1641 = vmatprep.mubr.bf16.mxu0 0
        %1642 = vmatmul.mubr.bf16.gmra.mxu0 %v1473
        %v1643 = vpop.f32.mrf.mxu0
        %v1644 = vadd.f32 %v1392, %v1643
        %v1645 = vpop.f32.mrf.mxu0
        %v1646 = vadd.f32 %v1396, %v1645
        %v1647 = vpop.f32.mrf.mxu0
        %v1648 = vadd.f32 %v1392, %v1647
        %v1649 = vpop.f32.mrf.mxu0
        %v1650 = vadd.f32 %v1396, %v1649
        %1651 = vmatprep.mubr.bf16.mxu0 0
        %1652 = vmatmul.mubr.bf16.gmra.mxu0 %v1476
        %v1653 = vpop.f32.mrf.mxu0
        %v1654 = vadd.f32 %v1392, %v1653
        %v1655 = vpop.f32.mrf.mxu0
        %v1656 = vadd.f32 %v1396, %v1655
        %v1657 = vpop.f32.mrf.mxu0
        %v1658 = vadd.f32 %v1392, %v1657
        %v1659 = vpop.f32.mrf.mxu0
        %v1660 = vadd.f32 %v1396, %v1659
        %1661 = vmatprep.mubr.bf16.mxu0 0
        %1662 = vmatmul.mubr.bf16.gmra.mxu0 %v1479
        %v1663 = vpop.f32.mrf.mxu0
        %v1664 = vadd.f32 %v1392, %v1663
        %v1665 = vpop.f32.mrf.mxu0
        %v1666 = vadd.f32 %v1396, %v1665
        %v1667 = vpop.f32.mrf.mxu0
        %v1668 = vadd.f32 %v1392, %v1667
        %v1669 = vpop.f32.mrf.mxu0
        %v1670 = vadd.f32 %v1396, %v1669
        %1671 = vmatprep.mubr.bf16.mxu0 0
        %1672 = vmatmul.mubr.bf16.gmra.mxu0 %v1482
        %v1673 = vpop.f32.mrf.mxu0
        %v1674 = vadd.f32 %v1392, %v1673
        %v1675 = vpop.f32.mrf.mxu0
        %v1676 = vadd.f32 %v1396, %v1675
        %v1677 = vpop.f32.mrf.mxu0
        %v1678 = vadd.f32 %v1392, %v1677
        %v1679 = vpop.f32.mrf.mxu0
        %v1680 = vadd.f32 %v1396, %v1679
        %1681 = vmatprep.mubr.bf16.mxu0 0
        %1682 = vmatmul.mubr.bf16.gmra.mxu0 %v1485
        %v1683 = vpop.f32.mrf.mxu0
        %v1684 = vadd.f32 %v1392, %v1683
        %v1685 = vpop.f32.mrf.mxu0
        %v1686 = vadd.f32 %v1396, %v1685
        %v1687 = vpop.f32.mrf.mxu0
        %v1688 = vadd.f32 %v1392, %v1687
        %v1689 = vpop.f32.mrf.mxu0
        %v1690 = vadd.f32 %v1396, %v1689
        %1691 = vmatprep.mubr.bf16.mxu0 0
        %1692 = vmatmul.mubr.bf16.gmra.mxu0 %v1488
        %v1693 = vpop.f32.mrf.mxu0
        %v1694 = vadd.f32 %v1392, %v1693
        %v1695 = vpop.f32.mrf.mxu0
        %v1696 = vadd.f32 %v1396, %v1695
        %v1697 = vpop.f32.mrf.mxu0
        %v1698 = vadd.f32 %v1392, %v1697
        %v1699 = vpop.f32.mrf.mxu0
        %v1700 = vadd.f32 %v1396, %v1699
        %1701 = vmatprep.mubr.bf16.mxu0 0
        %1702 = vmatmul.mubr.bf16.gmra.mxu0 %v1491
        %v1703 = vpop.f32.mrf.mxu0
        %v1704 = vadd.f32 %v1392, %v1703
        %v1705 = vpop.f32.mrf.mxu0
        %v1706 = vadd.f32 %v1396, %v1705
        %v1707 = vpop.f32.mrf.mxu0
        %v1708 = vadd.f32 %v1392, %v1707
        %v1709 = vpop.f32.mrf.mxu0
        %v1710 = vadd.f32 %v1396, %v1709
        %1711 = vmatprep.mubr.bf16.mxu0 0
        %1712 = vmatmul.mubr.bf16.gmra.mxu0 %v1494
        %v1713 = vpop.f32.mrf.mxu0
        %v1714 = vadd.f32 %v1392, %v1713
        %v1715 = vpop.f32.mrf.mxu0
        %v1716 = vadd.f32 %v1396, %v1715
        %v1717 = vpop.f32.mrf.mxu0
        %v1718 = vadd.f32 %v1392, %v1717
        %v1719 = vpop.f32.mrf.mxu0
        %v1720 = vadd.f32 %v1396, %v1719
        %1721 = vdwg.mxu0
        %1722 = vmatprep.subr.bf16.mxu0 0
        %1723 = vmatpush1.bf16.msra.mxu0 0
        %1724 = vmatprep.subr.bf16.mxu0 0
        %1725 = vmatpush1.bf16.msra.mxu0 0
        %1726 = vmatprep.subr.bf16.mxu0 0
        %1727 = vmatpush1.bf16.msra.mxu0 0
        %1728 = vmatprep.subr.bf16.mxu0 0
        %1729 = vmatpush1.bf16.msra.mxu0 0
        %1730 = vmatprep.subr.bf16.mxu0 0
        %1731 = vmatpush1.bf16.msra.mxu0 0
        %1732 = vmatprep.subr.bf16.mxu0 0
        %1733 = vmatpush1.bf16.msra.mxu0 0
        %1734 = vmatprep.subr.bf16.mxu0 %v1458
        %1735 = vmatpush1.bf16.msra.mxu0 %v1457
        %1736 = vmatprep.subr.bf16.mxu0 %v1452
        %1737 = vmatpush1.bf16.msra.mxu0 %v1451
        %1738 = vmatprep.subr.bf16.mxu0 0
        %1739 = vmatpush2.bf16.msra.mxu0 0
        %1740 = vmatprep.subr.bf16.mxu0 0
        %1741 = vmatpush2.bf16.msra.mxu0 0
        %1742 = vmatprep.subr.bf16.mxu0 0
        %1743 = vmatpush2.bf16.msra.mxu0 0
        %1744 = vmatprep.subr.bf16.mxu0 0
        %1745 = vmatpush2.bf16.msra.mxu0 0
        %1746 = vmatprep.subr.bf16.mxu0 0
        %1747 = vmatpush2.bf16.msra.mxu0 0
        %1748 = vmatprep.subr.bf16.mxu0 0
        %1749 = vmatpush2.bf16.msra.mxu0 0
        %1750 = vmatprep.subr.bf16.mxu0 0
        %1751 = vmatpush2.bf16.msra.mxu0 0
        %1752 = vmatprep.subr.bf16.mxu0 0
        %1753 = vmatpush2.bf16.msra.mxu0 0
        %1754 = vmatprep.mubr.bf16.mxu0 0
        %1755 = vmatmul.mubr.bf16.gmra.mxu0 %v1473
        %v1756 = vpop.f32.mrf.mxu0
        %v1757 = vadd.f32 %v1400, %v1756
        %v1758 = vpop.f32.mrf.mxu0
        %v1759 = vadd.f32 %v1404, %v1758
        %v1760 = vpop.f32.mrf.mxu0
        %v1761 = vadd.f32 %v1400, %v1760
        %v1762 = vpop.f32.mrf.mxu0
        %v1763 = vadd.f32 %v1404, %v1762
        %1764 = vmatprep.mubr.bf16.mxu0 0
        %1765 = vmatmul.mubr.bf16.gmra.mxu0 %v1476
        %v1766 = vpop.f32.mrf.mxu0
        %v1767 = vadd.f32 %v1400, %v1766
        %v1768 = vpop.f32.mrf.mxu0
        %v1769 = vadd.f32 %v1404, %v1768
        %v1770 = vpop.f32.mrf.mxu0
        %v1771 = vadd.f32 %v1400, %v1770
        %v1772 = vpop.f32.mrf.mxu0
        %v1773 = vadd.f32 %v1404, %v1772
        %1774 = vmatprep.mubr.bf16.mxu0 0
        %1775 = vmatmul.mubr.bf16.gmra.mxu0 %v1479
        %v1776 = vpop.f32.mrf.mxu0
        %v1777 = vadd.f32 %v1400, %v1776
        %v1778 = vpop.f32.mrf.mxu0
        %v1779 = vadd.f32 %v1404, %v1778
        %v1780 = vpop.f32.mrf.mxu0
        %v1781 = vadd.f32 %v1400, %v1780
        %v1782 = vpop.f32.mrf.mxu0
        %v1783 = vadd.f32 %v1404, %v1782
        %1784 = vmatprep.mubr.bf16.mxu0 0
        %1785 = vmatmul.mubr.bf16.gmra.mxu0 %v1482
        %v1786 = vpop.f32.mrf.mxu0
        %v1787 = vadd.f32 %v1400, %v1786
        %v1788 = vpop.f32.mrf.mxu0
        %v1789 = vadd.f32 %v1404, %v1788
        %v1790 = vpop.f32.mrf.mxu0
        %v1791 = vadd.f32 %v1400, %v1790
        %v1792 = vpop.f32.mrf.mxu0
        %v1793 = vadd.f32 %v1404, %v1792
        %1794 = vmatprep.mubr.bf16.mxu0 0
        %1795 = vmatmul.mubr.bf16.gmra.mxu0 %v1485
        %v1796 = vpop.f32.mrf.mxu0
        %v1797 = vadd.f32 %v1400, %v1796
        %v1798 = vpop.f32.mrf.mxu0
        %v1799 = vadd.f32 %v1404, %v1798
        %v1800 = vpop.f32.mrf.mxu0
        %v1801 = vadd.f32 %v1400, %v1800
        %v1802 = vpop.f32.mrf.mxu0
        %v1803 = vadd.f32 %v1404, %v1802
        %1804 = vmatprep.mubr.bf16.mxu0 0
        %1805 = vmatmul.mubr.bf16.gmra.mxu0 %v1488
        %v1806 = vpop.f32.mrf.mxu0
        %v1807 = vadd.f32 %v1400, %v1806
        %v1808 = vpop.f32.mrf.mxu0
        %v1809 = vadd.f32 %v1404, %v1808
        %v1810 = vpop.f32.mrf.mxu0
        %v1811 = vadd.f32 %v1400, %v1810
        %v1812 = vpop.f32.mrf.mxu0
        %v1813 = vadd.f32 %v1404, %v1812
        %1814 = vmatprep.mubr.bf16.mxu0 0
        %1815 = vmatmul.mubr.bf16.gmra.mxu0 %v1491
        %v1816 = vpop.f32.mrf.mxu0
        %v1817 = vadd.f32 %v1400, %v1816
        %v1818 = vpop.f32.mrf.mxu0
        %v1819 = vadd.f32 %v1404, %v1818
        %v1820 = vpop.f32.mrf.mxu0
        %v1821 = vadd.f32 %v1400, %v1820
        %v1822 = vpop.f32.mrf.mxu0
        %v1823 = vadd.f32 %v1404, %v1822
        %1824 = vmatprep.mubr.bf16.mxu0 0
        %1825 = vmatmul.mubr.bf16.gmra.mxu0 %v1494
        %v1826 = vpop.f32.mrf.mxu0
        %v1827 = vadd.f32 %v1400, %v1826
        %v1828 = vpop.f32.mrf.mxu0
        %v1829 = vadd.f32 %v1404, %v1828
        %v1830 = vpop.f32.mrf.mxu0
        %v1831 = vadd.f32 %v1400, %v1830
        %v1832 = vpop.f32.mrf.mxu0
        %v1833 = vadd.f32 %v1404, %v1832
        %1834 = vdwg.mxu0
        %v1835 = vmul.f32 %v1531, 0.25
        %v1836 = vmul.f32 %v1535, 0.25
        %v1837 = vmul.f32 %v1541, 0.25
        %v1838 = vmul.f32 %v1545, 0.25
        %v1839 = vmul.f32 %v1551, 0.25
        %v1840 = vmul.f32 %v1555, 0.25
        %v1841 = vmul.f32 %v1561, 0.25
        %v1842 = vmul.f32 %v1565, 0.25
        %v1843 = vmul.f32 %v1571, 0.25
        %v1844 = vmul.f32 %v1575, 0.25
        %v1845 = vmul.f32 %v1581, 0.25
        %v1846 = vmul.f32 %v1585, 0.25
        %v1847 = vmul.f32 %v1591, 0.25
        %v1848 = vmul.f32 %v1595, 0.25
        %v1849 = vmul.f32 %v1601, 0.25
        %v1850 = vmul.f32 %v1605, 0.25
        %v1851 = vpack.c.bf16 %v1836, %v1835
        %v1852 = vpack.c.bf16 %v1838, %v1837
        %v1853 = vpack.c.bf16 %v1840, %v1839
        %v1854 = vpack.c.bf16 %v1842, %v1841
        %v1855 = vpack.c.bf16 %v1844, %v1843
        %v1856 = vpack.c.bf16 %v1846, %v1845
        %v1857 = vpack.c.bf16 %v1848, %v1847
        %v1858 = vpack.c.bf16 %v1850, %v1849
        %v1859 = vpack.c.bf16 %v1537, %v1533
        %v1860 = vpack.c.bf16 %v1547, %v1543
        %v1861 = vpack.c.bf16 %v1557, %v1553
        %v1862 = vpack.c.bf16 %v1567, %v1563
        %v1863 = vpack.c.bf16 %v1577, %v1573
        %v1864 = vpack.c.bf16 %v1587, %v1583
        %v1865 = vpack.c.bf16 %v1597, %v1593
        %v1866 = vpack.c.bf16 %v1607, %v1603
        %1867 = vmatprep.subr.bf16.mxu0 0
        %1868 = vmatpush1.bf16.xpose.msra.mxu0 %v1866
        %1869 = vmatprep.subr.bf16.mxu0 0
        %1870 = vmatpush1.bf16.xpose.msra.mxu0 %v1865
        %1871 = vmatprep.subr.bf16.mxu0 0
        %1872 = vmatpush1.bf16.xpose.msra.mxu0 %v1864
        %1873 = vmatprep.subr.bf16.mxu0 0
        %1874 = vmatpush1.bf16.xpose.msra.mxu0 %v1863
        %1875 = vmatprep.subr.bf16.mxu0 0
        %1876 = vmatpush1.bf16.xpose.msra.mxu0 %v1862
        %1877 = vmatprep.subr.bf16.mxu0 0
        %1878 = vmatpush1.bf16.xpose.msra.mxu0 %v1861
        %1879 = vmatprep.subr.bf16.mxu0 0
        %1880 = vmatpush1.bf16.xpose.msra.mxu0 %v1860
        %1881 = vmatprep.subr.bf16.mxu0 0
        %1882 = vmatpush1.bf16.xpose.msra.mxu0 %v1859
        %1883 = vmatprep.subr.bf16.mxu0 0
        %1884 = vmatpush2.bf16.xpose.msra.mxu0 0
        %1885 = vmatprep.subr.bf16.mxu0 0
        %1886 = vmatpush2.bf16.xpose.msra.mxu0 0
        %1887 = vmatprep.subr.bf16.mxu0 0
        %1888 = vmatpush2.bf16.xpose.msra.mxu0 0
        %1889 = vmatprep.subr.bf16.mxu0 0
        %1890 = vmatpush2.bf16.xpose.msra.mxu0 0
        %1891 = vmatprep.subr.bf16.mxu0 0
        %1892 = vmatpush2.bf16.xpose.msra.mxu0 0
        %1893 = vmatprep.subr.bf16.mxu0 0
        %1894 = vmatpush2.bf16.xpose.msra.mxu0 0
        %1895 = vmatprep.subr.bf16.mxu0 0
        %1896 = vmatpush2.bf16.xpose.msra.mxu0 0
        %1897 = vmatprep.subr.bf16.mxu0 0
        %1898 = vmatpush2.bf16.xpose.msra.mxu0 0
        %1899 = vmatprep.mubr.bf16.mxu0 0
        %1900 = vmatmul.mubr.bf16.gmra.mxu0 %v1851
        %v1901 = vpop.f32.mrf.mxu0
        %v1902 = vadd.f32 %v1102, %v1901
        %v1903 = vpop.f32.mrf.mxu0
        %v1904 = vpop.f32.mrf.mxu0
        %v1905 = vadd.f32 %v1102, %v1904
        %v1906 = vpop.f32.mrf.mxu0
        %1907 = vmatprep.mubr.bf16.mxu0 0
        %1908 = vmatmul.mubr.bf16.gmra.mxu0 %v1852
        %v1909 = vpop.f32.mrf.mxu0
        %v1910 = vadd.f32 %v1102, %v1909
        %v1911 = vpop.f32.mrf.mxu0
        %v1912 = vpop.f32.mrf.mxu0
        %v1913 = vadd.f32 %v1102, %v1912
        %v1914 = vpop.f32.mrf.mxu0
        %1915 = vmatprep.mubr.bf16.mxu0 0
        %1916 = vmatmul.mubr.bf16.gmra.mxu0 %v1853
        %v1917 = vpop.f32.mrf.mxu0
        %v1918 = vadd.f32 %v1102, %v1917
        %v1919 = vpop.f32.mrf.mxu0
        %v1920 = vpop.f32.mrf.mxu0
        %v1921 = vadd.f32 %v1102, %v1920
        %v1922 = vpop.f32.mrf.mxu0
        %1923 = vmatprep.mubr.bf16.mxu0 0
        %1924 = vmatmul.mubr.bf16.gmra.mxu0 %v1854
        %v1925 = vpop.f32.mrf.mxu0
        %v1926 = vadd.f32 %v1102, %v1925
        %v1927 = vpop.f32.mrf.mxu0
        %v1928 = vpop.f32.mrf.mxu0
        %v1929 = vadd.f32 %v1102, %v1928
        %v1930 = vpop.f32.mrf.mxu0
        %1931 = vmatprep.mubr.bf16.mxu0 0
        %1932 = vmatmul.mubr.bf16.gmra.mxu0 %v1855
        %v1933 = vpop.f32.mrf.mxu0
        %v1934 = vadd.f32 %v1102, %v1933
        %v1935 = vpop.f32.mrf.mxu0
        %v1936 = vpop.f32.mrf.mxu0
        %v1937 = vadd.f32 %v1102, %v1936
        %v1938 = vpop.f32.mrf.mxu0
        %1939 = vmatprep.mubr.bf16.mxu0 0
        %1940 = vmatmul.mubr.bf16.gmra.mxu0 %v1856
        %v1941 = vpop.f32.mrf.mxu0
        %v1942 = vadd.f32 %v1102, %v1941
        %v1943 = vpop.f32.mrf.mxu0
        %v1944 = vpop.f32.mrf.mxu0
        %v1945 = vadd.f32 %v1102, %v1944
        %v1946 = vpop.f32.mrf.mxu0
        %1947 = vmatprep.mubr.bf16.mxu0 0
        %1948 = vmatmul.mubr.bf16.gmra.mxu0 %v1857
        %v1949 = vpop.f32.mrf.mxu0
        %v1950 = vadd.f32 %v1102, %v1949
        %v1951 = vpop.f32.mrf.mxu0
        %v1952 = vpop.f32.mrf.mxu0
        %v1953 = vadd.f32 %v1102, %v1952
        %v1954 = vpop.f32.mrf.mxu0
        %1955 = vmatprep.mubr.bf16.mxu0 0
        %1956 = vmatmul.mubr.bf16.gmra.mxu0 %v1858
        %v1957 = vpop.f32.mrf.mxu0
        %v1958 = vadd.f32 %v1102, %v1957
        %v1959 = vpop.f32.mrf.mxu0
        %v1960 = vpop.f32.mrf.mxu0
        %v1961 = vadd.f32 %v1102, %v1960
        %v1962 = vpop.f32.mrf.mxu0
        %1963 = vdwg.mxu0
        %1964 = vmax.xlane.f32.xlu0 %v1902
        %v1965 = vpop.xlane.xlu0 %1964
        %1966 = vmax.xlane.f32.xlu0 %v1905
        %v1967 = vpop.xlane.xlu0 %1966
        %1968 = vmax.xlane.f32.xlu0 %v1910
        %v1969 = vpop.xlane.xlu0 %1968
        %1970 = vmax.xlane.f32.xlu0 %v1913
        %v1971 = vpop.xlane.xlu0 %1970
        %1972 = vmax.xlane.f32.xlu0 %v1918
        %v1973 = vpop.xlane.xlu0 %1972
        %1974 = vmax.xlane.f32.xlu0 %v1921
        %v1975 = vpop.xlane.xlu0 %1974
        %1976 = vmax.xlane.f32.xlu0 %v1926
        %v1977 = vpop.xlane.xlu0 %1976
        %1978 = vmax.xlane.f32.xlu0 %v1929
        %v1979 = vpop.xlane.xlu0 %1978
        %1980 = vmax.xlane.f32.xlu0 %v1934
        %v1981 = vpop.xlane.xlu0 %1980
        %1982 = vmax.xlane.f32.xlu0 %v1937
        %v1983 = vpop.xlane.xlu0 %1982
        %1984 = vmax.xlane.f32.xlu0 %v1942
        %v1985 = vpop.xlane.xlu0 %1984
        %1986 = vmax.xlane.f32.xlu0 %v1945
        %v1987 = vpop.xlane.xlu0 %1986
        %1988 = vmax.xlane.f32.xlu0 %v1950
        %v1989 = vpop.xlane.xlu0 %1988
        %1990 = vmax.xlane.f32.xlu0 %v1953
        %v1991 = vpop.xlane.xlu0 %1990
        %1992 = vmax.xlane.f32.xlu0 %v1958
        %v1993 = vpop.xlane.xlu0 %1992
        %1994 = vmax.xlane.f32.xlu0 %v1961
        %v1995 = vpop.xlane.xlu0 %1994
        %v1996 = vsub.f32 %v1902, %v1965
        %v1997 = vsub.f32 %v1905, %v1967
        %v1998 = vsub.f32 %v1910, %v1969
        %v1999 = vsub.f32 %v1913, %v1971
        %v2000 = vsub.f32 %v1918, %v1973
        %v2001 = vsub.f32 %v1921, %v1975
        %v2002 = vsub.f32 %v1926, %v1977
        %v2003 = vsub.f32 %v1929, %v1979
        %v2004 = vsub.f32 %v1934, %v1981
        %v2005 = vsub.f32 %v1937, %v1983
        %v2006 = vsub.f32 %v1942, %v1985
        %v2007 = vsub.f32 %v1945, %v1987
        %v2008 = vsub.f32 %v1950, %v1989
        %v2009 = vsub.f32 %v1953, %v1991
        %v2010 = vsub.f32 %v1958, %v1993
        %v2011 = vsub.f32 %v1961, %v1995
        %v2012 = vmul.f32 %v1996, 1.442695
        %v2013 = vpow.pop %v2012
        %v2014 = vmul.f32 %v1997, 1.442695
        %v2015 = vpow.pop %v2014
        %v2016 = vmul.f32 %v1998, 1.442695
        %v2017 = vpow.pop %v2016
        %v2018 = vmul.f32 %v1999, 1.442695
        %v2019 = vpow.pop %v2018
        %v2020 = vmul.f32 %v2000, 1.442695
        %v2021 = vpow.pop %v2020
        %v2022 = vmul.f32 %v2001, 1.442695
        %v2023 = vpow.pop %v2022
        %v2024 = vmul.f32 %v2002, 1.442695
        %v2025 = vpow.pop %v2024
        %v2026 = vmul.f32 %v2003, 1.442695
        %v2027 = vpow.pop %v2026
        %v2028 = vmul.f32 %v2004, 1.442695
        %v2029 = vpow.pop %v2028
        %v2030 = vmul.f32 %v2005, 1.442695
        %v2031 = vpow.pop %v2030
        %v2032 = vmul.f32 %v2006, 1.442695
        %v2033 = vpow.pop %v2032
        %v2034 = vmul.f32 %v2007, 1.442695
        %v2035 = vpow.pop %v2034
        %v2036 = vmul.f32 %v2008, 1.442695
        %v2037 = vpow.pop %v2036
        %v2038 = vmul.f32 %v2009, 1.442695
        %v2039 = vpow.pop %v2038
        %v2040 = vmul.f32 %v2010, 1.442695
        %v2041 = vpow.pop %v2040
        %v2042 = vmul.f32 %v2011, 1.442695
        %v2043 = vpow.pop %v2042
        %2044 = vadd.xlane.f32.xlu0 %v2013
        %v2045 = vpop.xlane.xlu0 %2044
        %2046 = vadd.xlane.f32.xlu0 %v2015
        %v2047 = vpop.xlane.xlu0 %2046
        %2048 = vadd.xlane.f32.xlu0 %v2017
        %v2049 = vpop.xlane.xlu0 %2048
        %2050 = vadd.xlane.f32.xlu0 %v2019
        %v2051 = vpop.xlane.xlu0 %2050
        %2052 = vadd.xlane.f32.xlu0 %v2021
        %v2053 = vpop.xlane.xlu0 %2052
        %2054 = vadd.xlane.f32.xlu0 %v2023
        %v2055 = vpop.xlane.xlu0 %2054
        %2056 = vadd.xlane.f32.xlu0 %v2025
        %v2057 = vpop.xlane.xlu0 %2056
        %2058 = vadd.xlane.f32.xlu0 %v2027
        %v2059 = vpop.xlane.xlu0 %2058
        %2060 = vadd.xlane.f32.xlu0 %v2029
        %v2061 = vpop.xlane.xlu0 %2060
        %2062 = vadd.xlane.f32.xlu0 %v2031
        %v2063 = vpop.xlane.xlu0 %2062
        %2064 = vadd.xlane.f32.xlu0 %v2033
        %v2065 = vpop.xlane.xlu0 %2064
        %2066 = vadd.xlane.f32.xlu0 %v2035
        %v2067 = vpop.xlane.xlu0 %2066
        %2068 = vadd.xlane.f32.xlu0 %v2037
        %v2069 = vpop.xlane.xlu0 %2068
        %2070 = vadd.xlane.f32.xlu0 %v2039
        %v2071 = vpop.xlane.xlu0 %2070
        %2072 = vadd.xlane.f32.xlu0 %v2041
        %v2073 = vpop.xlane.xlu0 %2072
        %2074 = vadd.xlane.f32.xlu0 %v2043
        %v2075 = vpop.xlane.xlu0 %2074
        %v2076 = vrcp.pop %v2045
        %v2077 = vrcp.pop %v2047
        %v2078 = vrcp.pop %v2049
        %v2079 = vrcp.pop %v2051
        %v2080 = vrcp.pop %v2053
        %v2081 = vrcp.pop %v2055
        %v2082 = vrcp.pop %v2057
        %v2083 = vrcp.pop %v2059
        %v2084 = vrcp.pop %v2061
        %v2085 = vrcp.pop %v2063
        %v2086 = vrcp.pop %v2065
        %v2087 = vrcp.pop %v2067
        %v2088 = vrcp.pop %v2069
        %v2089 = vrcp.pop %v2071
        %v2090 = vrcp.pop %v2073
        %v2091 = vrcp.pop %v2075
        %v2092 = vmul.f32 %v2013, %v2076
        %v2093 = vmul.f32 %v2015, %v2077
        %v2094 = vmul.f32 %v2017, %v2078
        %v2095 = vmul.f32 %v2019, %v2079
        %v2096 = vmul.f32 %v2021, %v2080
        %v2097 = vmul.f32 %v2023, %v2081
        %v2098 = vmul.f32 %v2025, %v2082
        %v2099 = vmul.f32 %v2027, %v2083
        %v2100 = vmul.f32 %v2029, %v2084
        %v2101 = vmul.f32 %v2031, %v2085
        %v2102 = vmul.f32 %v2033, %v2086
        %v2103 = vmul.f32 %v2035, %v2087
        %v2104 = vmul.f32 %v2037, %v2088
        %v2105 = vmul.f32 %v2039, %v2089
        %v2106 = vmul.f32 %v2041, %v2090
        %v2107 = vmul.f32 %v2043, %v2091
        %v2108 = vpack.c.bf16 %v2093, %v2092
        %v2109 = vpack.c.bf16 %v2095, %v2094
        %v2110 = vpack.c.bf16 %v2097, %v2096
        %v2111 = vpack.c.bf16 %v2099, %v2098
        %v2112 = vpack.c.bf16 %v2101, %v2100
        %v2113 = vpack.c.bf16 %v2103, %v2102
        %v2114 = vpack.c.bf16 %v2105, %v2104
        %v2115 = vpack.c.bf16 %v2107, %v2106
        %v2116 = vpack.c.bf16 %v1648, %v1644
        %v2117 = vpack.c.bf16 %v1658, %v1654
        %v2118 = vpack.c.bf16 %v1668, %v1664
        %v2119 = vpack.c.bf16 %v1678, %v1674
        %v2120 = vpack.c.bf16 %v1688, %v1684
        %v2121 = vpack.c.bf16 %v1698, %v1694
        %v2122 = vpack.c.bf16 %v1708, %v1704
        %v2123 = vpack.c.bf16 %v1718, %v1714
        %2124 = vmatprep.subr.bf16.mxu0 0
        %2125 = vmatpush1.bf16.msra.mxu0 %v2123
        %2126 = vmatprep.subr.bf16.mxu0 0
        %2127 = vmatpush1.bf16.msra.mxu0 %v2122
        %2128 = vmatprep.subr.bf16.mxu0 0
        %2129 = vmatpush1.bf16.msra.mxu0 %v2121
        %2130 = vmatprep.subr.bf16.mxu0 0
        %2131 = vmatpush1.bf16.msra.mxu0 %v2120
        %2132 = vmatprep.subr.bf16.mxu0 0
        %2133 = vmatpush1.bf16.msra.mxu0 %v2119
        %2134 = vmatprep.subr.bf16.mxu0 0
        %2135 = vmatpush1.bf16.msra.mxu0 %v2118
        %2136 = vmatprep.subr.bf16.mxu0 0
        %2137 = vmatpush1.bf16.msra.mxu0 %v2117
        %2138 = vmatprep.subr.bf16.mxu0 0
        %2139 = vmatpush1.bf16.msra.mxu0 %v2116
        %2140 = vmatprep.subr.bf16.mxu0 0
        %2141 = vmatpush2.bf16.msra.mxu0 0
        %2142 = vmatprep.subr.bf16.mxu0 0
        %2143 = vmatpush2.bf16.msra.mxu0 0
        %2144 = vmatprep.subr.bf16.mxu0 0
        %2145 = vmatpush2.bf16.msra.mxu0 0
        %2146 = vmatprep.subr.bf16.mxu0 0
        %2147 = vmatpush2.bf16.msra.mxu0 0
        %2148 = vmatprep.subr.bf16.mxu0 0
        %2149 = vmatpush2.bf16.msra.mxu0 0
        %2150 = vmatprep.subr.bf16.mxu0 0
        %2151 = vmatpush2.bf16.msra.mxu0 0
        %2152 = vmatprep.subr.bf16.mxu0 0
        %2153 = vmatpush2.bf16.msra.mxu0 0
        %2154 = vmatprep.subr.bf16.mxu0 0
        %2155 = vmatpush2.bf16.msra.mxu0 0
        %2156 = vmatprep.mubr.bf16.mxu0 0
        %2157 = vmatmul.mubr.bf16.gmra.mxu0 %v2108
        %v2158 = vpop.f32.mrf.mxu0
        %v2159 = vadd.f32 0.0, %v2158
        %v2160 = vpop.f32.mrf.mxu0
        %v2161 = vpop.f32.mrf.mxu0
        %v2162 = vadd.f32 0.0, %v2161
        %v2163 = vpop.f32.mrf.mxu0
        %2164 = vmatprep.mubr.bf16.mxu0 0
        %2165 = vmatmul.mubr.bf16.gmra.mxu0 %v2109
        %v2166 = vpop.f32.mrf.mxu0
        %v2167 = vadd.f32 0.0, %v2166
        %v2168 = vpop.f32.mrf.mxu0
        %v2169 = vpop.f32.mrf.mxu0
        %v2170 = vadd.f32 0.0, %v2169
        %v2171 = vpop.f32.mrf.mxu0
        %2172 = vmatprep.mubr.bf16.mxu0 0
        %2173 = vmatmul.mubr.bf16.gmra.mxu0 %v2110
        %v2174 = vpop.f32.mrf.mxu0
        %v2175 = vadd.f32 0.0, %v2174
        %v2176 = vpop.f32.mrf.mxu0
        %v2177 = vpop.f32.mrf.mxu0
        %v2178 = vadd.f32 0.0, %v2177
        %v2179 = vpop.f32.mrf.mxu0
        %2180 = vmatprep.mubr.bf16.mxu0 0
        %2181 = vmatmul.mubr.bf16.gmra.mxu0 %v2111
        %v2182 = vpop.f32.mrf.mxu0
        %v2183 = vadd.f32 0.0, %v2182
        %v2184 = vpop.f32.mrf.mxu0
        %v2185 = vpop.f32.mrf.mxu0
        %v2186 = vadd.f32 0.0, %v2185
        %v2187 = vpop.f32.mrf.mxu0
        %2188 = vmatprep.mubr.bf16.mxu0 0
        %2189 = vmatmul.mubr.bf16.gmra.mxu0 %v2112
        %v2190 = vpop.f32.mrf.mxu0
        %v2191 = vadd.f32 0.0, %v2190
        %v2192 = vpop.f32.mrf.mxu0
        %v2193 = vpop.f32.mrf.mxu0
        %v2194 = vadd.f32 0.0, %v2193
        %v2195 = vpop.f32.mrf.mxu0
        %2196 = vmatprep.mubr.bf16.mxu0 0
        %2197 = vmatmul.mubr.bf16.gmra.mxu0 %v2113
        %v2198 = vpop.f32.mrf.mxu0
        %v2199 = vadd.f32 0.0, %v2198
        %v2200 = vpop.f32.mrf.mxu0
        %v2201 = vpop.f32.mrf.mxu0
        %v2202 = vadd.f32 0.0, %v2201
        %v2203 = vpop.f32.mrf.mxu0
        %2204 = vmatprep.mubr.bf16.mxu0 0
        %2205 = vmatmul.mubr.bf16.gmra.mxu0 %v2114
        %v2206 = vpop.f32.mrf.mxu0
        %v2207 = vadd.f32 0.0, %v2206
        %v2208 = vpop.f32.mrf.mxu0
        %v2209 = vpop.f32.mrf.mxu0
        %v2210 = vadd.f32 0.0, %v2209
        %v2211 = vpop.f32.mrf.mxu0
        %2212 = vmatprep.mubr.bf16.mxu0 0
        %2213 = vmatmul.mubr.bf16.gmra.mxu0 %v2115
        %v2214 = vpop.f32.mrf.mxu0
        %v2215 = vadd.f32 0.0, %v2214
        %v2216 = vpop.f32.mrf.mxu0
        %v2217 = vpop.f32.mrf.mxu0
        %v2218 = vadd.f32 0.0, %v2217
        %v2219 = vpop.f32.mrf.mxu0
        %2220 = vdwg.mxu0
        %v2221 = vmul.f32 %v1646, 0.25
        %v2222 = vmul.f32 %v1650, 0.25
        %v2223 = vmul.f32 %v1656, 0.25
        %v2224 = vmul.f32 %v1660, 0.25
        %v2225 = vmul.f32 %v1666, 0.25
        %v2226 = vmul.f32 %v1670, 0.25
        %v2227 = vmul.f32 %v1676, 0.25
        %v2228 = vmul.f32 %v1680, 0.25
        %v2229 = vmul.f32 %v1686, 0.25
        %v2230 = vmul.f32 %v1690, 0.25
        %v2231 = vmul.f32 %v1696, 0.25
        %v2232 = vmul.f32 %v1700, 0.25
        %v2233 = vmul.f32 %v1706, 0.25
        %v2234 = vmul.f32 %v1710, 0.25
        %v2235 = vmul.f32 %v1716, 0.25
        %v2236 = vmul.f32 %v1720, 0.25
        %v2237 = vpack.c.bf16 %v2222, %v2221
        %v2238 = vpack.c.bf16 %v2224, %v2223
        %v2239 = vpack.c.bf16 %v2226, %v2225
        %v2240 = vpack.c.bf16 %v2228, %v2227
        %v2241 = vpack.c.bf16 %v2230, %v2229
        %v2242 = vpack.c.bf16 %v2232, %v2231
        %v2243 = vpack.c.bf16 %v2234, %v2233
        %v2244 = vpack.c.bf16 %v2236, %v2235
        %v2245 = vpack.c.bf16 %v1761, %v1757
        %v2246 = vpack.c.bf16 %v1771, %v1767
        %v2247 = vpack.c.bf16 %v1781, %v1777
        %v2248 = vpack.c.bf16 %v1791, %v1787
        %v2249 = vpack.c.bf16 %v1801, %v1797
        %v2250 = vpack.c.bf16 %v1811, %v1807
        %v2251 = vpack.c.bf16 %v1821, %v1817
        %v2252 = vpack.c.bf16 %v1831, %v1827
        %2253 = vmatprep.subr.bf16.mxu0 0
        %2254 = vmatpush1.bf16.xpose.msra.mxu0 %v2252
        %2255 = vmatprep.subr.bf16.mxu0 0
        %2256 = vmatpush1.bf16.xpose.msra.mxu0 %v2251
        %2257 = vmatprep.subr.bf16.mxu0 0
        %2258 = vmatpush1.bf16.xpose.msra.mxu0 %v2250
        %2259 = vmatprep.subr.bf16.mxu0 0
        %2260 = vmatpush1.bf16.xpose.msra.mxu0 %v2249
        %2261 = vmatprep.subr.bf16.mxu0 0
        %2262 = vmatpush1.bf16.xpose.msra.mxu0 %v2248
        %2263 = vmatprep.subr.bf16.mxu0 0
        %2264 = vmatpush1.bf16.xpose.msra.mxu0 %v2247
        %2265 = vmatprep.subr.bf16.mxu0 0
        %2266 = vmatpush1.bf16.xpose.msra.mxu0 %v2246
        %2267 = vmatprep.subr.bf16.mxu0 0
        %2268 = vmatpush1.bf16.xpose.msra.mxu0 %v2245
        %2269 = vmatprep.subr.bf16.mxu0 0
        %2270 = vmatpush2.bf16.xpose.msra.mxu0 0
        %2271 = vmatprep.subr.bf16.mxu0 0
        %2272 = vmatpush2.bf16.xpose.msra.mxu0 0
        %2273 = vmatprep.subr.bf16.mxu0 0
        %2274 = vmatpush2.bf16.xpose.msra.mxu0 0
        %2275 = vmatprep.subr.bf16.mxu0 0
        %2276 = vmatpush2.bf16.xpose.msra.mxu0 0
        %2277 = vmatprep.subr.bf16.mxu0 0
        %2278 = vmatpush2.bf16.xpose.msra.mxu0 0
        %2279 = vmatprep.subr.bf16.mxu0 0
        %2280 = vmatpush2.bf16.xpose.msra.mxu0 0
        %2281 = vmatprep.subr.bf16.mxu0 0
        %2282 = vmatpush2.bf16.xpose.msra.mxu0 0
        %2283 = vmatprep.subr.bf16.mxu0 0
        %2284 = vmatpush2.bf16.xpose.msra.mxu0 0
        %2285 = vmatprep.mubr.bf16.mxu0 0
        %2286 = vmatmul.mubr.bf16.gmra.mxu0 %v2237
        %v2287 = vpop.f32.mrf.mxu0
        %v2288 = vadd.f32 %v1102, %v2287
        %v2289 = vpop.f32.mrf.mxu0
        %v2290 = vpop.f32.mrf.mxu0
        %v2291 = vadd.f32 %v1102, %v2290
        %v2292 = vpop.f32.mrf.mxu0
        %2293 = vmatprep.mubr.bf16.mxu0 0
        %2294 = vmatmul.mubr.bf16.gmra.mxu0 %v2238
        %v2295 = vpop.f32.mrf.mxu0
        %v2296 = vadd.f32 %v1102, %v2295
        %v2297 = vpop.f32.mrf.mxu0
        %v2298 = vpop.f32.mrf.mxu0
        %v2299 = vadd.f32 %v1102, %v2298
        %v2300 = vpop.f32.mrf.mxu0
        %2301 = vmatprep.mubr.bf16.mxu0 0
        %2302 = vmatmul.mubr.bf16.gmra.mxu0 %v2239
        %v2303 = vpop.f32.mrf.mxu0
        %v2304 = vadd.f32 %v1102, %v2303
        %v2305 = vpop.f32.mrf.mxu0
        %v2306 = vpop.f32.mrf.mxu0
        %v2307 = vadd.f32 %v1102, %v2306
        %v2308 = vpop.f32.mrf.mxu0
        %2309 = vmatprep.mubr.bf16.mxu0 0
        %2310 = vmatmul.mubr.bf16.gmra.mxu0 %v2240
        %v2311 = vpop.f32.mrf.mxu0
        %v2312 = vadd.f32 %v1102, %v2311
        %v2313 = vpop.f32.mrf.mxu0
        %v2314 = vpop.f32.mrf.mxu0
        %v2315 = vadd.f32 %v1102, %v2314
        %v2316 = vpop.f32.mrf.mxu0
        %2317 = vmatprep.mubr.bf16.mxu0 0
        %2318 = vmatmul.mubr.bf16.gmra.mxu0 %v2241
        %v2319 = vpop.f32.mrf.mxu0
        %v2320 = vadd.f32 %v1102, %v2319
        %v2321 = vpop.f32.mrf.mxu0
        %v2322 = vpop.f32.mrf.mxu0
        %v2323 = vadd.f32 %v1102, %v2322
        %v2324 = vpop.f32.mrf.mxu0
        %2325 = vmatprep.mubr.bf16.mxu0 0
        %2326 = vmatmul.mubr.bf16.gmra.mxu0 %v2242
        %v2327 = vpop.f32.mrf.mxu0
        %v2328 = vadd.f32 %v1102, %v2327
        %v2329 = vpop.f32.mrf.mxu0
        %v2330 = vpop.f32.mrf.mxu0
        %v2331 = vadd.f32 %v1102, %v2330
        %v2332 = vpop.f32.mrf.mxu0
        %2333 = vmatprep.mubr.bf16.mxu0 0
        %2334 = vmatmul.mubr.bf16.gmra.mxu0 %v2243
        %v2335 = vpop.f32.mrf.mxu0
        %v2336 = vadd.f32 %v1102, %v2335
        %v2337 = vpop.f32.mrf.mxu0
        %v2338 = vpop.f32.mrf.mxu0
        %v2339 = vadd.f32 %v1102, %v2338
        %v2340 = vpop.f32.mrf.mxu0
        %2341 = vmatprep.mubr.bf16.mxu0 0
        %2342 = vmatmul.mubr.bf16.gmra.mxu0 %v2244
        %v2343 = vpop.f32.mrf.mxu0
        %v2344 = vadd.f32 %v1102, %v2343
        %v2345 = vpop.f32.mrf.mxu0
        %v2346 = vpop.f32.mrf.mxu0
        %v2347 = vadd.f32 %v1102, %v2346
        %v2348 = vpop.f32.mrf.mxu0
        %2349 = vdwg.mxu0
        %2350 = vmax.xlane.f32.xlu0 %v2288
        %v2351 = vpop.xlane.xlu0 %2350
        %2352 = vmax.xlane.f32.xlu0 %v2291
        %v2353 = vpop.xlane.xlu0 %2352
        %2354 = vmax.xlane.f32.xlu0 %v2296
        %v2355 = vpop.xlane.xlu0 %2354
        %2356 = vmax.xlane.f32.xlu0 %v2299
        %v2357 = vpop.xlane.xlu0 %2356
        %2358 = vmax.xlane.f32.xlu0 %v2304
        %v2359 = vpop.xlane.xlu0 %2358
        %2360 = vmax.xlane.f32.xlu0 %v2307
        %v2361 = vpop.xlane.xlu0 %2360
        %2362 = vmax.xlane.f32.xlu0 %v2312
        %v2363 = vpop.xlane.xlu0 %2362
        %2364 = vmax.xlane.f32.xlu0 %v2315
        %v2365 = vpop.xlane.xlu0 %2364
        %2366 = vmax.xlane.f32.xlu0 %v2320
        %v2367 = vpop.xlane.xlu0 %2366
        %2368 = vmax.xlane.f32.xlu0 %v2323
        %v2369 = vpop.xlane.xlu0 %2368
        %2370 = vmax.xlane.f32.xlu0 %v2328
        %v2371 = vpop.xlane.xlu0 %2370
        %2372 = vmax.xlane.f32.xlu0 %v2331
        %v2373 = vpop.xlane.xlu0 %2372
        %2374 = vmax.xlane.f32.xlu0 %v2336
        %v2375 = vpop.xlane.xlu0 %2374
        %2376 = vmax.xlane.f32.xlu0 %v2339
        %v2377 = vpop.xlane.xlu0 %2376
        %2378 = vmax.xlane.f32.xlu0 %v2344
        %v2379 = vpop.xlane.xlu0 %2378
        %2380 = vmax.xlane.f32.xlu0 %v2347
        %v2381 = vpop.xlane.xlu0 %2380
        %v2382 = vsub.f32 %v2288, %v2351
        %v2383 = vsub.f32 %v2291, %v2353
        %v2384 = vsub.f32 %v2296, %v2355
        %v2385 = vsub.f32 %v2299, %v2357
        %v2386 = vsub.f32 %v2304, %v2359
        %v2387 = vsub.f32 %v2307, %v2361
        %v2388 = vsub.f32 %v2312, %v2363
        %v2389 = vsub.f32 %v2315, %v2365
        %v2390 = vsub.f32 %v2320, %v2367
        %v2391 = vsub.f32 %v2323, %v2369
        %v2392 = vsub.f32 %v2328, %v2371
        %v2393 = vsub.f32 %v2331, %v2373
        %v2394 = vsub.f32 %v2336, %v2375
        %v2395 = vsub.f32 %v2339, %v2377
        %v2396 = vsub.f32 %v2344, %v2379
        %v2397 = vsub.f32 %v2347, %v2381
        %v2398 = vmul.f32 %v2382, 1.442695
        %v2399 = vpow.pop %v2398
        %v2400 = vmul.f32 %v2383, 1.442695
        %v2401 = vpow.pop %v2400
        %v2402 = vmul.f32 %v2384, 1.442695
        %v2403 = vpow.pop %v2402
        %v2404 = vmul.f32 %v2385, 1.442695
        %v2405 = vpow.pop %v2404
        %v2406 = vmul.f32 %v2386, 1.442695
        %v2407 = vpow.pop %v2406
        %v2408 = vmul.f32 %v2387, 1.442695
        %v2409 = vpow.pop %v2408
        %v2410 = vmul.f32 %v2388, 1.442695
        %v2411 = vpow.pop %v2410
        %v2412 = vmul.f32 %v2389, 1.442695
        %v2413 = vpow.pop %v2412
        %v2414 = vmul.f32 %v2390, 1.442695
        %v2415 = vpow.pop %v2414
        %v2416 = vmul.f32 %v2391, 1.442695
        %v2417 = vpow.pop %v2416
        %v2418 = vmul.f32 %v2392, 1.442695
        %v2419 = vpow.pop %v2418
        %v2420 = vmul.f32 %v2393, 1.442695
        %v2421 = vpow.pop %v2420
        %v2422 = vmul.f32 %v2394, 1.442695
        %v2423 = vpow.pop %v2422
        %v2424 = vmul.f32 %v2395, 1.442695
        %v2425 = vpow.pop %v2424
        %v2426 = vmul.f32 %v2396, 1.442695
        %v2427 = vpow.pop %v2426
        %v2428 = vmul.f32 %v2397, 1.442695
        %v2429 = vpow.pop %v2428
        %2430 = vadd.xlane.f32.xlu0 %v2399
        %v2431 = vpop.xlane.xlu0 %2430
        %2432 = vadd.xlane.f32.xlu0 %v2401
        %v2433 = vpop.xlane.xlu0 %2432
        %2434 = vadd.xlane.f32.xlu0 %v2403
        %v2435 = vpop.xlane.xlu0 %2434
        %2436 = vadd.xlane.f32.xlu0 %v2405
        %v2437 = vpop.xlane.xlu0 %2436
        %2438 = vadd.xlane.f32.xlu0 %v2407
        %v2439 = vpop.xlane.xlu0 %2438
        %2440 = vadd.xlane.f32.xlu0 %v2409
        %v2441 = vpop.xlane.xlu0 %2440
        %2442 = vadd.xlane.f32.xlu0 %v2411
        %v2443 = vpop.xlane.xlu0 %2442
        %2444 = vadd.xlane.f32.xlu0 %v2413
        %v2445 = vpop.xlane.xlu0 %2444
        %2446 = vadd.xlane.f32.xlu0 %v2415
        %v2447 = vpop.xlane.xlu0 %2446
        %2448 = vadd.xlane.f32.xlu0 %v2417
        %v2449 = vpop.xlane.xlu0 %2448
        %2450 = vadd.xlane.f32.xlu0 %v2419
        %v2451 = vpop.xlane.xlu0 %2450
        %2452 = vadd.xlane.f32.xlu0 %v2421
        %v2453 = vpop.xlane.xlu0 %2452
        %2454 = vadd.xlane.f32.xlu0 %v2423
        %v2455 = vpop.xlane.xlu0 %2454
        %2456 = vadd.xlane.f32.xlu0 %v2425
        %v2457 = vpop.xlane.xlu0 %2456
        %2458 = vadd.xlane.f32.xlu0 %v2427
        %v2459 = vpop.xlane.xlu0 %2458
        %2460 = vadd.xlane.f32.xlu0 %v2429
        %v2461 = vpop.xlane.xlu0 %2460
        %v2462 = vrcp.pop %v2431
        %v2463 = vrcp.pop %v2433
        %v2464 = vrcp.pop %v2435
        %v2465 = vrcp.pop %v2437
        %v2466 = vrcp.pop %v2439
        %v2467 = vrcp.pop %v2441
        %v2468 = vrcp.pop %v2443
        %v2469 = vrcp.pop %v2445
        %v2470 = vrcp.pop %v2447
        %v2471 = vrcp.pop %v2449
        %v2472 = vrcp.pop %v2451
        %v2473 = vrcp.pop %v2453
        %v2474 = vrcp.pop %v2455
        %v2475 = vrcp.pop %v2457
        %v2476 = vrcp.pop %v2459
        %v2477 = vrcp.pop %v2461
        %v2478 = vmul.f32 %v2399, %v2462
        %v2479 = vmul.f32 %v2401, %v2463
        %v2480 = vmul.f32 %v2403, %v2464
        %v2481 = vmul.f32 %v2405, %v2465
        %v2482 = vmul.f32 %v2407, %v2466
        %v2483 = vmul.f32 %v2409, %v2467
        %v2484 = vmul.f32 %v2411, %v2468
        %v2485 = vmul.f32 %v2413, %v2469
        %v2486 = vmul.f32 %v2415, %v2470
        %v2487 = vmul.f32 %v2417, %v2471
        %v2488 = vmul.f32 %v2419, %v2472
        %v2489 = vmul.f32 %v2421, %v2473
        %v2490 = vmul.f32 %v2423, %v2474
        %v2491 = vmul.f32 %v2425, %v2475
        %v2492 = vmul.f32 %v2427, %v2476
        %v2493 = vmul.f32 %v2429, %v2477
        %v2494 = vpack.c.bf16 %v2479, %v2478
        %v2495 = vpack.c.bf16 %v2481, %v2480
        %v2496 = vpack.c.bf16 %v2483, %v2482
        %v2497 = vpack.c.bf16 %v2485, %v2484
        %v2498 = vpack.c.bf16 %v2487, %v2486
        %v2499 = vpack.c.bf16 %v2489, %v2488
        %v2500 = vpack.c.bf16 %v2491, %v2490
        %v2501 = vpack.c.bf16 %v2493, %v2492
        %v2502 = vpack.c.bf16 %v1763, %v1759
        %v2503 = vpack.c.bf16 %v1773, %v1769
        %v2504 = vpack.c.bf16 %v1783, %v1779
        %v2505 = vpack.c.bf16 %v1793, %v1789
        %v2506 = vpack.c.bf16 %v1803, %v1799
        %v2507 = vpack.c.bf16 %v1813, %v1809
        %v2508 = vpack.c.bf16 %v1823, %v1819
        %v2509 = vpack.c.bf16 %v1833, %v1829
        %2510 = vmatprep.subr.bf16.mxu0 0
        %2511 = vmatpush1.bf16.msra.mxu0 %v2509
        %2512 = vmatprep.subr.bf16.mxu0 0
        %2513 = vmatpush1.bf16.msra.mxu0 %v2508
        %2514 = vmatprep.subr.bf16.mxu0 0
        %2515 = vmatpush1.bf16.msra.mxu0 %v2507
        %2516 = vmatprep.subr.bf16.mxu0 0
        %2517 = vmatpush1.bf16.msra.mxu0 %v2506
        %2518 = vmatprep.subr.bf16.mxu0 0
        %2519 = vmatpush1.bf16.msra.mxu0 %v2505
        %2520 = vmatprep.subr.bf16.mxu0 0
        %2521 = vmatpush1.bf16.msra.mxu0 %v2504
        %2522 = vmatprep.subr.bf16.mxu0 0
        %2523 = vmatpush1.bf16.msra.mxu0 %v2503
        %2524 = vmatprep.subr.bf16.mxu0 0
        %2525 = vmatpush1.bf16.msra.mxu0 %v2502
        %2526 = vmatprep.subr.bf16.mxu0 0
        %2527 = vmatpush2.bf16.msra.mxu0 0
        %2528 = vmatprep.subr.bf16.mxu0 0
        %2529 = vmatpush2.bf16.msra.mxu0 0
        %2530 = vmatprep.subr.bf16.mxu0 0
        %2531 = vmatpush2.bf16.msra.mxu0 0
        %2532 = vmatprep.subr.bf16.mxu0 0
        %2533 = vmatpush2.bf16.msra.mxu0 0
        %2534 = vmatprep.subr.bf16.mxu0 0
        %2535 = vmatpush2.bf16.msra.mxu0 0
        %2536 = vmatprep.subr.bf16.mxu0 0
        %2537 = vmatpush2.bf16.msra.mxu0 0
        %2538 = vmatprep.subr.bf16.mxu0 0
        %2539 = vmatpush2.bf16.msra.mxu0 0
        %2540 = vmatprep.subr.bf16.mxu0 0
        %2541 = vmatpush2.bf16.msra.mxu0 0
        %2542 = vmatprep.mubr.bf16.mxu0 0
        %2543 = vmatmul.mubr.bf16.gmra.mxu0 %v2494
        %v2544 = vpop.f32.mrf.mxu0
        %v2545 = vadd.f32 0.0, %v2544
        %v2546 = vpop.f32.mrf.mxu0
        %v2547 = vpop.f32.mrf.mxu0
        %v2548 = vadd.f32 0.0, %v2547
        %v2549 = vpop.f32.mrf.mxu0
        %2550 = vmatprep.mubr.bf16.mxu0 0
        %2551 = vmatmul.mubr.bf16.gmra.mxu0 %v2495
        %v2552 = vpop.f32.mrf.mxu0
        %v2553 = vadd.f32 0.0, %v2552
        %v2554 = vpop.f32.mrf.mxu0
        %v2555 = vpop.f32.mrf.mxu0
        %v2556 = vadd.f32 0.0, %v2555
        %v2557 = vpop.f32.mrf.mxu0
        %2558 = vmatprep.mubr.bf16.mxu0 0
        %2559 = vmatmul.mubr.bf16.gmra.mxu0 %v2496
        %v2560 = vpop.f32.mrf.mxu0
        %v2561 = vadd.f32 0.0, %v2560
        %v2562 = vpop.f32.mrf.mxu0
        %v2563 = vpop.f32.mrf.mxu0
        %v2564 = vadd.f32 0.0, %v2563
        %v2565 = vpop.f32.mrf.mxu0
        %2566 = vmatprep.mubr.bf16.mxu0 0
        %2567 = vmatmul.mubr.bf16.gmra.mxu0 %v2497
        %v2568 = vpop.f32.mrf.mxu0
        %v2569 = vadd.f32 0.0, %v2568
        %v2570 = vpop.f32.mrf.mxu0
        %v2571 = vpop.f32.mrf.mxu0
        %v2572 = vadd.f32 0.0, %v2571
        %v2573 = vpop.f32.mrf.mxu0
        %2574 = vmatprep.mubr.bf16.mxu0 0
        %2575 = vmatmul.mubr.bf16.gmra.mxu0 %v2498
        %v2576 = vpop.f32.mrf.mxu0
        %v2577 = vadd.f32 0.0, %v2576
        %v2578 = vpop.f32.mrf.mxu0
        %v2579 = vpop.f32.mrf.mxu0
        %v2580 = vadd.f32 0.0, %v2579
        %v2581 = vpop.f32.mrf.mxu0
        %2582 = vmatprep.mubr.bf16.mxu0 0
        %2583 = vmatmul.mubr.bf16.gmra.mxu0 %v2499
        %v2584 = vpop.f32.mrf.mxu0
        %v2585 = vadd.f32 0.0, %v2584
        %v2586 = vpop.f32.mrf.mxu0
        %v2587 = vpop.f32.mrf.mxu0
        %v2588 = vadd.f32 0.0, %v2587
        %v2589 = vpop.f32.mrf.mxu0
        %2590 = vmatprep.mubr.bf16.mxu0 0
        %2591 = vmatmul.mubr.bf16.gmra.mxu0 %v2500
        %v2592 = vpop.f32.mrf.mxu0
        %v2593 = vadd.f32 0.0, %v2592
        %v2594 = vpop.f32.mrf.mxu0
        %v2595 = vpop.f32.mrf.mxu0
        %v2596 = vadd.f32 0.0, %v2595
        %v2597 = vpop.f32.mrf.mxu0
        %2598 = vmatprep.mubr.bf16.mxu0 0
        %2599 = vmatmul.mubr.bf16.gmra.mxu0 %v2501
        %v2600 = vpop.f32.mrf.mxu0
        %v2601 = vadd.f32 0.0, %v2600
        %v2602 = vpop.f32.mrf.mxu0
        %v2603 = vpop.f32.mrf.mxu0
        %v2604 = vadd.f32 0.0, %v2603
        %v2605 = vpop.f32.mrf.mxu0
        %2606 = vdwg.mxu0
        %v2607 = vpack.c.bf16 %v2162, %v2159
        %v2608 = vpack.c.bf16 %v2548, %v2545
        %v2609 = vpack.c.bf16 %v2170, %v2167
        %v2610 = vpack.c.bf16 %v2556, %v2553
        %v2611 = vpack.c.bf16 %v2178, %v2175
        %v2612 = vpack.c.bf16 %v2564, %v2561
        %v2613 = vpack.c.bf16 %v2186, %v2183
        %v2614 = vpack.c.bf16 %v2572, %v2569
        %v2615 = vpack.c.bf16 %v2194, %v2191
        %v2616 = vpack.c.bf16 %v2580, %v2577
        %v2617 = vpack.c.bf16 %v2202, %v2199
        %v2618 = vpack.c.bf16 %v2588, %v2585
        %v2619 = vpack.c.bf16 %v2210, %v2207
        %v2620 = vpack.c.bf16 %v2596, %v2593
        %v2621 = vpack.c.bf16 %v2218, %v2215
        %v2622 = vpack.c.bf16 %v2604, %v2601
        %v2623 = vld [vmem:[%s999] sm:$0xf]
        %v2624 = vld [vmem:[%s999 + $0x4] sm:$0xf]
        %v2625 = vld [vmem:[%s999 + $0x8] sm:$0xf]
        %v2626 = vld [vmem:[%s999 + $0xc] sm:$0xf]
        %v2627 = vld [vmem:[%s999 + $0x10] sm:$0xf]
        %v2628 = vld [vmem:[%s999 + $0x14] sm:$0xf]
        %v2629 = vld [vmem:[%s999 + $0x18] sm:$0xf]
        %v2630 = vld [vmem:[%s999 + $0x1c] sm:$0xf]
        %v2631 = vld [vmem:[%s999 + $0x20] sm:$0xf]
        %v2632 = vld [vmem:[%s999 + $0x24] sm:$0xf]
        %v2633 = vld [vmem:[%s999 + $0x28] sm:$0xf]
        %v2634 = vld [vmem:[%s999 + $0x2c] sm:$0xf]
        %v2635 = vld [vmem:[%s999 + $0x30] sm:$0xf]
        %v2636 = vld [vmem:[%s999 + $0x34] sm:$0xf]
        %v2637 = vld [vmem:[%s999 + $0x38] sm:$0xf]
        %v2638 = vld [vmem:[%s999 + $0x3c] sm:$0xf]
        %v2639 = vld [vmem:[%s999 + $0x40] sm:$0xf]
        %v2640 = vld [vmem:[%s999 + $0x44] sm:$0xf]
        %v2641 = vld [vmem:[%s999 + $0x48] sm:$0xf]
        %v2642 = vld [vmem:[%s999 + $0x4c] sm:$0xf]
        %v2643 = vld [vmem:[%s999 + $0x50] sm:$0xf]
        %v2644 = vld [vmem:[%s999 + $0x54] sm:$0xf]
        %v2645 = vld [vmem:[%s999 + $0x58] sm:$0xf]
        %v2646 = vld [vmem:[%s999 + $0x5c] sm:$0xf]
        %v2647 = vld [vmem:[%s999 + $0x60] sm:$0xf]
        %v2648 = vld [vmem:[%s999 + $0x64] sm:$0xf]
        %v2649 = vld [vmem:[%s999 + $0x68] sm:$0xf]
        %v2650 = vld [vmem:[%s999 + $0x6c] sm:$0xf]
        %v2651 = vld [vmem:[%s999 + $0x70] sm:$0xf]
        %v2652 = vld [vmem:[%s999 + $0x74] sm:$0xf]
        %v2653 = vld [vmem:[%s999 + $0x78] sm:$0xf]
        %v2654 = vld [vmem:[%s999 + $0x7c] sm:$0xf]
        %v2655 = vld [vmem:[%s1002] sm:$0x1]
        %v2657 = vlaneseq
        %v2658 = vshrl.u32 %v2657, 7
        %v2659 = vsub.s32 0, %v2658
        %v2660 = vrot.slane %v2655, %v2659
        %v2694 = vunpack.c.l.b16 %v2623
        %v2695 = vunpack.c.l.b16 %v2624
        %v2696 = vunpack.c.l.b16 %v2625
        %v2697 = vunpack.c.l.b16 %v2626
        %v2698 = vunpack.c.l.b16 %v2627
        %v2699 = vunpack.c.l.b16 %v2628
        %v2700 = vunpack.c.l.b16 %v2629
        %v2701 = vunpack.c.l.b16 %v2630
        %v2702 = vunpack.c.l.b16 %v2631
        %v2703 = vunpack.c.l.b16 %v2632
        %v2704 = vunpack.c.l.b16 %v2633
        %v2705 = vunpack.c.l.b16 %v2634
        %v2706 = vunpack.c.l.b16 %v2635
        %v2707 = vunpack.c.l.b16 %v2636
        %v2708 = vunpack.c.l.b16 %v2637
        %v2709 = vunpack.c.l.b16 %v2638
        %v2710 = vunpack.c.l.b16 %v2639
        %v2711 = vunpack.c.l.b16 %v2640
        %v2712 = vunpack.c.l.b16 %v2641
        %v2713 = vunpack.c.l.b16 %v2642
        %v2714 = vunpack.c.l.b16 %v2643
        %v2715 = vunpack.c.l.b16 %v2644
        %v2716 = vunpack.c.l.b16 %v2645
        %v2717 = vunpack.c.l.b16 %v2646
        %v2718 = vunpack.c.l.b16 %v2647
        %v2719 = vunpack.c.l.b16 %v2648
        %v2720 = vunpack.c.l.b16 %v2649
        %v2721 = vunpack.c.l.b16 %v2650
        %v2722 = vunpack.c.l.b16 %v2651
        %v2723 = vunpack.c.l.b16 %v2652
        %v2724 = vunpack.c.l.b16 %v2653
        %v2725 = vunpack.c.l.b16 %v2654
        %v2726 = vpack.c.b16 %v2695, %v2694
        %v2727 = vpack.c.b16 %v2697, %v2696
        %v2728 = vpack.c.b16 %v2699, %v2698
        %v2729 = vpack.c.b16 %v2701, %v2700
        %v2730 = vpack.c.b16 %v2703, %v2702
        %v2731 = vpack.c.b16 %v2705, %v2704
        %v2732 = vpack.c.b16 %v2707, %v2706
        %v2733 = vpack.c.b16 %v2709, %v2708
        %v2734 = vpack.c.b16 %v2711, %v2710
        %v2735 = vpack.c.b16 %v2713, %v2712
        %v2736 = vpack.c.b16 %v2715, %v2714
        %v2737 = vpack.c.b16 %v2717, %v2716
        %v2738 = vpack.c.b16 %v2719, %v2718
        %v2739 = vpack.c.b16 %v2721, %v2720
        %v2740 = vpack.c.b16 %v2723, %v2722
        %v2741 = vpack.c.b16 %v2725, %v2724
        %2758 = vmatprep.subr.bf16.mxu0 0
        %2759 = vmatpush1.bf16.msra.mxu0 %v2733
        %2760 = vmatprep.subr.bf16.mxu0 0
        %2761 = vmatpush1.bf16.msra.mxu0 %v2732
        %2762 = vmatprep.subr.bf16.mxu0 0
        %2763 = vmatpush1.bf16.msra.mxu0 %v2731
        %2764 = vmatprep.subr.bf16.mxu0 0
        %2765 = vmatpush1.bf16.msra.mxu0 %v2730
        %2766 = vmatprep.subr.bf16.mxu0 0
        %2767 = vmatpush1.bf16.msra.mxu0 %v2729
        %2768 = vmatprep.subr.bf16.mxu0 0
        %2769 = vmatpush1.bf16.msra.mxu0 %v2728
        %2770 = vmatprep.subr.bf16.mxu0 0
        %2771 = vmatpush1.bf16.msra.mxu0 %v2727
        %2772 = vmatprep.subr.bf16.mxu0 0
        %2773 = vmatpush1.bf16.msra.mxu0 %v2726
        %2774 = vmatprep.subr.bf16.mxu0 0
        %2775 = vmatpush2.bf16.msra.mxu0 %v2741
        %2776 = vmatprep.subr.bf16.mxu0 0
        %2777 = vmatpush2.bf16.msra.mxu0 %v2740
        %2778 = vmatprep.subr.bf16.mxu0 0
        %2779 = vmatpush2.bf16.msra.mxu0 %v2739
        %2780 = vmatprep.subr.bf16.mxu0 0
        %2781 = vmatpush2.bf16.msra.mxu0 %v2738
        %2782 = vmatprep.subr.bf16.mxu0 0
        %2783 = vmatpush2.bf16.msra.mxu0 %v2737
        %2784 = vmatprep.subr.bf16.mxu0 0
        %2785 = vmatpush2.bf16.msra.mxu0 %v2736
        %2786 = vmatprep.subr.bf16.mxu0 0
        %2787 = vmatpush2.bf16.msra.mxu0 %v2735
        %2788 = vmatprep.subr.bf16.mxu0 0
        %2789 = vmatpush2.bf16.msra.mxu0 %v2734
        %2790 = vmatprep.mubr.bf16.mxu0 %v2608
        %2791 = vmatmul.mubr.bf16.gmra.mxu0 %v2607
        %v2792 = vpop.f32.mrf.mxu0
        %v2793 = vadd.f32 %v2660, %v2792
        %v2794 = vpop.f32.mrf.mxu0
        %v2795 = vpop.f32.mrf.mxu0
        %v2796 = vadd.f32 %v2660, %v2795
        %v2797 = vpop.f32.mrf.mxu0
        %2798 = vmatprep.mubr.bf16.mxu0 %v2610
        %2799 = vmatmul.mubr.bf16.gmra.mxu0 %v2609
        %v2800 = vpop.f32.mrf.mxu0
        %v2801 = vadd.f32 %v2660, %v2800
        %v2802 = vpop.f32.mrf.mxu0
        %v2803 = vpop.f32.mrf.mxu0
        %v2804 = vadd.f32 %v2660, %v2803
        %v2805 = vpop.f32.mrf.mxu0
        %2806 = vmatprep.mubr.bf16.mxu0 %v2612
        %2807 = vmatmul.mubr.bf16.gmra.mxu0 %v2611
        %v2808 = vpop.f32.mrf.mxu0
        %v2809 = vadd.f32 %v2660, %v2808
        %v2810 = vpop.f32.mrf.mxu0
        %v2811 = vpop.f32.mrf.mxu0
        %v2812 = vadd.f32 %v2660, %v2811
        %v2813 = vpop.f32.mrf.mxu0
        %2814 = vmatprep.mubr.bf16.mxu0 %v2614
        %2815 = vmatmul.mubr.bf16.gmra.mxu0 %v2613
        %v2816 = vpop.f32.mrf.mxu0
        %v2817 = vadd.f32 %v2660, %v2816
        %v2818 = vpop.f32.mrf.mxu0
        %v2819 = vpop.f32.mrf.mxu0
        %v2820 = vadd.f32 %v2660, %v2819
        %v2821 = vpop.f32.mrf.mxu0
        %2822 = vmatprep.mubr.bf16.mxu0 %v2616
        %2823 = vmatmul.mubr.bf16.gmra.mxu0 %v2615
        %v2824 = vpop.f32.mrf.mxu0
        %v2825 = vadd.f32 %v2660, %v2824
        %v2826 = vpop.f32.mrf.mxu0
        %v2827 = vpop.f32.mrf.mxu0
        %v2828 = vadd.f32 %v2660, %v2827
        %v2829 = vpop.f32.mrf.mxu0
        %2830 = vmatprep.mubr.bf16.mxu0 %v2618
        %2831 = vmatmul.mubr.bf16.gmra.mxu0 %v2617
        %v2832 = vpop.f32.mrf.mxu0
        %v2833 = vadd.f32 %v2660, %v2832
        %v2834 = vpop.f32.mrf.mxu0
        %v2835 = vpop.f32.mrf.mxu0
        %v2836 = vadd.f32 %v2660, %v2835
        %v2837 = vpop.f32.mrf.mxu0
        %2838 = vmatprep.mubr.bf16.mxu0 %v2620
        %2839 = vmatmul.mubr.bf16.gmra.mxu0 %v2619
        %v2840 = vpop.f32.mrf.mxu0
        %v2841 = vadd.f32 %v2660, %v2840
        %v2842 = vpop.f32.mrf.mxu0
        %v2843 = vpop.f32.mrf.mxu0
        %v2844 = vadd.f32 %v2660, %v2843
        %v2845 = vpop.f32.mrf.mxu0
        %2846 = vmatprep.mubr.bf16.mxu0 %v2622
        %2847 = vmatmul.mubr.bf16.gmra.mxu0 %v2621
        %v2848 = vpop.f32.mrf.mxu0
        %v2849 = vadd.f32 %v2660, %v2848
        %v2850 = vpop.f32.mrf.mxu0
        %v2851 = vpop.f32.mrf.mxu0
        %v2852 = vadd.f32 %v2660, %v2851
        %v2853 = vpop.f32.mrf.mxu0
        %2854 = vdwg.mxu0
        %v2855 = vadd.f32 %v1343, %v2793
        %v2856 = vadd.f32 %v1344, %v2796
        %v2857 = vadd.f32 %v1345, %v2801
        %v2858 = vadd.f32 %v1346, %v2804
        %v2859 = vadd.f32 %v1347, %v2809
        %v2860 = vadd.f32 %v1348, %v2812
        %v2861 = vadd.f32 %v1349, %v2817
        %v2862 = vadd.f32 %v1350, %v2820
        %v2863 = vadd.f32 %v1351, %v2825
        %v2864 = vadd.f32 %v1352, %v2828
        %v2865 = vadd.f32 %v1353, %v2833
        %v2866 = vadd.f32 %v1354, %v2836
        %v2867 = vadd.f32 %v1355, %v2841
        %v2868 = vadd.f32 %v1356, %v2844
        %v2869 = vadd.f32 %v1357, %v2849
        %v2870 = vadd.f32 %v1358, %v2852
        %v2871 = vld [vmem:[%s1005] sm:$0x1]
        %v2872 = vld [vmem:[%s1008] sm:$0x1]
        %v2873 = vsel %vm1471, %v2855, 0.0
        %2874 = vadd.xlane.f32.xlu0 %v2873
        %v2875 = vpop.xlane.xlu0 %2874
        %v2876 = vsel %vm1471, %v2856, 0.0
        %2877 = vadd.xlane.f32.xlu0 %v2876
        %v2878 = vpop.xlane.xlu0 %2877
        %v2879 = vsel %vm1471, %v2857, 0.0
        %2880 = vadd.xlane.f32.xlu0 %v2879
        %v2881 = vpop.xlane.xlu0 %2880
        %v2882 = vsel %vm1471, %v2858, 0.0
        %2883 = vadd.xlane.f32.xlu0 %v2882
        %v2884 = vpop.xlane.xlu0 %2883
        %v2885 = vsel %vm1471, %v2859, 0.0
        %2886 = vadd.xlane.f32.xlu0 %v2885
        %v2887 = vpop.xlane.xlu0 %2886
        %v2888 = vsel %vm1471, %v2860, 0.0
        %2889 = vadd.xlane.f32.xlu0 %v2888
        %v2890 = vpop.xlane.xlu0 %2889
        %v2891 = vsel %vm1471, %v2861, 0.0
        %2892 = vadd.xlane.f32.xlu0 %v2891
        %v2893 = vpop.xlane.xlu0 %2892
        %v2894 = vsel %vm1471, %v2862, 0.0
        %2895 = vadd.xlane.f32.xlu0 %v2894
        %v2896 = vpop.xlane.xlu0 %2895
        %v2897 = vsel %vm1471, %v2863, 0.0
        %2898 = vadd.xlane.f32.xlu0 %v2897
        %v2899 = vpop.xlane.xlu0 %2898
        %v2900 = vsel %vm1471, %v2864, 0.0
        %2901 = vadd.xlane.f32.xlu0 %v2900
        %v2902 = vpop.xlane.xlu0 %2901
        %v2903 = vsel %vm1471, %v2865, 0.0
        %2904 = vadd.xlane.f32.xlu0 %v2903
        %v2905 = vpop.xlane.xlu0 %2904
        %v2906 = vsel %vm1471, %v2866, 0.0
        %2907 = vadd.xlane.f32.xlu0 %v2906
        %v2908 = vpop.xlane.xlu0 %2907
        %v2909 = vsel %vm1471, %v2867, 0.0
        %2910 = vadd.xlane.f32.xlu0 %v2909
        %v2911 = vpop.xlane.xlu0 %2910
        %v2912 = vsel %vm1471, %v2868, 0.0
        %2913 = vadd.xlane.f32.xlu0 %v2912
        %v2914 = vpop.xlane.xlu0 %2913
        %v2915 = vsel %vm1471, %v2869, 0.0
        %2916 = vadd.xlane.f32.xlu0 %v2915
        %v2917 = vpop.xlane.xlu0 %2916
        %v2918 = vsel %vm1471, %v2870, 0.0
        %2919 = vadd.xlane.f32.xlu0 %v2918
        %v2920 = vpop.xlane.xlu0 %2919
        %v2921 = vrcp.pop 32.0
        %v2922 = vmul.f32 %v2875, %v2921
        %v2923 = vmul.f32 %v2878, %v2921
        %v2924 = vmul.f32 %v2881, %v2921
        %v2925 = vmul.f32 %v2884, %v2921
        %v2926 = vmul.f32 %v2887, %v2921
        %v2927 = vmul.f32 %v2890, %v2921
        %v2928 = vmul.f32 %v2893, %v2921
        %v2929 = vmul.f32 %v2896, %v2921
        %v2930 = vmul.f32 %v2899, %v2921
        %v2931 = vmul.f32 %v2902, %v2921
        %v2932 = vmul.f32 %v2905, %v2921
        %v2933 = vmul.f32 %v2908, %v2921
        %v2934 = vmul.f32 %v2911, %v2921
        %v2935 = vmul.f32 %v2914, %v2921
        %v2936 = vmul.f32 %v2917, %v2921
        %v2937 = vmul.f32 %v2920, %v2921
        %v2938 = vsub.f32 %v2855, %v2922
        %v2939 = vsub.f32 %v2856, %v2923
        %v2940 = vsub.f32 %v2857, %v2924
        %v2941 = vsub.f32 %v2858, %v2925
        %v2942 = vsub.f32 %v2859, %v2926
        %v2943 = vsub.f32 %v2860, %v2927
        %v2944 = vsub.f32 %v2861, %v2928
        %v2945 = vsub.f32 %v2862, %v2929
        %v2946 = vsub.f32 %v2863, %v2930
        %v2947 = vsub.f32 %v2864, %v2931
        %v2948 = vsub.f32 %v2865, %v2932
        %v2949 = vsub.f32 %v2866, %v2933
        %v2950 = vsub.f32 %v2867, %v2934
        %v2951 = vsub.f32 %v2868, %v2935
        %v2952 = vsub.f32 %v2869, %v2936
        %v2953 = vsub.f32 %v2870, %v2937
        %v2954 = vmul.f32 %v2938, %v2938
        %v2955 = vmul.f32 %v2939, %v2939
        %v2956 = vmul.f32 %v2940, %v2940
        %v2957 = vmul.f32 %v2941, %v2941
        %v2958 = vmul.f32 %v2942, %v2942
        %v2959 = vmul.f32 %v2943, %v2943
        %v2960 = vmul.f32 %v2944, %v2944
        %v2961 = vmul.f32 %v2945, %v2945
        %v2962 = vmul.f32 %v2946, %v2946
        %v2963 = vmul.f32 %v2947, %v2947
        %v2964 = vmul.f32 %v2948, %v2948
        %v2965 = vmul.f32 %v2949, %v2949
        %v2966 = vmul.f32 %v2950, %v2950
        %v2967 = vmul.f32 %v2951, %v2951
        %v2968 = vmul.f32 %v2952, %v2952
        %v2969 = vmul.f32 %v2953, %v2953
        %v2970 = vsel %vm1471, %v2954, 0.0
        %2971 = vadd.xlane.f32.xlu0 %v2970
        %v2972 = vpop.xlane.xlu0 %2971
        %v2973 = vsel %vm1471, %v2955, 0.0
        %2974 = vadd.xlane.f32.xlu0 %v2973
        %v2975 = vpop.xlane.xlu0 %2974
        %v2976 = vsel %vm1471, %v2956, 0.0
        %2977 = vadd.xlane.f32.xlu0 %v2976
        %v2978 = vpop.xlane.xlu0 %2977
        %v2979 = vsel %vm1471, %v2957, 0.0
        %2980 = vadd.xlane.f32.xlu0 %v2979
        %v2981 = vpop.xlane.xlu0 %2980
        %v2982 = vsel %vm1471, %v2958, 0.0
        %2983 = vadd.xlane.f32.xlu0 %v2982
        %v2984 = vpop.xlane.xlu0 %2983
        %v2985 = vsel %vm1471, %v2959, 0.0
        %2986 = vadd.xlane.f32.xlu0 %v2985
        %v2987 = vpop.xlane.xlu0 %2986
        %v2988 = vsel %vm1471, %v2960, 0.0
        %2989 = vadd.xlane.f32.xlu0 %v2988
        %v2990 = vpop.xlane.xlu0 %2989
        %v2991 = vsel %vm1471, %v2961, 0.0
        %2992 = vadd.xlane.f32.xlu0 %v2991
        %v2993 = vpop.xlane.xlu0 %2992
        %v2994 = vsel %vm1471, %v2962, 0.0
        %2995 = vadd.xlane.f32.xlu0 %v2994
        %v2996 = vpop.xlane.xlu0 %2995
        %v2997 = vsel %vm1471, %v2963, 0.0
        %2998 = vadd.xlane.f32.xlu0 %v2997
        %v2999 = vpop.xlane.xlu0 %2998
        %v3000 = vsel %vm1471, %v2964, 0.0
        %3001 = vadd.xlane.f32.xlu0 %v3000
        %v3002 = vpop.xlane.xlu0 %3001
        %v3003 = vsel %vm1471, %v2965, 0.0
        %3004 = vadd.xlane.f32.xlu0 %v3003
        %v3005 = vpop.xlane.xlu0 %3004
        %v3006 = vsel %vm1471, %v2966, 0.0
        %3007 = vadd.xlane.f32.xlu0 %v3006
        %v3008 = vpop.xlane.xlu0 %3007
        %v3009 = vsel %vm1471, %v2967, 0.0
        %3010 = vadd.xlane.f32.xlu0 %v3009
        %v3011 = vpop.xlane.xlu0 %3010
        %v3012 = vsel %vm1471, %v2968, 0.0
        %3013 = vadd.xlane.f32.xlu0 %v3012
        %v3014 = vpop.xlane.xlu0 %3013
        %v3015 = vsel %vm1471, %v2969, 0.0
        %3016 = vadd.xlane.f32.xlu0 %v3015
        %v3017 = vpop.xlane.xlu0 %3016
        %v3018 = vmul.f32 %v2972, %v2921
        %v3019 = vmul.f32 %v2975, %v2921
        %v3020 = vmul.f32 %v2978, %v2921
        %v3021 = vmul.f32 %v2981, %v2921
        %v3022 = vmul.f32 %v2984, %v2921
        %v3023 = vmul.f32 %v2987, %v2921
        %v3024 = vmul.f32 %v2990, %v2921
        %v3025 = vmul.f32 %v2993, %v2921
        %v3026 = vmul.f32 %v2996, %v2921
        %v3027 = vmul.f32 %v2999, %v2921
        %v3028 = vmul.f32 %v3002, %v2921
        %v3029 = vmul.f32 %v3005, %v2921
        %v3030 = vmul.f32 %v3008, %v2921
        %v3031 = vmul.f32 %v3011, %v2921
        %v3032 = vmul.f32 %v3014, %v2921
        %v3033 = vmul.f32 %v3017, %v2921
        %v3034 = vadd.f32 %v3018, 0.0001
        %v3035 = vadd.f32 %v3019, 0.0001
        %v3036 = vadd.f32 %v3020, 0.0001
        %v3037 = vadd.f32 %v3021, 0.0001
        %v3038 = vadd.f32 %v3022, 0.0001
        %v3039 = vadd.f32 %v3023, 0.0001
        %v3040 = vadd.f32 %v3024, 0.0001
        %v3041 = vadd.f32 %v3025, 0.0001
        %v3042 = vadd.f32 %v3026, 0.0001
        %v3043 = vadd.f32 %v3027, 0.0001
        %v3044 = vadd.f32 %v3028, 0.0001
        %v3045 = vadd.f32 %v3029, 0.0001
        %v3046 = vadd.f32 %v3030, 0.0001
        %v3047 = vadd.f32 %v3031, 0.0001
        %v3048 = vadd.f32 %v3032, 0.0001
        %v3049 = vadd.f32 %v3033, 0.0001
        %v3050 = vrsqrt.pop %v3034
        %v3051 = vrsqrt.pop %v3035
        %v3052 = vrsqrt.pop %v3036
        %v3053 = vrsqrt.pop %v3037
        %v3054 = vrsqrt.pop %v3038
        %v3055 = vrsqrt.pop %v3039
        %v3056 = vrsqrt.pop %v3040
        %v3057 = vrsqrt.pop %v3041
        %v3058 = vrsqrt.pop %v3042
        %v3059 = vrsqrt.pop %v3043
        %v3060 = vrsqrt.pop %v3044
        %v3061 = vrsqrt.pop %v3045
        %v3062 = vrsqrt.pop %v3046
        %v3063 = vrsqrt.pop %v3047
        %v3064 = vrsqrt.pop %v3048
        %v3065 = vrsqrt.pop %v3049
        %v3066 = vmul.f32 %v2938, %v3050
        %v3067 = vmul.f32 %v2939, %v3051
        %v3068 = vmul.f32 %v2940, %v3052
        %v3069 = vmul.f32 %v2941, %v3053
        %v3070 = vmul.f32 %v2942, %v3054
        %v3071 = vmul.f32 %v2943, %v3055
        %v3072 = vmul.f32 %v2944, %v3056
        %v3073 = vmul.f32 %v2945, %v3057
        %v3074 = vmul.f32 %v2946, %v3058
        %v3075 = vmul.f32 %v2947, %v3059
        %v3076 = vmul.f32 %v2948, %v3060
        %v3077 = vmul.f32 %v2949, %v3061
        %v3078 = vmul.f32 %v2950, %v3062
        %v3079 = vmul.f32 %v2951, %v3063
        %v3080 = vmul.f32 %v2952, %v3064
        %v3081 = vmul.f32 %v2953, %v3065
        %v3083 = vlaneseq
        %v3084 = vshrl.u32 %v3083, 7
        %v3085 = vsub.s32 0, %v3084
        %v3086 = vrot.slane %v2871, %v3085
        %v3088 = vmul.f32 %v3066, %v3086
        %v3089 = vmul.f32 %v3067, %v3086
        %v3090 = vmul.f32 %v3068, %v3086
        %v3091 = vmul.f32 %v3069, %v3086
        %v3092 = vmul.f32 %v3070, %v3086
        %v3093 = vmul.f32 %v3071, %v3086
        %v3094 = vmul.f32 %v3072, %v3086
        %v3095 = vmul.f32 %v3073, %v3086
        %v3096 = vmul.f32 %v3074, %v3086
        %v3097 = vmul.f32 %v3075, %v3086
        %v3098 = vmul.f32 %v3076, %v3086
        %v3099 = vmul.f32 %v3077, %v3086
        %v3100 = vmul.f32 %v3078, %v3086
        %v3101 = vmul.f32 %v3079, %v3086
        %v3102 = vmul.f32 %v3080, %v3086
        %v3103 = vmul.f32 %v3081, %v3086
        %v3105 = vlaneseq
        %v3106 = vshrl.u32 %v3105, 7
        %v3107 = vsub.s32 0, %v3106
        %v3108 = vrot.slane %v2872, %v3107
        %v3110 = vadd.f32 %v3088, %v3108
        %v3111 = vadd.f32 %v3089, %v3108
        %v3112 = vadd.f32 %v3090, %v3108
        %v3113 = vadd.f32 %v3091, %v3108
        %v3114 = vadd.f32 %v3092, %v3108
        %v3115 = vadd.f32 %v3093, %v3108
        %v3116 = vadd.f32 %v3094, %v3108
        %v3117 = vadd.f32 %v3095, %v3108
        %v3118 = vadd.f32 %v3096, %v3108
        %v3119 = vadd.f32 %v3097, %v3108
        %v3120 = vadd.f32 %v3098, %v3108
        %v3121 = vadd.f32 %v3099, %v3108
        %v3122 = vadd.f32 %v3100, %v3108
        %v3123 = vadd.f32 %v3101, %v3108
        %v3124 = vadd.f32 %v3102, %v3108
        %v3125 = vadd.f32 %v3103, %v3108
        %v3126 = vmul.f32 %v3110, %v1085
        %v3127 = vmul.f32 %v3111, %v1086
        %v3128 = vmul.f32 %v3112, %v1087
        %v3129 = vmul.f32 %v3113, %v1088
        %v3130 = vmul.f32 %v3114, %v1089
        %v3131 = vmul.f32 %v3115, %v1090
        %v3132 = vmul.f32 %v3116, %v1091
        %v3133 = vmul.f32 %v3117, %v1092
        %v3134 = vmul.f32 %v3118, %v1093
        %v3135 = vmul.f32 %v3119, %v1094
        %v3136 = vmul.f32 %v3120, %v1095
        %v3137 = vmul.f32 %v3121, %v1096
        %v3138 = vmul.f32 %v3122, %v1097
        %v3139 = vmul.f32 %v3123, %v1098
        %v3140 = vmul.f32 %v3124, %v1099
        %v3141 = vmul.f32 %v3125, %v1100
        %v3142 = vld [vmem:[%s1016] sm:$0x1]
        %v3143 = vld [vmem:[%s1013] sm:$0xf]
        %v3144 = vld [vmem:[%s1013 + $0x4] sm:$0xf]
        %v3145 = vld [vmem:[%s1013 + $0x8] sm:$0xf]
        %v3146 = vld [vmem:[%s1013 + $0xc] sm:$0xf]
        %s3147 = scalar_lea.vmem %s1013, 16
        %v3148 = vld [vmem:[%s3147] sm:$0xf]
        %v3149 = vld [vmem:[%s3147 + $0x4] sm:$0xf]
        %v3150 = vld [vmem:[%s3147 + $0x8] sm:$0xf]
        %v3151 = vld [vmem:[%s3147 + $0xc] sm:$0xf]
        %s3152 = scalar_lea.vmem %s1013, 32
        %v3153 = vld [vmem:[%s3152] sm:$0xf]
        %v3154 = vld [vmem:[%s3152 + $0x4] sm:$0xf]
        %v3155 = vld [vmem:[%s3152 + $0x8] sm:$0xf]
        %v3156 = vld [vmem:[%s3152 + $0xc] sm:$0xf]
        %v3157 = vpack.c.bf16 %v3127, %v3126
        %v3158 = vpack.c.bf16 %v3129, %v3128
        %v3159 = vpack.c.bf16 %v3131, %v3130
        %v3160 = vpack.c.bf16 %v3133, %v3132
        %v3161 = vpack.c.bf16 %v3135, %v3134
        %v3162 = vpack.c.bf16 %v3137, %v3136
        %v3163 = vpack.c.bf16 %v3139, %v3138
        %v3164 = vpack.c.bf16 %v3141, %v3140
        %vm3165 = vsmask.f32 256
        %v3167 = vshrl.u32 %v3157, 16
        %v3169 = vrot.slane %v3167, 7
        %v3170 = vshll.u32 %v3157, 16
        %v3172 = vor.u32 %v3169, %v3170
        %v3174 = vshrl.u32 %v3158, 16
        %v3176 = vrot.slane %v3174, 7
        %v3177 = vshll.u32 %v3158, 16
        %v3179 = vor.u32 %v3176, %v3177
        %v3180 = vsel %vm3165, %v3169, %v3179
        %v3182 = vshrl.u32 %v3159, 16
        %v3184 = vrot.slane %v3182, 7
        %v3185 = vshll.u32 %v3159, 16
        %v3187 = vor.u32 %v3184, %v3185
        %v3188 = vsel %vm3165, %v3176, %v3187
        %v3190 = vshrl.u32 %v3160, 16
        %v3192 = vrot.slane %v3190, 7
        %v3193 = vshll.u32 %v3160, 16
        %v3195 = vor.u32 %v3192, %v3193
        %v3196 = vsel %vm3165, %v3184, %v3195
        %v3198 = vshrl.u32 %v3161, 16
        %v3200 = vrot.slane %v3198, 7
        %v3201 = vshll.u32 %v3161, 16
        %v3203 = vor.u32 %v3200, %v3201
        %v3204 = vsel %vm3165, %v3192, %v3203
        %v3206 = vshrl.u32 %v3162, 16
        %v3208 = vrot.slane %v3206, 7
        %v3209 = vshll.u32 %v3162, 16
        %v3211 = vor.u32 %v3208, %v3209
        %v3212 = vsel %vm3165, %v3200, %v3211
        %v3214 = vshrl.u32 %v3163, 16
        %v3216 = vrot.slane %v3214, 7
        %v3217 = vshll.u32 %v3163, 16
        %v3219 = vor.u32 %v3216, %v3217
        %v3220 = vsel %vm3165, %v3208, %v3219
        %v3222 = vshrl.u32 %v3164, 16
        %v3224 = vrot.slane %v3222, 7
        %v3225 = vshll.u32 %v3164, 16
        %v3227 = vor.u32 %v3224, %v3225
        %v3228 = vsel %vm3165, %v3216, %v3227
        %vm3230 = vcmask 1040384
        %vm3231 = vmand %vm3230, %vm3165
        %v3232 = vsel %vm3231, 0, %v3172
        %v3237 = vunpack.c.l.b16 %v3148
        %v3238 = vunpack.c.l.b16 %v3149
        %v3239 = vunpack.c.l.b16 %v3150
        %v3240 = vunpack.c.l.b16 %v3151
        %v3241 = vpack.c.b16 %v3238, %v3237
        %v3242 = vpack.c.b16 %v3240, %v3239
        %v3245 = vsel %vm1471, %v3157, 0
        %v3247 = vsel %vm1471, %v3158, 0
        %v3249 = vsel %vm1471, %v3159, 0
        %v3251 = vsel %vm1471, %v3160, 0
        %v3253 = vsel %vm1471, %v3161, 0
        %v3255 = vsel %vm1471, %v3162, 0
        %v3257 = vsel %vm1471, %v3163, 0
        %v3259 = vsel %vm1471, %v3164, 0
        %3261 = vmatprep.subr.bf16.mxu0 0
        %3262 = vmatpush1.bf16.msra.mxu0 0
        %3263 = vmatprep.subr.bf16.mxu0 0
        %3264 = vmatpush1.bf16.msra.mxu0 0
        %3265 = vmatprep.subr.bf16.mxu0 0
        %3266 = vmatpush1.bf16.msra.mxu0 0
        %3267 = vmatprep.subr.bf16.mxu0 0
        %3268 = vmatpush1.bf16.msra.mxu0 0
        %3269 = vmatprep.subr.bf16.mxu0 0
        %3270 = vmatpush1.bf16.msra.mxu0 0
        %3271 = vmatprep.subr.bf16.mxu0 0
        %3272 = vmatpush1.bf16.msra.mxu0 0
        %3273 = vmatprep.subr.bf16.mxu0 0
        %3274 = vmatpush1.bf16.msra.mxu0 %v3242
        %3275 = vmatprep.subr.bf16.mxu0 0
        %3276 = vmatpush1.bf16.msra.mxu0 %v3241
        %3277 = vmatprep.subr.bf16.mxu0 0
        %3278 = vmatpush2.bf16.msra.mxu0 0
        %3279 = vmatprep.subr.bf16.mxu0 0
        %3280 = vmatpush2.bf16.msra.mxu0 0
        %3281 = vmatprep.subr.bf16.mxu0 0
        %3282 = vmatpush2.bf16.msra.mxu0 0
        %3283 = vmatprep.subr.bf16.mxu0 0
        %3284 = vmatpush2.bf16.msra.mxu0 0
        %3285 = vmatprep.subr.bf16.mxu0 0
        %3286 = vmatpush2.bf16.msra.mxu0 0
        %3287 = vmatprep.subr.bf16.mxu0 0
        %3288 = vmatpush2.bf16.msra.mxu0 0
        %3289 = vmatprep.subr.bf16.mxu0 0
        %3290 = vmatpush2.bf16.msra.mxu0 0
        %3291 = vmatprep.subr.bf16.mxu0 0
        %3292 = vmatpush2.bf16.msra.mxu0 0
        %3293 = vmatprep.mubr.bf16.mxu0 0
        %3294 = vmatmul.mubr.bf16.gmra.mxu0 %v3245
        %v3295 = vpop.f32.mrf.mxu0
        %v3296 = vadd.f32 0.0, %v3295
        %v3297 = vpop.f32.mrf.mxu0
        %v3298 = vpop.f32.mrf.mxu0
        %v3299 = vadd.f32 0.0, %v3298
        %v3300 = vpop.f32.mrf.mxu0
        %3301 = vmatprep.mubr.bf16.mxu0 0
        %3302 = vmatmul.mubr.bf16.gmra.mxu0 %v3247
        %v3303 = vpop.f32.mrf.mxu0
        %v3304 = vadd.f32 0.0, %v3303
        %v3305 = vpop.f32.mrf.mxu0
        %v3306 = vpop.f32.mrf.mxu0
        %v3307 = vadd.f32 0.0, %v3306
        %v3308 = vpop.f32.mrf.mxu0
        %3309 = vmatprep.mubr.bf16.mxu0 0
        %3310 = vmatmul.mubr.bf16.gmra.mxu0 %v3249
        %v3311 = vpop.f32.mrf.mxu0
        %v3312 = vadd.f32 0.0, %v3311
        %v3313 = vpop.f32.mrf.mxu0
        %v3314 = vpop.f32.mrf.mxu0
        %v3315 = vadd.f32 0.0, %v3314
        %v3316 = vpop.f32.mrf.mxu0
        %3317 = vmatprep.mubr.bf16.mxu0 0
        %3318 = vmatmul.mubr.bf16.gmra.mxu0 %v3251
        %v3319 = vpop.f32.mrf.mxu0
        %v3320 = vadd.f32 0.0, %v3319
        %v3321 = vpop.f32.mrf.mxu0
        %v3322 = vpop.f32.mrf.mxu0
        %v3323 = vadd.f32 0.0, %v3322
        %v3324 = vpop.f32.mrf.mxu0
        %3325 = vmatprep.mubr.bf16.mxu0 0
        %3326 = vmatmul.mubr.bf16.gmra.mxu0 %v3253
        %v3327 = vpop.f32.mrf.mxu0
        %v3328 = vadd.f32 0.0, %v3327
        %v3329 = vpop.f32.mrf.mxu0
        %v3330 = vpop.f32.mrf.mxu0
        %v3331 = vadd.f32 0.0, %v3330
        %v3332 = vpop.f32.mrf.mxu0
        %3333 = vmatprep.mubr.bf16.mxu0 0
        %3334 = vmatmul.mubr.bf16.gmra.mxu0 %v3255
        %v3335 = vpop.f32.mrf.mxu0
        %v3336 = vadd.f32 0.0, %v3335
        %v3337 = vpop.f32.mrf.mxu0
        %v3338 = vpop.f32.mrf.mxu0
        %v3339 = vadd.f32 0.0, %v3338
        %v3340 = vpop.f32.mrf.mxu0
        %3341 = vmatprep.mubr.bf16.mxu0 0
        %3342 = vmatmul.mubr.bf16.gmra.mxu0 %v3257
        %v3343 = vpop.f32.mrf.mxu0
        %v3344 = vadd.f32 0.0, %v3343
        %v3345 = vpop.f32.mrf.mxu0
        %v3346 = vpop.f32.mrf.mxu0
        %v3347 = vadd.f32 0.0, %v3346
        %v3348 = vpop.f32.mrf.mxu0
        %3349 = vmatprep.mubr.bf16.mxu0 0
        %3350 = vmatmul.mubr.bf16.gmra.mxu0 %v3259
        %v3351 = vpop.f32.mrf.mxu0
        %v3352 = vadd.f32 0.0, %v3351
        %v3353 = vpop.f32.mrf.mxu0
        %v3354 = vpop.f32.mrf.mxu0
        %v3355 = vadd.f32 0.0, %v3354
        %v3356 = vpop.f32.mrf.mxu0
        %3357 = vdwg.mxu0
        %v3362 = vunpack.c.l.b16 %v3143
        %v3363 = vunpack.c.l.b16 %v3144
        %v3364 = vunpack.c.l.b16 %v3145
        %v3365 = vunpack.c.l.b16 %v3146
        %v3366 = vpack.c.b16 %v3363, %v3362
        %v3367 = vpack.c.b16 %v3365, %v3364
        %v3371 = vsel %vm1471, %v3232, 0
        %v3374 = vsel %vm1471, %v3180, 0
        %v3377 = vsel %vm1471, %v3188, 0
        %v3380 = vsel %vm1471, %v3196, 0
        %v3383 = vsel %vm1471, %v3204, 0
        %v3386 = vsel %vm1471, %v3212, 0
        %v3389 = vsel %vm1471, %v3220, 0
        %v3392 = vsel %vm1471, %v3228, 0
        %3394 = vmatprep.subr.bf16.mxu0 0
        %3395 = vmatpush1.bf16.msra.mxu0 0
        %3396 = vmatprep.subr.bf16.mxu0 0
        %3397 = vmatpush1.bf16.msra.mxu0 0
        %3398 = vmatprep.subr.bf16.mxu0 0
        %3399 = vmatpush1.bf16.msra.mxu0 0
        %3400 = vmatprep.subr.bf16.mxu0 0
        %3401 = vmatpush1.bf16.msra.mxu0 0
        %3402 = vmatprep.subr.bf16.mxu0 0
        %3403 = vmatpush1.bf16.msra.mxu0 0
        %3404 = vmatprep.subr.bf16.mxu0 0
        %3405 = vmatpush1.bf16.msra.mxu0 0
        %3406 = vmatprep.subr.bf16.mxu0 0
        %3407 = vmatpush1.bf16.msra.mxu0 %v3367
        %3408 = vmatprep.subr.bf16.mxu0 0
        %3409 = vmatpush1.bf16.msra.mxu0 %v3366
        %3410 = vmatprep.subr.bf16.mxu0 0
        %3411 = vmatpush2.bf16.msra.mxu0 0
        %3412 = vmatprep.subr.bf16.mxu0 0
        %3413 = vmatpush2.bf16.msra.mxu0 0
        %3414 = vmatprep.subr.bf16.mxu0 0
        %3415 = vmatpush2.bf16.msra.mxu0 0
        %3416 = vmatprep.subr.bf16.mxu0 0
        %3417 = vmatpush2.bf16.msra.mxu0 0
        %3418 = vmatprep.subr.bf16.mxu0 0
        %3419 = vmatpush2.bf16.msra.mxu0 0
        %3420 = vmatprep.subr.bf16.mxu0 0
        %3421 = vmatpush2.bf16.msra.mxu0 0
        %3422 = vmatprep.subr.bf16.mxu0 0
        %3423 = vmatpush2.bf16.msra.mxu0 0
        %3424 = vmatprep.subr.bf16.mxu0 0
        %3425 = vmatpush2.bf16.msra.mxu0 0
        %3426 = vmatprep.mubr.bf16.mxu0 0
        %3427 = vmatmul.mubr.bf16.gmra.mxu0 %v3371
        %v3428 = vpop.f32.mrf.mxu0
        %v3429 = vadd.f32 %v3296, %v3428
        %v3430 = vpop.f32.mrf.mxu0
        %v3431 = vpop.f32.mrf.mxu0
        %v3432 = vadd.f32 %v3299, %v3431
        %v3433 = vpop.f32.mrf.mxu0
        %3434 = vmatprep.mubr.bf16.mxu0 0
        %3435 = vmatmul.mubr.bf16.gmra.mxu0 %v3374
        %v3436 = vpop.f32.mrf.mxu0
        %v3437 = vadd.f32 %v3304, %v3436
        %v3438 = vpop.f32.mrf.mxu0
        %v3439 = vpop.f32.mrf.mxu0
        %v3440 = vadd.f32 %v3307, %v3439
        %v3441 = vpop.f32.mrf.mxu0
        %3442 = vmatprep.mubr.bf16.mxu0 0
        %3443 = vmatmul.mubr.bf16.gmra.mxu0 %v3377
        %v3444 = vpop.f32.mrf.mxu0
        %v3445 = vadd.f32 %v3312, %v3444
        %v3446 = vpop.f32.mrf.mxu0
        %v3447 = vpop.f32.mrf.mxu0
        %v3448 = vadd.f32 %v3315, %v3447
        %v3449 = vpop.f32.mrf.mxu0
        %3450 = vmatprep.mubr.bf16.mxu0 0
        %3451 = vmatmul.mubr.bf16.gmra.mxu0 %v3380
        %v3452 = vpop.f32.mrf.mxu0
        %v3453 = vadd.f32 %v3320, %v3452
        %v3454 = vpop.f32.mrf.mxu0
        %v3455 = vpop.f32.mrf.mxu0
        %v3456 = vadd.f32 %v3323, %v3455
        %v3457 = vpop.f32.mrf.mxu0
        %3458 = vmatprep.mubr.bf16.mxu0 0
        %3459 = vmatmul.mubr.bf16.gmra.mxu0 %v3383
        %v3460 = vpop.f32.mrf.mxu0
        %v3461 = vadd.f32 %v3328, %v3460
        %v3462 = vpop.f32.mrf.mxu0
        %v3463 = vpop.f32.mrf.mxu0
        %v3464 = vadd.f32 %v3331, %v3463
        %v3465 = vpop.f32.mrf.mxu0
        %3466 = vmatprep.mubr.bf16.mxu0 0
        %3467 = vmatmul.mubr.bf16.gmra.mxu0 %v3386
        %v3468 = vpop.f32.mrf.mxu0
        %v3469 = vadd.f32 %v3336, %v3468
        %v3470 = vpop.f32.mrf.mxu0
        %v3471 = vpop.f32.mrf.mxu0
        %v3472 = vadd.f32 %v3339, %v3471
        %v3473 = vpop.f32.mrf.mxu0
        %3474 = vmatprep.mubr.bf16.mxu0 0
        %3475 = vmatmul.mubr.bf16.gmra.mxu0 %v3389
        %v3476 = vpop.f32.mrf.mxu0
        %v3477 = vadd.f32 %v3344, %v3476
        %v3478 = vpop.f32.mrf.mxu0
        %v3479 = vpop.f32.mrf.mxu0
        %v3480 = vadd.f32 %v3347, %v3479
        %v3481 = vpop.f32.mrf.mxu0
        %3482 = vmatprep.mubr.bf16.mxu0 0
        %3483 = vmatmul.mubr.bf16.gmra.mxu0 %v3392
        %v3484 = vpop.f32.mrf.mxu0
        %v3485 = vadd.f32 %v3352, %v3484
        %v3486 = vpop.f32.mrf.mxu0
        %v3487 = vpop.f32.mrf.mxu0
        %v3488 = vadd.f32 %v3355, %v3487
        %v3489 = vpop.f32.mrf.mxu0
        %3490 = vdwg.mxu0
        %vm3491 = vsmask.f32 7424
        %v3492 = vrot.slane %v3170, 1
        %v3493 = vor.u32 %v3167, %v3492
        %v3494 = vrot.slane %v3177, 1
        %v3495 = vsel %vm3491, %v3493, %v3494
        %v3496 = vor.u32 %v3174, %v3494
        %v3497 = vrot.slane %v3185, 1
        %v3498 = vsel %vm3491, %v3496, %v3497
        %v3499 = vor.u32 %v3182, %v3497
        %v3500 = vrot.slane %v3193, 1
        %v3501 = vsel %vm3491, %v3499, %v3500
        %v3502 = vor.u32 %v3190, %v3500
        %v3503 = vrot.slane %v3201, 1
        %v3504 = vsel %vm3491, %v3502, %v3503
        %v3505 = vor.u32 %v3198, %v3503
        %v3506 = vrot.slane %v3209, 1
        %v3507 = vsel %vm3491, %v3505, %v3506
        %v3508 = vor.u32 %v3206, %v3506
        %v3509 = vrot.slane %v3217, 1
        %v3510 = vsel %vm3491, %v3508, %v3509
        %v3511 = vor.u32 %v3214, %v3509
        %v3512 = vrot.slane %v3225, 1
        %v3513 = vsel %vm3491, %v3511, %v3512
        %v3514 = vor.u32 %v3222, %v3512
        %vm3516 = vcmask 1047552
        %vm3517 = vmand %vm3516, %vm3491
        %v3518 = vsel %vm3517, %v3514, 0
        %v3523 = vunpack.c.l.b16 %v3153
        %v3524 = vunpack.c.l.b16 %v3154
        %v3525 = vunpack.c.l.b16 %v3155
        %v3526 = vunpack.c.l.b16 %v3156
        %v3527 = vpack.c.b16 %v3524, %v3523
        %v3528 = vpack.c.b16 %v3526, %v3525
        %v3532 = vsel %vm1471, %v3495, 0
        %v3535 = vsel %vm1471, %v3498, 0
        %v3538 = vsel %vm1471, %v3501, 0
        %v3541 = vsel %vm1471, %v3504, 0
        %v3544 = vsel %vm1471, %v3507, 0
        %v3547 = vsel %vm1471, %v3510, 0
        %v3550 = vsel %vm1471, %v3513, 0
        %v3553 = vsel %vm1471, %v3518, 0
        %3555 = vmatprep.subr.bf16.mxu0 0
        %3556 = vmatpush1.bf16.msra.mxu0 0
        %3557 = vmatprep.subr.bf16.mxu0 0
        %3558 = vmatpush1.bf16.msra.mxu0 0
        %3559 = vmatprep.subr.bf16.mxu0 0
        %3560 = vmatpush1.bf16.msra.mxu0 0
        %3561 = vmatprep.subr.bf16.mxu0 0
        %3562 = vmatpush1.bf16.msra.mxu0 0
        %3563 = vmatprep.subr.bf16.mxu0 0
        %3564 = vmatpush1.bf16.msra.mxu0 0
        %3565 = vmatprep.subr.bf16.mxu0 0
        %3566 = vmatpush1.bf16.msra.mxu0 0
        %3567 = vmatprep.subr.bf16.mxu0 0
        %3568 = vmatpush1.bf16.msra.mxu0 %v3528
        %3569 = vmatprep.subr.bf16.mxu0 0
        %3570 = vmatpush1.bf16.msra.mxu0 %v3527
        %3571 = vmatprep.subr.bf16.mxu0 0
        %3572 = vmatpush2.bf16.msra.mxu0 0
        %3573 = vmatprep.subr.bf16.mxu0 0
        %3574 = vmatpush2.bf16.msra.mxu0 0
        %3575 = vmatprep.subr.bf16.mxu0 0
        %3576 = vmatpush2.bf16.msra.mxu0 0
        %3577 = vmatprep.subr.bf16.mxu0 0
        %3578 = vmatpush2.bf16.msra.mxu0 0
        %3579 = vmatprep.subr.bf16.mxu0 0
        %3580 = vmatpush2.bf16.msra.mxu0 0
        %3581 = vmatprep.subr.bf16.mxu0 0
        %3582 = vmatpush2.bf16.msra.mxu0 0
        %3583 = vmatprep.subr.bf16.mxu0 0
        %3584 = vmatpush2.bf16.msra.mxu0 0
        %3585 = vmatprep.subr.bf16.mxu0 0
        %3586 = vmatpush2.bf16.msra.mxu0 0
        %3587 = vmatprep.mubr.bf16.mxu0 0
        %3588 = vmatmul.mubr.bf16.gmra.mxu0 %v3532
        %v3589 = vpop.f32.mrf.mxu0
        %v3590 = vadd.f32 0.0, %v3589
        %v3591 = vpop.f32.mrf.mxu0
        %v3592 = vpop.f32.mrf.mxu0
        %v3593 = vadd.f32 0.0, %v3592
        %v3594 = vpop.f32.mrf.mxu0
        %3595 = vmatprep.mubr.bf16.mxu0 0
        %3596 = vmatmul.mubr.bf16.gmra.mxu0 %v3535
        %v3597 = vpop.f32.mrf.mxu0
        %v3598 = vadd.f32 0.0, %v3597
        %v3599 = vpop.f32.mrf.mxu0
        %v3600 = vpop.f32.mrf.mxu0
        %v3601 = vadd.f32 0.0, %v3600
        %v3602 = vpop.f32.mrf.mxu0
        %3603 = vmatprep.mubr.bf16.mxu0 0
        %3604 = vmatmul.mubr.bf16.gmra.mxu0 %v3538
        %v3605 = vpop.f32.mrf.mxu0
        %v3606 = vadd.f32 0.0, %v3605
        %v3607 = vpop.f32.mrf.mxu0
        %v3608 = vpop.f32.mrf.mxu0
        %v3609 = vadd.f32 0.0, %v3608
        %v3610 = vpop.f32.mrf.mxu0
        %3611 = vmatprep.mubr.bf16.mxu0 0
        %3612 = vmatmul.mubr.bf16.gmra.mxu0 %v3541
        %v3613 = vpop.f32.mrf.mxu0
        %v3614 = vadd.f32 0.0, %v3613
        %v3615 = vpop.f32.mrf.mxu0
        %v3616 = vpop.f32.mrf.mxu0
        %v3617 = vadd.f32 0.0, %v3616
        %v3618 = vpop.f32.mrf.mxu0
        %3619 = vmatprep.mubr.bf16.mxu0 0
        %3620 = vmatmul.mubr.bf16.gmra.mxu0 %v3544
        %v3621 = vpop.f32.mrf.mxu0
        %v3622 = vadd.f32 0.0, %v3621
        %v3623 = vpop.f32.mrf.mxu0
        %v3624 = vpop.f32.mrf.mxu0
        %v3625 = vadd.f32 0.0, %v3624
        %v3626 = vpop.f32.mrf.mxu0
        %3627 = vmatprep.mubr.bf16.mxu0 0
        %3628 = vmatmul.mubr.bf16.gmra.mxu0 %v3547
        %v3629 = vpop.f32.mrf.mxu0
        %v3630 = vadd.f32 0.0, %v3629
        %v3631 = vpop.f32.mrf.mxu0
        %v3632 = vpop.f32.mrf.mxu0
        %v3633 = vadd.f32 0.0, %v3632
        %v3634 = vpop.f32.mrf.mxu0
        %3635 = vmatprep.mubr.bf16.mxu0 0
        %3636 = vmatmul.mubr.bf16.gmra.mxu0 %v3550
        %v3637 = vpop.f32.mrf.mxu0
        %v3638 = vadd.f32 0.0, %v3637
        %v3639 = vpop.f32.mrf.mxu0
        %v3640 = vpop.f32.mrf.mxu0
        %v3641 = vadd.f32 0.0, %v3640
        %v3642 = vpop.f32.mrf.mxu0
        %3643 = vmatprep.mubr.bf16.mxu0 0
        %3644 = vmatmul.mubr.bf16.gmra.mxu0 %v3553
        %v3645 = vpop.f32.mrf.mxu0
        %v3646 = vadd.f32 0.0, %v3645
        %v3647 = vpop.f32.mrf.mxu0
        %v3648 = vpop.f32.mrf.mxu0
        %v3649 = vadd.f32 0.0, %v3648
        %v3650 = vpop.f32.mrf.mxu0
        %3651 = vdwg.mxu0
        %v3652 = vadd.f32 %v3429, %v3590
        %v3653 = vadd.f32 %v3432, %v3593
        %v3654 = vadd.f32 %v3437, %v3598
        %v3655 = vadd.f32 %v3440, %v3601
        %v3656 = vadd.f32 %v3445, %v3606
        %v3657 = vadd.f32 %v3448, %v3609
        %v3658 = vadd.f32 %v3453, %v3614
        %v3659 = vadd.f32 %v3456, %v3617
        %v3660 = vadd.f32 %v3461, %v3622
        %v3661 = vadd.f32 %v3464, %v3625
        %v3662 = vadd.f32 %v3469, %v3630
        %v3663 = vadd.f32 %v3472, %v3633
        %v3664 = vadd.f32 %v3477, %v3638
        %v3665 = vadd.f32 %v3480, %v3641
        %v3666 = vadd.f32 %v3485, %v3646
        %v3667 = vadd.f32 %v3488, %v3649
        %v3669 = vlaneseq
        %v3670 = vshrl.u32 %v3669, 7
        %v3671 = vsub.s32 0, %v3670
        %v3672 = vrot.slane %v3142, %v3671
        %v3674 = vadd.f32 %v3652, %v3672
        %v3675 = vadd.f32 %v3653, %v3672
        %v3676 = vadd.f32 %v3654, %v3672
        %v3677 = vadd.f32 %v3655, %v3672
        %v3678 = vadd.f32 %v3656, %v3672
        %v3679 = vadd.f32 %v3657, %v3672
        %v3680 = vadd.f32 %v3658, %v3672
        %v3681 = vadd.f32 %v3659, %v3672
        %v3682 = vadd.f32 %v3660, %v3672
        %v3683 = vadd.f32 %v3661, %v3672
        %v3684 = vadd.f32 %v3662, %v3672
        %v3685 = vadd.f32 %v3663, %v3672
        %v3686 = vadd.f32 %v3664, %v3672
        %v3687 = vadd.f32 %v3665, %v3672
        %v3688 = vadd.f32 %v3666, %v3672
        %v3689 = vadd.f32 %v3667, %v3672
        %v3690 = vmax.f32 %v3674, 0.0
        %v3691 = vmax.f32 %v3675, 0.0
        %v3692 = vmax.f32 %v3676, 0.0
        %v3693 = vmax.f32 %v3677, 0.0
        %v3694 = vmax.f32 %v3678, 0.0
        %v3695 = vmax.f32 %v3679, 0.0
        %v3696 = vmax.f32 %v3680, 0.0
        %v3697 = vmax.f32 %v3681, 0.0
        %v3698 = vmax.f32 %v3682, 0.0
        %v3699 = vmax.f32 %v3683, 0.0
        %v3700 = vmax.f32 %v3684, 0.0
        %v3701 = vmax.f32 %v3685, 0.0
        %v3702 = vmax.f32 %v3686, 0.0
        %v3703 = vmax.f32 %v3687, 0.0
        %v3704 = vmax.f32 %v3688, 0.0
        %v3705 = vmax.f32 %v3689, 0.0
        %v3706 = vmul.f32 %v3690, %v1085
        %v3707 = vmul.f32 %v3691, %v1086
        %v3708 = vmul.f32 %v3692, %v1087
        %v3709 = vmul.f32 %v3693, %v1088
        %v3710 = vmul.f32 %v3694, %v1089
        %v3711 = vmul.f32 %v3695, %v1090
        %v3712 = vmul.f32 %v3696, %v1091
        %v3713 = vmul.f32 %v3697, %v1092
        %v3714 = vmul.f32 %v3698, %v1093
        %v3715 = vmul.f32 %v3699, %v1094
        %v3716 = vmul.f32 %v3700, %v1095
        %v3717 = vmul.f32 %v3701, %v1096
        %v3718 = vmul.f32 %v3702, %v1097
        %v3719 = vmul.f32 %v3703, %v1098
        %v3720 = vmul.f32 %v3704, %v1099
        %v3721 = vmul.f32 %v3705, %v1100
        %v3722 = vld [vmem:[%s1024] sm:$0x1]
        %v3723 = vld [vmem:[%s1021] sm:$0xf]
        %v3724 = vld [vmem:[%s1021 + $0x4] sm:$0xf]
        %v3725 = vld [vmem:[%s1021 + $0x8] sm:$0xf]
        %v3726 = vld [vmem:[%s1021 + $0xc] sm:$0xf]
        %v3727 = vld [vmem:[%s1021 + $0x10] sm:$0xf]
        %v3728 = vld [vmem:[%s1021 + $0x14] sm:$0xf]
        %v3729 = vld [vmem:[%s1021 + $0x18] sm:$0xf]
        %v3730 = vld [vmem:[%s1021 + $0x1c] sm:$0xf]
        %s3731 = scalar_lea.vmem %s1021, 32
        %v3732 = vld [vmem:[%s3731] sm:$0xf]
        %v3733 = vld [vmem:[%s3731 + $0x4] sm:$0xf]
        %v3734 = vld [vmem:[%s3731 + $0x8] sm:$0xf]
        %v3735 = vld [vmem:[%s3731 + $0xc] sm:$0xf]
        %v3736 = vld [vmem:[%s3731 + $0x10] sm:$0xf]
        %v3737 = vld [vmem:[%s3731 + $0x14] sm:$0xf]
        %v3738 = vld [vmem:[%s3731 + $0x18] sm:$0xf]
        %v3739 = vld [vmem:[%s3731 + $0x1c] sm:$0xf]
        %s3740 = scalar_lea.vmem %s1021, 64
        %v3741 = vld [vmem:[%s3740] sm:$0xf]
        %v3742 = vld [vmem:[%s3740 + $0x4] sm:$0xf]
        %v3743 = vld [vmem:[%s3740 + $0x8] sm:$0xf]
        %v3744 = vld [vmem:[%s3740 + $0xc] sm:$0xf]
        %v3745 = vld [vmem:[%s3740 + $0x10] sm:$0xf]
        %v3746 = vld [vmem:[%s3740 + $0x14] sm:$0xf]
        %v3747 = vld [vmem:[%s3740 + $0x18] sm:$0xf]
        %v3748 = vld [vmem:[%s3740 + $0x1c] sm:$0xf]
        %v3749 = vpack.c.bf16 %v3707, %v3706
        %v3750 = vpack.c.bf16 %v3709, %v3708
        %v3751 = vpack.c.bf16 %v3711, %v3710
        %v3752 = vpack.c.bf16 %v3713, %v3712
        %v3753 = vpack.c.bf16 %v3715, %v3714
        %v3754 = vpack.c.bf16 %v3717, %v3716
        %v3755 = vpack.c.bf16 %v3719, %v3718
        %v3756 = vpack.c.bf16 %v3721, %v3720
        %v3758 = vshrl.u32 %v3749, 16
        %v3760 = vrot.slane %v3758, 7
        %v3761 = vshll.u32 %v3749, 16
        %v3763 = vor.u32 %v3760, %v3761
        %v3765 = vshrl.u32 %v3750, 16
        %v3767 = vrot.slane %v3765, 7
        %v3768 = vshll.u32 %v3750, 16
        %v3770 = vor.u32 %v3767, %v3768
        %v3771 = vsel %vm3165, %v3760, %v3770
        %v3773 = vshrl.u32 %v3751, 16
        %v3775 = vrot.slane %v3773, 7
        %v3776 = vshll.u32 %v3751, 16
        %v3778 = vor.u32 %v3775, %v3776
        %v3779 = vsel %vm3165, %v3767, %v3778
        %v3781 = vshrl.u32 %v3752, 16
        %v3783 = vrot.slane %v3781, 7
        %v3784 = vshll.u32 %v3752, 16
        %v3786 = vor.u32 %v3783, %v3784
        %v3787 = vsel %vm3165, %v3775, %v3786
        %v3789 = vshrl.u32 %v3753, 16
        %v3791 = vrot.slane %v3789, 7
        %v3792 = vshll.u32 %v3753, 16
        %v3794 = vor.u32 %v3791, %v3792
        %v3795 = vsel %vm3165, %v3783, %v3794
        %v3797 = vshrl.u32 %v3754, 16
        %v3799 = vrot.slane %v3797, 7
        %v3800 = vshll.u32 %v3754, 16
        %v3802 = vor.u32 %v3799, %v3800
        %v3803 = vsel %vm3165, %v3791, %v3802
        %v3805 = vshrl.u32 %v3755, 16
        %v3807 = vrot.slane %v3805, 7
        %v3808 = vshll.u32 %v3755, 16
        %v3810 = vor.u32 %v3807, %v3808
        %v3811 = vsel %vm3165, %v3799, %v3810
        %v3813 = vshrl.u32 %v3756, 16
        %v3815 = vrot.slane %v3813, 7
        %v3816 = vshll.u32 %v3756, 16
        %v3818 = vor.u32 %v3815, %v3816
        %v3819 = vsel %vm3165, %v3807, %v3818
        %v3821 = vsel %vm3231, 0, %v3763
        %v3830 = vunpack.c.l.b16 %v3732
        %v3831 = vunpack.c.l.b16 %v3733
        %v3832 = vunpack.c.l.b16 %v3734
        %v3833 = vunpack.c.l.b16 %v3735
        %v3834 = vunpack.c.l.b16 %v3736
        %v3835 = vunpack.c.l.b16 %v3737
        %v3836 = vunpack.c.l.b16 %v3738
        %v3837 = vunpack.c.l.b16 %v3739
        %v3838 = vpack.c.b16 %v3831, %v3830
        %v3839 = vpack.c.b16 %v3833, %v3832
        %v3840 = vpack.c.b16 %v3835, %v3834
        %v3841 = vpack.c.b16 %v3837, %v3836
        %vm3846 = vcmask 523264
        %v3847 = vsel %vm3846, %v3749, 0
        %v3849 = vsel %vm3846, %v3750, 0
        %v3851 = vsel %vm3846, %v3751, 0
        %v3853 = vsel %vm3846, %v3752, 0
        %v3855 = vsel %vm3846, %v3753, 0
        %v3857 = vsel %vm3846, %v3754, 0
        %v3859 = vsel %vm3846, %v3755, 0
        %v3861 = vsel %vm3846, %v3756, 0
        %3863 = vmatprep.subr.bf16.mxu0 0
        %3864 = vmatpush1.bf16.msra.mxu0 0
        %3865 = vmatprep.subr.bf16.mxu0 0
        %3866 = vmatpush1.bf16.msra.mxu0 0
        %3867 = vmatprep.subr.bf16.mxu0 0
        %3868 = vmatpush1.bf16.msra.mxu0 0
        %3869 = vmatprep.subr.bf16.mxu0 0
        %3870 = vmatpush1.bf16.msra.mxu0 0
        %3871 = vmatprep.subr.bf16.mxu0 0
        %3872 = vmatpush1.bf16.msra.mxu0 %v3841
        %3873 = vmatprep.subr.bf16.mxu0 0
        %3874 = vmatpush1.bf16.msra.mxu0 %v3840
        %3875 = vmatprep.subr.bf16.mxu0 0
        %3876 = vmatpush1.bf16.msra.mxu0 %v3839
        %3877 = vmatprep.subr.bf16.mxu0 0
        %3878 = vmatpush1.bf16.msra.mxu0 %v3838
        %3879 = vmatprep.subr.bf16.mxu0 0
        %3880 = vmatpush2.bf16.msra.mxu0 0
        %3881 = vmatprep.subr.bf16.mxu0 0
        %3882 = vmatpush2.bf16.msra.mxu0 0
        %3883 = vmatprep.subr.bf16.mxu0 0
        %3884 = vmatpush2.bf16.msra.mxu0 0
        %3885 = vmatprep.subr.bf16.mxu0 0
        %3886 = vmatpush2.bf16.msra.mxu0 0
        %3887 = vmatprep.subr.bf16.mxu0 0
        %3888 = vmatpush2.bf16.msra.mxu0 0
        %3889 = vmatprep.subr.bf16.mxu0 0
        %3890 = vmatpush2.bf16.msra.mxu0 0
        %3891 = vmatprep.subr.bf16.mxu0 0
        %3892 = vmatpush2.bf16.msra.mxu0 0
        %3893 = vmatprep.subr.bf16.mxu0 0
        %3894 = vmatpush2.bf16.msra.mxu0 0
        %3895 = vmatprep.mubr.bf16.mxu0 0
        %3896 = vmatmul.mubr.bf16.gmra.mxu0 %v3847
        %v3897 = vpop.f32.mrf.mxu0
        %v3898 = vadd.f32 0.0, %v3897
        %v3899 = vpop.f32.mrf.mxu0
        %v3900 = vpop.f32.mrf.mxu0
        %v3901 = vadd.f32 0.0, %v3900
        %v3902 = vpop.f32.mrf.mxu0
        %3903 = vmatprep.mubr.bf16.mxu0 0
        %3904 = vmatmul.mubr.bf16.gmra.mxu0 %v3849
        %v3905 = vpop.f32.mrf.mxu0
        %v3906 = vadd.f32 0.0, %v3905
        %v3907 = vpop.f32.mrf.mxu0
        %v3908 = vpop.f32.mrf.mxu0
        %v3909 = vadd.f32 0.0, %v3908
        %v3910 = vpop.f32.mrf.mxu0
        %3911 = vmatprep.mubr.bf16.mxu0 0
        %3912 = vmatmul.mubr.bf16.gmra.mxu0 %v3851
        %v3913 = vpop.f32.mrf.mxu0
        %v3914 = vadd.f32 0.0, %v3913
        %v3915 = vpop.f32.mrf.mxu0
        %v3916 = vpop.f32.mrf.mxu0
        %v3917 = vadd.f32 0.0, %v3916
        %v3918 = vpop.f32.mrf.mxu0
        %3919 = vmatprep.mubr.bf16.mxu0 0
        %3920 = vmatmul.mubr.bf16.gmra.mxu0 %v3853
        %v3921 = vpop.f32.mrf.mxu0
        %v3922 = vadd.f32 0.0, %v3921
        %v3923 = vpop.f32.mrf.mxu0
        %v3924 = vpop.f32.mrf.mxu0
        %v3925 = vadd.f32 0.0, %v3924
        %v3926 = vpop.f32.mrf.mxu0
        %3927 = vmatprep.mubr.bf16.mxu0 0
        %3928 = vmatmul.mubr.bf16.gmra.mxu0 %v3855
        %v3929 = vpop.f32.mrf.mxu0
        %v3930 = vadd.f32 0.0, %v3929
        %v3931 = vpop.f32.mrf.mxu0
        %v3932 = vpop.f32.mrf.mxu0
        %v3933 = vadd.f32 0.0, %v3932
        %v3934 = vpop.f32.mrf.mxu0
        %3935 = vmatprep.mubr.bf16.mxu0 0
        %3936 = vmatmul.mubr.bf16.gmra.mxu0 %v3857
        %v3937 = vpop.f32.mrf.mxu0
        %v3938 = vadd.f32 0.0, %v3937
        %v3939 = vpop.f32.mrf.mxu0
        %v3940 = vpop.f32.mrf.mxu0
        %v3941 = vadd.f32 0.0, %v3940
        %v3942 = vpop.f32.mrf.mxu0
        %3943 = vmatprep.mubr.bf16.mxu0 0
        %3944 = vmatmul.mubr.bf16.gmra.mxu0 %v3859
        %v3945 = vpop.f32.mrf.mxu0
        %v3946 = vadd.f32 0.0, %v3945
        %v3947 = vpop.f32.mrf.mxu0
        %v3948 = vpop.f32.mrf.mxu0
        %v3949 = vadd.f32 0.0, %v3948
        %v3950 = vpop.f32.mrf.mxu0
        %3951 = vmatprep.mubr.bf16.mxu0 0
        %3952 = vmatmul.mubr.bf16.gmra.mxu0 %v3861
        %v3953 = vpop.f32.mrf.mxu0
        %v3954 = vadd.f32 0.0, %v3953
        %v3955 = vpop.f32.mrf.mxu0
        %v3956 = vpop.f32.mrf.mxu0
        %v3957 = vadd.f32 0.0, %v3956
        %v3958 = vpop.f32.mrf.mxu0
        %3959 = vdwg.mxu0
        %v3968 = vunpack.c.l.b16 %v3723
        %v3969 = vunpack.c.l.b16 %v3724
        %v3970 = vunpack.c.l.b16 %v3725
        %v3971 = vunpack.c.l.b16 %v3726
        %v3972 = vunpack.c.l.b16 %v3727
        %v3973 = vunpack.c.l.b16 %v3728
        %v3974 = vunpack.c.l.b16 %v3729
        %v3975 = vunpack.c.l.b16 %v3730
        %v3976 = vpack.c.b16 %v3969, %v3968
        %v3977 = vpack.c.b16 %v3971, %v3970
        %v3978 = vpack.c.b16 %v3973, %v3972
        %v3979 = vpack.c.b16 %v3975, %v3974
        %v3985 = vsel %vm3846, %v3821, 0
        %v3988 = vsel %vm3846, %v3771, 0
        %v3991 = vsel %vm3846, %v3779, 0
        %v3994 = vsel %vm3846, %v3787, 0
        %v3997 = vsel %vm3846, %v3795, 0
        %v4000 = vsel %vm3846, %v3803, 0
        %v4003 = vsel %vm3846, %v3811, 0
        %v4006 = vsel %vm3846, %v3819, 0
        %4008 = vmatprep.subr.bf16.mxu0 0
        %4009 = vmatpush1.bf16.msra.mxu0 0
        %4010 = vmatprep.subr.bf16.mxu0 0
        %4011 = vmatpush1.bf16.msra.mxu0 0
        %4012 = vmatprep.subr.bf16.mxu0 0
        %4013 = vmatpush1.bf16.msra.mxu0 0
        %4014 = vmatprep.subr.bf16.mxu0 0
        %4015 = vmatpush1.bf16.msra.mxu0 0
        %4016 = vmatprep.subr.bf16.mxu0 0
        %4017 = vmatpush1.bf16.msra.mxu0 %v3979
        %4018 = vmatprep.subr.bf16.mxu0 0
        %4019 = vmatpush1.bf16.msra.mxu0 %v3978
        %4020 = vmatprep.subr.bf16.mxu0 0
        %4021 = vmatpush1.bf16.msra.mxu0 %v3977
        %4022 = vmatprep.subr.bf16.mxu0 0
        %4023 = vmatpush1.bf16.msra.mxu0 %v3976
        %4024 = vmatprep.subr.bf16.mxu0 0
        %4025 = vmatpush2.bf16.msra.mxu0 0
        %4026 = vmatprep.subr.bf16.mxu0 0
        %4027 = vmatpush2.bf16.msra.mxu0 0
        %4028 = vmatprep.subr.bf16.mxu0 0
        %4029 = vmatpush2.bf16.msra.mxu0 0
        %4030 = vmatprep.subr.bf16.mxu0 0
        %4031 = vmatpush2.bf16.msra.mxu0 0
        %4032 = vmatprep.subr.bf16.mxu0 0
        %4033 = vmatpush2.bf16.msra.mxu0 0
        %4034 = vmatprep.subr.bf16.mxu0 0
        %4035 = vmatpush2.bf16.msra.mxu0 0
        %4036 = vmatprep.subr.bf16.mxu0 0
        %4037 = vmatpush2.bf16.msra.mxu0 0
        %4038 = vmatprep.subr.bf16.mxu0 0
        %4039 = vmatpush2.bf16.msra.mxu0 0
        %4040 = vmatprep.mubr.bf16.mxu0 0
        %4041 = vmatmul.mubr.bf16.gmra.mxu0 %v3985
        %v4042 = vpop.f32.mrf.mxu0
        %v4043 = vadd.f32 %v3898, %v4042
        %v4044 = vpop.f32.mrf.mxu0
        %v4045 = vpop.f32.mrf.mxu0
        %v4046 = vadd.f32 %v3901, %v4045
        %v4047 = vpop.f32.mrf.mxu0
        %4048 = vmatprep.mubr.bf16.mxu0 0
        %4049 = vmatmul.mubr.bf16.gmra.mxu0 %v3988
        %v4050 = vpop.f32.mrf.mxu0
        %v4051 = vadd.f32 %v3906, %v4050
        %v4052 = vpop.f32.mrf.mxu0
        %v4053 = vpop.f32.mrf.mxu0
        %v4054 = vadd.f32 %v3909, %v4053
        %v4055 = vpop.f32.mrf.mxu0
        %4056 = vmatprep.mubr.bf16.mxu0 0
        %4057 = vmatmul.mubr.bf16.gmra.mxu0 %v3991
        %v4058 = vpop.f32.mrf.mxu0
        %v4059 = vadd.f32 %v3914, %v4058
        %v4060 = vpop.f32.mrf.mxu0
        %v4061 = vpop.f32.mrf.mxu0
        %v4062 = vadd.f32 %v3917, %v4061
        %v4063 = vpop.f32.mrf.mxu0
        %4064 = vmatprep.mubr.bf16.mxu0 0
        %4065 = vmatmul.mubr.bf16.gmra.mxu0 %v3994
        %v4066 = vpop.f32.mrf.mxu0
        %v4067 = vadd.f32 %v3922, %v4066
        %v4068 = vpop.f32.mrf.mxu0
        %v4069 = vpop.f32.mrf.mxu0
        %v4070 = vadd.f32 %v3925, %v4069
        %v4071 = vpop.f32.mrf.mxu0
        %4072 = vmatprep.mubr.bf16.mxu0 0
        %4073 = vmatmul.mubr.bf16.gmra.mxu0 %v3997
        %v4074 = vpop.f32.mrf.mxu0
        %v4075 = vadd.f32 %v3930, %v4074
        %v4076 = vpop.f32.mrf.mxu0
        %v4077 = vpop.f32.mrf.mxu0
        %v4078 = vadd.f32 %v3933, %v4077
        %v4079 = vpop.f32.mrf.mxu0
        %4080 = vmatprep.mubr.bf16.mxu0 0
        %4081 = vmatmul.mubr.bf16.gmra.mxu0 %v4000
        %v4082 = vpop.f32.mrf.mxu0
        %v4083 = vadd.f32 %v3938, %v4082
        %v4084 = vpop.f32.mrf.mxu0
        %v4085 = vpop.f32.mrf.mxu0
        %v4086 = vadd.f32 %v3941, %v4085
        %v4087 = vpop.f32.mrf.mxu0
        %4088 = vmatprep.mubr.bf16.mxu0 0
        %4089 = vmatmul.mubr.bf16.gmra.mxu0 %v4003
        %v4090 = vpop.f32.mrf.mxu0
        %v4091 = vadd.f32 %v3946, %v4090
        %v4092 = vpop.f32.mrf.mxu0
        %v4093 = vpop.f32.mrf.mxu0
        %v4094 = vadd.f32 %v3949, %v4093
        %v4095 = vpop.f32.mrf.mxu0
        %4096 = vmatprep.mubr.bf16.mxu0 0
        %4097 = vmatmul.mubr.bf16.gmra.mxu0 %v4006
        %v4098 = vpop.f32.mrf.mxu0
        %v4099 = vadd.f32 %v3954, %v4098
        %v4100 = vpop.f32.mrf.mxu0
        %v4101 = vpop.f32.mrf.mxu0
        %v4102 = vadd.f32 %v3957, %v4101
        %v4103 = vpop.f32.mrf.mxu0
        %4104 = vdwg.mxu0
        %v4105 = vrot.slane %v3761, 1
        %v4106 = vor.u32 %v3758, %v4105
        %v4107 = vrot.slane %v3768, 1
        %v4108 = vsel %vm3491, %v4106, %v4107
        %v4109 = vor.u32 %v3765, %v4107
        %v4110 = vrot.slane %v3776, 1
        %v4111 = vsel %vm3491, %v4109, %v4110
        %v4112 = vor.u32 %v3773, %v4110
        %v4113 = vrot.slane %v3784, 1
        %v4114 = vsel %vm3491, %v4112, %v4113
        %v4115 = vor.u32 %v3781, %v4113
        %v4116 = vrot.slane %v3792, 1
        %v4117 = vsel %vm3491, %v4115, %v4116
        %v4118 = vor.u32 %v3789, %v4116
        %v4119 = vrot.slane %v3800, 1
        %v4120 = vsel %vm3491, %v4118, %v4119
        %v4121 = vor.u32 %v3797, %v4119
        %v4122 = vrot.slane %v3808, 1
        %v4123 = vsel %vm3491, %v4121, %v4122
        %v4124 = vor.u32 %v3805, %v4122
        %v4125 = vrot.slane %v3816, 1
        %v4126 = vsel %vm3491, %v4124, %v4125
        %v4127 = vor.u32 %v3813, %v4125
        %v4129 = vsel %vm3517, %v4127, 0
        %v4138 = vunpack.c.l.b16 %v3741
        %v4139 = vunpack.c.l.b16 %v3742
        %v4140 = vunpack.c.l.b16 %v3743
        %v4141 = vunpack.c.l.b16 %v3744
        %v4142 = vunpack.c.l.b16 %v3745
        %v4143 = vunpack.c.l.b16 %v3746
        %v4144 = vunpack.c.l.b16 %v3747
        %v4145 = vunpack.c.l.b16 %v3748
        %v4146 = vpack.c.b16 %v4139, %v4138
        %v4147 = vpack.c.b16 %v4141, %v4140
        %v4148 = vpack.c.b16 %v4143, %v4142
        %v4149 = vpack.c.b16 %v4145, %v4144
        %v4155 = vsel %vm3846, %v4108, 0
        %v4158 = vsel %vm3846, %v4111, 0
        %v4161 = vsel %vm3846, %v4114, 0
        %v4164 = vsel %vm3846, %v4117, 0
        %v4167 = vsel %vm3846, %v4120, 0
        %v4170 = vsel %vm3846, %v4123, 0
        %v4173 = vsel %vm3846, %v4126, 0
        %v4176 = vsel %vm3846, %v4129, 0
        %4178 = vmatprep.subr.bf16.mxu0 0
        %4179 = vmatpush1.bf16.msra.mxu0 0
        %4180 = vmatprep.subr.bf16.mxu0 0
        %4181 = vmatpush1.bf16.msra.mxu0 0
        %4182 = vmatprep.subr.bf16.mxu0 0
        %4183 = vmatpush1.bf16.msra.mxu0 0
        %4184 = vmatprep.subr.bf16.mxu0 0
        %4185 = vmatpush1.bf16.msra.mxu0 0
        %4186 = vmatprep.subr.bf16.mxu0 0
        %4187 = vmatpush1.bf16.msra.mxu0 %v4149
        %4188 = vmatprep.subr.bf16.mxu0 0
        %4189 = vmatpush1.bf16.msra.mxu0 %v4148
        %4190 = vmatprep.subr.bf16.mxu0 0
        %4191 = vmatpush1.bf16.msra.mxu0 %v4147
        %4192 = vmatprep.subr.bf16.mxu0 0
        %4193 = vmatpush1.bf16.msra.mxu0 %v4146
        %4194 = vmatprep.subr.bf16.mxu0 0
        %4195 = vmatpush2.bf16.msra.mxu0 0
        %4196 = vmatprep.subr.bf16.mxu0 0
        %4197 = vmatpush2.bf16.msra.mxu0 0
        %4198 = vmatprep.subr.bf16.mxu0 0
        %4199 = vmatpush2.bf16.msra.mxu0 0
        %4200 = vmatprep.subr.bf16.mxu0 0
        %4201 = vmatpush2.bf16.msra.mxu0 0
        %4202 = vmatprep.subr.bf16.mxu0 0
        %4203 = vmatpush2.bf16.msra.mxu0 0
        %4204 = vmatprep.subr.bf16.mxu0 0
        %4205 = vmatpush2.bf16.msra.mxu0 0
        %4206 = vmatprep.subr.bf16.mxu0 0
        %4207 = vmatpush2.bf16.msra.mxu0 0
        %4208 = vmatprep.subr.bf16.mxu0 0
        %4209 = vmatpush2.bf16.msra.mxu0 0
        %4210 = vmatprep.mubr.bf16.mxu0 0
        %4211 = vmatmul.mubr.bf16.gmra.mxu0 %v4155
        %v4212 = vpop.f32.mrf.mxu0
        %v4213 = vadd.f32 0.0, %v4212
        %v4214 = vpop.f32.mrf.mxu0
        %v4215 = vpop.f32.mrf.mxu0
        %v4216 = vadd.f32 0.0, %v4215
        %v4217 = vpop.f32.mrf.mxu0
        %4218 = vmatprep.mubr.bf16.mxu0 0
        %4219 = vmatmul.mubr.bf16.gmra.mxu0 %v4158
        %v4220 = vpop.f32.mrf.mxu0
        %v4221 = vadd.f32 0.0, %v4220
        %v4222 = vpop.f32.mrf.mxu0
        %v4223 = vpop.f32.mrf.mxu0
        %v4224 = vadd.f32 0.0, %v4223
        %v4225 = vpop.f32.mrf.mxu0
        %4226 = vmatprep.mubr.bf16.mxu0 0
        %4227 = vmatmul.mubr.bf16.gmra.mxu0 %v4161
        %v4228 = vpop.f32.mrf.mxu0
        %v4229 = vadd.f32 0.0, %v4228
        %v4230 = vpop.f32.mrf.mxu0
        %v4231 = vpop.f32.mrf.mxu0
        %v4232 = vadd.f32 0.0, %v4231
        %v4233 = vpop.f32.mrf.mxu0
        %4234 = vmatprep.mubr.bf16.mxu0 0
        %4235 = vmatmul.mubr.bf16.gmra.mxu0 %v4164
        %v4236 = vpop.f32.mrf.mxu0
        %v4237 = vadd.f32 0.0, %v4236
        %v4238 = vpop.f32.mrf.mxu0
        %v4239 = vpop.f32.mrf.mxu0
        %v4240 = vadd.f32 0.0, %v4239
        %v4241 = vpop.f32.mrf.mxu0
        %4242 = vmatprep.mubr.bf16.mxu0 0
        %4243 = vmatmul.mubr.bf16.gmra.mxu0 %v4167
        %v4244 = vpop.f32.mrf.mxu0
        %v4245 = vadd.f32 0.0, %v4244
        %v4246 = vpop.f32.mrf.mxu0
        %v4247 = vpop.f32.mrf.mxu0
        %v4248 = vadd.f32 0.0, %v4247
        %v4249 = vpop.f32.mrf.mxu0
        %4250 = vmatprep.mubr.bf16.mxu0 0
        %4251 = vmatmul.mubr.bf16.gmra.mxu0 %v4170
        %v4252 = vpop.f32.mrf.mxu0
        %v4253 = vadd.f32 0.0, %v4252
        %v4254 = vpop.f32.mrf.mxu0
        %v4255 = vpop.f32.mrf.mxu0
        %v4256 = vadd.f32 0.0, %v4255
        %v4257 = vpop.f32.mrf.mxu0
        %4258 = vmatprep.mubr.bf16.mxu0 0
        %4259 = vmatmul.mubr.bf16.gmra.mxu0 %v4173
        %v4260 = vpop.f32.mrf.mxu0
        %v4261 = vadd.f32 0.0, %v4260
        %v4262 = vpop.f32.mrf.mxu0
        %v4263 = vpop.f32.mrf.mxu0
        %v4264 = vadd.f32 0.0, %v4263
        %v4265 = vpop.f32.mrf.mxu0
        %4266 = vmatprep.mubr.bf16.mxu0 0
        %4267 = vmatmul.mubr.bf16.gmra.mxu0 %v4176
        %v4268 = vpop.f32.mrf.mxu0
        %v4269 = vadd.f32 0.0, %v4268
        %v4270 = vpop.f32.mrf.mxu0
        %v4271 = vpop.f32.mrf.mxu0
        %v4272 = vadd.f32 0.0, %v4271
        %v4273 = vpop.f32.mrf.mxu0
        %4274 = vdwg.mxu0
        %v4275 = vadd.f32 %v4043, %v4213
        %v4276 = vadd.f32 %v4046, %v4216
        %v4277 = vadd.f32 %v4051, %v4221
        %v4278 = vadd.f32 %v4054, %v4224
        %v4279 = vadd.f32 %v4059, %v4229
        %v4280 = vadd.f32 %v4062, %v4232
        %v4281 = vadd.f32 %v4067, %v4237
        %v4282 = vadd.f32 %v4070, %v4240
        %v4283 = vadd.f32 %v4075, %v4245
        %v4284 = vadd.f32 %v4078, %v4248
        %v4285 = vadd.f32 %v4083, %v4253
        %v4286 = vadd.f32 %v4086, %v4256
        %v4287 = vadd.f32 %v4091, %v4261
        %v4288 = vadd.f32 %v4094, %v4264
        %v4289 = vadd.f32 %v4099, %v4269
        %v4290 = vadd.f32 %v4102, %v4272
        %v4292 = vlaneseq
        %v4293 = vshrl.u32 %v4292, 7
        %v4294 = vsub.s32 0, %v4293
        %v4295 = vrot.slane %v3722, %v4294
        %v4297 = vadd.f32 %v4275, %v4295
        %v4298 = vadd.f32 %v4276, %v4295
        %v4299 = vadd.f32 %v4277, %v4295
        %v4300 = vadd.f32 %v4278, %v4295
        %v4301 = vadd.f32 %v4279, %v4295
        %v4302 = vadd.f32 %v4280, %v4295
        %v4303 = vadd.f32 %v4281, %v4295
        %v4304 = vadd.f32 %v4282, %v4295
        %v4305 = vadd.f32 %v4283, %v4295
        %v4306 = vadd.f32 %v4284, %v4295
        %v4307 = vadd.f32 %v4285, %v4295
        %v4308 = vadd.f32 %v4286, %v4295
        %v4309 = vadd.f32 %v4287, %v4295
        %v4310 = vadd.f32 %v4288, %v4295
        %v4311 = vadd.f32 %v4289, %v4295
        %v4312 = vadd.f32 %v4290, %v4295
        %v4313 = vmul.f32 %v4297, %v1085
        %v4314 = vmul.f32 %v4298, %v1086
        %v4315 = vmul.f32 %v4299, %v1087
        %v4316 = vmul.f32 %v4300, %v1088
        %v4317 = vmul.f32 %v4301, %v1089
        %v4318 = vmul.f32 %v4302, %v1090
        %v4319 = vmul.f32 %v4303, %v1091
        %v4320 = vmul.f32 %v4304, %v1092
        %v4321 = vmul.f32 %v4305, %v1093
        %v4322 = vmul.f32 %v4306, %v1094
        %v4323 = vmul.f32 %v4307, %v1095
        %v4324 = vmul.f32 %v4308, %v1096
        %v4325 = vmul.f32 %v4309, %v1097
        %v4326 = vmul.f32 %v4310, %v1098
        %v4327 = vmul.f32 %v4311, %v1099
        %v4328 = vmul.f32 %v4312, %v1100
        %v4329 = vadd.f32 %v3110, %v4313
        %v4330 = vadd.f32 %v3111, %v4314
        %v4331 = vadd.f32 %v3112, %v4315
        %v4332 = vadd.f32 %v3113, %v4316
        %v4333 = vadd.f32 %v3114, %v4317
        %v4334 = vadd.f32 %v3115, %v4318
        %v4335 = vadd.f32 %v3116, %v4319
        %v4336 = vadd.f32 %v3117, %v4320
        %v4337 = vadd.f32 %v3118, %v4321
        %v4338 = vadd.f32 %v3119, %v4322
        %v4339 = vadd.f32 %v3120, %v4323
        %v4340 = vadd.f32 %v3121, %v4324
        %v4341 = vadd.f32 %v3122, %v4325
        %v4342 = vadd.f32 %v3123, %v4326
        %v4343 = vadd.f32 %v3124, %v4327
        %v4344 = vadd.f32 %v3125, %v4328
        %v4345 = vld [vmem:[%s1027] sm:$0x1]
        %v4346 = vld [vmem:[%s1030] sm:$0x1]
        %v4347 = vsel %vm1471, %v4329, 0.0
        %4348 = vadd.xlane.f32.xlu0 %v4347
        %v4349 = vpop.xlane.xlu0 %4348
        %v4350 = vsel %vm1471, %v4330, 0.0
        %4351 = vadd.xlane.f32.xlu0 %v4350
        %v4352 = vpop.xlane.xlu0 %4351
        %v4353 = vsel %vm1471, %v4331, 0.0
        %4354 = vadd.xlane.f32.xlu0 %v4353
        %v4355 = vpop.xlane.xlu0 %4354
        %v4356 = vsel %vm1471, %v4332, 0.0
        %4357 = vadd.xlane.f32.xlu0 %v4356
        %v4358 = vpop.xlane.xlu0 %4357
        %v4359 = vsel %vm1471, %v4333, 0.0
        %4360 = vadd.xlane.f32.xlu0 %v4359
        %v4361 = vpop.xlane.xlu0 %4360
        %v4362 = vsel %vm1471, %v4334, 0.0
        %4363 = vadd.xlane.f32.xlu0 %v4362
        %v4364 = vpop.xlane.xlu0 %4363
        %v4365 = vsel %vm1471, %v4335, 0.0
        %4366 = vadd.xlane.f32.xlu0 %v4365
        %v4367 = vpop.xlane.xlu0 %4366
        %v4368 = vsel %vm1471, %v4336, 0.0
        %4369 = vadd.xlane.f32.xlu0 %v4368
        %v4370 = vpop.xlane.xlu0 %4369
        %v4371 = vsel %vm1471, %v4337, 0.0
        %4372 = vadd.xlane.f32.xlu0 %v4371
        %v4373 = vpop.xlane.xlu0 %4372
        %v4374 = vsel %vm1471, %v4338, 0.0
        %4375 = vadd.xlane.f32.xlu0 %v4374
        %v4376 = vpop.xlane.xlu0 %4375
        %v4377 = vsel %vm1471, %v4339, 0.0
        %4378 = vadd.xlane.f32.xlu0 %v4377
        %v4379 = vpop.xlane.xlu0 %4378
        %v4380 = vsel %vm1471, %v4340, 0.0
        %4381 = vadd.xlane.f32.xlu0 %v4380
        %v4382 = vpop.xlane.xlu0 %4381
        %v4383 = vsel %vm1471, %v4341, 0.0
        %4384 = vadd.xlane.f32.xlu0 %v4383
        %v4385 = vpop.xlane.xlu0 %4384
        %v4386 = vsel %vm1471, %v4342, 0.0
        %4387 = vadd.xlane.f32.xlu0 %v4386
        %v4388 = vpop.xlane.xlu0 %4387
        %v4389 = vsel %vm1471, %v4343, 0.0
        %4390 = vadd.xlane.f32.xlu0 %v4389
        %v4391 = vpop.xlane.xlu0 %4390
        %v4392 = vsel %vm1471, %v4344, 0.0
        %4393 = vadd.xlane.f32.xlu0 %v4392
        %v4394 = vpop.xlane.xlu0 %4393
        %v4395 = vmul.f32 %v4349, %v2921
        %v4396 = vmul.f32 %v4352, %v2921
        %v4397 = vmul.f32 %v4355, %v2921
        %v4398 = vmul.f32 %v4358, %v2921
        %v4399 = vmul.f32 %v4361, %v2921
        %v4400 = vmul.f32 %v4364, %v2921
        %v4401 = vmul.f32 %v4367, %v2921
        %v4402 = vmul.f32 %v4370, %v2921
        %v4403 = vmul.f32 %v4373, %v2921
        %v4404 = vmul.f32 %v4376, %v2921
        %v4405 = vmul.f32 %v4379, %v2921
        %v4406 = vmul.f32 %v4382, %v2921
        %v4407 = vmul.f32 %v4385, %v2921
        %v4408 = vmul.f32 %v4388, %v2921
        %v4409 = vmul.f32 %v4391, %v2921
        %v4410 = vmul.f32 %v4394, %v2921
        %v4411 = vsub.f32 %v4329, %v4395
        %v4412 = vsub.f32 %v4330, %v4396
        %v4413 = vsub.f32 %v4331, %v4397
        %v4414 = vsub.f32 %v4332, %v4398
        %v4415 = vsub.f32 %v4333, %v4399
        %v4416 = vsub.f32 %v4334, %v4400
        %v4417 = vsub.f32 %v4335, %v4401
        %v4418 = vsub.f32 %v4336, %v4402
        %v4419 = vsub.f32 %v4337, %v4403
        %v4420 = vsub.f32 %v4338, %v4404
        %v4421 = vsub.f32 %v4339, %v4405
        %v4422 = vsub.f32 %v4340, %v4406
        %v4423 = vsub.f32 %v4341, %v4407
        %v4424 = vsub.f32 %v4342, %v4408
        %v4425 = vsub.f32 %v4343, %v4409
        %v4426 = vsub.f32 %v4344, %v4410
        %v4427 = vmul.f32 %v4411, %v4411
        %v4428 = vmul.f32 %v4412, %v4412
        %v4429 = vmul.f32 %v4413, %v4413
        %v4430 = vmul.f32 %v4414, %v4414
        %v4431 = vmul.f32 %v4415, %v4415
        %v4432 = vmul.f32 %v4416, %v4416
        %v4433 = vmul.f32 %v4417, %v4417
        %v4434 = vmul.f32 %v4418, %v4418
        %v4435 = vmul.f32 %v4419, %v4419
        %v4436 = vmul.f32 %v4420, %v4420
        %v4437 = vmul.f32 %v4421, %v4421
        %v4438 = vmul.f32 %v4422, %v4422
        %v4439 = vmul.f32 %v4423, %v4423
        %v4440 = vmul.f32 %v4424, %v4424
        %v4441 = vmul.f32 %v4425, %v4425
        %v4442 = vmul.f32 %v4426, %v4426
        %v4443 = vsel %vm1471, %v4427, 0.0
        %4444 = vadd.xlane.f32.xlu0 %v4443
        %v4445 = vpop.xlane.xlu0 %4444
        %v4446 = vsel %vm1471, %v4428, 0.0
        %4447 = vadd.xlane.f32.xlu0 %v4446
        %v4448 = vpop.xlane.xlu0 %4447
        %v4449 = vsel %vm1471, %v4429, 0.0
        %4450 = vadd.xlane.f32.xlu0 %v4449
        %v4451 = vpop.xlane.xlu0 %4450
        %v4452 = vsel %vm1471, %v4430, 0.0
        %4453 = vadd.xlane.f32.xlu0 %v4452
        %v4454 = vpop.xlane.xlu0 %4453
        %v4455 = vsel %vm1471, %v4431, 0.0
        %4456 = vadd.xlane.f32.xlu0 %v4455
        %v4457 = vpop.xlane.xlu0 %4456
        %v4458 = vsel %vm1471, %v4432, 0.0
        %4459 = vadd.xlane.f32.xlu0 %v4458
        %v4460 = vpop.xlane.xlu0 %4459
        %v4461 = vsel %vm1471, %v4433, 0.0
        %4462 = vadd.xlane.f32.xlu0 %v4461
        %v4463 = vpop.xlane.xlu0 %4462
        %v4464 = vsel %vm1471, %v4434, 0.0
        %4465 = vadd.xlane.f32.xlu0 %v4464
        %v4466 = vpop.xlane.xlu0 %4465
        %v4467 = vsel %vm1471, %v4435, 0.0
        %4468 = vadd.xlane.f32.xlu0 %v4467
        %v4469 = vpop.xlane.xlu0 %4468
        %v4470 = vsel %vm1471, %v4436, 0.0
        %4471 = vadd.xlane.f32.xlu0 %v4470
        %v4472 = vpop.xlane.xlu0 %4471
        %v4473 = vsel %vm1471, %v4437, 0.0
        %4474 = vadd.xlane.f32.xlu0 %v4473
        %v4475 = vpop.xlane.xlu0 %4474
        %v4476 = vsel %vm1471, %v4438, 0.0
        %4477 = vadd.xlane.f32.xlu0 %v4476
        %v4478 = vpop.xlane.xlu0 %4477
        %v4479 = vsel %vm1471, %v4439, 0.0
        %4480 = vadd.xlane.f32.xlu0 %v4479
        %v4481 = vpop.xlane.xlu0 %4480
        %v4482 = vsel %vm1471, %v4440, 0.0
        %4483 = vadd.xlane.f32.xlu0 %v4482
        %v4484 = vpop.xlane.xlu0 %4483
        %v4485 = vsel %vm1471, %v4441, 0.0
        %4486 = vadd.xlane.f32.xlu0 %v4485
        %v4487 = vpop.xlane.xlu0 %4486
        %v4488 = vsel %vm1471, %v4442, 0.0
        %4489 = vadd.xlane.f32.xlu0 %v4488
        %v4490 = vpop.xlane.xlu0 %4489
        %v4491 = vmul.f32 %v4445, %v2921
        %v4492 = vmul.f32 %v4448, %v2921
        %v4493 = vmul.f32 %v4451, %v2921
        %v4494 = vmul.f32 %v4454, %v2921
        %v4495 = vmul.f32 %v4457, %v2921
        %v4496 = vmul.f32 %v4460, %v2921
        %v4497 = vmul.f32 %v4463, %v2921
        %v4498 = vmul.f32 %v4466, %v2921
        %v4499 = vmul.f32 %v4469, %v2921
        %v4500 = vmul.f32 %v4472, %v2921
        %v4501 = vmul.f32 %v4475, %v2921
        %v4502 = vmul.f32 %v4478, %v2921
        %v4503 = vmul.f32 %v4481, %v2921
        %v4504 = vmul.f32 %v4484, %v2921
        %v4505 = vmul.f32 %v4487, %v2921
        %v4506 = vmul.f32 %v4490, %v2921
        %v4507 = vadd.f32 %v4491, 0.0001
        %v4508 = vadd.f32 %v4492, 0.0001
        %v4509 = vadd.f32 %v4493, 0.0001
        %v4510 = vadd.f32 %v4494, 0.0001
        %v4511 = vadd.f32 %v4495, 0.0001
        %v4512 = vadd.f32 %v4496, 0.0001
        %v4513 = vadd.f32 %v4497, 0.0001
        %v4514 = vadd.f32 %v4498, 0.0001
        %v4515 = vadd.f32 %v4499, 0.0001
        %v4516 = vadd.f32 %v4500, 0.0001
        %v4517 = vadd.f32 %v4501, 0.0001
        %v4518 = vadd.f32 %v4502, 0.0001
        %v4519 = vadd.f32 %v4503, 0.0001
        %v4520 = vadd.f32 %v4504, 0.0001
        %v4521 = vadd.f32 %v4505, 0.0001
        %v4522 = vadd.f32 %v4506, 0.0001
        %v4523 = vrsqrt.pop %v4507
        %v4524 = vrsqrt.pop %v4508
        %v4525 = vrsqrt.pop %v4509
        %v4526 = vrsqrt.pop %v4510
        %v4527 = vrsqrt.pop %v4511
        %v4528 = vrsqrt.pop %v4512
        %v4529 = vrsqrt.pop %v4513
        %v4530 = vrsqrt.pop %v4514
        %v4531 = vrsqrt.pop %v4515
        %v4532 = vrsqrt.pop %v4516
        %v4533 = vrsqrt.pop %v4517
        %v4534 = vrsqrt.pop %v4518
        %v4535 = vrsqrt.pop %v4519
        %v4536 = vrsqrt.pop %v4520
        %v4537 = vrsqrt.pop %v4521
        %v4538 = vrsqrt.pop %v4522
        %v4539 = vmul.f32 %v4411, %v4523
        %v4540 = vmul.f32 %v4412, %v4524
        %v4541 = vmul.f32 %v4413, %v4525
        %v4542 = vmul.f32 %v4414, %v4526
        %v4543 = vmul.f32 %v4415, %v4527
        %v4544 = vmul.f32 %v4416, %v4528
        %v4545 = vmul.f32 %v4417, %v4529
        %v4546 = vmul.f32 %v4418, %v4530
        %v4547 = vmul.f32 %v4419, %v4531
        %v4548 = vmul.f32 %v4420, %v4532
        %v4549 = vmul.f32 %v4421, %v4533
        %v4550 = vmul.f32 %v4422, %v4534
        %v4551 = vmul.f32 %v4423, %v4535
        %v4552 = vmul.f32 %v4424, %v4536
        %v4553 = vmul.f32 %v4425, %v4537
        %v4554 = vmul.f32 %v4426, %v4538
        %v4556 = vlaneseq
        %v4557 = vshrl.u32 %v4556, 7
        %v4558 = vsub.s32 0, %v4557
        %v4559 = vrot.slane %v4345, %v4558
        %v4561 = vmul.f32 %v4539, %v4559
        %v4562 = vmul.f32 %v4540, %v4559
        %v4563 = vmul.f32 %v4541, %v4559
        %v4564 = vmul.f32 %v4542, %v4559
        %v4565 = vmul.f32 %v4543, %v4559
        %v4566 = vmul.f32 %v4544, %v4559
        %v4567 = vmul.f32 %v4545, %v4559
        %v4568 = vmul.f32 %v4546, %v4559
        %v4569 = vmul.f32 %v4547, %v4559
        %v4570 = vmul.f32 %v4548, %v4559
        %v4571 = vmul.f32 %v4549, %v4559
        %v4572 = vmul.f32 %v4550, %v4559
        %v4573 = vmul.f32 %v4551, %v4559
        %v4574 = vmul.f32 %v4552, %v4559
        %v4575 = vmul.f32 %v4553, %v4559
        %v4576 = vmul.f32 %v4554, %v4559
        %v4578 = vlaneseq
        %v4579 = vshrl.u32 %v4578, 7
        %v4580 = vsub.s32 0, %v4579
        %v4581 = vrot.slane %v4346, %v4580
        %v4583 = vadd.f32 %v4561, %v4581
        %v4584 = vadd.f32 %v4562, %v4581
        %v4585 = vadd.f32 %v4563, %v4581
        %v4586 = vadd.f32 %v4564, %v4581
        %v4587 = vadd.f32 %v4565, %v4581
        %v4588 = vadd.f32 %v4566, %v4581
        %v4589 = vadd.f32 %v4567, %v4581
        %v4590 = vadd.f32 %v4568, %v4581
        %v4591 = vadd.f32 %v4569, %v4581
        %v4592 = vadd.f32 %v4570, %v4581
        %v4593 = vadd.f32 %v4571, %v4581
        %v4594 = vadd.f32 %v4572, %v4581
        %v4595 = vadd.f32 %v4573, %v4581
        %v4596 = vadd.f32 %v4574, %v4581
        %v4597 = vadd.f32 %v4575, %v4581
        %v4598 = vadd.f32 %v4576, %v4581
        %4599 = vst.msk [vmem:[#allocation2] sm:$0xff] %vm1471, %v4583
        %4600 = vst.msk [vmem:[#allocation2 + $0x8] sm:$0xff] %vm1471, %v4584
        %4601 = vst.msk [vmem:[#allocation2 + $0x10] sm:$0xff] %vm1471, %v4585
        %4602 = vst.msk [vmem:[#allocation2 + $0x18] sm:$0xff] %vm1471, %v4586
        %4603 = vst.msk [vmem:[#allocation2 + $0x20] sm:$0xff] %vm1471, %v4587
        %4604 = vst.msk [vmem:[#allocation2 + $0x28] sm:$0xff] %vm1471, %v4588
        %4605 = vst.msk [vmem:[#allocation2 + $0x30] sm:$0xff] %vm1471, %v4589
        %4606 = vst.msk [vmem:[#allocation2 + $0x38] sm:$0xff] %vm1471, %v4590
        %4607 = vst.msk [vmem:[#allocation2 + $0x40] sm:$0xff] %vm1471, %v4591
        %4608 = vst.msk [vmem:[#allocation2 + $0x48] sm:$0xff] %vm1471, %v4592
        %4609 = vst.msk [vmem:[#allocation2 + $0x50] sm:$0xff] %vm1471, %v4593
        %4610 = vst.msk [vmem:[#allocation2 + $0x58] sm:$0xff] %vm1471, %v4594
        %4611 = vst.msk [vmem:[#allocation2 + $0x60] sm:$0xff] %vm1471, %v4595
        %4612 = vst.msk [vmem:[#allocation2 + $0x68] sm:$0xff] %vm1471, %v4596
        %4613 = vst.msk [vmem:[#allocation2 + $0x70] sm:$0xff] %vm1471, %v4597
        %4614 = vst.msk [vmem:[#allocation2 + $0x78] sm:$0xff] %vm1471, %v4598
        %p4615 = scmp.eq.s32.totalorder %s53, 1
        // Predicated region
        $region133: #{tpu_custom_call.1} parent=127 // pred_check
          %p4616 = pneg %p4615
        $region134: #{tpu_custom_call.1} parent=127 // pred_check_branch
          %4618 = sbr.rel (%p4616) target = $region136
        $region135: #{tpu_custom_call.1} parent=127 // pred_region
          %v4619 = vmul.f32 %v4583, %v1085
          %v4620 = vmul.f32 %v4584, %v1086
          %v4621 = vmul.f32 %v4585, %v1087
          %v4622 = vmul.f32 %v4586, %v1088
          %v4623 = vmul.f32 %v4587, %v1089
          %v4624 = vmul.f32 %v4588, %v1090
          %v4625 = vmul.f32 %v4589, %v1091
          %v4626 = vmul.f32 %v4590, %v1092
          %v4627 = vmul.f32 %v4591, %v1093
          %v4628 = vmul.f32 %v4592, %v1094
          %v4629 = vmul.f32 %v4593, %v1095
          %v4630 = vmul.f32 %v4594, %v1096
          %v4631 = vmul.f32 %v4595, %v1097
          %v4632 = vmul.f32 %v4596, %v1098
          %v4633 = vmul.f32 %v4597, %v1099
          %v4634 = vmul.f32 %v4598, %v1100
          %vm4635 = vcmp.lt.s32.totalorder %v1034, 16
          %vm4636 = vcmp.lt.s32.totalorder %v1035, 16
          %vm4637 = vcmp.lt.s32.totalorder %v1036, 16
          %vm4638 = vcmp.lt.s32.totalorder %v1037, 16
          %vm4639 = vcmp.lt.s32.totalorder %v1038, 16
          %vm4640 = vcmp.lt.s32.totalorder %v1039, 16
          %vm4641 = vcmp.lt.s32.totalorder %v1040, 16
          %vm4642 = vcmp.lt.s32.totalorder %v1041, 16
          %vm4643 = vcmp.lt.s32.totalorder %v1042, 16
          %vm4644 = vcmp.lt.s32.totalorder %v1043, 16
          %vm4645 = vcmp.lt.s32.totalorder %v1044, 16
          %vm4646 = vcmp.lt.s32.totalorder %v1045, 16
          %vm4647 = vcmp.lt.s32.totalorder %v1046, 16
          %vm4648 = vcmp.lt.s32.totalorder %v1047, 16
          %vm4649 = vcmp.lt.s32.totalorder %v1048, 16
          %vm4650 = vcmp.lt.s32.totalorder %v1049, 16
          %v4651 = vsel %vm4635, 1, 0
          %v4652 = vsel %vm4636, 1, 0
          %v4653 = vsel %vm4637, 1, 0
          %v4654 = vsel %vm4638, 1, 0
          %v4655 = vsel %vm4639, 1, 0
          %v4656 = vsel %vm4640, 1, 0
          %v4657 = vsel %vm4641, 1, 0
          %v4658 = vsel %vm4642, 1, 0
          %v4659 = vsel %vm4643, 1, 0
          %v4660 = vsel %vm4644, 1, 0
          %v4661 = vsel %vm4645, 1, 0
          %v4662 = vsel %vm4646, 1, 0
          %v4663 = vsel %vm4647, 1, 0
          %v4664 = vsel %vm4648, 1, 0
          %v4665 = vsel %vm4649, 1, 0
          %v4666 = vsel %vm4650, 1, 0
          %v4667 = vcvt.s32.f32 %v4651
          %v4668 = vcvt.s32.f32 %v4652
          %v4669 = vcvt.s32.f32 %v4653
          %v4670 = vcvt.s32.f32 %v4654
          %v4671 = vcvt.s32.f32 %v4655
          %v4672 = vcvt.s32.f32 %v4656
          %v4673 = vcvt.s32.f32 %v4657
          %v4674 = vcvt.s32.f32 %v4658
          %v4675 = vcvt.s32.f32 %v4659
          %v4676 = vcvt.s32.f32 %v4660
          %v4677 = vcvt.s32.f32 %v4661
          %v4678 = vcvt.s32.f32 %v4662
          %v4679 = vcvt.s32.f32 %v4663
          %v4680 = vcvt.s32.f32 %v4664
          %v4681 = vcvt.s32.f32 %v4665
          %v4682 = vcvt.s32.f32 %v4666
          %v4683 = vld [vmem:[%s19] sm:$0x1]
          %v4684 = vld [vmem:[%s18] sm:$0xf]
          %v4685 = vld [vmem:[%s18 + $0x4] sm:$0xf]
          %v4686 = vld [vmem:[%s18 + $0x8] sm:$0xf]
          %v4687 = vld [vmem:[%s18 + $0xc] sm:$0xf]
          %s4688 = scalar_lea.vmem %s18, 16
          %v4689 = vld [vmem:[%s4688] sm:$0xf]
          %v4690 = vld [vmem:[%s4688 + $0x4] sm:$0xf]
          %v4691 = vld [vmem:[%s4688 + $0x8] sm:$0xf]
          %v4692 = vld [vmem:[%s4688 + $0xc] sm:$0xf]
          %s4693 = scalar_lea.vmem %s18, 32
          %v4694 = vld [vmem:[%s4693] sm:$0xf]
          %v4695 = vld [vmem:[%s4693 + $0x4] sm:$0xf]
          %v4696 = vld [vmem:[%s4693 + $0x8] sm:$0xf]
          %v4697 = vld [vmem:[%s4693 + $0xc] sm:$0xf]
          %v4698 = vpack.c.bf16 %v4620, %v4619
          %v4699 = vpack.c.bf16 %v4622, %v4621
          %v4700 = vpack.c.bf16 %v4624, %v4623
          %v4701 = vpack.c.bf16 %v4626, %v4625
          %v4702 = vpack.c.bf16 %v4628, %v4627
          %v4703 = vpack.c.bf16 %v4630, %v4629
          %v4704 = vpack.c.bf16 %v4632, %v4631
          %v4705 = vpack.c.bf16 %v4634, %v4633
          %v4707 = vshrl.u32 %v4698, 16
          %v4709 = vrot.slane %v4707, 7
          %v4710 = vshll.u32 %v4698, 16
          %v4712 = vor.u32 %v4709, %v4710
          %v4714 = vshrl.u32 %v4699, 16
          %v4716 = vrot.slane %v4714, 7
          %v4717 = vshll.u32 %v4699, 16
          %v4719 = vor.u32 %v4716, %v4717
          %v4720 = vsel %vm3165, %v4709, %v4719
          %v4722 = vshrl.u32 %v4700, 16
          %v4724 = vrot.slane %v4722, 7
          %v4725 = vshll.u32 %v4700, 16
          %v4727 = vor.u32 %v4724, %v4725
          %v4728 = vsel %vm3165, %v4716, %v4727
          %v4730 = vshrl.u32 %v4701, 16
          %v4732 = vrot.slane %v4730, 7
          %v4733 = vshll.u32 %v4701, 16
          %v4735 = vor.u32 %v4732, %v4733
          %v4736 = vsel %vm3165, %v4724, %v4735
          %v4738 = vshrl.u32 %v4702, 16
          %v4740 = vrot.slane %v4738, 7
          %v4741 = vshll.u32 %v4702, 16
          %v4743 = vor.u32 %v4740, %v4741
          %v4744 = vsel %vm3165, %v4732, %v4743
          %v4746 = vshrl.u32 %v4703, 16
          %v4748 = vrot.slane %v4746, 7
          %v4749 = vshll.u32 %v4703, 16
          %v4751 = vor.u32 %v4748, %v4749
          %v4752 = vsel %vm3165, %v4740, %v4751
          %v4754 = vshrl.u32 %v4704, 16
          %v4756 = vrot.slane %v4754, 7
          %v4757 = vshll.u32 %v4704, 16
          %v4759 = vor.u32 %v4756, %v4757
          %v4760 = vsel %vm3165, %v4748, %v4759
          %v4762 = vshrl.u32 %v4705, 16
          %v4764 = vrot.slane %v4762, 7
          %v4765 = vshll.u32 %v4705, 16
          %v4767 = vor.u32 %v4764, %v4765
          %v4768 = vsel %vm3165, %v4756, %v4767
          %v4770 = vsel %vm3231, 0, %v4712
          %v4775 = vunpack.c.l.b16 %v4689
          %v4776 = vunpack.c.l.b16 %v4690
          %v4777 = vunpack.c.l.b16 %v4691
          %v4778 = vunpack.c.l.b16 %v4692
          %v4779 = vpack.c.b16 %v4776, %v4775
          %v4780 = vpack.c.b16 %v4778, %v4777
          %v4783 = vsel %vm1471, %v4698, 0
          %v4785 = vsel %vm1471, %v4699, 0
          %v4787 = vsel %vm1471, %v4700, 0
          %v4789 = vsel %vm1471, %v4701, 0
          %v4791 = vsel %vm1471, %v4702, 0
          %v4793 = vsel %vm1471, %v4703, 0
          %v4795 = vsel %vm1471, %v4704, 0
          %v4797 = vsel %vm1471, %v4705, 0
          %4799 = vmatprep.subr.bf16.mxu0 0
          %4800 = vmatpush1.bf16.msra.mxu0 0
          %4801 = vmatprep.subr.bf16.mxu0 0
          %4802 = vmatpush1.bf16.msra.mxu0 0
          %4803 = vmatprep.subr.bf16.mxu0 0
          %4804 = vmatpush1.bf16.msra.mxu0 0
          %4805 = vmatprep.subr.bf16.mxu0 0
          %4806 = vmatpush1.bf16.msra.mxu0 0
          %4807 = vmatprep.subr.bf16.mxu0 0
          %4808 = vmatpush1.bf16.msra.mxu0 0
          %4809 = vmatprep.subr.bf16.mxu0 0
          %4810 = vmatpush1.bf16.msra.mxu0 0
          %4811 = vmatprep.subr.bf16.mxu0 0
          %4812 = vmatpush1.bf16.msra.mxu0 %v4780
          %4813 = vmatprep.subr.bf16.mxu0 0
          %4814 = vmatpush1.bf16.msra.mxu0 %v4779
          %4815 = vmatprep.subr.bf16.mxu0 0
          %4816 = vmatpush2.bf16.msra.mxu0 0
          %4817 = vmatprep.subr.bf16.mxu0 0
          %4818 = vmatpush2.bf16.msra.mxu0 0
          %4819 = vmatprep.subr.bf16.mxu0 0
          %4820 = vmatpush2.bf16.msra.mxu0 0
          %4821 = vmatprep.subr.bf16.mxu0 0
          %4822 = vmatpush2.bf16.msra.mxu0 0
          %4823 = vmatprep.subr.bf16.mxu0 0
          %4824 = vmatpush2.bf16.msra.mxu0 0
          %4825 = vmatprep.subr.bf16.mxu0 0
          %4826 = vmatpush2.bf16.msra.mxu0 0
          %4827 = vmatprep.subr.bf16.mxu0 0
          %4828 = vmatpush2.bf16.msra.mxu0 0
          %4829 = vmatprep.subr.bf16.mxu0 0
          %4830 = vmatpush2.bf16.msra.mxu0 0
          %4831 = vmatprep.mubr.bf16.mxu0 0
          %4832 = vmatmul.mubr.bf16.gmra.mxu0 %v4783
          %v4833 = vpop.f32.mrf.mxu0
          %v4834 = vadd.f32 0.0, %v4833
          %v4835 = vpop.f32.mrf.mxu0
          %v4836 = vpop.f32.mrf.mxu0
          %v4837 = vadd.f32 0.0, %v4836
          %v4838 = vpop.f32.mrf.mxu0
          %4839 = vmatprep.mubr.bf16.mxu0 0
          %4840 = vmatmul.mubr.bf16.gmra.mxu0 %v4785
          %v4841 = vpop.f32.mrf.mxu0
          %v4842 = vadd.f32 0.0, %v4841
          %v4843 = vpop.f32.mrf.mxu0
          %v4844 = vpop.f32.mrf.mxu0
          %v4845 = vadd.f32 0.0, %v4844
          %v4846 = vpop.f32.mrf.mxu0
          %4847 = vmatprep.mubr.bf16.mxu0 0
          %4848 = vmatmul.mubr.bf16.gmra.mxu0 %v4787
          %v4849 = vpop.f32.mrf.mxu0
          %v4850 = vadd.f32 0.0, %v4849
          %v4851 = vpop.f32.mrf.mxu0
          %v4852 = vpop.f32.mrf.mxu0
          %v4853 = vadd.f32 0.0, %v4852
          %v4854 = vpop.f32.mrf.mxu0
          %4855 = vmatprep.mubr.bf16.mxu0 0
          %4856 = vmatmul.mubr.bf16.gmra.mxu0 %v4789
          %v4857 = vpop.f32.mrf.mxu0
          %v4858 = vadd.f32 0.0, %v4857
          %v4859 = vpop.f32.mrf.mxu0
          %v4860 = vpop.f32.mrf.mxu0
          %v4861 = vadd.f32 0.0, %v4860
          %v4862 = vpop.f32.mrf.mxu0
          %4863 = vmatprep.mubr.bf16.mxu0 0
          %4864 = vmatmul.mubr.bf16.gmra.mxu0 %v4791
          %v4865 = vpop.f32.mrf.mxu0
          %v4866 = vadd.f32 0.0, %v4865
          %v4867 = vpop.f32.mrf.mxu0
          %v4868 = vpop.f32.mrf.mxu0
          %v4869 = vadd.f32 0.0, %v4868
          %v4870 = vpop.f32.mrf.mxu0
          %4871 = vmatprep.mubr.bf16.mxu0 0
          %4872 = vmatmul.mubr.bf16.gmra.mxu0 %v4793
          %v4873 = vpop.f32.mrf.mxu0
          %v4874 = vadd.f32 0.0, %v4873
          %v4875 = vpop.f32.mrf.mxu0
          %v4876 = vpop.f32.mrf.mxu0
          %v4877 = vadd.f32 0.0, %v4876
          %v4878 = vpop.f32.mrf.mxu0
          %4879 = vmatprep.mubr.bf16.mxu0 0
          %4880 = vmatmul.mubr.bf16.gmra.mxu0 %v4795
          %v4881 = vpop.f32.mrf.mxu0
          %v4882 = vadd.f32 0.0, %v4881
          %v4883 = vpop.f32.mrf.mxu0
          %v4884 = vpop.f32.mrf.mxu0
          %v4885 = vadd.f32 0.0, %v4884
          %v4886 = vpop.f32.mrf.mxu0
          %4887 = vmatprep.mubr.bf16.mxu0 0
          %4888 = vmatmul.mubr.bf16.gmra.mxu0 %v4797
          %v4889 = vpop.f32.mrf.mxu0
          %v4890 = vadd.f32 0.0, %v4889
          %v4891 = vpop.f32.mrf.mxu0
          %v4892 = vpop.f32.mrf.mxu0
          %v4893 = vadd.f32 0.0, %v4892
          %v4894 = vpop.f32.mrf.mxu0
          %4895 = vdwg.mxu0
          %v4900 = vunpack.c.l.b16 %v4684
          %v4901 = vunpack.c.l.b16 %v4685
          %v4902 = vunpack.c.l.b16 %v4686
          %v4903 = vunpack.c.l.b16 %v4687
          %v4904 = vpack.c.b16 %v4901, %v4900
          %v4905 = vpack.c.b16 %v4903, %v4902
          %v4909 = vsel %vm1471, %v4770, 0
          %v4912 = vsel %vm1471, %v4720, 0
          %v4915 = vsel %vm1471, %v4728, 0
          %v4918 = vsel %vm1471, %v4736, 0
          %v4921 = vsel %vm1471, %v4744, 0
          %v4924 = vsel %vm1471, %v4752, 0
          %v4927 = vsel %vm1471, %v4760, 0
          %v4930 = vsel %vm1471, %v4768, 0
          %4932 = vmatprep.subr.bf16.mxu0 0
          %4933 = vmatpush1.bf16.msra.mxu0 0
          %4934 = vmatprep.subr.bf16.mxu0 0
          %4935 = vmatpush1.bf16.msra.mxu0 0
          %4936 = vmatprep.subr.bf16.mxu0 0
          %4937 = vmatpush1.bf16.msra.mxu0 0
          %4938 = vmatprep.subr.bf16.mxu0 0
          %4939 = vmatpush1.bf16.msra.mxu0 0
          %4940 = vmatprep.subr.bf16.mxu0 0
          %4941 = vmatpush1.bf16.msra.mxu0 0
          %4942 = vmatprep.subr.bf16.mxu0 0
          %4943 = vmatpush1.bf16.msra.mxu0 0
          %4944 = vmatprep.subr.bf16.mxu0 0
          %4945 = vmatpush1.bf16.msra.mxu0 %v4905
          %4946 = vmatprep.subr.bf16.mxu0 0
          %4947 = vmatpush1.bf16.msra.mxu0 %v4904
          %4948 = vmatprep.subr.bf16.mxu0 0
          %4949 = vmatpush2.bf16.msra.mxu0 0
          %4950 = vmatprep.subr.bf16.mxu0 0
          %4951 = vmatpush2.bf16.msra.mxu0 0
          %4952 = vmatprep.subr.bf16.mxu0 0
          %4953 = vmatpush2.bf16.msra.mxu0 0
          %4954 = vmatprep.subr.bf16.mxu0 0
          %4955 = vmatpush2.bf16.msra.mxu0 0
          %4956 = vmatprep.subr.bf16.mxu0 0
          %4957 = vmatpush2.bf16.msra.mxu0 0
          %4958 = vmatprep.subr.bf16.mxu0 0
          %4959 = vmatpush2.bf16.msra.mxu0 0
          %4960 = vmatprep.subr.bf16.mxu0 0
          %4961 = vmatpush2.bf16.msra.mxu0 0
          %4962 = vmatprep.subr.bf16.mxu0 0
          %4963 = vmatpush2.bf16.msra.mxu0 0
          %4964 = vmatprep.mubr.bf16.mxu0 0
          %4965 = vmatmul.mubr.bf16.gmra.mxu0 %v4909
          %v4966 = vpop.f32.mrf.mxu0
          %v4967 = vadd.f32 %v4834, %v4966
          %v4968 = vpop.f32.mrf.mxu0
          %v4969 = vpop.f32.mrf.mxu0
          %v4970 = vadd.f32 %v4837, %v4969
          %v4971 = vpop.f32.mrf.mxu0
          %4972 = vmatprep.mubr.bf16.mxu0 0
          %4973 = vmatmul.mubr.bf16.gmra.mxu0 %v4912
          %v4974 = vpop.f32.mrf.mxu0
          %v4975 = vadd.f32 %v4842, %v4974
          %v4976 = vpop.f32.mrf.mxu0
          %v4977 = vpop.f32.mrf.mxu0
          %v4978 = vadd.f32 %v4845, %v4977
          %v4979 = vpop.f32.mrf.mxu0
          %4980 = vmatprep.mubr.bf16.mxu0 0
          %4981 = vmatmul.mubr.bf16.gmra.mxu0 %v4915
          %v4982 = vpop.f32.mrf.mxu0
          %v4983 = vadd.f32 %v4850, %v4982
          %v4984 = vpop.f32.mrf.mxu0
          %v4985 = vpop.f32.mrf.mxu0
          %v4986 = vadd.f32 %v4853, %v4985
          %v4987 = vpop.f32.mrf.mxu0
          %4988 = vmatprep.mubr.bf16.mxu0 0
          %4989 = vmatmul.mubr.bf16.gmra.mxu0 %v4918
          %v4990 = vpop.f32.mrf.mxu0
          %v4991 = vadd.f32 %v4858, %v4990
          %v4992 = vpop.f32.mrf.mxu0
          %v4993 = vpop.f32.mrf.mxu0
          %v4994 = vadd.f32 %v4861, %v4993
          %v4995 = vpop.f32.mrf.mxu0
          %4996 = vmatprep.mubr.bf16.mxu0 0
          %4997 = vmatmul.mubr.bf16.gmra.mxu0 %v4921
          %v4998 = vpop.f32.mrf.mxu0
          %v4999 = vadd.f32 %v4866, %v4998
          %v5000 = vpop.f32.mrf.mxu0
          %v5001 = vpop.f32.mrf.mxu0
          %v5002 = vadd.f32 %v4869, %v5001
          %v5003 = vpop.f32.mrf.mxu0
          %5004 = vmatprep.mubr.bf16.mxu0 0
          %5005 = vmatmul.mubr.bf16.gmra.mxu0 %v4924
          %v5006 = vpop.f32.mrf.mxu0
          %v5007 = vadd.f32 %v4874, %v5006
          %v5008 = vpop.f32.mrf.mxu0
          %v5009 = vpop.f32.mrf.mxu0
          %v5010 = vadd.f32 %v4877, %v5009
          %v5011 = vpop.f32.mrf.mxu0
          %5012 = vmatprep.mubr.bf16.mxu0 0
          %5013 = vmatmul.mubr.bf16.gmra.mxu0 %v4927
          %v5014 = vpop.f32.mrf.mxu0
          %v5015 = vadd.f32 %v4882, %v5014
          %v5016 = vpop.f32.mrf.mxu0
          %v5017 = vpop.f32.mrf.mxu0
          %v5018 = vadd.f32 %v4885, %v5017
          %v5019 = vpop.f32.mrf.mxu0
          %5020 = vmatprep.mubr.bf16.mxu0 0
          %5021 = vmatmul.mubr.bf16.gmra.mxu0 %v4930
          %v5022 = vpop.f32.mrf.mxu0
          %v5023 = vadd.f32 %v4890, %v5022
          %v5024 = vpop.f32.mrf.mxu0
          %v5025 = vpop.f32.mrf.mxu0
          %v5026 = vadd.f32 %v4893, %v5025
          %v5027 = vpop.f32.mrf.mxu0
          %5028 = vdwg.mxu0
          %v5029 = vrot.slane %v4710, 1
          %v5030 = vor.u32 %v4707, %v5029
          %v5031 = vrot.slane %v4717, 1
          %v5032 = vsel %vm3491, %v5030, %v5031
          %v5033 = vor.u32 %v4714, %v5031
          %v5034 = vrot.slane %v4725, 1
          %v5035 = vsel %vm3491, %v5033, %v5034
          %v5036 = vor.u32 %v4722, %v5034
          %v5037 = vrot.slane %v4733, 1
          %v5038 = vsel %vm3491, %v5036, %v5037
          %v5039 = vor.u32 %v4730, %v5037
          %v5040 = vrot.slane %v4741, 1
          %v5041 = vsel %vm3491, %v5039, %v5040
          %v5042 = vor.u32 %v4738, %v5040
          %v5043 = vrot.slane %v4749, 1
          %v5044 = vsel %vm3491, %v5042, %v5043
          %v5045 = vor.u32 %v4746, %v5043
          %v5046 = vrot.slane %v4757, 1
          %v5047 = vsel %vm3491, %v5045, %v5046
          %v5048 = vor.u32 %v4754, %v5046
          %v5049 = vrot.slane %v4765, 1
          %v5050 = vsel %vm3491, %v5048, %v5049
          %v5051 = vor.u32 %v4762, %v5049
          %v5053 = vsel %vm3517, %v5051, 0
          %v5058 = vunpack.c.l.b16 %v4694
          %v5059 = vunpack.c.l.b16 %v4695
          %v5060 = vunpack.c.l.b16 %v4696
          %v5061 = vunpack.c.l.b16 %v4697
          %v5062 = vpack.c.b16 %v5059, %v5058
          %v5063 = vpack.c.b16 %v5061, %v5060
          %v5067 = vsel %vm1471, %v5032, 0
          %v5070 = vsel %vm1471, %v5035, 0
          %v5073 = vsel %vm1471, %v5038, 0
          %v5076 = vsel %vm1471, %v5041, 0
          %v5079 = vsel %vm1471, %v5044, 0
          %v5082 = vsel %vm1471, %v5047, 0
          %v5085 = vsel %vm1471, %v5050, 0
          %v5088 = vsel %vm1471, %v5053, 0
          %5090 = vmatprep.subr.bf16.mxu0 0
          %5091 = vmatpush1.bf16.msra.mxu0 0
          %5092 = vmatprep.subr.bf16.mxu0 0
          %5093 = vmatpush1.bf16.msra.mxu0 0
          %5094 = vmatprep.subr.bf16.mxu0 0
          %5095 = vmatpush1.bf16.msra.mxu0 0
          %5096 = vmatprep.subr.bf16.mxu0 0
          %5097 = vmatpush1.bf16.msra.mxu0 0
          %5098 = vmatprep.subr.bf16.mxu0 0
          %5099 = vmatpush1.bf16.msra.mxu0 0
          %5100 = vmatprep.subr.bf16.mxu0 0
          %5101 = vmatpush1.bf16.msra.mxu0 0
          %5102 = vmatprep.subr.bf16.mxu0 0
          %5103 = vmatpush1.bf16.msra.mxu0 %v5063
          %5104 = vmatprep.subr.bf16.mxu0 0
          %5105 = vmatpush1.bf16.msra.mxu0 %v5062
          %5106 = vmatprep.subr.bf16.mxu0 0
          %5107 = vmatpush2.bf16.msra.mxu0 0
          %5108 = vmatprep.subr.bf16.mxu0 0
          %5109 = vmatpush2.bf16.msra.mxu0 0
          %5110 = vmatprep.subr.bf16.mxu0 0
          %5111 = vmatpush2.bf16.msra.mxu0 0
          %5112 = vmatprep.subr.bf16.mxu0 0
          %5113 = vmatpush2.bf16.msra.mxu0 0
          %5114 = vmatprep.subr.bf16.mxu0 0
          %5115 = vmatpush2.bf16.msra.mxu0 0
          %5116 = vmatprep.subr.bf16.mxu0 0
          %5117 = vmatpush2.bf16.msra.mxu0 0
          %5118 = vmatprep.subr.bf16.mxu0 0
          %5119 = vmatpush2.bf16.msra.mxu0 0
          %5120 = vmatprep.subr.bf16.mxu0 0
          %5121 = vmatpush2.bf16.msra.mxu0 0
          %5122 = vmatprep.mubr.bf16.mxu0 0
          %5123 = vmatmul.mubr.bf16.gmra.mxu0 %v5067
          %v5124 = vpop.f32.mrf.mxu0
          %v5125 = vadd.f32 0.0, %v5124
          %v5126 = vpop.f32.mrf.mxu0
          %v5127 = vpop.f32.mrf.mxu0
          %v5128 = vadd.f32 0.0, %v5127
          %v5129 = vpop.f32.mrf.mxu0
          %5130 = vmatprep.mubr.bf16.mxu0 0
          %5131 = vmatmul.mubr.bf16.gmra.mxu0 %v5070
          %v5132 = vpop.f32.mrf.mxu0
          %v5133 = vadd.f32 0.0, %v5132
          %v5134 = vpop.f32.mrf.mxu0
          %v5135 = vpop.f32.mrf.mxu0
          %v5136 = vadd.f32 0.0, %v5135
          %v5137 = vpop.f32.mrf.mxu0
          %5138 = vmatprep.mubr.bf16.mxu0 0
          %5139 = vmatmul.mubr.bf16.gmra.mxu0 %v5073
          %v5140 = vpop.f32.mrf.mxu0
          %v5141 = vadd.f32 0.0, %v5140
          %v5142 = vpop.f32.mrf.mxu0
          %v5143 = vpop.f32.mrf.mxu0
          %v5144 = vadd.f32 0.0, %v5143
          %v5145 = vpop.f32.mrf.mxu0
          %5146 = vmatprep.mubr.bf16.mxu0 0
          %5147 = vmatmul.mubr.bf16.gmra.mxu0 %v5076
          %v5148 = vpop.f32.mrf.mxu0
          %v5149 = vadd.f32 0.0, %v5148
          %v5150 = vpop.f32.mrf.mxu0
          %v5151 = vpop.f32.mrf.mxu0
          %v5152 = vadd.f32 0.0, %v5151
          %v5153 = vpop.f32.mrf.mxu0
          %5154 = vmatprep.mubr.bf16.mxu0 0
          %5155 = vmatmul.mubr.bf16.gmra.mxu0 %v5079
          %v5156 = vpop.f32.mrf.mxu0
          %v5157 = vadd.f32 0.0, %v5156
          %v5158 = vpop.f32.mrf.mxu0
          %v5159 = vpop.f32.mrf.mxu0
          %v5160 = vadd.f32 0.0, %v5159
          %v5161 = vpop.f32.mrf.mxu0
          %5162 = vmatprep.mubr.bf16.mxu0 0
          %5163 = vmatmul.mubr.bf16.gmra.mxu0 %v5082
          %v5164 = vpop.f32.mrf.mxu0
          %v5165 = vadd.f32 0.0, %v5164
          %v5166 = vpop.f32.mrf.mxu0
          %v5167 = vpop.f32.mrf.mxu0
          %v5168 = vadd.f32 0.0, %v5167
          %v5169 = vpop.f32.mrf.mxu0
          %5170 = vmatprep.mubr.bf16.mxu0 0
          %5171 = vmatmul.mubr.bf16.gmra.mxu0 %v5085
          %v5172 = vpop.f32.mrf.mxu0
          %v5173 = vadd.f32 0.0, %v5172
          %v5174 = vpop.f32.mrf.mxu0
          %v5175 = vpop.f32.mrf.mxu0
          %v5176 = vadd.f32 0.0, %v5175
          %v5177 = vpop.f32.mrf.mxu0
          %5178 = vmatprep.mubr.bf16.mxu0 0
          %5179 = vmatmul.mubr.bf16.gmra.mxu0 %v5088
          %v5180 = vpop.f32.mrf.mxu0
          %v5181 = vadd.f32 0.0, %v5180
          %v5182 = vpop.f32.mrf.mxu0
          %v5183 = vpop.f32.mrf.mxu0
          %v5184 = vadd.f32 0.0, %v5183
          %v5185 = vpop.f32.mrf.mxu0
          %5186 = vdwg.mxu0
          %v5187 = vadd.f32 %v4967, %v5125
          %v5188 = vadd.f32 %v4970, %v5128
          %v5189 = vadd.f32 %v4975, %v5133
          %v5190 = vadd.f32 %v4978, %v5136
          %v5191 = vadd.f32 %v4983, %v5141
          %v5192 = vadd.f32 %v4986, %v5144
          %v5193 = vadd.f32 %v4991, %v5149
          %v5194 = vadd.f32 %v4994, %v5152
          %v5195 = vadd.f32 %v4999, %v5157
          %v5196 = vadd.f32 %v5002, %v5160
          %v5197 = vadd.f32 %v5007, %v5165
          %v5198 = vadd.f32 %v5010, %v5168
          %v5199 = vadd.f32 %v5015, %v5173
          %v5200 = vadd.f32 %v5018, %v5176
          %v5201 = vadd.f32 %v5023, %v5181
          %v5202 = vadd.f32 %v5026, %v5184
          %v5204 = vlaneseq
          %v5205 = vshrl.u32 %v5204, 7
          %v5206 = vsub.s32 0, %v5205
          %v5207 = vrot.slane %v4683, %v5206
          %v5209 = vadd.f32 %v5187, %v5207
          %v5210 = vadd.f32 %v5188, %v5207
          %v5211 = vadd.f32 %v5189, %v5207
          %v5212 = vadd.f32 %v5190, %v5207
          %v5213 = vadd.f32 %v5191, %v5207
          %v5214 = vadd.f32 %v5192, %v5207
          %v5215 = vadd.f32 %v5193, %v5207
          %v5216 = vadd.f32 %v5194, %v5207
          %v5217 = vadd.f32 %v5195, %v5207
          %v5218 = vadd.f32 %v5196, %v5207
          %v5219 = vadd.f32 %v5197, %v5207
          %v5220 = vadd.f32 %v5198, %v5207
          %v5221 = vadd.f32 %v5199, %v5207
          %v5222 = vadd.f32 %v5200, %v5207
          %v5223 = vadd.f32 %v5201, %v5207
          %v5224 = vadd.f32 %v5202, %v5207
          %v5225 = vmax.f32 %v5209, 0.0
          %v5226 = vmax.f32 %v5210, 0.0
          %v5227 = vmax.f32 %v5211, 0.0
          %v5228 = vmax.f32 %v5212, 0.0
          %v5229 = vmax.f32 %v5213, 0.0
          %v5230 = vmax.f32 %v5214, 0.0
          %v5231 = vmax.f32 %v5215, 0.0
          %v5232 = vmax.f32 %v5216, 0.0
          %v5233 = vmax.f32 %v5217, 0.0
          %v5234 = vmax.f32 %v5218, 0.0
          %v5235 = vmax.f32 %v5219, 0.0
          %v5236 = vmax.f32 %v5220, 0.0
          %v5237 = vmax.f32 %v5221, 0.0
          %v5238 = vmax.f32 %v5222, 0.0
          %v5239 = vmax.f32 %v5223, 0.0
          %v5240 = vmax.f32 %v5224, 0.0
          %v5241 = vld [vmem:[%s20] sm:$0x1]
          %v5242 = vld [vmem:[%s21] sm:$0x1]
          %v5243 = vsel %vm3846, %v5225, 0.0
          %5244 = vadd.xlane.f32.xlu0 %v5243
          %v5245 = vpop.xlane.xlu0 %5244
          %v5246 = vsel %vm3846, %v5226, 0.0
          %5247 = vadd.xlane.f32.xlu0 %v5246
          %v5248 = vpop.xlane.xlu0 %5247
          %v5249 = vsel %vm3846, %v5227, 0.0
          %5250 = vadd.xlane.f32.xlu0 %v5249
          %v5251 = vpop.xlane.xlu0 %5250
          %v5252 = vsel %vm3846, %v5228, 0.0
          %5253 = vadd.xlane.f32.xlu0 %v5252
          %v5254 = vpop.xlane.xlu0 %5253
          %v5255 = vsel %vm3846, %v5229, 0.0
          %5256 = vadd.xlane.f32.xlu0 %v5255
          %v5257 = vpop.xlane.xlu0 %5256
          %v5258 = vsel %vm3846, %v5230, 0.0
          %5259 = vadd.xlane.f32.xlu0 %v5258
          %v5260 = vpop.xlane.xlu0 %5259
          %v5261 = vsel %vm3846, %v5231, 0.0
          %5262 = vadd.xlane.f32.xlu0 %v5261
          %v5263 = vpop.xlane.xlu0 %5262
          %v5264 = vsel %vm3846, %v5232, 0.0
          %5265 = vadd.xlane.f32.xlu0 %v5264
          %v5266 = vpop.xlane.xlu0 %5265
          %v5267 = vsel %vm3846, %v5233, 0.0
          %5268 = vadd.xlane.f32.xlu0 %v5267
          %v5269 = vpop.xlane.xlu0 %5268
          %v5270 = vsel %vm3846, %v5234, 0.0
          %5271 = vadd.xlane.f32.xlu0 %v5270
          %v5272 = vpop.xlane.xlu0 %5271
          %v5273 = vsel %vm3846, %v5235, 0.0
          %5274 = vadd.xlane.f32.xlu0 %v5273
          %v5275 = vpop.xlane.xlu0 %5274
          %v5276 = vsel %vm3846, %v5236, 0.0
          %5277 = vadd.xlane.f32.xlu0 %v5276
          %v5278 = vpop.xlane.xlu0 %5277
          %v5279 = vsel %vm3846, %v5237, 0.0
          %5280 = vadd.xlane.f32.xlu0 %v5279
          %v5281 = vpop.xlane.xlu0 %5280
          %v5282 = vsel %vm3846, %v5238, 0.0
          %5283 = vadd.xlane.f32.xlu0 %v5282
          %v5284 = vpop.xlane.xlu0 %5283
          %v5285 = vsel %vm3846, %v5239, 0.0
          %5286 = vadd.xlane.f32.xlu0 %v5285
          %v5287 = vpop.xlane.xlu0 %5286
          %v5288 = vsel %vm3846, %v5240, 0.0
          %5289 = vadd.xlane.f32.xlu0 %v5288
          %v5290 = vpop.xlane.xlu0 %5289
          %v5291 = vrcp.pop 64.0
          %v5292 = vmul.f32 %v5245, %v5291
          %v5293 = vmul.f32 %v5248, %v5291
          %v5294 = vmul.f32 %v5251, %v5291
          %v5295 = vmul.f32 %v5254, %v5291
          %v5296 = vmul.f32 %v5257, %v5291
          %v5297 = vmul.f32 %v5260, %v5291
          %v5298 = vmul.f32 %v5263, %v5291
          %v5299 = vmul.f32 %v5266, %v5291
          %v5300 = vmul.f32 %v5269, %v5291
          %v5301 = vmul.f32 %v5272, %v5291
          %v5302 = vmul.f32 %v5275, %v5291
          %v5303 = vmul.f32 %v5278, %v5291
          %v5304 = vmul.f32 %v5281, %v5291
          %v5305 = vmul.f32 %v5284, %v5291
          %v5306 = vmul.f32 %v5287, %v5291
          %v5307 = vmul.f32 %v5290, %v5291
          %v5308 = vsub.f32 %v5225, %v5292
          %v5309 = vsub.f32 %v5226, %v5293
          %v5310 = vsub.f32 %v5227, %v5294
          %v5311 = vsub.f32 %v5228, %v5295
          %v5312 = vsub.f32 %v5229, %v5296
          %v5313 = vsub.f32 %v5230, %v5297
          %v5314 = vsub.f32 %v5231, %v5298
          %v5315 = vsub.f32 %v5232, %v5299
          %v5316 = vsub.f32 %v5233, %v5300
          %v5317 = vsub.f32 %v5234, %v5301
          %v5318 = vsub.f32 %v5235, %v5302
          %v5319 = vsub.f32 %v5236, %v5303
          %v5320 = vsub.f32 %v5237, %v5304
          %v5321 = vsub.f32 %v5238, %v5305
          %v5322 = vsub.f32 %v5239, %v5306
          %v5323 = vsub.f32 %v5240, %v5307
          %v5324 = vmul.f32 %v5308, %v5308
          %v5325 = vmul.f32 %v5309, %v5309
          %v5326 = vmul.f32 %v5310, %v5310
          %v5327 = vmul.f32 %v5311, %v5311
          %v5328 = vmul.f32 %v5312, %v5312
          %v5329 = vmul.f32 %v5313, %v5313
          %v5330 = vmul.f32 %v5314, %v5314
          %v5331 = vmul.f32 %v5315, %v5315
          %v5332 = vmul.f32 %v5316, %v5316
          %v5333 = vmul.f32 %v5317, %v5317
          %v5334 = vmul.f32 %v5318, %v5318
          %v5335 = vmul.f32 %v5319, %v5319
          %v5336 = vmul.f32 %v5320, %v5320
          %v5337 = vmul.f32 %v5321, %v5321
          %v5338 = vmul.f32 %v5322, %v5322
          %v5339 = vmul.f32 %v5323, %v5323
          %v5340 = vsel %vm3846, %v5324, 0.0
          %5341 = vadd.xlane.f32.xlu0 %v5340
          %v5342 = vpop.xlane.xlu0 %5341
          %v5343 = vsel %vm3846, %v5325, 0.0
          %5344 = vadd.xlane.f32.xlu0 %v5343
          %v5345 = vpop.xlane.xlu0 %5344
          %v5346 = vsel %vm3846, %v5326, 0.0
          %5347 = vadd.xlane.f32.xlu0 %v5346
          %v5348 = vpop.xlane.xlu0 %5347
          %v5349 = vsel %vm3846, %v5327, 0.0
          %5350 = vadd.xlane.f32.xlu0 %v5349
          %v5351 = vpop.xlane.xlu0 %5350
          %v5352 = vsel %vm3846, %v5328, 0.0
          %5353 = vadd.xlane.f32.xlu0 %v5352
          %v5354 = vpop.xlane.xlu0 %5353
          %v5355 = vsel %vm3846, %v5329, 0.0
          %5356 = vadd.xlane.f32.xlu0 %v5355
          %v5357 = vpop.xlane.xlu0 %5356
          %v5358 = vsel %vm3846, %v5330, 0.0
          %5359 = vadd.xlane.f32.xlu0 %v5358
          %v5360 = vpop.xlane.xlu0 %5359
          %v5361 = vsel %vm3846, %v5331, 0.0
          %5362 = vadd.xlane.f32.xlu0 %v5361
          %v5363 = vpop.xlane.xlu0 %5362
          %v5364 = vsel %vm3846, %v5332, 0.0
          %5365 = vadd.xlane.f32.xlu0 %v5364
          %v5366 = vpop.xlane.xlu0 %5365
          %v5367 = vsel %vm3846, %v5333, 0.0
          %5368 = vadd.xlane.f32.xlu0 %v5367
          %v5369 = vpop.xlane.xlu0 %5368
          %v5370 = vsel %vm3846, %v5334, 0.0
          %5371 = vadd.xlane.f32.xlu0 %v5370
          %v5372 = vpop.xlane.xlu0 %5371
          %v5373 = vsel %vm3846, %v5335, 0.0
          %5374 = vadd.xlane.f32.xlu0 %v5373
          %v5375 = vpop.xlane.xlu0 %5374
          %v5376 = vsel %vm3846, %v5336, 0.0
          %5377 = vadd.xlane.f32.xlu0 %v5376
          %v5378 = vpop.xlane.xlu0 %5377
          %v5379 = vsel %vm3846, %v5337, 0.0
          %5380 = vadd.xlane.f32.xlu0 %v5379
          %v5381 = vpop.xlane.xlu0 %5380
          %v5382 = vsel %vm3846, %v5338, 0.0
          %5383 = vadd.xlane.f32.xlu0 %v5382
          %v5384 = vpop.xlane.xlu0 %5383
          %v5385 = vsel %vm3846, %v5339, 0.0
          %5386 = vadd.xlane.f32.xlu0 %v5385
          %v5387 = vpop.xlane.xlu0 %5386
          %v5388 = vmul.f32 %v5342, %v5291
          %v5389 = vmul.f32 %v5345, %v5291
          %v5390 = vmul.f32 %v5348, %v5291
          %v5391 = vmul.f32 %v5351, %v5291
          %v5392 = vmul.f32 %v5354, %v5291
          %v5393 = vmul.f32 %v5357, %v5291
          %v5394 = vmul.f32 %v5360, %v5291
          %v5395 = vmul.f32 %v5363, %v5291
          %v5396 = vmul.f32 %v5366, %v5291
          %v5397 = vmul.f32 %v5369, %v5291
          %v5398 = vmul.f32 %v5372, %v5291
          %v5399 = vmul.f32 %v5375, %v5291
          %v5400 = vmul.f32 %v5378, %v5291
          %v5401 = vmul.f32 %v5381, %v5291
          %v5402 = vmul.f32 %v5384, %v5291
          %v5403 = vmul.f32 %v5387, %v5291
          %v5404 = vadd.f32 %v5388, 0.0001
          %v5405 = vadd.f32 %v5389, 0.0001
          %v5406 = vadd.f32 %v5390, 0.0001
          %v5407 = vadd.f32 %v5391, 0.0001
          %v5408 = vadd.f32 %v5392, 0.0001
          %v5409 = vadd.f32 %v5393, 0.0001
          %v5410 = vadd.f32 %v5394, 0.0001
          %v5411 = vadd.f32 %v5395, 0.0001
          %v5412 = vadd.f32 %v5396, 0.0001
          %v5413 = vadd.f32 %v5397, 0.0001
          %v5414 = vadd.f32 %v5398, 0.0001
          %v5415 = vadd.f32 %v5399, 0.0001
          %v5416 = vadd.f32 %v5400, 0.0001
          %v5417 = vadd.f32 %v5401, 0.0001
          %v5418 = vadd.f32 %v5402, 0.0001
          %v5419 = vadd.f32 %v5403, 0.0001
          %v5420 = vrsqrt.pop %v5404
          %v5421 = vrsqrt.pop %v5405
          %v5422 = vrsqrt.pop %v5406
          %v5423 = vrsqrt.pop %v5407
          %v5424 = vrsqrt.pop %v5408
          %v5425 = vrsqrt.pop %v5409
          %v5426 = vrsqrt.pop %v5410
          %v5427 = vrsqrt.pop %v5411
          %v5428 = vrsqrt.pop %v5412
          %v5429 = vrsqrt.pop %v5413
          %v5430 = vrsqrt.pop %v5414
          %v5431 = vrsqrt.pop %v5415
          %v5432 = vrsqrt.pop %v5416
          %v5433 = vrsqrt.pop %v5417
          %v5434 = vrsqrt.pop %v5418
          %v5435 = vrsqrt.pop %v5419
          %v5436 = vmul.f32 %v5308, %v5420
          %v5437 = vmul.f32 %v5309, %v5421
          %v5438 = vmul.f32 %v5310, %v5422
          %v5439 = vmul.f32 %v5311, %v5423
          %v5440 = vmul.f32 %v5312, %v5424
          %v5441 = vmul.f32 %v5313, %v5425
          %v5442 = vmul.f32 %v5314, %v5426
          %v5443 = vmul.f32 %v5315, %v5427
          %v5444 = vmul.f32 %v5316, %v5428
          %v5445 = vmul.f32 %v5317, %v5429
          %v5446 = vmul.f32 %v5318, %v5430
          %v5447 = vmul.f32 %v5319, %v5431
          %v5448 = vmul.f32 %v5320, %v5432
          %v5449 = vmul.f32 %v5321, %v5433
          %v5450 = vmul.f32 %v5322, %v5434
          %v5451 = vmul.f32 %v5323, %v5435
          %v5453 = vlaneseq
          %v5454 = vshrl.u32 %v5453, 7
          %v5455 = vsub.s32 0, %v5454
          %v5456 = vrot.slane %v5241, %v5455
          %v5458 = vmul.f32 %v5436, %v5456
          %v5459 = vmul.f32 %v5437, %v5456
          %v5460 = vmul.f32 %v5438, %v5456
          %v5461 = vmul.f32 %v5439, %v5456
          %v5462 = vmul.f32 %v5440, %v5456
          %v5463 = vmul.f32 %v5441, %v5456
          %v5464 = vmul.f32 %v5442, %v5456
          %v5465 = vmul.f32 %v5443, %v5456
          %v5466 = vmul.f32 %v5444, %v5456
          %v5467 = vmul.f32 %v5445, %v5456
          %v5468 = vmul.f32 %v5446, %v5456
          %v5469 = vmul.f32 %v5447, %v5456
          %v5470 = vmul.f32 %v5448, %v5456
          %v5471 = vmul.f32 %v5449, %v5456
          %v5472 = vmul.f32 %v5450, %v5456
          %v5473 = vmul.f32 %v5451, %v5456
          %v5475 = vlaneseq
          %v5476 = vshrl.u32 %v5475, 7
          %v5477 = vsub.s32 0, %v5476
          %v5478 = vrot.slane %v5242, %v5477
          %v5480 = vadd.f32 %v5458, %v5478
          %v5481 = vadd.f32 %v5459, %v5478
          %v5482 = vadd.f32 %v5460, %v5478
          %v5483 = vadd.f32 %v5461, %v5478
          %v5484 = vadd.f32 %v5462, %v5478
          %v5485 = vadd.f32 %v5463, %v5478
          %v5486 = vadd.f32 %v5464, %v5478
          %v5487 = vadd.f32 %v5465, %v5478
          %v5488 = vadd.f32 %v5466, %v5478
          %v5489 = vadd.f32 %v5467, %v5478
          %v5490 = vadd.f32 %v5468, %v5478
          %v5491 = vadd.f32 %v5469, %v5478
          %v5492 = vadd.f32 %v5470, %v5478
          %v5493 = vadd.f32 %v5471, %v5478
          %v5494 = vadd.f32 %v5472, %v5478
          %v5495 = vadd.f32 %v5473, %v5478
          %v5496 = vmul.f32 %v5480, %v4667
          %v5497 = vmul.f32 %v5481, %v4668
          %v5498 = vmul.f32 %v5482, %v4669
          %v5499 = vmul.f32 %v5483, %v4670
          %v5500 = vmul.f32 %v5484, %v4671
          %v5501 = vmul.f32 %v5485, %v4672
          %v5502 = vmul.f32 %v5486, %v4673
          %v5503 = vmul.f32 %v5487, %v4674
          %v5504 = vmul.f32 %v5488, %v4675
          %v5505 = vmul.f32 %v5489, %v4676
          %v5506 = vmul.f32 %v5490, %v4677
          %v5507 = vmul.f32 %v5491, %v4678
          %v5508 = vmul.f32 %v5492, %v4679
          %v5509 = vmul.f32 %v5493, %v4680
          %v5510 = vmul.f32 %v5494, %v4681
          %v5511 = vmul.f32 %v5495, %v4682
          %v5512 = vld [vmem:[%s23] sm:$0x1]
          %v5513 = vld [vmem:[%s22] sm:$0xf]
          %v5514 = vld [vmem:[%s22 + $0x4] sm:$0xf]
          %v5515 = vld [vmem:[%s22 + $0x8] sm:$0xf]
          %v5516 = vld [vmem:[%s22 + $0xc] sm:$0xf]
          %v5517 = vld [vmem:[%s22 + $0x10] sm:$0xf]
          %v5518 = vld [vmem:[%s22 + $0x14] sm:$0xf]
          %v5519 = vld [vmem:[%s22 + $0x18] sm:$0xf]
          %v5520 = vld [vmem:[%s22 + $0x1c] sm:$0xf]
          %s5521 = scalar_lea.vmem %s22, 32
          %v5522 = vld [vmem:[%s5521] sm:$0xf]
          %v5523 = vld [vmem:[%s5521 + $0x4] sm:$0xf]
          %v5524 = vld [vmem:[%s5521 + $0x8] sm:$0xf]
          %v5525 = vld [vmem:[%s5521 + $0xc] sm:$0xf]
          %v5526 = vld [vmem:[%s5521 + $0x10] sm:$0xf]
          %v5527 = vld [vmem:[%s5521 + $0x14] sm:$0xf]
          %v5528 = vld [vmem:[%s5521 + $0x18] sm:$0xf]
          %v5529 = vld [vmem:[%s5521 + $0x1c] sm:$0xf]
          %s5530 = scalar_lea.vmem %s22, 64
          %v5531 = vld [vmem:[%s5530] sm:$0xf]
          %v5532 = vld [vmem:[%s5530 + $0x4] sm:$0xf]
          %v5533 = vld [vmem:[%s5530 + $0x8] sm:$0xf]
          %v5534 = vld [vmem:[%s5530 + $0xc] sm:$0xf]
          %v5535 = vld [vmem:[%s5530 + $0x10] sm:$0xf]
          %v5536 = vld [vmem:[%s5530 + $0x14] sm:$0xf]
          %v5537 = vld [vmem:[%s5530 + $0x18] sm:$0xf]
          %v5538 = vld [vmem:[%s5530 + $0x1c] sm:$0xf]
          %v5539 = vpack.c.bf16 %v5497, %v5496
          %v5540 = vpack.c.bf16 %v5499, %v5498
          %v5541 = vpack.c.bf16 %v5501, %v5500
          %v5542 = vpack.c.bf16 %v5503, %v5502
          %v5543 = vpack.c.bf16 %v5505, %v5504
          %v5544 = vpack.c.bf16 %v5507, %v5506
          %v5545 = vpack.c.bf16 %v5509, %v5508
          %v5546 = vpack.c.bf16 %v5511, %v5510
          %v5548 = vshrl.u32 %v5539, 16
          %v5550 = vrot.slane %v5548, 7
          %v5551 = vshll.u32 %v5539, 16
          %v5553 = vor.u32 %v5550, %v5551
          %v5555 = vshrl.u32 %v5540, 16
          %v5557 = vrot.slane %v5555, 7
          %v5558 = vshll.u32 %v5540, 16
          %v5560 = vor.u32 %v5557, %v5558
          %v5561 = vsel %vm3165, %v5550, %v5560
          %v5563 = vshrl.u32 %v5541, 16
          %v5565 = vrot.slane %v5563, 7
          %v5566 = vshll.u32 %v5541, 16
          %v5568 = vor.u32 %v5565, %v5566
          %v5569 = vsel %vm3165, %v5557, %v5568
          %v5571 = vshrl.u32 %v5542, 16
          %v5573 = vrot.slane %v5571, 7
          %v5574 = vshll.u32 %v5542, 16
          %v5576 = vor.u32 %v5573, %v5574
          %v5577 = vsel %vm3165, %v5565, %v5576
          %v5579 = vshrl.u32 %v5543, 16
          %v5581 = vrot.slane %v5579, 7
          %v5582 = vshll.u32 %v5543, 16
          %v5584 = vor.u32 %v5581, %v5582
          %v5585 = vsel %vm3165, %v5573, %v5584
          %v5587 = vshrl.u32 %v5544, 16
          %v5589 = vrot.slane %v5587, 7
          %v5590 = vshll.u32 %v5544, 16
          %v5592 = vor.u32 %v5589, %v5590
          %v5593 = vsel %vm3165, %v5581, %v5592
          %v5595 = vshrl.u32 %v5545, 16
          %v5597 = vrot.slane %v5595, 7
          %v5598 = vshll.u32 %v5545, 16
          %v5600 = vor.u32 %v5597, %v5598
          %v5601 = vsel %vm3165, %v5589, %v5600
          %v5603 = vshrl.u32 %v5546, 16
          %v5605 = vrot.slane %v5603, 7
          %v5606 = vshll.u32 %v5546, 16
          %v5608 = vor.u32 %v5605, %v5606
          %v5609 = vsel %vm3165, %v5597, %v5608
          %v5611 = vsel %vm3231, 0, %v5553
          %v5620 = vunpack.c.l.b16 %v5522
          %v5621 = vunpack.c.l.b16 %v5523
          %v5622 = vunpack.c.l.b16 %v5524
          %v5623 = vunpack.c.l.b16 %v5525
          %v5624 = vunpack.c.l.b16 %v5526
          %v5625 = vunpack.c.l.b16 %v5527
          %v5626 = vunpack.c.l.b16 %v5528
          %v5627 = vunpack.c.l.b16 %v5529
          %v5628 = vpack.c.b16 %v5621, %v5620
          %v5629 = vpack.c.b16 %v5623, %v5622
          %v5630 = vpack.c.b16 %v5625, %v5624
          %v5631 = vpack.c.b16 %v5627, %v5626
          %v5636 = vsel %vm3846, %v5539, 0
          %v5638 = vsel %vm3846, %v5540, 0
          %v5640 = vsel %vm3846, %v5541, 0
          %v5642 = vsel %vm3846, %v5542, 0
          %v5644 = vsel %vm3846, %v5543, 0
          %v5646 = vsel %vm3846, %v5544, 0
          %v5648 = vsel %vm3846, %v5545, 0
          %v5650 = vsel %vm3846, %v5546, 0
          %5652 = vmatprep.subr.bf16.mxu0 0
          %5653 = vmatpush1.bf16.msra.mxu0 0
          %5654 = vmatprep.subr.bf16.mxu0 0
          %5655 = vmatpush1.bf16.msra.mxu0 0
          %5656 = vmatprep.subr.bf16.mxu0 0
          %5657 = vmatpush1.bf16.msra.mxu0 0
          %5658 = vmatprep.subr.bf16.mxu0 0
          %5659 = vmatpush1.bf16.msra.mxu0 0
          %5660 = vmatprep.subr.bf16.mxu0 0
          %5661 = vmatpush1.bf16.msra.mxu0 %v5631
          %5662 = vmatprep.subr.bf16.mxu0 0
          %5663 = vmatpush1.bf16.msra.mxu0 %v5630
          %5664 = vmatprep.subr.bf16.mxu0 0
          %5665 = vmatpush1.bf16.msra.mxu0 %v5629
          %5666 = vmatprep.subr.bf16.mxu0 0
          %5667 = vmatpush1.bf16.msra.mxu0 %v5628
          %5668 = vmatprep.subr.bf16.mxu0 0
          %5669 = vmatpush2.bf16.msra.mxu0 0
          %5670 = vmatprep.subr.bf16.mxu0 0
          %5671 = vmatpush2.bf16.msra.mxu0 0
          %5672 = vmatprep.subr.bf16.mxu0 0
          %5673 = vmatpush2.bf16.msra.mxu0 0
          %5674 = vmatprep.subr.bf16.mxu0 0
          %5675 = vmatpush2.bf16.msra.mxu0 0
          %5676 = vmatprep.subr.bf16.mxu0 0
          %5677 = vmatpush2.bf16.msra.mxu0 0
          %5678 = vmatprep.subr.bf16.mxu0 0
          %5679 = vmatpush2.bf16.msra.mxu0 0
          %5680 = vmatprep.subr.bf16.mxu0 0
          %5681 = vmatpush2.bf16.msra.mxu0 0
          %5682 = vmatprep.subr.bf16.mxu0 0
          %5683 = vmatpush2.bf16.msra.mxu0 0
          %5684 = vmatprep.mubr.bf16.mxu0 0
          %5685 = vmatmul.mubr.bf16.gmra.mxu0 %v5636
          %v5686 = vpop.f32.mrf.mxu0
          %v5687 = vadd.f32 0.0, %v5686
          %v5688 = vpop.f32.mrf.mxu0
          %v5689 = vpop.f32.mrf.mxu0
          %v5690 = vadd.f32 0.0, %v5689
          %v5691 = vpop.f32.mrf.mxu0
          %5692 = vmatprep.mubr.bf16.mxu0 0
          %5693 = vmatmul.mubr.bf16.gmra.mxu0 %v5638
          %v5694 = vpop.f32.mrf.mxu0
          %v5695 = vadd.f32 0.0, %v5694
          %v5696 = vpop.f32.mrf.mxu0
          %v5697 = vpop.f32.mrf.mxu0
          %v5698 = vadd.f32 0.0, %v5697
          %v5699 = vpop.f32.mrf.mxu0
          %5700 = vmatprep.mubr.bf16.mxu0 0
          %5701 = vmatmul.mubr.bf16.gmra.mxu0 %v5640
          %v5702 = vpop.f32.mrf.mxu0
          %v5703 = vadd.f32 0.0, %v5702
          %v5704 = vpop.f32.mrf.mxu0
          %v5705 = vpop.f32.mrf.mxu0
          %v5706 = vadd.f32 0.0, %v5705
          %v5707 = vpop.f32.mrf.mxu0
          %5708 = vmatprep.mubr.bf16.mxu0 0
          %5709 = vmatmul.mubr.bf16.gmra.mxu0 %v5642
          %v5710 = vpop.f32.mrf.mxu0
          %v5711 = vadd.f32 0.0, %v5710
          %v5712 = vpop.f32.mrf.mxu0
          %v5713 = vpop.f32.mrf.mxu0
          %v5714 = vadd.f32 0.0, %v5713
          %v5715 = vpop.f32.mrf.mxu0
          %5716 = vmatprep.mubr.bf16.mxu0 0
          %5717 = vmatmul.mubr.bf16.gmra.mxu0 %v5644
          %v5718 = vpop.f32.mrf.mxu0
          %v5719 = vadd.f32 0.0, %v5718
          %v5720 = vpop.f32.mrf.mxu0
          %v5721 = vpop.f32.mrf.mxu0
          %v5722 = vadd.f32 0.0, %v5721
          %v5723 = vpop.f32.mrf.mxu0
          %5724 = vmatprep.mubr.bf16.mxu0 0
          %5725 = vmatmul.mubr.bf16.gmra.mxu0 %v5646
          %v5726 = vpop.f32.mrf.mxu0
          %v5727 = vadd.f32 0.0, %v5726
          %v5728 = vpop.f32.mrf.mxu0
          %v5729 = vpop.f32.mrf.mxu0
          %v5730 = vadd.f32 0.0, %v5729
          %v5731 = vpop.f32.mrf.mxu0
          %5732 = vmatprep.mubr.bf16.mxu0 0
          %5733 = vmatmul.mubr.bf16.gmra.mxu0 %v5648
          %v5734 = vpop.f32.mrf.mxu0
          %v5735 = vadd.f32 0.0, %v5734
          %v5736 = vpop.f32.mrf.mxu0
          %v5737 = vpop.f32.mrf.mxu0
          %v5738 = vadd.f32 0.0, %v5737
          %v5739 = vpop.f32.mrf.mxu0
          %5740 = vmatprep.mubr.bf16.mxu0 0
          %5741 = vmatmul.mubr.bf16.gmra.mxu0 %v5650
          %v5742 = vpop.f32.mrf.mxu0
          %v5743 = vadd.f32 0.0, %v5742
          %v5744 = vpop.f32.mrf.mxu0
          %v5745 = vpop.f32.mrf.mxu0
          %v5746 = vadd.f32 0.0, %v5745
          %v5747 = vpop.f32.mrf.mxu0
          %5748 = vdwg.mxu0
          %v5757 = vunpack.c.l.b16 %v5513
          %v5758 = vunpack.c.l.b16 %v5514
          %v5759 = vunpack.c.l.b16 %v5515
          %v5760 = vunpack.c.l.b16 %v5516
          %v5761 = vunpack.c.l.b16 %v5517
          %v5762 = vunpack.c.l.b16 %v5518
          %v5763 = vunpack.c.l.b16 %v5519
          %v5764 = vunpack.c.l.b16 %v5520
          %v5765 = vpack.c.b16 %v5758, %v5757
          %v5766 = vpack.c.b16 %v5760, %v5759
          %v5767 = vpack.c.b16 %v5762, %v5761
          %v5768 = vpack.c.b16 %v5764, %v5763
          %v5774 = vsel %vm3846, %v5611, 0
          %v5777 = vsel %vm3846, %v5561, 0
          %v5780 = vsel %vm3846, %v5569, 0
          %v5783 = vsel %vm3846, %v5577, 0
          %v5786 = vsel %vm3846, %v5585, 0
          %v5789 = vsel %vm3846, %v5593, 0
          %v5792 = vsel %vm3846, %v5601, 0
          %v5795 = vsel %vm3846, %v5609, 0
          %5797 = vmatprep.subr.bf16.mxu0 0
          %5798 = vmatpush1.bf16.msra.mxu0 0
          %5799 = vmatprep.subr.bf16.mxu0 0
          %5800 = vmatpush1.bf16.msra.mxu0 0
          %5801 = vmatprep.subr.bf16.mxu0 0
          %5802 = vmatpush1.bf16.msra.mxu0 0
          %5803 = vmatprep.subr.bf16.mxu0 0
          %5804 = vmatpush1.bf16.msra.mxu0 0
          %5805 = vmatprep.subr.bf16.mxu0 0
          %5806 = vmatpush1.bf16.msra.mxu0 %v5768
          %5807 = vmatprep.subr.bf16.mxu0 0
          %5808 = vmatpush1.bf16.msra.mxu0 %v5767
          %5809 = vmatprep.subr.bf16.mxu0 0
          %5810 = vmatpush1.bf16.msra.mxu0 %v5766
          %5811 = vmatprep.subr.bf16.mxu0 0
          %5812 = vmatpush1.bf16.msra.mxu0 %v5765
          %5813 = vmatprep.subr.bf16.mxu0 0
          %5814 = vmatpush2.bf16.msra.mxu0 0
          %5815 = vmatprep.subr.bf16.mxu0 0
          %5816 = vmatpush2.bf16.msra.mxu0 0
          %5817 = vmatprep.subr.bf16.mxu0 0
          %5818 = vmatpush2.bf16.msra.mxu0 0
          %5819 = vmatprep.subr.bf16.mxu0 0
          %5820 = vmatpush2.bf16.msra.mxu0 0
          %5821 = vmatprep.subr.bf16.mxu0 0
          %5822 = vmatpush2.bf16.msra.mxu0 0
          %5823 = vmatprep.subr.bf16.mxu0 0
          %5824 = vmatpush2.bf16.msra.mxu0 0
          %5825 = vmatprep.subr.bf16.mxu0 0
          %5826 = vmatpush2.bf16.msra.mxu0 0
          %5827 = vmatprep.subr.bf16.mxu0 0
          %5828 = vmatpush2.bf16.msra.mxu0 0
          %5829 = vmatprep.mubr.bf16.mxu0 0
          %5830 = vmatmul.mubr.bf16.gmra.mxu0 %v5774
          %v5831 = vpop.f32.mrf.mxu0
          %v5832 = vadd.f32 %v5687, %v5831
          %v5833 = vpop.f32.mrf.mxu0
          %v5834 = vpop.f32.mrf.mxu0
          %v5835 = vadd.f32 %v5690, %v5834
          %v5836 = vpop.f32.mrf.mxu0
          %5837 = vmatprep.mubr.bf16.mxu0 0
          %5838 = vmatmul.mubr.bf16.gmra.mxu0 %v5777
          %v5839 = vpop.f32.mrf.mxu0
          %v5840 = vadd.f32 %v5695, %v5839
          %v5841 = vpop.f32.mrf.mxu0
          %v5842 = vpop.f32.mrf.mxu0
          %v5843 = vadd.f32 %v5698, %v5842
          %v5844 = vpop.f32.mrf.mxu0
          %5845 = vmatprep.mubr.bf16.mxu0 0
          %5846 = vmatmul.mubr.bf16.gmra.mxu0 %v5780
          %v5847 = vpop.f32.mrf.mxu0
          %v5848 = vadd.f32 %v5703, %v5847
          %v5849 = vpop.f32.mrf.mxu0
          %v5850 = vpop.f32.mrf.mxu0
          %v5851 = vadd.f32 %v5706, %v5850
          %v5852 = vpop.f32.mrf.mxu0
          %5853 = vmatprep.mubr.bf16.mxu0 0
          %5854 = vmatmul.mubr.bf16.gmra.mxu0 %v5783
          %v5855 = vpop.f32.mrf.mxu0
          %v5856 = vadd.f32 %v5711, %v5855
          %v5857 = vpop.f32.mrf.mxu0
          %v5858 = vpop.f32.mrf.mxu0
          %v5859 = vadd.f32 %v5714, %v5858
          %v5860 = vpop.f32.mrf.mxu0
          %5861 = vmatprep.mubr.bf16.mxu0 0
          %5862 = vmatmul.mubr.bf16.gmra.mxu0 %v5786
          %v5863 = vpop.f32.mrf.mxu0
          %v5864 = vadd.f32 %v5719, %v5863
          %v5865 = vpop.f32.mrf.mxu0
          %v5866 = vpop.f32.mrf.mxu0
          %v5867 = vadd.f32 %v5722, %v5866
          %v5868 = vpop.f32.mrf.mxu0
          %5869 = vmatprep.mubr.bf16.mxu0 0
          %5870 = vmatmul.mubr.bf16.gmra.mxu0 %v5789
          %v5871 = vpop.f32.mrf.mxu0
          %v5872 = vadd.f32 %v5727, %v5871
          %v5873 = vpop.f32.mrf.mxu0
          %v5874 = vpop.f32.mrf.mxu0
          %v5875 = vadd.f32 %v5730, %v5874
          %v5876 = vpop.f32.mrf.mxu0
          %5877 = vmatprep.mubr.bf16.mxu0 0
          %5878 = vmatmul.mubr.bf16.gmra.mxu0 %v5792
          %v5879 = vpop.f32.mrf.mxu0
          %v5880 = vadd.f32 %v5735, %v5879
          %v5881 = vpop.f32.mrf.mxu0
          %v5882 = vpop.f32.mrf.mxu0
          %v5883 = vadd.f32 %v5738, %v5882
          %v5884 = vpop.f32.mrf.mxu0
          %5885 = vmatprep.mubr.bf16.mxu0 0
          %5886 = vmatmul.mubr.bf16.gmra.mxu0 %v5795
          %v5887 = vpop.f32.mrf.mxu0
          %v5888 = vadd.f32 %v5743, %v5887
          %v5889 = vpop.f32.mrf.mxu0
          %v5890 = vpop.f32.mrf.mxu0
          %v5891 = vadd.f32 %v5746, %v5890
          %v5892 = vpop.f32.mrf.mxu0
          %5893 = vdwg.mxu0
          %v5894 = vrot.slane %v5551, 1
          %v5895 = vor.u32 %v5548, %v5894
          %v5896 = vrot.slane %v5558, 1
          %v5897 = vsel %vm3491, %v5895, %v5896
          %v5898 = vor.u32 %v5555, %v5896
          %v5899 = vrot.slane %v5566, 1
          %v5900 = vsel %vm3491, %v5898, %v5899
          %v5901 = vor.u32 %v5563, %v5899
          %v5902 = vrot.slane %v5574, 1
          %v5903 = vsel %vm3491, %v5901, %v5902
          %v5904 = vor.u32 %v5571, %v5902
          %v5905 = vrot.slane %v5582, 1
          %v5906 = vsel %vm3491, %v5904, %v5905
          %v5907 = vor.u32 %v5579, %v5905
          %v5908 = vrot.slane %v5590, 1
          %v5909 = vsel %vm3491, %v5907, %v5908
          %v5910 = vor.u32 %v5587, %v5908
          %v5911 = vrot.slane %v5598, 1
          %v5912 = vsel %vm3491, %v5910, %v5911
          %v5913 = vor.u32 %v5595, %v5911
          %v5914 = vrot.slane %v5606, 1
          %v5915 = vsel %vm3491, %v5913, %v5914
          %v5916 = vor.u32 %v5603, %v5914
          %v5918 = vsel %vm3517, %v5916, 0
          %v5927 = vunpack.c.l.b16 %v5531
          %v5928 = vunpack.c.l.b16 %v5532
          %v5929 = vunpack.c.l.b16 %v5533
          %v5930 = vunpack.c.l.b16 %v5534
          %v5931 = vunpack.c.l.b16 %v5535
          %v5932 = vunpack.c.l.b16 %v5536
          %v5933 = vunpack.c.l.b16 %v5537
          %v5934 = vunpack.c.l.b16 %v5538
          %v5935 = vpack.c.b16 %v5928, %v5927
          %v5936 = vpack.c.b16 %v5930, %v5929
          %v5937 = vpack.c.b16 %v5932, %v5931
          %v5938 = vpack.c.b16 %v5934, %v5933
          %v5944 = vsel %vm3846, %v5897, 0
          %v5947 = vsel %vm3846, %v5900, 0
          %v5950 = vsel %vm3846, %v5903, 0
          %v5953 = vsel %vm3846, %v5906, 0
          %v5956 = vsel %vm3846, %v5909, 0
          %v5959 = vsel %vm3846, %v5912, 0
          %v5962 = vsel %vm3846, %v5915, 0
          %v5965 = vsel %vm3846, %v5918, 0
          %5967 = vmatprep.subr.bf16.mxu0 0
          %5968 = vmatpush1.bf16.msra.mxu0 0
          %5969 = vmatprep.subr.bf16.mxu0 0
          %5970 = vmatpush1.bf16.msra.mxu0 0
          %5971 = vmatprep.subr.bf16.mxu0 0
          %5972 = vmatpush1.bf16.msra.mxu0 0
          %5973 = vmatprep.subr.bf16.mxu0 0
          %5974 = vmatpush1.bf16.msra.mxu0 0
          %5975 = vmatprep.subr.bf16.mxu0 0
          %5976 = vmatpush1.bf16.msra.mxu0 %v5938
          %5977 = vmatprep.subr.bf16.mxu0 0
          %5978 = vmatpush1.bf16.msra.mxu0 %v5937
          %5979 = vmatprep.subr.bf16.mxu0 0
          %5980 = vmatpush1.bf16.msra.mxu0 %v5936
          %5981 = vmatprep.subr.bf16.mxu0 0
          %5982 = vmatpush1.bf16.msra.mxu0 %v5935
          %5983 = vmatprep.subr.bf16.mxu0 0
          %5984 = vmatpush2.bf16.msra.mxu0 0
          %5985 = vmatprep.subr.bf16.mxu0 0
          %5986 = vmatpush2.bf16.msra.mxu0 0
          %5987 = vmatprep.subr.bf16.mxu0 0
          %5988 = vmatpush2.bf16.msra.mxu0 0
          %5989 = vmatprep.subr.bf16.mxu0 0
          %5990 = vmatpush2.bf16.msra.mxu0 0
          %5991 = vmatprep.subr.bf16.mxu0 0
          %5992 = vmatpush2.bf16.msra.mxu0 0
          %5993 = vmatprep.subr.bf16.mxu0 0
          %5994 = vmatpush2.bf16.msra.mxu0 0
          %5995 = vmatprep.subr.bf16.mxu0 0
          %5996 = vmatpush2.bf16.msra.mxu0 0
          %5997 = vmatprep.subr.bf16.mxu0 0
          %5998 = vmatpush2.bf16.msra.mxu0 0
          %5999 = vmatprep.mubr.bf16.mxu0 0
          %6000 = vmatmul.mubr.bf16.gmra.mxu0 %v5944
          %v6001 = vpop.f32.mrf.mxu0
          %v6002 = vadd.f32 0.0, %v6001
          %v6003 = vpop.f32.mrf.mxu0
          %v6004 = vpop.f32.mrf.mxu0
          %v6005 = vadd.f32 0.0, %v6004
          %v6006 = vpop.f32.mrf.mxu0
          %6007 = vmatprep.mubr.bf16.mxu0 0
          %6008 = vmatmul.mubr.bf16.gmra.mxu0 %v5947
          %v6009 = vpop.f32.mrf.mxu0
          %v6010 = vadd.f32 0.0, %v6009
          %v6011 = vpop.f32.mrf.mxu0
          %v6012 = vpop.f32.mrf.mxu0
          %v6013 = vadd.f32 0.0, %v6012
          %v6014 = vpop.f32.mrf.mxu0
          %6015 = vmatprep.mubr.bf16.mxu0 0
          %6016 = vmatmul.mubr.bf16.gmra.mxu0 %v5950
          %v6017 = vpop.f32.mrf.mxu0
          %v6018 = vadd.f32 0.0, %v6017
          %v6019 = vpop.f32.mrf.mxu0
          %v6020 = vpop.f32.mrf.mxu0
          %v6021 = vadd.f32 0.0, %v6020
          %v6022 = vpop.f32.mrf.mxu0
          %6023 = vmatprep.mubr.bf16.mxu0 0
          %6024 = vmatmul.mubr.bf16.gmra.mxu0 %v5953
          %v6025 = vpop.f32.mrf.mxu0
          %v6026 = vadd.f32 0.0, %v6025
          %v6027 = vpop.f32.mrf.mxu0
          %v6028 = vpop.f32.mrf.mxu0
          %v6029 = vadd.f32 0.0, %v6028
          %v6030 = vpop.f32.mrf.mxu0
          %6031 = vmatprep.mubr.bf16.mxu0 0
          %6032 = vmatmul.mubr.bf16.gmra.mxu0 %v5956
          %v6033 = vpop.f32.mrf.mxu0
          %v6034 = vadd.f32 0.0, %v6033
          %v6035 = vpop.f32.mrf.mxu0
          %v6036 = vpop.f32.mrf.mxu0
          %v6037 = vadd.f32 0.0, %v6036
          %v6038 = vpop.f32.mrf.mxu0
          %6039 = vmatprep.mubr.bf16.mxu0 0
          %6040 = vmatmul.mubr.bf16.gmra.mxu0 %v5959
          %v6041 = vpop.f32.mrf.mxu0
          %v6042 = vadd.f32 0.0, %v6041
          %v6043 = vpop.f32.mrf.mxu0
          %v6044 = vpop.f32.mrf.mxu0
          %v6045 = vadd.f32 0.0, %v6044
          %v6046 = vpop.f32.mrf.mxu0
          %6047 = vmatprep.mubr.bf16.mxu0 0
          %6048 = vmatmul.mubr.bf16.gmra.mxu0 %v5962
          %v6049 = vpop.f32.mrf.mxu0
          %v6050 = vadd.f32 0.0, %v6049
          %v6051 = vpop.f32.mrf.mxu0
          %v6052 = vpop.f32.mrf.mxu0
          %v6053 = vadd.f32 0.0, %v6052
          %v6054 = vpop.f32.mrf.mxu0
          %6055 = vmatprep.mubr.bf16.mxu0 0
          %6056 = vmatmul.mubr.bf16.gmra.mxu0 %v5965
          %v6057 = vpop.f32.mrf.mxu0
          %v6058 = vadd.f32 0.0, %v6057
          %v6059 = vpop.f32.mrf.mxu0
          %v6060 = vpop.f32.mrf.mxu0
          %v6061 = vadd.f32 0.0, %v6060
          %v6062 = vpop.f32.mrf.mxu0
          %6063 = vdwg.mxu0
          %v6064 = vadd.f32 %v5832, %v6002
          %v6065 = vadd.f32 %v5835, %v6005
          %v6066 = vadd.f32 %v5840, %v6010
          %v6067 = vadd.f32 %v5843, %v6013
          %v6068 = vadd.f32 %v5848, %v6018
          %v6069 = vadd.f32 %v5851, %v6021
          %v6070 = vadd.f32 %v5856, %v6026
          %v6071 = vadd.f32 %v5859, %v6029
          %v6072 = vadd.f32 %v5864, %v6034
          %v6073 = vadd.f32 %v5867, %v6037
          %v6074 = vadd.f32 %v5872, %v6042
          %v6075 = vadd.f32 %v5875, %v6045
          %v6076 = vadd.f32 %v5880, %v6050
          %v6077 = vadd.f32 %v5883, %v6053
          %v6078 = vadd.f32 %v5888, %v6058
          %v6079 = vadd.f32 %v5891, %v6061
          %v6081 = vlaneseq
          %v6082 = vshrl.u32 %v6081, 7
          %v6083 = vsub.s32 0, %v6082
          %v6084 = vrot.slane %v5512, %v6083
          %v6086 = vadd.f32 %v6064, %v6084
          %v6087 = vadd.f32 %v6065, %v6084
          %v6088 = vadd.f32 %v6066, %v6084
          %v6089 = vadd.f32 %v6067, %v6084
          %v6090 = vadd.f32 %v6068, %v6084
          %v6091 = vadd.f32 %v6069, %v6084
          %v6092 = vadd.f32 %v6070, %v6084
          %v6093 = vadd.f32 %v6071, %v6084
          %v6094 = vadd.f32 %v6072, %v6084
          %v6095 = vadd.f32 %v6073, %v6084
          %v6096 = vadd.f32 %v6074, %v6084
          %v6097 = vadd.f32 %v6075, %v6084
          %v6098 = vadd.f32 %v6076, %v6084
          %v6099 = vadd.f32 %v6077, %v6084
          %v6100 = vadd.f32 %v6078, %v6084
          %v6101 = vadd.f32 %v6079, %v6084
          %v6102 = vmax.f32 %v6086, 0.0
          %v6103 = vmax.f32 %v6087, 0.0
          %v6104 = vmax.f32 %v6088, 0.0
          %v6105 = vmax.f32 %v6089, 0.0
          %v6106 = vmax.f32 %v6090, 0.0
          %v6107 = vmax.f32 %v6091, 0.0
          %v6108 = vmax.f32 %v6092, 0.0
          %v6109 = vmax.f32 %v6093, 0.0
          %v6110 = vmax.f32 %v6094, 0.0
          %v6111 = vmax.f32 %v6095, 0.0
          %v6112 = vmax.f32 %v6096, 0.0
          %v6113 = vmax.f32 %v6097, 0.0
          %v6114 = vmax.f32 %v6098, 0.0
          %v6115 = vmax.f32 %v6099, 0.0
          %v6116 = vmax.f32 %v6100, 0.0
          %v6117 = vmax.f32 %v6101, 0.0
          %v6118 = vld [vmem:[%s24] sm:$0x1]
          %v6119 = vld [vmem:[%s25] sm:$0x1]
          %v6120 = vsel %vm3846, %v6102, 0.0
          %6121 = vadd.xlane.f32.xlu0 %v6120
          %v6122 = vpop.xlane.xlu0 %6121
          %v6123 = vsel %vm3846, %v6103, 0.0
          %6124 = vadd.xlane.f32.xlu0 %v6123
          %v6125 = vpop.xlane.xlu0 %6124
          %v6126 = vsel %vm3846, %v6104, 0.0
          %6127 = vadd.xlane.f32.xlu0 %v6126
          %v6128 = vpop.xlane.xlu0 %6127
          %v6129 = vsel %vm3846, %v6105, 0.0
          %6130 = vadd.xlane.f32.xlu0 %v6129
          %v6131 = vpop.xlane.xlu0 %6130
          %v6132 = vsel %vm3846, %v6106, 0.0
          %6133 = vadd.xlane.f32.xlu0 %v6132
          %v6134 = vpop.xlane.xlu0 %6133
          %v6135 = vsel %vm3846, %v6107, 0.0
          %6136 = vadd.xlane.f32.xlu0 %v6135
          %v6137 = vpop.xlane.xlu0 %6136
          %v6138 = vsel %vm3846, %v6108, 0.0
          %6139 = vadd.xlane.f32.xlu0 %v6138
          %v6140 = vpop.xlane.xlu0 %6139
          %v6141 = vsel %vm3846, %v6109, 0.0
          %6142 = vadd.xlane.f32.xlu0 %v6141
          %v6143 = vpop.xlane.xlu0 %6142
          %v6144 = vsel %vm3846, %v6110, 0.0
          %6145 = vadd.xlane.f32.xlu0 %v6144
          %v6146 = vpop.xlane.xlu0 %6145
          %v6147 = vsel %vm3846, %v6111, 0.0
          %6148 = vadd.xlane.f32.xlu0 %v6147
          %v6149 = vpop.xlane.xlu0 %6148
          %v6150 = vsel %vm3846, %v6112, 0.0
          %6151 = vadd.xlane.f32.xlu0 %v6150
          %v6152 = vpop.xlane.xlu0 %6151
          %v6153 = vsel %vm3846, %v6113, 0.0
          %6154 = vadd.xlane.f32.xlu0 %v6153
          %v6155 = vpop.xlane.xlu0 %6154
          %v6156 = vsel %vm3846, %v6114, 0.0
          %6157 = vadd.xlane.f32.xlu0 %v6156
          %v6158 = vpop.xlane.xlu0 %6157
          %v6159 = vsel %vm3846, %v6115, 0.0
          %6160 = vadd.xlane.f32.xlu0 %v6159
          %v6161 = vpop.xlane.xlu0 %6160
          %v6162 = vsel %vm3846, %v6116, 0.0
          %6163 = vadd.xlane.f32.xlu0 %v6162
          %v6164 = vpop.xlane.xlu0 %6163
          %v6165 = vsel %vm3846, %v6117, 0.0
          %6166 = vadd.xlane.f32.xlu0 %v6165
          %v6167 = vpop.xlane.xlu0 %6166
          %v6168 = vmul.f32 %v6122, %v5291
          %v6169 = vmul.f32 %v6125, %v5291
          %v6170 = vmul.f32 %v6128, %v5291
          %v6171 = vmul.f32 %v6131, %v5291
          %v6172 = vmul.f32 %v6134, %v5291
          %v6173 = vmul.f32 %v6137, %v5291
          %v6174 = vmul.f32 %v6140, %v5291
          %v6175 = vmul.f32 %v6143, %v5291
          %v6176 = vmul.f32 %v6146, %v5291
          %v6177 = vmul.f32 %v6149, %v5291
          %v6178 = vmul.f32 %v6152, %v5291
          %v6179 = vmul.f32 %v6155, %v5291
          %v6180 = vmul.f32 %v6158, %v5291
          %v6181 = vmul.f32 %v6161, %v5291
          %v6182 = vmul.f32 %v6164, %v5291
          %v6183 = vmul.f32 %v6167, %v5291
          %v6184 = vsub.f32 %v6102, %v6168
          %v6185 = vsub.f32 %v6103, %v6169
          %v6186 = vsub.f32 %v6104, %v6170
          %v6187 = vsub.f32 %v6105, %v6171
          %v6188 = vsub.f32 %v6106, %v6172
          %v6189 = vsub.f32 %v6107, %v6173
          %v6190 = vsub.f32 %v6108, %v6174
          %v6191 = vsub.f32 %v6109, %v6175
          %v6192 = vsub.f32 %v6110, %v6176
          %v6193 = vsub.f32 %v6111, %v6177
          %v6194 = vsub.f32 %v6112, %v6178
          %v6195 = vsub.f32 %v6113, %v6179
          %v6196 = vsub.f32 %v6114, %v6180
          %v6197 = vsub.f32 %v6115, %v6181
          %v6198 = vsub.f32 %v6116, %v6182
          %v6199 = vsub.f32 %v6117, %v6183
          %v6200 = vmul.f32 %v6184, %v6184
          %v6201 = vmul.f32 %v6185, %v6185
          %v6202 = vmul.f32 %v6186, %v6186
          %v6203 = vmul.f32 %v6187, %v6187
          %v6204 = vmul.f32 %v6188, %v6188
          %v6205 = vmul.f32 %v6189, %v6189
          %v6206 = vmul.f32 %v6190, %v6190
          %v6207 = vmul.f32 %v6191, %v6191
          %v6208 = vmul.f32 %v6192, %v6192
          %v6209 = vmul.f32 %v6193, %v6193
          %v6210 = vmul.f32 %v6194, %v6194
          %v6211 = vmul.f32 %v6195, %v6195
          %v6212 = vmul.f32 %v6196, %v6196
          %v6213 = vmul.f32 %v6197, %v6197
          %v6214 = vmul.f32 %v6198, %v6198
          %v6215 = vmul.f32 %v6199, %v6199
          %v6216 = vsel %vm3846, %v6200, 0.0
          %6217 = vadd.xlane.f32.xlu0 %v6216
          %v6218 = vpop.xlane.xlu0 %6217
          %v6219 = vsel %vm3846, %v6201, 0.0
          %6220 = vadd.xlane.f32.xlu0 %v6219
          %v6221 = vpop.xlane.xlu0 %6220
          %v6222 = vsel %vm3846, %v6202, 0.0
          %6223 = vadd.xlane.f32.xlu0 %v6222
          %v6224 = vpop.xlane.xlu0 %6223
          %v6225 = vsel %vm3846, %v6203, 0.0
          %6226 = vadd.xlane.f32.xlu0 %v6225
          %v6227 = vpop.xlane.xlu0 %6226
          %v6228 = vsel %vm3846, %v6204, 0.0
          %6229 = vadd.xlane.f32.xlu0 %v6228
          %v6230 = vpop.xlane.xlu0 %6229
          %v6231 = vsel %vm3846, %v6205, 0.0
          %6232 = vadd.xlane.f32.xlu0 %v6231
          %v6233 = vpop.xlane.xlu0 %6232
          %v6234 = vsel %vm3846, %v6206, 0.0
          %6235 = vadd.xlane.f32.xlu0 %v6234
          %v6236 = vpop.xlane.xlu0 %6235
          %v6237 = vsel %vm3846, %v6207, 0.0
          %6238 = vadd.xlane.f32.xlu0 %v6237
          %v6239 = vpop.xlane.xlu0 %6238
          %v6240 = vsel %vm3846, %v6208, 0.0
          %6241 = vadd.xlane.f32.xlu0 %v6240
          %v6242 = vpop.xlane.xlu0 %6241
          %v6243 = vsel %vm3846, %v6209, 0.0
          %6244 = vadd.xlane.f32.xlu0 %v6243
          %v6245 = vpop.xlane.xlu0 %6244
          %v6246 = vsel %vm3846, %v6210, 0.0
          %6247 = vadd.xlane.f32.xlu0 %v6246
          %v6248 = vpop.xlane.xlu0 %6247
          %v6249 = vsel %vm3846, %v6211, 0.0
          %6250 = vadd.xlane.f32.xlu0 %v6249
          %v6251 = vpop.xlane.xlu0 %6250
          %v6252 = vsel %vm3846, %v6212, 0.0
          %6253 = vadd.xlane.f32.xlu0 %v6252
          %v6254 = vpop.xlane.xlu0 %6253
          %v6255 = vsel %vm3846, %v6213, 0.0
          %6256 = vadd.xlane.f32.xlu0 %v6255
          %v6257 = vpop.xlane.xlu0 %6256
          %v6258 = vsel %vm3846, %v6214, 0.0
          %6259 = vadd.xlane.f32.xlu0 %v6258
          %v6260 = vpop.xlane.xlu0 %6259
          %v6261 = vsel %vm3846, %v6215, 0.0
          %6262 = vadd.xlane.f32.xlu0 %v6261
          %v6263 = vpop.xlane.xlu0 %6262
          %v6264 = vmul.f32 %v6218, %v5291
          %v6265 = vmul.f32 %v6221, %v5291
          %v6266 = vmul.f32 %v6224, %v5291
          %v6267 = vmul.f32 %v6227, %v5291
          %v6268 = vmul.f32 %v6230, %v5291
          %v6269 = vmul.f32 %v6233, %v5291
          %v6270 = vmul.f32 %v6236, %v5291
          %v6271 = vmul.f32 %v6239, %v5291
          %v6272 = vmul.f32 %v6242, %v5291
          %v6273 = vmul.f32 %v6245, %v5291
          %v6274 = vmul.f32 %v6248, %v5291
          %v6275 = vmul.f32 %v6251, %v5291
          %v6276 = vmul.f32 %v6254, %v5291
          %v6277 = vmul.f32 %v6257, %v5291
          %v6278 = vmul.f32 %v6260, %v5291
          %v6279 = vmul.f32 %v6263, %v5291
          %v6280 = vadd.f32 %v6264, 0.0001
          %v6281 = vadd.f32 %v6265, 0.0001
          %v6282 = vadd.f32 %v6266, 0.0001
          %v6283 = vadd.f32 %v6267, 0.0001
          %v6284 = vadd.f32 %v6268, 0.0001
          %v6285 = vadd.f32 %v6269, 0.0001
          %v6286 = vadd.f32 %v6270, 0.0001
          %v6287 = vadd.f32 %v6271, 0.0001
          %v6288 = vadd.f32 %v6272, 0.0001
          %v6289 = vadd.f32 %v6273, 0.0001
          %v6290 = vadd.f32 %v6274, 0.0001
          %v6291 = vadd.f32 %v6275, 0.0001
          %v6292 = vadd.f32 %v6276, 0.0001
          %v6293 = vadd.f32 %v6277, 0.0001
          %v6294 = vadd.f32 %v6278, 0.0001
          %v6295 = vadd.f32 %v6279, 0.0001
          %v6296 = vrsqrt.pop %v6280
          %v6297 = vrsqrt.pop %v6281
          %v6298 = vrsqrt.pop %v6282
          %v6299 = vrsqrt.pop %v6283
          %v6300 = vrsqrt.pop %v6284
          %v6301 = vrsqrt.pop %v6285
          %v6302 = vrsqrt.pop %v6286
          %v6303 = vrsqrt.pop %v6287
          %v6304 = vrsqrt.pop %v6288
          %v6305 = vrsqrt.pop %v6289
          %v6306 = vrsqrt.pop %v6290
          %v6307 = vrsqrt.pop %v6291
          %v6308 = vrsqrt.pop %v6292
          %v6309 = vrsqrt.pop %v6293
          %v6310 = vrsqrt.pop %v6294
          %v6311 = vrsqrt.pop %v6295
          %v6312 = vmul.f32 %v6184, %v6296
          %v6313 = vmul.f32 %v6185, %v6297
          %v6314 = vmul.f32 %v6186, %v6298
          %v6315 = vmul.f32 %v6187, %v6299
          %v6316 = vmul.f32 %v6188, %v6300
          %v6317 = vmul.f32 %v6189, %v6301
          %v6318 = vmul.f32 %v6190, %v6302
          %v6319 = vmul.f32 %v6191, %v6303
          %v6320 = vmul.f32 %v6192, %v6304
          %v6321 = vmul.f32 %v6193, %v6305
          %v6322 = vmul.f32 %v6194, %v6306
          %v6323 = vmul.f32 %v6195, %v6307
          %v6324 = vmul.f32 %v6196, %v6308
          %v6325 = vmul.f32 %v6197, %v6309
          %v6326 = vmul.f32 %v6198, %v6310
          %v6327 = vmul.f32 %v6199, %v6311
          %v6329 = vlaneseq
          %v6330 = vshrl.u32 %v6329, 7
          %v6331 = vsub.s32 0, %v6330
          %v6332 = vrot.slane %v6118, %v6331
          %v6334 = vmul.f32 %v6312, %v6332
          %v6335 = vmul.f32 %v6313, %v6332
          %v6336 = vmul.f32 %v6314, %v6332
          %v6337 = vmul.f32 %v6315, %v6332
          %v6338 = vmul.f32 %v6316, %v6332
          %v6339 = vmul.f32 %v6317, %v6332
          %v6340 = vmul.f32 %v6318, %v6332
          %v6341 = vmul.f32 %v6319, %v6332
          %v6342 = vmul.f32 %v6320, %v6332
          %v6343 = vmul.f32 %v6321, %v6332
          %v6344 = vmul.f32 %v6322, %v6332
          %v6345 = vmul.f32 %v6323, %v6332
          %v6346 = vmul.f32 %v6324, %v6332
          %v6347 = vmul.f32 %v6325, %v6332
          %v6348 = vmul.f32 %v6326, %v6332
          %v6349 = vmul.f32 %v6327, %v6332
          %v6351 = vlaneseq
          %v6352 = vshrl.u32 %v6351, 7
          %v6353 = vsub.s32 0, %v6352
          %v6354 = vrot.slane %v6119, %v6353
          %v6356 = vadd.f32 %v6334, %v6354
          %v6357 = vadd.f32 %v6335, %v6354
          %v6358 = vadd.f32 %v6336, %v6354
          %v6359 = vadd.f32 %v6337, %v6354
          %v6360 = vadd.f32 %v6338, %v6354
          %v6361 = vadd.f32 %v6339, %v6354
          %v6362 = vadd.f32 %v6340, %v6354
          %v6363 = vadd.f32 %v6341, %v6354
          %v6364 = vadd.f32 %v6342, %v6354
          %v6365 = vadd.f32 %v6343, %v6354
          %v6366 = vadd.f32 %v6344, %v6354
          %v6367 = vadd.f32 %v6345, %v6354
          %v6368 = vadd.f32 %v6346, %v6354
          %v6369 = vadd.f32 %v6347, %v6354
          %v6370 = vadd.f32 %v6348, %v6354
          %v6371 = vadd.f32 %v6349, %v6354
          %v6372 = vld [vmem:[%s16] sm:$0xff]
          %v6373 = vld [vmem:[%s16 + $0x8] sm:$0xff]
          %v6374 = vld [vmem:[%s16 + $0x10] sm:$0xff]
          %v6375 = vld [vmem:[%s16 + $0x18] sm:$0xff]
          %v6376 = vld [vmem:[%s17] sm:$0x1]
          %v6378 = vlaneseq
          %v6379 = vshrl.u32 %v6378, 7
          %v6380 = vsub.s32 0, %v6379
          %v6381 = vrot.slane %v6376, %v6380
          %v6384 = vsel %vm1471, %v4619, 0
          %v6387 = vsel %vm1471, %v4620, 0
          %v6390 = vsel %vm1471, %v4621, 0
          %v6393 = vsel %vm1471, %v4622, 0
          %v6396 = vsel %vm1471, %v4623, 0
          %v6399 = vsel %vm1471, %v4624, 0
          %v6402 = vsel %vm1471, %v4625, 0
          %v6405 = vsel %vm1471, %v4626, 0
          %v6408 = vsel %vm1471, %v4627, 0
          %v6411 = vsel %vm1471, %v4628, 0
          %v6414 = vsel %vm1471, %v4629, 0
          %v6417 = vsel %vm1471, %v4630, 0
          %v6420 = vsel %vm1471, %v4631, 0
          %v6423 = vsel %vm1471, %v4632, 0
          %v6426 = vsel %vm1471, %v4633, 0
          %v6429 = vsel %vm1471, %v4634, 0
          %6431 = vmatprep.subr.mxu0 0.0
          %6432 = vmatpush1.msra.mxu0 0.0
          %6433 = vmatprep.subr.mxu0 0.0
          %6434 = vmatpush1.msra.mxu0 0.0
          %6435 = vmatprep.subr.mxu0 0.0
          %6436 = vmatpush1.msra.mxu0 0.0
          %6437 = vmatprep.subr.mxu0 0.0
          %6438 = vmatpush1.msra.mxu0 0.0
          %6439 = vmatprep.subr.mxu0 0.0
          %6440 = vmatpush1.msra.mxu0 0.0
          %6441 = vmatprep.subr.mxu0 0.0
          %6442 = vmatpush1.msra.mxu0 0.0
          %6443 = vmatprep.subr.mxu0 0.0
          %6444 = vmatpush1.msra.mxu0 0.0
          %6445 = vmatprep.subr.mxu0 0.0
          %6446 = vmatpush1.msra.mxu0 0.0
          %6447 = vmatprep.subr.mxu0 0.0
          %6448 = vmatpush1.msra.mxu0 0.0
          %6449 = vmatprep.subr.mxu0 0.0
          %6450 = vmatpush1.msra.mxu0 0.0
          %6451 = vmatprep.subr.mxu0 0.0
          %6452 = vmatpush1.msra.mxu0 0.0
          %6453 = vmatprep.subr.mxu0 0.0
          %6454 = vmatpush1.msra.mxu0 0.0
          %6455 = vmatprep.subr.mxu0 0.0
          %6456 = vmatpush1.msra.mxu0 %v6375
          %6457 = vmatprep.subr.mxu0 0.0
          %6458 = vmatpush1.msra.mxu0 %v6374
          %6459 = vmatprep.subr.mxu0 0.0
          %6460 = vmatpush1.msra.mxu0 %v6373
          %6461 = vmatprep.subr.mxu0 0.0
          %6462 = vmatpush1.msra.mxu0 %v6372
          %6463 = vmatprep.subr.mxu0 0.0
          %6464 = vmatpush2.msra.mxu0 0.0
          %6465 = vmatprep.subr.mxu0 0.0
          %6466 = vmatpush2.msra.mxu0 0.0
          %6467 = vmatprep.subr.mxu0 0.0
          %6468 = vmatpush2.msra.mxu0 0.0
          %6469 = vmatprep.subr.mxu0 0.0
          %6470 = vmatpush2.msra.mxu0 0.0
          %6471 = vmatprep.subr.mxu0 0.0
          %6472 = vmatpush2.msra.mxu0 0.0
          %6473 = vmatprep.subr.mxu0 0.0
          %6474 = vmatpush2.msra.mxu0 0.0
          %6475 = vmatprep.subr.mxu0 0.0
          %6476 = vmatpush2.msra.mxu0 0.0
          %6477 = vmatprep.subr.mxu0 0.0
          %6478 = vmatpush2.msra.mxu0 0.0
          %6479 = vmatprep.subr.mxu0 0.0
          %6480 = vmatpush2.msra.mxu0 0.0
          %6481 = vmatprep.subr.mxu0 0.0
          %6482 = vmatpush2.msra.mxu0 0.0
          %6483 = vmatprep.subr.mxu0 0.0
          %6484 = vmatpush2.msra.mxu0 0.0
          %6485 = vmatprep.subr.mxu0 0.0
          %6486 = vmatpush2.msra.mxu0 0.0
          %6487 = vmatprep.subr.mxu0 0.0
          %6488 = vmatpush2.msra.mxu0 0.0
          %6489 = vmatprep.subr.mxu0 0.0
          %6490 = vmatpush2.msra.mxu0 0.0
          %6491 = vmatprep.subr.mxu0 0.0
          %6492 = vmatpush2.msra.mxu0 0.0
          %6493 = vmatprep.subr.mxu0 0.0
          %6494 = vmatpush2.msra.mxu0 0.0
          %6495 = vmatprep.mubr.f32.mxu0 0.0
          %6496 = vmatmul.mubr.f32.gmra.mxu0 %v6384
          %v6497 = vpop.f32.mrf.mxu0
          %v6498 = vadd.f32 %v6381, %v6497
          %v6499 = vpop.f32.mrf.mxu0
          %6500 = vmatprep.mubr.f32.mxu0 0.0
          %6501 = vmatmul.mubr.f32.gmra.mxu0 %v6387
          %v6502 = vpop.f32.mrf.mxu0
          %v6503 = vadd.f32 %v6381, %v6502
          %v6504 = vpop.f32.mrf.mxu0
          %6505 = vmatprep.mubr.f32.mxu0 0.0
          %6506 = vmatmul.mubr.f32.gmra.mxu0 %v6390
          %v6507 = vpop.f32.mrf.mxu0
          %v6508 = vadd.f32 %v6381, %v6507
          %v6509 = vpop.f32.mrf.mxu0
          %6510 = vmatprep.mubr.f32.mxu0 0.0
          %6511 = vmatmul.mubr.f32.gmra.mxu0 %v6393
          %v6512 = vpop.f32.mrf.mxu0
          %v6513 = vadd.f32 %v6381, %v6512
          %v6514 = vpop.f32.mrf.mxu0
          %6515 = vmatprep.mubr.f32.mxu0 0.0
          %6516 = vmatmul.mubr.f32.gmra.mxu0 %v6396
          %v6517 = vpop.f32.mrf.mxu0
          %v6518 = vadd.f32 %v6381, %v6517
          %v6519 = vpop.f32.mrf.mxu0
          %6520 = vmatprep.mubr.f32.mxu0 0.0
          %6521 = vmatmul.mubr.f32.gmra.mxu0 %v6399
          %v6522 = vpop.f32.mrf.mxu0
          %v6523 = vadd.f32 %v6381, %v6522
          %v6524 = vpop.f32.mrf.mxu0
          %6525 = vmatprep.mubr.f32.mxu0 0.0
          %6526 = vmatmul.mubr.f32.gmra.mxu0 %v6402
          %v6527 = vpop.f32.mrf.mxu0
          %v6528 = vadd.f32 %v6381, %v6527
          %v6529 = vpop.f32.mrf.mxu0
          %6530 = vmatprep.mubr.f32.mxu0 0.0
          %6531 = vmatmul.mubr.f32.gmra.mxu0 %v6405
          %v6532 = vpop.f32.mrf.mxu0
          %v6533 = vadd.f32 %v6381, %v6532
          %v6534 = vpop.f32.mrf.mxu0
          %6535 = vmatprep.mubr.f32.mxu0 0.0
          %6536 = vmatmul.mubr.f32.gmra.mxu0 %v6408
          %v6537 = vpop.f32.mrf.mxu0
          %v6538 = vadd.f32 %v6381, %v6537
          %v6539 = vpop.f32.mrf.mxu0
          %6540 = vmatprep.mubr.f32.mxu0 0.0
          %6541 = vmatmul.mubr.f32.gmra.mxu0 %v6411
          %v6542 = vpop.f32.mrf.mxu0
          %v6543 = vadd.f32 %v6381, %v6542
          %v6544 = vpop.f32.mrf.mxu0
          %6545 = vmatprep.mubr.f32.mxu0 0.0
          %6546 = vmatmul.mubr.f32.gmra.mxu0 %v6414
          %v6547 = vpop.f32.mrf.mxu0
          %v6548 = vadd.f32 %v6381, %v6547
          %v6549 = vpop.f32.mrf.mxu0
          %6550 = vmatprep.mubr.f32.mxu0 0.0
          %6551 = vmatmul.mubr.f32.gmra.mxu0 %v6417
          %v6552 = vpop.f32.mrf.mxu0
          %v6553 = vadd.f32 %v6381, %v6552
          %v6554 = vpop.f32.mrf.mxu0
          %6555 = vmatprep.mubr.f32.mxu0 0.0
          %6556 = vmatmul.mubr.f32.gmra.mxu0 %v6420
          %v6557 = vpop.f32.mrf.mxu0
          %v6558 = vadd.f32 %v6381, %v6557
          %v6559 = vpop.f32.mrf.mxu0
          %6560 = vmatprep.mubr.f32.mxu0 0.0
          %6561 = vmatmul.mubr.f32.gmra.mxu0 %v6423
          %v6562 = vpop.f32.mrf.mxu0
          %v6563 = vadd.f32 %v6381, %v6562
          %v6564 = vpop.f32.mrf.mxu0
          %6565 = vmatprep.mubr.f32.mxu0 0.0
          %6566 = vmatmul.mubr.f32.gmra.mxu0 %v6426
          %v6567 = vpop.f32.mrf.mxu0
          %v6568 = vadd.f32 %v6381, %v6567
          %v6569 = vpop.f32.mrf.mxu0
          %6570 = vmatprep.mubr.f32.mxu0 0.0
          %6571 = vmatmul.mubr.f32.gmra.mxu0 %v6429
          %v6572 = vpop.f32.mrf.mxu0
          %v6573 = vadd.f32 %v6381, %v6572
          %v6574 = vpop.f32.mrf.mxu0
          %6575 = vdwg.mxu0
          %v6576 = vld [vmem:[%s26] sm:$0xff]
          %v6577 = vld [vmem:[%s26 + $0x8] sm:$0xff]
          %v6578 = vld [vmem:[%s26 + $0x10] sm:$0xff]
          %v6579 = vld [vmem:[%s26 + $0x18] sm:$0xff]
          %v6580 = vld [vmem:[%s26 + $0x20] sm:$0xff]
          %v6581 = vld [vmem:[%s26 + $0x28] sm:$0xff]
          %v6582 = vld [vmem:[%s26 + $0x30] sm:$0xff]
          %v6583 = vld [vmem:[%s26 + $0x38] sm:$0xff]
          %v6584 = vld [vmem:[%s27] sm:$0x1]
          %v6586 = vlaneseq
          %v6587 = vshrl.u32 %v6586, 7
          %v6588 = vsub.s32 0, %v6587
          %v6589 = vrot.slane %v6584, %v6588
          %v6592 = vsel %vm3846, %v6356, 0
          %v6595 = vsel %vm3846, %v6357, 0
          %v6598 = vsel %vm3846, %v6358, 0
          %v6601 = vsel %vm3846, %v6359, 0
          %v6604 = vsel %vm3846, %v6360, 0
          %v6607 = vsel %vm3846, %v6361, 0
          %v6610 = vsel %vm3846, %v6362, 0
          %v6613 = vsel %vm3846, %v6363, 0
          %v6616 = vsel %vm3846, %v6364, 0
          %v6619 = vsel %vm3846, %v6365, 0
          %v6622 = vsel %vm3846, %v6366, 0
          %v6625 = vsel %vm3846, %v6367, 0
          %v6628 = vsel %vm3846, %v6368, 0
          %v6631 = vsel %vm3846, %v6369, 0
          %v6634 = vsel %vm3846, %v6370, 0
          %v6637 = vsel %vm3846, %v6371, 0
          %6639 = vmatprep.subr.mxu0 0.0
          %6640 = vmatpush1.msra.mxu0 0.0
          %6641 = vmatprep.subr.mxu0 0.0
          %6642 = vmatpush1.msra.mxu0 0.0
          %6643 = vmatprep.subr.mxu0 0.0
          %6644 = vmatpush1.msra.mxu0 0.0
          %6645 = vmatprep.subr.mxu0 0.0
          %6646 = vmatpush1.msra.mxu0 0.0
          %6647 = vmatprep.subr.mxu0 0.0
          %6648 = vmatpush1.msra.mxu0 0.0
          %6649 = vmatprep.subr.mxu0 0.0
          %6650 = vmatpush1.msra.mxu0 0.0
          %6651 = vmatprep.subr.mxu0 0.0
          %6652 = vmatpush1.msra.mxu0 0.0
          %6653 = vmatprep.subr.mxu0 0.0
          %6654 = vmatpush1.msra.mxu0 0.0
          %6655 = vmatprep.subr.mxu0 0.0
          %6656 = vmatpush1.msra.mxu0 %v6583
          %6657 = vmatprep.subr.mxu0 0.0
          %6658 = vmatpush1.msra.mxu0 %v6582
          %6659 = vmatprep.subr.mxu0 0.0
          %6660 = vmatpush1.msra.mxu0 %v6581
          %6661 = vmatprep.subr.mxu0 0.0
          %6662 = vmatpush1.msra.mxu0 %v6580
          %6663 = vmatprep.subr.mxu0 0.0
          %6664 = vmatpush1.msra.mxu0 %v6579
          %6665 = vmatprep.subr.mxu0 0.0
          %6666 = vmatpush1.msra.mxu0 %v6578
          %6667 = vmatprep.subr.mxu0 0.0
          %6668 = vmatpush1.msra.mxu0 %v6577
          %6669 = vmatprep.subr.mxu0 0.0
          %6670 = vmatpush1.msra.mxu0 %v6576
          %6671 = vmatprep.subr.mxu0 0.0
          %6672 = vmatpush2.msra.mxu0 0.0
          %6673 = vmatprep.subr.mxu0 0.0
          %6674 = vmatpush2.msra.mxu0 0.0
          %6675 = vmatprep.subr.mxu0 0.0
          %6676 = vmatpush2.msra.mxu0 0.0
          %6677 = vmatprep.subr.mxu0 0.0
          %6678 = vmatpush2.msra.mxu0 0.0
          %6679 = vmatprep.subr.mxu0 0.0
          %6680 = vmatpush2.msra.mxu0 0.0
          %6681 = vmatprep.subr.mxu0 0.0
          %6682 = vmatpush2.msra.mxu0 0.0
          %6683 = vmatprep.subr.mxu0 0.0
          %6684 = vmatpush2.msra.mxu0 0.0
          %6685 = vmatprep.subr.mxu0 0.0
          %6686 = vmatpush2.msra.mxu0 0.0
          %6687 = vmatprep.subr.mxu0 0.0
          %6688 = vmatpush2.msra.mxu0 0.0
          %6689 = vmatprep.subr.mxu0 0.0
          %6690 = vmatpush2.msra.mxu0 0.0
          %6691 = vmatprep.subr.mxu0 0.0
          %6692 = vmatpush2.msra.mxu0 0.0
          %6693 = vmatprep.subr.mxu0 0.0
          %6694 = vmatpush2.msra.mxu0 0.0
          %6695 = vmatprep.subr.mxu0 0.0
          %6696 = vmatpush2.msra.mxu0 0.0
          %6697 = vmatprep.subr.mxu0 0.0
          %6698 = vmatpush2.msra.mxu0 0.0
          %6699 = vmatprep.subr.mxu0 0.0
          %6700 = vmatpush2.msra.mxu0 0.0
          %6701 = vmatprep.subr.mxu0 0.0
          %6702 = vmatpush2.msra.mxu0 0.0
          %6703 = vmatprep.mubr.f32.mxu0 0.0
          %6704 = vmatmul.mubr.f32.gmra.mxu0 %v6592
          %v6705 = vpop.f32.mrf.mxu0
          %v6706 = vadd.f32 %v6589, %v6705
          %v6707 = vpop.f32.mrf.mxu0
          %6708 = vmatprep.mubr.f32.mxu0 0.0
          %6709 = vmatmul.mubr.f32.gmra.mxu0 %v6595
          %v6710 = vpop.f32.mrf.mxu0
          %v6711 = vadd.f32 %v6589, %v6710
          %v6712 = vpop.f32.mrf.mxu0
          %6713 = vmatprep.mubr.f32.mxu0 0.0
          %6714 = vmatmul.mubr.f32.gmra.mxu0 %v6598
          %v6715 = vpop.f32.mrf.mxu0
          %v6716 = vadd.f32 %v6589, %v6715
          %v6717 = vpop.f32.mrf.mxu0
          %6718 = vmatprep.mubr.f32.mxu0 0.0
          %6719 = vmatmul.mubr.f32.gmra.mxu0 %v6601
          %v6720 = vpop.f32.mrf.mxu0
          %v6721 = vadd.f32 %v6589, %v6720
          %v6722 = vpop.f32.mrf.mxu0
          %6723 = vmatprep.mubr.f32.mxu0 0.0
          %6724 = vmatmul.mubr.f32.gmra.mxu0 %v6604
          %v6725 = vpop.f32.mrf.mxu0
          %v6726 = vadd.f32 %v6589, %v6725
          %v6727 = vpop.f32.mrf.mxu0
          %6728 = vmatprep.mubr.f32.mxu0 0.0
          %6729 = vmatmul.mubr.f32.gmra.mxu0 %v6607
          %v6730 = vpop.f32.mrf.mxu0
          %v6731 = vadd.f32 %v6589, %v6730
          %v6732 = vpop.f32.mrf.mxu0
          %6733 = vmatprep.mubr.f32.mxu0 0.0
          %6734 = vmatmul.mubr.f32.gmra.mxu0 %v6610
          %v6735 = vpop.f32.mrf.mxu0
          %v6736 = vadd.f32 %v6589, %v6735
          %v6737 = vpop.f32.mrf.mxu0
          %6738 = vmatprep.mubr.f32.mxu0 0.0
          %6739 = vmatmul.mubr.f32.gmra.mxu0 %v6613
          %v6740 = vpop.f32.mrf.mxu0
          %v6741 = vadd.f32 %v6589, %v6740
          %v6742 = vpop.f32.mrf.mxu0
          %6743 = vmatprep.mubr.f32.mxu0 0.0
          %6744 = vmatmul.mubr.f32.gmra.mxu0 %v6616
          %v6745 = vpop.f32.mrf.mxu0
          %v6746 = vadd.f32 %v6589, %v6745
          %v6747 = vpop.f32.mrf.mxu0
          %6748 = vmatprep.mubr.f32.mxu0 0.0
          %6749 = vmatmul.mubr.f32.gmra.mxu0 %v6619
          %v6750 = vpop.f32.mrf.mxu0
          %v6751 = vadd.f32 %v6589, %v6750
          %v6752 = vpop.f32.mrf.mxu0
          %6753 = vmatprep.mubr.f32.mxu0 0.0
          %6754 = vmatmul.mubr.f32.gmra.mxu0 %v6622
          %v6755 = vpop.f32.mrf.mxu0
          %v6756 = vadd.f32 %v6589, %v6755
          %v6757 = vpop.f32.mrf.mxu0
          %6758 = vmatprep.mubr.f32.mxu0 0.0
          %6759 = vmatmul.mubr.f32.gmra.mxu0 %v6625
          %v6760 = vpop.f32.mrf.mxu0
          %v6761 = vadd.f32 %v6589, %v6760
          %v6762 = vpop.f32.mrf.mxu0
          %6763 = vmatprep.mubr.f32.mxu0 0.0
          %6764 = vmatmul.mubr.f32.gmra.mxu0 %v6628
          %v6765 = vpop.f32.mrf.mxu0
          %v6766 = vadd.f32 %v6589, %v6765
          %v6767 = vpop.f32.mrf.mxu0
          %6768 = vmatprep.mubr.f32.mxu0 0.0
          %6769 = vmatmul.mubr.f32.gmra.mxu0 %v6631
          %v6770 = vpop.f32.mrf.mxu0
          %v6771 = vadd.f32 %v6589, %v6770
          %v6772 = vpop.f32.mrf.mxu0
          %6773 = vmatprep.mubr.f32.mxu0 0.0
          %6774 = vmatmul.mubr.f32.gmra.mxu0 %v6634
          %v6775 = vpop.f32.mrf.mxu0
          %v6776 = vadd.f32 %v6589, %v6775
          %v6777 = vpop.f32.mrf.mxu0
          %6778 = vmatprep.mubr.f32.mxu0 0.0
          %6779 = vmatmul.mubr.f32.gmra.mxu0 %v6637
          %v6780 = vpop.f32.mrf.mxu0
          %v6781 = vadd.f32 %v6589, %v6780
          %v6782 = vpop.f32.mrf.mxu0
          %6783 = vdwg.mxu0
          %v6784 = vmul.f32 %v6706, %v1085
          %v6785 = vmul.f32 %v6711, %v1086
          %v6786 = vmul.f32 %v6716, %v1087
          %v6787 = vmul.f32 %v6721, %v1088
          %v6788 = vmul.f32 %v6726, %v1089
          %v6789 = vmul.f32 %v6731, %v1090
          %v6790 = vmul.f32 %v6736, %v1091
          %v6791 = vmul.f32 %v6741, %v1092
          %v6792 = vmul.f32 %v6746, %v1093
          %v6793 = vmul.f32 %v6751, %v1094
          %v6794 = vmul.f32 %v6756, %v1095
          %v6795 = vmul.f32 %v6761, %v1096
          %v6796 = vmul.f32 %v6766, %v1097
          %v6797 = vmul.f32 %v6771, %v1098
          %v6798 = vmul.f32 %v6776, %v1099
          %v6799 = vmul.f32 %v6781, %v1100
          %v6800 = vadd.f32 %v6498, %v6784
          %v6801 = vadd.f32 %v6503, %v6785
          %v6802 = vadd.f32 %v6508, %v6786
          %v6803 = vadd.f32 %v6513, %v6787
          %v6804 = vadd.f32 %v6518, %v6788
          %v6805 = vadd.f32 %v6523, %v6789
          %v6806 = vadd.f32 %v6528, %v6790
          %v6807 = vadd.f32 %v6533, %v6791
          %v6808 = vadd.f32 %v6538, %v6792
          %v6809 = vadd.f32 %v6543, %v6793
          %v6810 = vadd.f32 %v6548, %v6794
          %v6811 = vadd.f32 %v6553, %v6795
          %v6812 = vadd.f32 %v6558, %v6796
          %v6813 = vadd.f32 %v6563, %v6797
          %v6814 = vadd.f32 %v6568, %v6798
          %v6815 = vadd.f32 %v6573, %v6799
          %6816 = vst [vmem:[%s980] sm:$0xff] %v6800
          %6817 = vst [vmem:[%s980 + $0x8] sm:$0xff] %v6801
          %6818 = vst [vmem:[%s980 + $0x10] sm:$0xff] %v6802
          %6819 = vst [vmem:[%s980 + $0x18] sm:$0xff] %v6803
          %6820 = vst [vmem:[%s980 + $0x20] sm:$0xff] %v6804
          %6821 = vst [vmem:[%s980 + $0x28] sm:$0xff] %v6805
          %6822 = vst [vmem:[%s980 + $0x30] sm:$0xff] %v6806
          %6823 = vst [vmem:[%s980 + $0x38] sm:$0xff] %v6807
          %6824 = vst [vmem:[%s980 + $0x40] sm:$0xff] %v6808
          %6825 = vst [vmem:[%s980 + $0x48] sm:$0xff] %v6809
          %6826 = vst [vmem:[%s980 + $0x50] sm:$0xff] %v6810
          %6827 = vst [vmem:[%s980 + $0x58] sm:$0xff] %v6811
          %6828 = vst [vmem:[%s980 + $0x60] sm:$0xff] %v6812
          %6829 = vst [vmem:[%s980 + $0x68] sm:$0xff] %v6813
          %6830 = vst [vmem:[%s980 + $0x70] sm:$0xff] %v6814
          %6831 = vst [vmem:[%s980 + $0x78] sm:$0xff] %v6815
        $region136: #{tpu_custom_call.1} parent=127 // pred_fallthru
          _
        %s6832 = sand.u32 %s700, 1
        %s6833 = scalar_lea.sflag [#allocation6], %s6832
        %s6834 = sand.u32 %s700, 1
        %s6835 = smul.addr %s6834, 128
        %s6836 = scalar_lea.vmem [#allocation5], %s6835
        // Predicated region
        $region137: #{tpu_custom_call.1} parent=127 // pred_check
          %p6837 = pneg %p710
        $region138: #{tpu_custom_call.1} parent=127 // pred_check_branch
          %6839 = sbr.rel (%p6837) target = $region140
        $region139: #{tpu_custom_call.1} parent=127 // pred_region
          %s6841 = ssub.s32 2048, 2048
          %6842 = vsyncadd %s6833, %s6841
          %s6843 = smul.addr %s52, 16
          %s6844 = smul.addr %s6843, 128
          %s6845 = scalar_lea.hbm %s28, %s6844
          %s6846 = sshll.u32 %s6836, 4
          %s6847 = int_to_ptr.vmem [resolvable:$true] %s6846
          %6852 = dma.vmem_to_hbm [thread:$0]  %s6847, 2048, %s6845, %s6833, 128, 128, 8
        $region140: #{tpu_custom_call.1} parent=127 // pred_fallthru
          _
      $region128: #{tpu_custom_call.1} parent=5 // pred_fallthru
        _
      %p6853 = scmp.le.s32.totalorder 2, %s43
      // Predicated region
      $region141: #{tpu_custom_call.1} parent=5 // pred_check
        %p6854 = pneg %p6853
      $region142: #{tpu_custom_call.1} parent=5 // pred_check_branch
        %6856 = sbr.rel (%p6854) target = $region144
      $region143: #{tpu_custom_call.1} parent=5 // pred_region
        %s6857 = ssub.s32 %s43, 2
        // Predicated region
        $region145: #{tpu_custom_call.1} parent=143 // pred_check
          %p6858 = pneg %p716
        $region146: #{tpu_custom_call.1} parent=143 // pred_check_branch
          %6860 = sbr.rel (%p6858) target = $region148
        $region147: #{tpu_custom_call.1} parent=143 // pred_region
          %s6861 = sand.u32 %s701, 1
          %s6862 = scalar_lea.sflag [#allocation6], %s6861
          %s6863 = sand.u32 %s701, 1
          %s6864 = smul.addr %s6863, 128
          %s6865 = scalar_lea.vmem [#allocation5], %s6864
          %6866 = dma.done %s6862, 2048
        $region148: #{tpu_custom_call.1} parent=143 // pred_fallthru
          _
      $region144: #{tpu_custom_call.1} parent=5 // pred_fallthru
        _
    $region6: #{tpu_custom_call.1} parent=1 // loop_footer
      %s47 = sadd.s32 1, %s43
    $region7: #{tpu_custom_call.1} parent=1 // loop_footer_branch
      %42 = sbr.rel target = $region3
    $region8: #{tpu_custom_call.1} parent=1 // loop_exit
      _
    %6867 = vsyncpa [#allocation6], 1
    %s6868 = scalar_lea.sflag [#allocation6], 1
    %6869 = vsyncpa %s6868, 1

</llo_original>
